<compile_context>
chip_gen: v5e
topology: v5e:2x2
jax: 0.10.0
libtpu: 0.0.40
codegen_flags: <defaults>
</compile_context>

<pallas_src>
import functools

import jax
import jax.numpy as jnp
from jax import lax
from jax.experimental import pallas as pl
from jax.experimental.pallas import tpu as pltpu

IMAGE_SIZE = (1, 28, 28)
IMAGE_FLAT = 28 * 28              # 784
LABEL_EMB_DIM = 32
LATENT_DIM = 96
N_CLASSES = 10
N_CLASSES_PADDED = 16             # zero-padded class axis (padded rows never selected)
EPS = 1e-5                        # torch.nn.BatchNorm1d default eps
_INV_SQRT2 = 0.7071067811865476

# (in_features, out_features) for the 5 Linear layers
LAYER_DIMS = [
    (LATENT_DIM + LABEL_EMB_DIM, 128),
    (128, 256),
    (256, 512),
    (512, 1024),
    (1024, IMAGE_FLAT),
]
BN_WIDTHS = (128, 256, 512, 1024)
IMAGE_FLAT_PADDED = 896           # 784 padded to a lane multiple *inside vec_packed only*

# Static offsets into the packed (1, VEC_LEN) f32 vector: g1..g4 | t1..t4 | b5 | s5.
# All offsets are multiples of 128 (lane-tile aligned -> free static slices).
_G_OFFS = (0, 128, 384, 896)
_T_BASE = sum(BN_WIDTHS)                          # 1920
_T_OFFS = tuple(_T_BASE + o for o in _G_OFFS)     # (1920, 2048, 2304, 2816)
_B5_OFF = 2 * _T_BASE                             # 3840
_S5_OFF = _B5_OFF + IMAGE_FLAT_PADDED             # 4736
VEC_LEN = _S5_OFF + IMAGE_FLAT_PADDED             # 5632


def _bn_gelu(h, gamma, beta):
    """BatchNorm1d (training mode, biased batch stats) + exact (erf) GELU, all f32."""
    mean = jnp.mean(h, axis=0, keepdims=True)
    var = jnp.mean(jnp.square(h - mean), axis=0, keepdims=True)
    hn = (h - mean) * lax.rsqrt(var + EPS) * gamma + beta
    return 0.5 * hn * (1.0 + lax.erf(hn * _INV_SQRT2))


def generator_mlp_kernel(labels_ref, z_ref, w1e_ref, w2_ref, w3_ref, w4_ref, w5_ref,
                         vec_ref, out_ref):
    bf16 = jnp.bfloat16
    f32 = jnp.float32
    G = z_ref.shape[0]

    def vec(off, width):
        # static, 128-aligned slices into the single packed parameter vector
        return vec_ref[:, off:off + width]

    def widen(w_int8_ref):
        # int8 -> bf16 via f32 (portable lowering path on v5e/v6e/v7x)
        return w_int8_ref[...].astype(f32).astype(bf16)

    # Embedding lookup fused into layer 1: one-hot(labels) hits the precomputed
    # (emb_padded @ W1[96:]) rows stacked under W1[:96] inside w1e_ref.
    onehot = (labels_ref[...] ==
              lax.broadcasted_iota(jnp.int32, (G, N_CLASSES_PADDED), 1)
              ).astype(f32).astype(bf16)

    # Layer 1:  z @ W1[:96]  +  onehot @ (emb @ W1[96:])      (bias cancels in BN)
    h = (jnp.dot(z_ref[...].astype(bf16), w1e_ref[:LATENT_DIM, :],
                 preferred_element_type=f32)
         + jnp.dot(onehot, w1e_ref[LATENT_DIM:, :], preferred_element_type=f32))
    h = _bn_gelu(h, vec(_G_OFFS[0], BN_WIDTHS[0]), vec(_T_OFFS[0], BN_WIDTHS[0]))

    # Layer 2 (bf16 weights)
    h = jnp.dot(h.astype(bf16), w2_ref[...], preferred_element_type=f32)
    h = _bn_gelu(h, vec(_G_OFFS[1], BN_WIDTHS[1]), vec(_T_OFFS[1], BN_WIDTHS[1]))

    # Layers 3/4 (int8 weights; per-column dequant scale cancels through BatchNorm)
    h = jnp.dot(h.astype(bf16), widen(w3_ref), preferred_element_type=f32)
    h = _bn_gelu(h, vec(_G_OFFS[2], BN_WIDTHS[2]), vec(_T_OFFS[2], BN_WIDTHS[2]))

    h = jnp.dot(h.astype(bf16), widen(w4_ref), preferred_element_type=f32)
    h = _bn_gelu(h, vec(_G_OFFS[3], BN_WIDTHS[3]), vec(_T_OFFS[3], BN_WIDTHS[3]))

    # Layer 5 (int8 weights; explicit per-column dequant scale + bias, then sigmoid)
    h = jnp.dot(h.astype(bf16), widen(w5_ref), preferred_element_type=f32)
    h = h * vec(_S5_OFF, IMAGE_FLAT) + vec(_B5_OFF, IMAGE_FLAT)
    out_ref[...] = jax.nn.sigmoid(h)


def _quantize_per_column(w):
    """Symmetric per-output-column int8 quantization; returns (q_int8, scale(1,N))."""
    scale = jnp.maximum(jnp.max(jnp.abs(w), axis=0, keepdims=True), 1e-8) / 127.0
    q = jnp.clip(jnp.round(w / scale), -127.0, 127.0).astype(jnp.int8)
    return q, scale


def init_params(key):
    """Deterministic synthetic parameters mirroring the PyTorch module shapes."""
    params = {}
    key, ek = jax.random.split(key)
    emb = jax.random.normal(ek, (N_CLASSES, LABEL_EMB_DIM), jnp.float32)
    params["embedding"] = emb
    for i, (fan_in, fan_out) in enumerate(LAYER_DIMS, start=1):
        key, wk, bk = jax.random.split(key, 3)
        bound = 1.0 / jnp.sqrt(fan_in)
        params[f"w{i}"] = jax.random.uniform(wk, (fan_in, fan_out), jnp.float32, -bound, bound)
        params[f"b{i}"] = jax.random.uniform(bk, (1, fan_out), jnp.float32, -bound, bound)
        if i <= 4:  # BatchNorm1d default init
            params[f"g{i}"] = jnp.ones((1, fan_out), jnp.float32)
            params[f"t{i}"] = jnp.zeros((1, fan_out), jnp.float32)

    # ---- kernel-side packed / quantized copies --------------------------------
    # Layer-1 weight with the embedding lookup folded in:
    #   rows   0.. 95 : W1[:96]                      (acts on z)
    #   rows  96..111 : emb_padded @ W1[96:]         (acts on one-hot(labels); rows 10..15 zero)
    emb_pad = jnp.zeros((N_CLASSES_PADDED, LABEL_EMB_DIM), jnp.float32).at[:N_CLASSES].set(emb)
    w1 = params["w1"]
    w1e = jnp.concatenate([w1[:LATENT_DIM, :], emb_pad @ w1[LATENT_DIM:, :]], axis=0)
    params["w1e_packed"] = w1e.astype(jnp.bfloat16)           # (112, 128) bf16
    params["w2_bf16"] = params["w2"].astype(jnp.bfloat16)      # (128, 256) bf16

    # int8 storage for the three largest weight matrices (>90% of weight bytes).
    params["w3_q"], _ = _quantize_per_column(params["w3"])     # scale cancels through BN
    params["w4_q"], _ = _quantize_per_column(params["w4"])     # scale cancels through BN
    params["w5_q"], s5 = _quantize_per_column(params["w5"])    # needs explicit dequant

    def pad_lane(v, n):
        return jnp.zeros((1, n), jnp.float32).at[:, :v.shape[1]].set(v)

    # One packed parameter vector (g1..g4 | t1..t4 | b5(pad 896) | s5(pad 896)) -> single DMA.
    params["vec_packed"] = jnp.concatenate(
        [params[f"g{i}"] for i in range(1, 5)]
        + [params[f"t{i}"] for i in range(1, 5)]
        + [pad_lane(params["b5"], IMAGE_FLAT_PADDED), pad_lane(s5, IMAGE_FLAT_PADDED)],
        axis=1)
    assert params["vec_packed"].shape == (1, VEC_LEN)
    return params


@functools.partial(jax.jit, static_argnames=("group_size",))
def generator_forward(z, labels, params, group_size=None):
    """Generator forward.  `group_size` = rows per BatchNorm group / grid step
    (default: whole batch, i.e. exact PyTorch whole-batch BN semantics)."""
    B = z.shape[0]
    G = B if group_size is None else int(group_size)
    assert B % G == 0, "batch must be a multiple of the BN group size"
    num_groups = B // G
    if num_groups > 1:
        assert G % 8 == 0, "grouped batches need a sublane-aligned (multiple-of-8) group size"

    labels2d = labels.astype(jnp.int32).reshape(B, 1)
    z = z.astype(jnp.float32)

    w1e = params["w1e_packed"]
    w2 = params["w2_bf16"]
    w3 = params["w3_q"]
    w4 = params["w4_q"]
    w5 = params["w5_q"]
    vec = params["vec_packed"]

    # Per-group blocks for activations, constant (grid-resident) blocks for weights:
    # the weight stream is DMA'd on the first grid step only (block index never changes).
    def act_spec(shape):
        return pl.BlockSpec(shape, lambda i: (i, 0))

    def const_spec(arr):
        return pl.BlockSpec(arr.shape, lambda i: (0, 0))

    flops = 2 * B * (LATENT_DIM * 128 + N_CLASSES_PADDED * 128 + 128 * 256
                     + 256 * 512 + 512 * 1024 + 1024 * IMAGE_FLAT)
    transcendentals = B * (2 * sum(BN_WIDTHS) + IMAGE_FLAT)
    bytes_accessed = (w1e.size * 2 + w2.size * 2 + w3.size + w4.size + w5.size
                      + vec.size * 4 + B * (LATENT_DIM * 4 + 4 + IMAGE_FLAT * 4))

    out = pl.pallas_call(
        generator_mlp_kernel,
        out_shape=jax.ShapeDtypeStruct((B, IMAGE_FLAT), jnp.float32),
        grid=(num_groups,),
        in_specs=[
            act_spec((G, 1)),              # labels
            act_spec((G, LATENT_DIM)),     # z
            const_spec(w1e),
            const_spec(w2),
            const_spec(w3),
            const_spec(w4),
            const_spec(w5),
            const_spec(vec),
        ],
        out_specs=act_spec((G, IMAGE_FLAT)),
        compiler_params=pltpu.CompilerParams(
            # Single-core: megacore would re-fetch the weights per core; only worth it
            # for >= ~32-64 groups.  Flip to ("parallel",) for very large batches.
            dimension_semantics=("arbitrary",),
            # ~1.6 MB resident weights + double buffers + int8->bf16 widen temporaries;
            # 16 MiB is ample on v5e/v6e/v7x and frees the old 32 MiB reservation.
            vmem_limit_bytes=16 << 20,
        ),
        cost_estimate=pl.CostEstimate(flops=flops, transcendentals=transcendentals,
                                      bytes_accessed=bytes_accessed),
    )(labels2d, z, w1e, w2, w3, w4, w5, vec)
    return out.reshape(B, *IMAGE_SIZE)     # NCHW: (B, 1, 28, 28)


def generator_reference(z, labels, params):
    """Pure-JAX f32 reference (full-precision weights, biases included; BN cancels b1..b4)."""
    emb = jnp.take(params["embedding"], labels, axis=0)
    h = jnp.concatenate([z, emb], axis=-1).astype(jnp.float32)
    for i in range(1, 5):
        h = jnp.dot(h, params[f"w{i}"], precision=lax.Precision.HIGHEST) + params[f"b{i}"]
        mean = jnp.mean(h, axis=0, keepdims=True)
        var = jnp.mean(jnp.square(h - mean), axis=0, keepdims=True)
        h = (h - mean) * lax.rsqrt(var + EPS) * params[f"g{i}"] + params[f"t{i}"]
        h = 0.5 * h * (1.0 + lax.erf(h * _INV_SQRT2))
    h = jnp.dot(h, params["w5"], precision=lax.Precision.HIGHEST) + params["b5"]
    return jax.nn.sigmoid(h).reshape(z.shape[0], *IMAGE_SIZE)


if __name__ == "__main__":
    key = jax.random.PRNGKey(0)
    pkey, zkey, lkey = jax.random.split(key, 3)
    params = init_params(pkey)

    # --- Check 1: single group (grid of 1) -> exact whole-batch BN semantics. ---
    B = 8
    z = jax.random.normal(zkey, (B, LATENT_DIM), jnp.float32)
    labels = jax.random.randint(lkey, (B,), 0, N_CLASSES, jnp.int32)
    image = jax.block_until_ready(generator_forward(z, labels, params))
    assert image.shape == (B, 1, 28, 28), image.shape
    assert image.dtype == jnp.float32
    ref = generator_reference(z, labels, params)
    err = float(jnp.max(jnp.abs(image - ref)))
    assert jnp.allclose(image, ref, atol=3e-2), err   # bf16 activations + int8 weight tolerance

    # --- Check 2: batch of 64 in groups of 8 (weights VMEM-resident across 8 grid steps). ---
    B2, G = 64, 8
    z2 = jax.random.normal(jax.random.fold_in(zkey, 1), (B2, LATENT_DIM), jnp.float32)
    labels2 = jax.random.randint(jax.random.fold_in(lkey, 1), (B2,), 0, N_CLASSES, jnp.int32)
    image2 = jax.block_until_ready(generator_forward(z2, labels2, params, group_size=G))
    assert image2.shape == (B2, 1, 28, 28), image2.shape
    ref2 = jnp.concatenate(
        [generator_reference(z2[i * G:(i + 1) * G], labels2[i * G:(i + 1) * G], params)
         for i in range(B2 // G)], axis=0)               # per-group BN, matching the kernel
    err2 = float(jnp.max(jnp.abs(image2 - ref2)))
    assert jnp.allclose(image2, ref2, atol=3e-2), err2

    print("KERNEL_OK")
</pallas_src>

<mosaic_0001>
module attributes {stable_mosaic.version = 11 : i64} {
  func.func @generator_mlp_kernel(%arg0: i32, %arg1: memref<8x1xi32, #tpu.memory_space<vmem>>, %arg2: memref<8x96xf32, #tpu.memory_space<vmem>>, %arg3: memref<112x128xbf16, #tpu.memory_space<vmem>>, %arg4: memref<128x256xbf16, #tpu.memory_space<vmem>>, %arg5: memref<256x512xi8, #tpu.memory_space<vmem>>, %arg6: memref<512x1024xi8, #tpu.memory_space<vmem>>, %arg7: memref<1024x784xi8, #tpu.memory_space<vmem>>, %arg8: memref<1x5632xf32, #tpu.memory_space<vmem>>, %arg9: memref<8x784xf32, #tpu.memory_space<vmem>>) attributes {dimension_semantics = [#tpu.dimension_semantics<arbitrary>], iteration_bounds = array<i64: 1>, scalar_prefetch = 0 : i64, scratch_operands = 0 : i64, tpu.core_type = #tpu.core_type<tc>, window_params = [{transform_indices = @transform_0, window_bounds = array<i64: 8, 1>}, {transform_indices = @transform_1, window_bounds = array<i64: 8, 96>}, {pipeline_mode = #tpu.pipeline_mode<synchronous>, transform_indices = @transform_2, window_bounds = array<i64: 112, 128>}, {pipeline_mode = #tpu.pipeline_mode<synchronous>, transform_indices = @transform_3, window_bounds = array<i64: 128, 256>}, {pipeline_mode = #tpu.pipeline_mode<synchronous>, transform_indices = @transform_4, window_bounds = array<i64: 256, 512>}, {pipeline_mode = #tpu.pipeline_mode<synchronous>, transform_indices = @transform_5, window_bounds = array<i64: 512, 1024>}, {pipeline_mode = #tpu.pipeline_mode<synchronous>, transform_indices = @transform_6, window_bounds = array<i64: 1024, 784>}, {pipeline_mode = #tpu.pipeline_mode<synchronous>, transform_indices = @transform_7, window_bounds = array<i64: 1, 5632>}, {transform_indices = @transform_8, window_bounds = array<i64: 8, 784>}]} {
    %c0 = arith.constant 0 : index
    %c0_0 = arith.constant 0 : index
    %0 = vector.load %arg1[%c0, %c0_0] : memref<8x1xi32, #tpu.memory_space<vmem>>, vector<8x1xi32>
    %1 = tpu.iota {dimensions = array<i32: 1>} : vector<8x16xi32>
    %2 = vector.broadcast %0 : vector<8x1xi32> to vector<8x16xi32>
    %3 = arith.cmpi eq, %2, %1 : vector<8x16xi32>
    %4 = arith.extui %3 : vector<8x16xi1> to vector<8x16xi32>
    %5 = arith.sitofp %4 : vector<8x16xi32> to vector<8x16xf32>
    %6 = arith.truncf %5 : vector<8x16xf32> to vector<8x16xbf16>
    %c0_1 = arith.constant 0 : index
    %c0_2 = arith.constant 0 : index
    %7 = vector.load %arg2[%c0_1, %c0_2] : memref<8x96xf32, #tpu.memory_space<vmem>>, vector<8x96xf32>
    %8 = arith.truncf %7 : vector<8x96xf32> to vector<8x96xbf16>
    %c0_3 = arith.constant 0 : index
    %c0_4 = arith.constant 0 : index
    %9 = vector.load %arg3[%c0_3, %c0_4] : memref<112x128xbf16, #tpu.memory_space<vmem>>, vector<96x128xbf16>
    %cst = arith.constant dense<0.000000e+00> : vector<8x128xf32>
    %10 = tpu.matmul %8, %9, %cst {dimension_numbers = #tpu.dot_dimension_numbers<[1], [0], [0], [1], [0, 0, 1, 1], [], []>} : vector<8x96xbf16>, vector<96x128xbf16>, vector<8x128xf32> -> vector<8x128xf32>
    %c96 = arith.constant 96 : index
    %c0_5 = arith.constant 0 : index
    %11 = vector.load %arg3[%c96, %c0_5] : memref<112x128xbf16, #tpu.memory_space<vmem>>, vector<16x128xbf16>
    %cst_6 = arith.constant dense<0.000000e+00> : vector<8x128xf32>
    %12 = tpu.matmul %6, %11, %cst_6 {dimension_numbers = #tpu.dot_dimension_numbers<[1], [0], [0], [1], [0, 0, 1, 1], [], []>} : vector<8x16xbf16>, vector<16x128xbf16>, vector<8x128xf32> -> vector<8x128xf32>
    %13 = arith.addf %10, %12 : vector<8x128xf32>
    %c0_7 = arith.constant 0 : index
    %c0_8 = arith.constant 0 : index
    %14 = vector.load %arg8[%c0_7, %c0_8] : memref<1x5632xf32, #tpu.memory_space<vmem>>, vector<1x128xf32>
    %c0_9 = arith.constant 0 : index
    %c1920 = arith.constant 1920 : index
    %15 = vector.load %arg8[%c0_9, %c1920] : memref<1x5632xf32, #tpu.memory_space<vmem>>, vector<1x128xf32>
    %cst_10 = arith.constant dense<0.000000e+00> : vector<128xf32>
    %16 = vector.multi_reduction <add>, %13, %cst_10 [0] : vector<8x128xf32> to vector<128xf32>
    %17 = vector.shape_cast %16 : vector<128xf32> to vector<1x128xf32>
    %cst_11 = arith.constant 8.000000e+00 : f32
    %18 = vector.broadcast %cst_11 : f32 to vector<1x128xf32>
    %19 = arith.divf %17, %18 : vector<1x128xf32>
    %20 = vector.broadcast %19 : vector<1x128xf32> to vector<8x128xf32>
    %21 = arith.subf %13, %20 : vector<8x128xf32>
    %22 = arith.mulf %21, %21 : vector<8x128xf32>
    %cst_12 = arith.constant dense<0.000000e+00> : vector<128xf32>
    %23 = vector.multi_reduction <add>, %22, %cst_12 [0] : vector<8x128xf32> to vector<128xf32>
    %24 = vector.shape_cast %23 : vector<128xf32> to vector<1x128xf32>
    %cst_13 = arith.constant 8.000000e+00 : f32
    %25 = vector.broadcast %cst_13 : f32 to vector<1x128xf32>
    %26 = arith.divf %24, %25 : vector<1x128xf32>
    %27 = vector.broadcast %19 : vector<1x128xf32> to vector<8x128xf32>
    %28 = arith.subf %13, %27 : vector<8x128xf32>
    %cst_14 = arith.constant 9.99999974E-6 : f32
    %29 = vector.broadcast %cst_14 : f32 to vector<1x128xf32>
    %30 = arith.addf %26, %29 : vector<1x128xf32>
    %31 = math.rsqrt %30 : vector<1x128xf32>
    %32 = vector.broadcast %31 : vector<1x128xf32> to vector<8x128xf32>
    %33 = arith.mulf %28, %32 : vector<8x128xf32>
    %34 = vector.broadcast %14 : vector<1x128xf32> to vector<8x128xf32>
    %35 = arith.mulf %33, %34 : vector<8x128xf32>
    %36 = vector.broadcast %15 : vector<1x128xf32> to vector<8x128xf32>
    %37 = arith.addf %35, %36 : vector<8x128xf32>
    %cst_15 = arith.constant 5.000000e-01 : f32
    %38 = vector.broadcast %cst_15 : f32 to vector<8x128xf32>
    %39 = arith.mulf %38, %37 : vector<8x128xf32>
    %cst_16 = arith.constant 0.707106769 : f32
    %40 = vector.broadcast %cst_16 : f32 to vector<8x128xf32>
    %41 = arith.mulf %37, %40 : vector<8x128xf32>
    %42 = math.erf %41 : vector<8x128xf32>
    %cst_17 = arith.constant 1.000000e+00 : f32
    %43 = vector.broadcast %cst_17 : f32 to vector<8x128xf32>
    %44 = arith.addf %43, %42 : vector<8x128xf32>
    %45 = arith.mulf %39, %44 : vector<8x128xf32>
    %46 = arith.truncf %45 : vector<8x128xf32> to vector<8x128xbf16>
    %c0_18 = arith.constant 0 : index
    %c0_19 = arith.constant 0 : index
    %47 = vector.load %arg4[%c0_18, %c0_19] : memref<128x256xbf16, #tpu.memory_space<vmem>>, vector<128x256xbf16>
    %cst_20 = arith.constant dense<0.000000e+00> : vector<8x256xf32>
    %48 = tpu.matmul %46, %47, %cst_20 {dimension_numbers = #tpu.dot_dimension_numbers<[1], [0], [0], [1], [0, 0, 1, 1], [], []>} : vector<8x128xbf16>, vector<128x256xbf16>, vector<8x256xf32> -> vector<8x256xf32>
    %c0_21 = arith.constant 0 : index
    %c128 = arith.constant 128 : index
    %49 = vector.load %arg8[%c0_21, %c128] : memref<1x5632xf32, #tpu.memory_space<vmem>>, vector<1x256xf32>
    %c0_22 = arith.constant 0 : index
    %c2048 = arith.constant 2048 : index
    %50 = vector.load %arg8[%c0_22, %c2048] : memref<1x5632xf32, #tpu.memory_space<vmem>>, vector<1x256xf32>
    %cst_23 = arith.constant dense<0.000000e+00> : vector<256xf32>
    %51 = vector.multi_reduction <add>, %48, %cst_23 [0] : vector<8x256xf32> to vector<256xf32>
    %52 = vector.shape_cast %51 : vector<256xf32> to vector<1x256xf32>
    %cst_24 = arith.constant 8.000000e+00 : f32
    %53 = vector.broadcast %cst_24 : f32 to vector<1x256xf32>
    %54 = arith.divf %52, %53 : vector<1x256xf32>
    %55 = vector.broadcast %54 : vector<1x256xf32> to vector<8x256xf32>
    %56 = arith.subf %48, %55 : vector<8x256xf32>
    %57 = arith.mulf %56, %56 : vector<8x256xf32>
    %cst_25 = arith.constant dense<0.000000e+00> : vector<256xf32>
    %58 = vector.multi_reduction <add>, %57, %cst_25 [0] : vector<8x256xf32> to vector<256xf32>
    %59 = vector.shape_cast %58 : vector<256xf32> to vector<1x256xf32>
    %cst_26 = arith.constant 8.000000e+00 : f32
    %60 = vector.broadcast %cst_26 : f32 to vector<1x256xf32>
    %61 = arith.divf %59, %60 : vector<1x256xf32>
    %62 = vector.broadcast %54 : vector<1x256xf32> to vector<8x256xf32>
    %63 = arith.subf %48, %62 : vector<8x256xf32>
    %cst_27 = arith.constant 9.99999974E-6 : f32
    %64 = vector.broadcast %cst_27 : f32 to vector<1x256xf32>
    %65 = arith.addf %61, %64 : vector<1x256xf32>
    %66 = math.rsqrt %65 : vector<1x256xf32>
    %67 = vector.broadcast %66 : vector<1x256xf32> to vector<8x256xf32>
    %68 = arith.mulf %63, %67 : vector<8x256xf32>
    %69 = vector.broadcast %49 : vector<1x256xf32> to vector<8x256xf32>
    %70 = arith.mulf %68, %69 : vector<8x256xf32>
    %71 = vector.broadcast %50 : vector<1x256xf32> to vector<8x256xf32>
    %72 = arith.addf %70, %71 : vector<8x256xf32>
    %cst_28 = arith.constant 5.000000e-01 : f32
    %73 = vector.broadcast %cst_28 : f32 to vector<8x256xf32>
    %74 = arith.mulf %73, %72 : vector<8x256xf32>
    %cst_29 = arith.constant 0.707106769 : f32
    %75 = vector.broadcast %cst_29 : f32 to vector<8x256xf32>
    %76 = arith.mulf %72, %75 : vector<8x256xf32>
    %77 = math.erf %76 : vector<8x256xf32>
    %cst_30 = arith.constant 1.000000e+00 : f32
    %78 = vector.broadcast %cst_30 : f32 to vector<8x256xf32>
    %79 = arith.addf %78, %77 : vector<8x256xf32>
    %80 = arith.mulf %74, %79 : vector<8x256xf32>
    %81 = arith.truncf %80 : vector<8x256xf32> to vector<8x256xbf16>
    %c0_31 = arith.constant 0 : index
    %c0_32 = arith.constant 0 : index
    %82 = vector.load %arg5[%c0_31, %c0_32] : memref<256x512xi8, #tpu.memory_space<vmem>>, vector<256x512xi8>
    %83 = arith.sitofp %82 : vector<256x512xi8> to vector<256x512xf32>
    %84 = arith.truncf %83 : vector<256x512xf32> to vector<256x512xbf16>
    %cst_33 = arith.constant dense<0.000000e+00> : vector<8x512xf32>
    %85 = tpu.matmul %81, %84, %cst_33 {dimension_numbers = #tpu.dot_dimension_numbers<[1], [0], [0], [1], [0, 0, 1, 1], [], []>} : vector<8x256xbf16>, vector<256x512xbf16>, vector<8x512xf32> -> vector<8x512xf32>
    %c0_34 = arith.constant 0 : index
    %c384 = arith.constant 384 : index
    %86 = vector.load %arg8[%c0_34, %c384] : memref<1x5632xf32, #tpu.memory_space<vmem>>, vector<1x512xf32>
    %c0_35 = arith.constant 0 : index
    %c2304 = arith.constant 2304 : index
    %87 = vector.load %arg8[%c0_35, %c2304] : memref<1x5632xf32, #tpu.memory_space<vmem>>, vector<1x512xf32>
    %cst_36 = arith.constant dense<0.000000e+00> : vector<512xf32>
    %88 = vector.multi_reduction <add>, %85, %cst_36 [0] : vector<8x512xf32> to vector<512xf32>
    %89 = vector.shape_cast %88 : vector<512xf32> to vector<1x512xf32>
    %cst_37 = arith.constant 8.000000e+00 : f32
    %90 = vector.broadcast %cst_37 : f32 to vector<1x512xf32>
    %91 = arith.divf %89, %90 : vector<1x512xf32>
    %92 = vector.broadcast %91 : vector<1x512xf32> to vector<8x512xf32>
    %93 = arith.subf %85, %92 : vector<8x512xf32>
    %94 = arith.mulf %93, %93 : vector<8x512xf32>
    %cst_38 = arith.constant dense<0.000000e+00> : vector<512xf32>
    %95 = vector.multi_reduction <add>, %94, %cst_38 [0] : vector<8x512xf32> to vector<512xf32>
    %96 = vector.shape_cast %95 : vector<512xf32> to vector<1x512xf32>
    %cst_39 = arith.constant 8.000000e+00 : f32
    %97 = vector.broadcast %cst_39 : f32 to vector<1x512xf32>
    %98 = arith.divf %96, %97 : vector<1x512xf32>
    %99 = vector.broadcast %91 : vector<1x512xf32> to vector<8x512xf32>
    %100 = arith.subf %85, %99 : vector<8x512xf32>
    %cst_40 = arith.constant 9.99999974E-6 : f32
    %101 = vector.broadcast %cst_40 : f32 to vector<1x512xf32>
    %102 = arith.addf %98, %101 : vector<1x512xf32>
    %103 = math.rsqrt %102 : vector<1x512xf32>
    %104 = vector.broadcast %103 : vector<1x512xf32> to vector<8x512xf32>
    %105 = arith.mulf %100, %104 : vector<8x512xf32>
    %106 = vector.broadcast %86 : vector<1x512xf32> to vector<8x512xf32>
    %107 = arith.mulf %105, %106 : vector<8x512xf32>
    %108 = vector.broadcast %87 : vector<1x512xf32> to vector<8x512xf32>
    %109 = arith.addf %107, %108 : vector<8x512xf32>
    %cst_41 = arith.constant 5.000000e-01 : f32
    %110 = vector.broadcast %cst_41 : f32 to vector<8x512xf32>
    %111 = arith.mulf %110, %109 : vector<8x512xf32>
    %cst_42 = arith.constant 0.707106769 : f32
    %112 = vector.broadcast %cst_42 : f32 to vector<8x512xf32>
    %113 = arith.mulf %109, %112 : vector<8x512xf32>
    %114 = math.erf %113 : vector<8x512xf32>
    %cst_43 = arith.constant 1.000000e+00 : f32
    %115 = vector.broadcast %cst_43 : f32 to vector<8x512xf32>
    %116 = arith.addf %115, %114 : vector<8x512xf32>
    %117 = arith.mulf %111, %116 : vector<8x512xf32>
    %118 = arith.truncf %117 : vector<8x512xf32> to vector<8x512xbf16>
    %c0_44 = arith.constant 0 : index
    %c0_45 = arith.constant 0 : index
    %119 = vector.load %arg6[%c0_44, %c0_45] : memref<512x1024xi8, #tpu.memory_space<vmem>>, vector<512x1024xi8>
    %120 = arith.sitofp %119 : vector<512x1024xi8> to vector<512x1024xf32>
    %121 = arith.truncf %120 : vector<512x1024xf32> to vector<512x1024xbf16>
    %cst_46 = arith.constant dense<0.000000e+00> : vector<8x1024xf32>
    %122 = tpu.matmul %118, %121, %cst_46 {dimension_numbers = #tpu.dot_dimension_numbers<[1], [0], [0], [1], [0, 0, 1, 1], [], []>} : vector<8x512xbf16>, vector<512x1024xbf16>, vector<8x1024xf32> -> vector<8x1024xf32>
    %c0_47 = arith.constant 0 : index
    %c896 = arith.constant 896 : index
    %123 = vector.load %arg8[%c0_47, %c896] : memref<1x5632xf32, #tpu.memory_space<vmem>>, vector<1x1024xf32>
    %c0_48 = arith.constant 0 : index
    %c2816 = arith.constant 2816 : index
    %124 = vector.load %arg8[%c0_48, %c2816] : memref<1x5632xf32, #tpu.memory_space<vmem>>, vector<1x1024xf32>
    %cst_49 = arith.constant dense<0.000000e+00> : vector<1024xf32>
    %125 = vector.multi_reduction <add>, %122, %cst_49 [0] : vector<8x1024xf32> to vector<1024xf32>
    %126 = vector.shape_cast %125 : vector<1024xf32> to vector<1x1024xf32>
    %cst_50 = arith.constant 8.000000e+00 : f32
    %127 = vector.broadcast %cst_50 : f32 to vector<1x1024xf32>
    %128 = arith.divf %126, %127 : vector<1x1024xf32>
    %129 = vector.broadcast %128 : vector<1x1024xf32> to vector<8x1024xf32>
    %130 = arith.subf %122, %129 : vector<8x1024xf32>
    %131 = arith.mulf %130, %130 : vector<8x1024xf32>
    %cst_51 = arith.constant dense<0.000000e+00> : vector<1024xf32>
    %132 = vector.multi_reduction <add>, %131, %cst_51 [0] : vector<8x1024xf32> to vector<1024xf32>
    %133 = vector.shape_cast %132 : vector<1024xf32> to vector<1x1024xf32>
    %cst_52 = arith.constant 8.000000e+00 : f32
    %134 = vector.broadcast %cst_52 : f32 to vector<1x1024xf32>
    %135 = arith.divf %133, %134 : vector<1x1024xf32>
    %136 = vector.broadcast %128 : vector<1x1024xf32> to vector<8x1024xf32>
    %137 = arith.subf %122, %136 : vector<8x1024xf32>
    %cst_53 = arith.constant 9.99999974E-6 : f32
    %138 = vector.broadcast %cst_53 : f32 to vector<1x1024xf32>
    %139 = arith.addf %135, %138 : vector<1x1024xf32>
    %140 = math.rsqrt %139 : vector<1x1024xf32>
    %141 = vector.broadcast %140 : vector<1x1024xf32> to vector<8x1024xf32>
    %142 = arith.mulf %137, %141 : vector<8x1024xf32>
    %143 = vector.broadcast %123 : vector<1x1024xf32> to vector<8x1024xf32>
    %144 = arith.mulf %142, %143 : vector<8x1024xf32>
    %145 = vector.broadcast %124 : vector<1x1024xf32> to vector<8x1024xf32>
    %146 = arith.addf %144, %145 : vector<8x1024xf32>
    %cst_54 = arith.constant 5.000000e-01 : f32
    %147 = vector.broadcast %cst_54 : f32 to vector<8x1024xf32>
    %148 = arith.mulf %147, %146 : vector<8x1024xf32>
    %cst_55 = arith.constant 0.707106769 : f32
    %149 = vector.broadcast %cst_55 : f32 to vector<8x1024xf32>
    %150 = arith.mulf %146, %149 : vector<8x1024xf32>
    %151 = math.erf %150 : vector<8x1024xf32>
    %cst_56 = arith.constant 1.000000e+00 : f32
    %152 = vector.broadcast %cst_56 : f32 to vector<8x1024xf32>
    %153 = arith.addf %152, %151 : vector<8x1024xf32>
    %154 = arith.mulf %148, %153 : vector<8x1024xf32>
    %155 = arith.truncf %154 : vector<8x1024xf32> to vector<8x1024xbf16>
    %c0_57 = arith.constant 0 : index
    %c0_58 = arith.constant 0 : index
    %156 = vector.load %arg7[%c0_57, %c0_58] : memref<1024x784xi8, #tpu.memory_space<vmem>>, vector<1024x784xi8>
    %157 = arith.sitofp %156 : vector<1024x784xi8> to vector<1024x784xf32>
    %158 = arith.truncf %157 : vector<1024x784xf32> to vector<1024x784xbf16>
    %cst_59 = arith.constant dense<0.000000e+00> : vector<8x784xf32>
    %159 = tpu.matmul %155, %158, %cst_59 {dimension_numbers = #tpu.dot_dimension_numbers<[1], [0], [0], [1], [0, 0, 1, 1], [], []>} : vector<8x1024xbf16>, vector<1024x784xbf16>, vector<8x784xf32> -> vector<8x784xf32>
    %c0_60 = arith.constant 0 : index
    %c4736 = arith.constant 4736 : index
    %160 = vector.load %arg8[%c0_60, %c4736] : memref<1x5632xf32, #tpu.memory_space<vmem>>, vector<1x784xf32>
    %161 = vector.broadcast %160 : vector<1x784xf32> to vector<8x784xf32>
    %162 = arith.mulf %159, %161 : vector<8x784xf32>
    %c0_61 = arith.constant 0 : index
    %c3840 = arith.constant 3840 : index
    %163 = vector.load %arg8[%c0_61, %c3840] : memref<1x5632xf32, #tpu.memory_space<vmem>>, vector<1x784xf32>
    %164 = vector.broadcast %163 : vector<1x784xf32> to vector<8x784xf32>
    %165 = arith.addf %162, %164 : vector<8x784xf32>
    %166 = arith.negf %165 : vector<8x784xf32>
    %167 = math.exp %166 : vector<8x784xf32>
    %cst_62 = arith.constant 1.000000e+00 : f32
    %168 = vector.broadcast %cst_62 : f32 to vector<8x784xf32>
    %169 = arith.addf %168, %167 : vector<8x784xf32>
    %170 = arith.divf %168, %169 : vector<8x784xf32>
    %c0_63 = arith.constant 0 : index
    %c0_64 = arith.constant 0 : index
    %171 = vector.load %arg9[%c0_63, %c0_64] : memref<8x784xf32, #tpu.memory_space<vmem>>, vector<8x784xf32>
    tpu.vector_store %arg9[%c0_63, %c0_64], %170 {strides = array<i32>} : memref<8x784xf32, #tpu.memory_space<vmem>>, vector<8x784xf32>,
    return
  }
  func.func @transform_0(%arg0: i32) -> (i32, i32) {
    %c0_i32 = arith.constant 0 : i32
    %c0_i32_0 = arith.constant 0 : i32
    return %arg0, %c0_i32 : i32, i32
  }
  func.func @transform_1(%arg0: i32) -> (i32, i32) {
    %c0_i32 = arith.constant 0 : i32
    %c0_i32_0 = arith.constant 0 : i32
    return %arg0, %c0_i32 : i32, i32
  }
  func.func @transform_2(%arg0: i32) -> (i32, i32) {
    %c0_i32 = arith.constant 0 : i32
    %c0_i32_0 = arith.constant 0 : i32
    %c0_i32_1 = arith.constant 0 : i32
    return %c0_i32, %c0_i32_0 : i32, i32
  }
  func.func @transform_3(%arg0: i32) -> (i32, i32) {
    %c0_i32 = arith.constant 0 : i32
    %c0_i32_0 = arith.constant 0 : i32
    %c0_i32_1 = arith.constant 0 : i32
    return %c0_i32, %c0_i32_0 : i32, i32
  }
  func.func @transform_4(%arg0: i32) -> (i32, i32) {
    %c0_i32 = arith.constant 0 : i32
    %c0_i32_0 = arith.constant 0 : i32
    %c0_i32_1 = arith.constant 0 : i32
    return %c0_i32, %c0_i32_0 : i32, i32
  }
  func.func @transform_5(%arg0: i32) -> (i32, i32) {
    %c0_i32 = arith.constant 0 : i32
    %c0_i32_0 = arith.constant 0 : i32
    %c0_i32_1 = arith.constant 0 : i32
    return %c0_i32, %c0_i32_0 : i32, i32
  }
  func.func @transform_6(%arg0: i32) -> (i32, i32) {
    %c0_i32 = arith.constant 0 : i32
    %c0_i32_0 = arith.constant 0 : i32
    %c0_i32_1 = arith.constant 0 : i32
    return %c0_i32, %c0_i32_0 : i32, i32
  }
  func.func @transform_7(%arg0: i32) -> (i32, i32) {
    %c0_i32 = arith.constant 0 : i32
    %c0_i32_0 = arith.constant 0 : i32
    %c0_i32_1 = arith.constant 0 : i32
    return %c0_i32, %c0_i32_0 : i32, i32
  }
  func.func @transform_8(%arg0: i32) -> (i32, i32) {
    %c0_i32 = arith.constant 0 : i32
    %c0_i32_0 = arith.constant 0 : i32
    return %arg0, %c0_i32 : i32, i32
  }
}

</mosaic_0001>

<llo_original>
// kernel: generator_forward.1
$region0: #{generator_forward.1}
  #allocation0 [shape = 'u32[]', space=smem, size = 0x4, offset = 0x4, fixed_abs, tag = 'smem constant byte address 0x4 - core index']
  #allocation1 [shape = 'u32[72,128]{1,0:T(1,128)}', space=vmem, size = 0x9000, scoped, tag = 'internal scratch']
  %s0 = inlined_call_operand.vmem [shape: s32[8,1], index: 0, kind: input, shape index: {}]
  %s1 = inlined_call_operand.vmem [shape: f32[8,96], index: 1, kind: input, shape index: {}]
  %s2 = inlined_call_operand.vmem [shape: bf16[112,128], index: 2, kind: input, shape index: {}]
  %s3 = inlined_call_operand.vmem [shape: bf16[128,256], index: 3, kind: input, shape index: {}]
  %s4 = inlined_call_operand.vmem [shape: s8[256,512], index: 4, kind: input, shape index: {}]
  %s5 = inlined_call_operand.vmem [shape: s8[512,1024], index: 5, kind: input, shape index: {}]
  %s6 = inlined_call_operand.vmem [shape: s8[1024,784], index: 6, kind: input, shape index: {}]
  %s7 = inlined_call_operand.vmem [shape: f32[1,5632], index: 7, kind: input, shape index: {}]
  %s8 = inlined_call_operand.vmem [shape: f32[8,784], index: 8, kind: output, shape index: {}]
  %s9 = sld [smem:[#allocation0]]
  $region42: #{generator_forward.1} parent=0
    _
  %s11 = ssub.s32 1, %s9
  %s12 = scalar_select 0, %s11, %s9
  // Predicated region
  $region2: #{generator_forward.1} parent=0 // pred_check
    _
  $region3: #{generator_forward.1} parent=0 // pred_check_branch
    %14 = sbr.rel (0) target = $region5
  $region4: #{generator_forward.1} parent=0 // pred_region
    _
  $region5: #{generator_forward.1} parent=0 // pred_fallthru
    _
  // Predicated region
  $region6: #{generator_forward.1} parent=0 // pred_check
    _
  $region7: #{generator_forward.1} parent=0 // pred_check_branch
    %16 = sbr.rel (0) target = $region9
  $region8: #{generator_forward.1} parent=0 // pred_region
    _
  $region9: #{generator_forward.1} parent=0 // pred_fallthru
    _
  // Predicated region
  $region10: #{generator_forward.1} parent=0 // pred_check
    _
  $region11: #{generator_forward.1} parent=0 // pred_check_branch
    %18 = sbr.rel (0) target = $region13
  $region12: #{generator_forward.1} parent=0 // pred_region
    _
  $region13: #{generator_forward.1} parent=0 // pred_fallthru
    _
  // Predicated region
  $region14: #{generator_forward.1} parent=0 // pred_check
    _
  $region15: #{generator_forward.1} parent=0 // pred_check_branch
    %20 = sbr.rel (0) target = $region17
  $region16: #{generator_forward.1} parent=0 // pred_region
    _
  $region17: #{generator_forward.1} parent=0 // pred_fallthru
    _
  // Predicated region
  $region18: #{generator_forward.1} parent=0 // pred_check
    _
  $region19: #{generator_forward.1} parent=0 // pred_check_branch
    %22 = sbr.rel (0) target = $region21
  $region20: #{generator_forward.1} parent=0 // pred_region
    _
  $region21: #{generator_forward.1} parent=0 // pred_fallthru
    _
  // Predicated region
  $region22: #{generator_forward.1} parent=0 // pred_check
    _
  $region23: #{generator_forward.1} parent=0 // pred_check_branch
    %24 = sbr.rel (0) target = $region25
  $region24: #{generator_forward.1} parent=0 // pred_region
    _
  $region25: #{generator_forward.1} parent=0 // pred_fallthru
    _
  // Predicated region
  $region26: #{generator_forward.1} parent=0 // pred_check
    _
  $region27: #{generator_forward.1} parent=0 // pred_check_branch
    %26 = sbr.rel (0) target = $region29
  $region28: #{generator_forward.1} parent=0 // pred_region
    _
  $region29: #{generator_forward.1} parent=0 // pred_fallthru
    _
  // Predicated region
  $region30: #{generator_forward.1} parent=0 // pred_check
    _
  $region31: #{generator_forward.1} parent=0 // pred_check_branch
    %28 = sbr.rel (0) target = $region33
  $region32: #{generator_forward.1} parent=0 // pred_region
    _
  $region33: #{generator_forward.1} parent=0 // pred_fallthru
    _
  %v30 = vld [vmem:[%s0] sm:$0xff]
  %v31 = vlaneseq
  %v32 = vand.u32 %v31, 127
  %33 = vset.pattern.permute.xlu0 0
  %34 = vperm.xlu0 %33, %v30
  %v35 = vpop.permute.xlu0 %34
  %vm36 = vcmp.eq.s32.totalorder %v35, %v32
  %v37 = vsel %vm36, 1, 0
  %v38 = vcvt.s32.f32 %v37
  %v39 = vpack.c.bf16 %v38, %v38
  %v40 = vld [vmem:[%s1] sm:$0xff]
  %v41 = vpack.c.bf16 %v40, %v40
  %v42 = vld [vmem:[%s2] sm:$0xf]
  %v43 = vld [vmem:[%s2 + $0x4] sm:$0xf]
  %v44 = vld [vmem:[%s2 + $0x8] sm:$0xf]
  %v45 = vld [vmem:[%s2 + $0xc] sm:$0xf]
  %v46 = vld [vmem:[%s2 + $0x10] sm:$0xf]
  %v47 = vld [vmem:[%s2 + $0x14] sm:$0xf]
  %v48 = vld [vmem:[%s2 + $0x18] sm:$0xf]
  %v49 = vld [vmem:[%s2 + $0x1c] sm:$0xf]
  %v50 = vld [vmem:[%s2 + $0x20] sm:$0xf]
  %v51 = vld [vmem:[%s2 + $0x24] sm:$0xf]
  %v52 = vld [vmem:[%s2 + $0x28] sm:$0xf]
  %v53 = vld [vmem:[%s2 + $0x2c] sm:$0xf]
  %v54 = vld [vmem:[%s2 + $0x30] sm:$0xf]
  %v55 = vld [vmem:[%s2 + $0x34] sm:$0xf]
  %v58 = vunpack.c.l.b16 %v54
  %v59 = vunpack.c.l.b16 %v55
  %v60 = vpack.c.b16 %v59, %v58
  %vm62 = vcmask 130048
  %v64 = vsel %vm62, %v39, 0
  %66 = vmatpush.bf16.msra.mxu0 0
  %67 = vmatpush.bf16.msra.mxu0 0
  %68 = vmatpush.bf16.msra.mxu0 0
  %69 = vmatpush.bf16.msra.mxu0 0
  %70 = vmatpush.bf16.msra.mxu0 0
  %71 = vmatpush.bf16.msra.mxu0 0
  %72 = vmatpush.bf16.msra.mxu0 0
  %73 = vmatpush.bf16.msra.mxu0 %v60
  %74 = vmatmul.bf16.gmra.mxu0 %v64
  %v75 = vpop.f32.mrf.mxu0
  %v76 = vadd.f32 0.0, %v75
  %v77 = vpop.f32.mrf.mxu0
  %78 = vdwg.mxu0
  %v91 = vunpack.c.l.b16 %v42
  %v92 = vunpack.c.l.b16 %v43
  %v93 = vunpack.c.l.b16 %v44
  %v94 = vunpack.c.l.b16 %v45
  %v95 = vunpack.c.l.b16 %v46
  %v96 = vunpack.c.l.b16 %v47
  %v97 = vunpack.c.l.b16 %v48
  %v98 = vunpack.c.l.b16 %v49
  %v99 = vunpack.c.l.b16 %v50
  %v100 = vunpack.c.l.b16 %v51
  %v101 = vunpack.c.l.b16 %v52
  %v102 = vunpack.c.l.b16 %v53
  %v103 = vpack.c.b16 %v92, %v91
  %v104 = vpack.c.b16 %v94, %v93
  %v105 = vpack.c.b16 %v96, %v95
  %v106 = vpack.c.b16 %v98, %v97
  %v107 = vpack.c.b16 %v100, %v99
  %v108 = vpack.c.b16 %v102, %v101
  %vm115 = vcmask 785408
  %v117 = vsel %vm115, %v41, 0
  %119 = vmatpush.bf16.msra.mxu0 0
  %120 = vmatpush.bf16.msra.mxu0 0
  %121 = vmatpush.bf16.msra.mxu0 %v108
  %122 = vmatpush.bf16.msra.mxu0 %v107
  %123 = vmatpush.bf16.msra.mxu0 %v106
  %124 = vmatpush.bf16.msra.mxu0 %v105
  %125 = vmatpush.bf16.msra.mxu0 %v104
  %126 = vmatpush.bf16.msra.mxu0 %v103
  %127 = vmatmul.bf16.gmra.mxu0 %v117
  %v128 = vpop.f32.mrf.mxu0
  %v129 = vadd.f32 %v76, %v128
  %v130 = vpop.f32.mrf.mxu0
  %131 = vdwg.mxu0
  %v132 = vld [vmem:[%s7] sm:$0x1]
  %v133 = vld [vmem:[%s7 + $0xf] sm:$0x1]
  %v134 = vrot.slane %v129, 4
  %v135 = vadd.f32 %v129, %v134
  %v136 = vrot.slane %v135, 2
  %v137 = vadd.f32 %v135, %v136
  %v138 = vrot.slane %v137, 1
  %v139 = vadd.f32 %v137, %v138
  %v140 = vrcp.pop 8.0
  %v141 = vmul.f32 8.0, %v140
  %v142 = vsub.f32 1.0, %v141
  %v143 = vmul.f32 %v140, %v142
  %v144 = vadd.f32 %v140, %v143
  %vm145 = vweird.f32 %v140
  %v146 = vsel %vm145, %v140, %v144
  %v147 = vmul.f32 %v139, %v146
  %v148 = vsub.f32 %v129, %v147
  %v149 = vmul.f32 %v148, %v148
  %v150 = vrot.slane %v149, 4
  %v151 = vadd.f32 %v149, %v150
  %v152 = vrot.slane %v151, 2
  %v153 = vadd.f32 %v151, %v152
  %v154 = vrot.slane %v153, 1
  %v155 = vadd.f32 %v153, %v154
  %v156 = vmul.f32 %v155, %v146
  %v157 = vadd.f32 %v156, 1e-05
  %v158 = vrsqrt.pop %v157
  %v159 = vmul.f32 %v158, %v157
  %v160 = vmul.f32 %v159, %v158
  %v161 = vmul.f32 0.5, %v160
  %v162 = vsub.f32 1.5, %v161
  %v163 = vmul.f32 %v158, %v162
  %vm164 = vweird.f32 %v157
  %vm165 = vweird.f32 %v158
  %vm166 = vmor %vm164, %vm165
  %v167 = vsel %vm166, %v158, %v163
  %v168 = vmul.f32 %v148, %v167
  %v170 = vperm.slane %v132, 0
  %v172 = vmul.f32 %v168, %v170
  %v174 = vperm.slane %v133, 0
  %v176 = vadd.f32 %v172, %v174
  %v177 = vmul.f32 %v176, 0.5
  %v178 = vmul.f32 %v176, 0.70710677
  %v179 = vmul.f32 %v178, %v178
  %v180 = vmin.f32 16.0, %v179
  %v181 = vmul.f32 %v180, 2.1237322e-06
  %v182 = vadd.f32 %v181, 0.00028619796
  %v183 = vmul.f32 %v180, %v182
  %v184 = vadd.f32 %v183, 0.0036580483
  %v185 = vmul.f32 %v180, %v184
  %v186 = vadd.f32 %v185, 0.05243302
  %v187 = vmul.f32 %v180, %v186
  %v188 = vadd.f32 %v187, 0.18741608
  %v189 = vmul.f32 %v180, %v188
  %v190 = vadd.f32 %v189, 1.1283791
  %v191 = vmul.f32 %v178, %v190
  %v192 = vmul.f32 %v180, 3.8918573e-05
  %v193 = vadd.f32 %v192, 0.001143296
  %v194 = vmul.f32 %v180, %v193
  %v195 = vadd.f32 %v194, 0.014752088
  %v196 = vmul.f32 %v180, %v195
  %v197 = vadd.f32 %v196, 0.112945676
  %v198 = vmul.f32 %v180, %v197
  %v199 = vadd.f32 %v198, 0.4994258
  %v200 = vmul.f32 %v180, %v199
  %v201 = vadd.f32 %v200, 1.0
  %v202 = vrcp.pop %v201
  %v203 = vmul.f32 %v201, %v202
  %v204 = vsub.f32 1.0, %v203
  %v205 = vmul.f32 %v202, %v204
  %v206 = vadd.f32 %v202, %v205
  %vm207 = vweird.f32 %v201
  %vm208 = vweird.f32 %v202
  %vm209 = vmor %vm207, %vm208
  %v210 = vsel %vm209, %v202, %v206
  %v211 = vand.u32 2147483647, %v201
  %vm212 = vcmp.eq.f32.partialorder %v211, 8.507059e+37
  %v213 = vand.u32 %v201, 2147483648
  %v214 = vor.u32 1.1754944e-38, %v213
  %v215 = vsel %vm212, %v214, %v210
  %v216 = vmul.f32 %v191, %v215
  %v217 = vmin.f32 %v216, 1.0
  %v218 = vmax.f32 %v217, -1.0
  %v219 = vadd.f32 %v218, 1.0
  %v220 = vmul.f32 %v177, %v219
  %v221 = vpack.c.bf16 %v220, %v220
  %v222 = vld [vmem:[%s3] sm:$0xff]
  %v223 = vld [vmem:[%s3 + $0x8] sm:$0xff]
  %v224 = vld [vmem:[%s3 + $0x10] sm:$0xff]
  %v225 = vld [vmem:[%s3 + $0x18] sm:$0xff]
  %v226 = vld [vmem:[%s3 + $0x20] sm:$0xff]
  %v227 = vld [vmem:[%s3 + $0x28] sm:$0xff]
  %v228 = vld [vmem:[%s3 + $0x30] sm:$0xff]
  %v229 = vld [vmem:[%s3 + $0x38] sm:$0xff]
  %v230 = vld [vmem:[%s3 + $0x40] sm:$0xff]
  %v231 = vld [vmem:[%s3 + $0x48] sm:$0xff]
  %v232 = vld [vmem:[%s3 + $0x50] sm:$0xff]
  %v233 = vld [vmem:[%s3 + $0x58] sm:$0xff]
  %v234 = vld [vmem:[%s3 + $0x60] sm:$0xff]
  %v235 = vld [vmem:[%s3 + $0x68] sm:$0xff]
  %v236 = vld [vmem:[%s3 + $0x70] sm:$0xff]
  %v237 = vld [vmem:[%s3 + $0x78] sm:$0xff]
  %v254 = vunpack.c.l.b16 %v222
  %v255 = vunpack.c.h.b16 %v222
  %v256 = vunpack.c.l.b16 %v223
  %v257 = vunpack.c.h.b16 %v223
  %v258 = vunpack.c.l.b16 %v224
  %v259 = vunpack.c.h.b16 %v224
  %v260 = vunpack.c.l.b16 %v225
  %v261 = vunpack.c.h.b16 %v225
  %v262 = vunpack.c.l.b16 %v226
  %v263 = vunpack.c.h.b16 %v226
  %v264 = vunpack.c.l.b16 %v227
  %v265 = vunpack.c.h.b16 %v227
  %v266 = vunpack.c.l.b16 %v228
  %v267 = vunpack.c.h.b16 %v228
  %v268 = vunpack.c.l.b16 %v229
  %v269 = vunpack.c.h.b16 %v229
  %v270 = vunpack.c.l.b16 %v230
  %v271 = vunpack.c.h.b16 %v230
  %v272 = vunpack.c.l.b16 %v231
  %v273 = vunpack.c.h.b16 %v231
  %v274 = vunpack.c.l.b16 %v232
  %v275 = vunpack.c.h.b16 %v232
  %v276 = vunpack.c.l.b16 %v233
  %v277 = vunpack.c.h.b16 %v233
  %v278 = vunpack.c.l.b16 %v234
  %v279 = vunpack.c.h.b16 %v234
  %v280 = vunpack.c.l.b16 %v235
  %v281 = vunpack.c.h.b16 %v235
  %v282 = vunpack.c.l.b16 %v236
  %v283 = vunpack.c.h.b16 %v236
  %v284 = vunpack.c.l.b16 %v237
  %v285 = vunpack.c.h.b16 %v237
  %v286 = vpack.c.b16 %v256, %v254
  %v287 = vpack.c.b16 %v257, %v255
  %v288 = vpack.c.b16 %v260, %v258
  %v289 = vpack.c.b16 %v261, %v259
  %v290 = vpack.c.b16 %v264, %v262
  %v291 = vpack.c.b16 %v265, %v263
  %v292 = vpack.c.b16 %v268, %v266
  %v293 = vpack.c.b16 %v269, %v267
  %v294 = vpack.c.b16 %v272, %v270
  %v295 = vpack.c.b16 %v273, %v271
  %v296 = vpack.c.b16 %v276, %v274
  %v297 = vpack.c.b16 %v277, %v275
  %v298 = vpack.c.b16 %v280, %v278
  %v299 = vpack.c.b16 %v281, %v279
  %v300 = vpack.c.b16 %v284, %v282
  %v301 = vpack.c.b16 %v285, %v283
  %318 = vmatpush.bf16.msra.mxu0 %v300
  %319 = vmatpush.bf16.msra.mxu0 %v298
  %320 = vmatpush.bf16.msra.mxu0 %v296
  %321 = vmatpush.bf16.msra.mxu0 %v294
  %322 = vmatpush.bf16.msra.mxu0 %v292
  %323 = vmatpush.bf16.msra.mxu0 %v290
  %324 = vmatpush.bf16.msra.mxu0 %v288
  %325 = vmatpush.bf16.msra.mxu0 %v286
  %326 = vmatmul.bf16.gmra.mxu0 %v221
  %v327 = vpop.f32.mrf.mxu0
  %v328 = vadd.f32 0.0, %v327
  %v329 = vpop.f32.mrf.mxu0
  %330 = vdwg.mxu0
  %331 = vmatpush.bf16.msra.mxu0 %v301
  %332 = vmatpush.bf16.msra.mxu0 %v299
  %333 = vmatpush.bf16.msra.mxu0 %v297
  %334 = vmatpush.bf16.msra.mxu0 %v295
  %335 = vmatpush.bf16.msra.mxu0 %v293
  %336 = vmatpush.bf16.msra.mxu0 %v291
  %337 = vmatpush.bf16.msra.mxu0 %v289
  %338 = vmatpush.bf16.msra.mxu0 %v287
  %339 = vmatmul.bf16.gmra.mxu0 %v221
  %v340 = vpop.f32.mrf.mxu0
  %v341 = vadd.f32 0.0, %v340
  %v342 = vpop.f32.mrf.mxu0
  %343 = vdwg.mxu0
  %v344 = vld [vmem:[%s7 + $0x1] sm:$0x3]
  %v345 = vld [vmem:[%s7 + $0x10] sm:$0x3]
  %v346 = vrot.slane %v328, 4
  %v347 = vadd.f32 %v328, %v346
  %v348 = vrot.slane %v347, 2
  %v349 = vadd.f32 %v347, %v348
  %v350 = vrot.slane %v349, 1
  %v351 = vadd.f32 %v349, %v350
  %v352 = vrot.slane %v341, 4
  %v353 = vadd.f32 %v341, %v352
  %v354 = vrot.slane %v353, 2
  %v355 = vadd.f32 %v353, %v354
  %v356 = vrot.slane %v355, 1
  %v357 = vadd.f32 %v355, %v356
  %v358 = vmul.f32 %v351, %v146
  %v359 = vmul.f32 %v357, %v146
  %v360 = vsub.f32 %v328, %v358
  %v361 = vsub.f32 %v341, %v359
  %v362 = vmul.f32 %v360, %v360
  %v363 = vmul.f32 %v361, %v361
  %v364 = vrot.slane %v362, 4
  %v365 = vadd.f32 %v362, %v364
  %v366 = vrot.slane %v365, 2
  %v367 = vadd.f32 %v365, %v366
  %v368 = vrot.slane %v367, 1
  %v369 = vadd.f32 %v367, %v368
  %v370 = vrot.slane %v363, 4
  %v371 = vadd.f32 %v363, %v370
  %v372 = vrot.slane %v371, 2
  %v373 = vadd.f32 %v371, %v372
  %v374 = vrot.slane %v373, 1
  %v375 = vadd.f32 %v373, %v374
  %v376 = vmul.f32 %v369, %v146
  %v377 = vmul.f32 %v375, %v146
  %v378 = vadd.f32 %v376, 1e-05
  %v379 = vadd.f32 %v377, 1e-05
  %v380 = vrsqrt.pop %v378
  %v381 = vmul.f32 %v380, %v378
  %v382 = vmul.f32 %v381, %v380
  %v383 = vmul.f32 0.5, %v382
  %v384 = vsub.f32 1.5, %v383
  %v385 = vmul.f32 %v380, %v384
  %vm386 = vweird.f32 %v378
  %vm387 = vweird.f32 %v380
  %vm388 = vmor %vm386, %vm387
  %v389 = vsel %vm388, %v380, %v385
  %v390 = vrsqrt.pop %v379
  %v391 = vmul.f32 %v390, %v379
  %v392 = vmul.f32 %v391, %v390
  %v393 = vmul.f32 0.5, %v392
  %v394 = vsub.f32 1.5, %v393
  %v395 = vmul.f32 %v390, %v394
  %vm396 = vweird.f32 %v379
  %vm397 = vweird.f32 %v390
  %vm398 = vmor %vm396, %vm397
  %v399 = vsel %vm398, %v390, %v395
  %v400 = vmul.f32 %v360, %v389
  %v401 = vmul.f32 %v361, %v399
  %v403 = vperm.slane %v344, 0
  %v404 = vperm.slane %v344, 1
  %v407 = vmul.f32 %v400, %v403
  %v408 = vmul.f32 %v401, %v404
  %v410 = vperm.slane %v345, 0
  %v411 = vperm.slane %v345, 1
  %v414 = vadd.f32 %v407, %v410
  %v415 = vadd.f32 %v408, %v411
  %v416 = vmul.f32 %v414, 0.5
  %v417 = vmul.f32 %v415, 0.5
  %v418 = vmul.f32 %v414, 0.70710677
  %v419 = vmul.f32 %v415, 0.70710677
  %v420 = vmul.f32 %v418, %v418
  %v421 = vmin.f32 16.0, %v420
  %v422 = vmul.f32 %v421, 2.1237322e-06
  %v423 = vadd.f32 %v422, 0.00028619796
  %v424 = vmul.f32 %v421, %v423
  %v425 = vadd.f32 %v424, 0.0036580483
  %v426 = vmul.f32 %v421, %v425
  %v427 = vadd.f32 %v426, 0.05243302
  %v428 = vmul.f32 %v421, %v427
  %v429 = vadd.f32 %v428, 0.18741608
  %v430 = vmul.f32 %v421, %v429
  %v431 = vadd.f32 %v430, 1.1283791
  %v432 = vmul.f32 %v418, %v431
  %v433 = vmul.f32 %v421, 3.8918573e-05
  %v434 = vadd.f32 %v433, 0.001143296
  %v435 = vmul.f32 %v421, %v434
  %v436 = vadd.f32 %v435, 0.014752088
  %v437 = vmul.f32 %v421, %v436
  %v438 = vadd.f32 %v437, 0.112945676
  %v439 = vmul.f32 %v421, %v438
  %v440 = vadd.f32 %v439, 0.4994258
  %v441 = vmul.f32 %v421, %v440
  %v442 = vadd.f32 %v441, 1.0
  %v443 = vrcp.pop %v442
  %v444 = vmul.f32 %v442, %v443
  %v445 = vsub.f32 1.0, %v444
  %v446 = vmul.f32 %v443, %v445
  %v447 = vadd.f32 %v443, %v446
  %vm448 = vweird.f32 %v442
  %vm449 = vweird.f32 %v443
  %vm450 = vmor %vm448, %vm449
  %v451 = vsel %vm450, %v443, %v447
  %v452 = vand.u32 2147483647, %v442
  %vm453 = vcmp.eq.f32.partialorder %v452, 8.507059e+37
  %v454 = vand.u32 %v442, 2147483648
  %v455 = vor.u32 1.1754944e-38, %v454
  %v456 = vsel %vm453, %v455, %v451
  %v457 = vmul.f32 %v432, %v456
  %v458 = vmin.f32 %v457, 1.0
  %v459 = vmax.f32 %v458, -1.0
  %v460 = vmul.f32 %v419, %v419
  %v461 = vmin.f32 16.0, %v460
  %v462 = vmul.f32 %v461, 2.1237322e-06
  %v463 = vadd.f32 %v462, 0.00028619796
  %v464 = vmul.f32 %v461, %v463
  %v465 = vadd.f32 %v464, 0.0036580483
  %v466 = vmul.f32 %v461, %v465
  %v467 = vadd.f32 %v466, 0.05243302
  %v468 = vmul.f32 %v461, %v467
  %v469 = vadd.f32 %v468, 0.18741608
  %v470 = vmul.f32 %v461, %v469
  %v471 = vadd.f32 %v470, 1.1283791
  %v472 = vmul.f32 %v419, %v471
  %v473 = vmul.f32 %v461, 3.8918573e-05
  %v474 = vadd.f32 %v473, 0.001143296
  %v475 = vmul.f32 %v461, %v474
  %v476 = vadd.f32 %v475, 0.014752088
  %v477 = vmul.f32 %v461, %v476
  %v478 = vadd.f32 %v477, 0.112945676
  %v479 = vmul.f32 %v461, %v478
  %v480 = vadd.f32 %v479, 0.4994258
  %v481 = vmul.f32 %v461, %v480
  %v482 = vadd.f32 %v481, 1.0
  %v483 = vrcp.pop %v482
  %v484 = vmul.f32 %v482, %v483
  %v485 = vsub.f32 1.0, %v484
  %v486 = vmul.f32 %v483, %v485
  %v487 = vadd.f32 %v483, %v486
  %vm488 = vweird.f32 %v482
  %vm489 = vweird.f32 %v483
  %vm490 = vmor %vm488, %vm489
  %v491 = vsel %vm490, %v483, %v487
  %v492 = vand.u32 2147483647, %v482
  %vm493 = vcmp.eq.f32.partialorder %v492, 8.507059e+37
  %v494 = vand.u32 %v482, 2147483648
  %v495 = vor.u32 1.1754944e-38, %v494
  %v496 = vsel %vm493, %v495, %v491
  %v497 = vmul.f32 %v472, %v496
  %v498 = vmin.f32 %v497, 1.0
  %v499 = vmax.f32 %v498, -1.0
  %v500 = vadd.f32 %v459, 1.0
  %v501 = vadd.f32 %v499, 1.0
  %v502 = vmul.f32 %v416, %v500
  %v503 = vmul.f32 %v417, %v501
  %v504 = vpack.c.bf16 %v502, %v502
  %v505 = vpack.c.bf16 %v503, %v503
  %v506 = vld [vmem:[%s4] sm:$0xff]
  %v507 = vld [vmem:[%s4 + $0x8] sm:$0xff]
  %v508 = vld [vmem:[%s4 + $0x10] sm:$0xff]
  %v509 = vld [vmem:[%s4 + $0x18] sm:$0xff]
  %v510 = vld [vmem:[%s4 + $0x20] sm:$0xff]
  %v511 = vld [vmem:[%s4 + $0x28] sm:$0xff]
  %v512 = vld [vmem:[%s4 + $0x30] sm:$0xff]
  %v513 = vld [vmem:[%s4 + $0x38] sm:$0xff]
  %v514 = vld [vmem:[%s4 + $0x40] sm:$0xff]
  %v515 = vld [vmem:[%s4 + $0x48] sm:$0xff]
  %v516 = vld [vmem:[%s4 + $0x50] sm:$0xff]
  %v517 = vld [vmem:[%s4 + $0x58] sm:$0xff]
  %v518 = vld [vmem:[%s4 + $0x60] sm:$0xff]
  %v519 = vld [vmem:[%s4 + $0x68] sm:$0xff]
  %v520 = vld [vmem:[%s4 + $0x70] sm:$0xff]
  %v521 = vld [vmem:[%s4 + $0x78] sm:$0xff]
  %v522 = vld [vmem:[%s4 + $0x80] sm:$0xff]
  %v523 = vld [vmem:[%s4 + $0x88] sm:$0xff]
  %v524 = vld [vmem:[%s4 + $0x90] sm:$0xff]
  %v525 = vld [vmem:[%s4 + $0x98] sm:$0xff]
  %v526 = vld [vmem:[%s4 + $0xa0] sm:$0xff]
  %v527 = vld [vmem:[%s4 + $0xa8] sm:$0xff]
  %v528 = vld [vmem:[%s4 + $0xb0] sm:$0xff]
  %v529 = vld [vmem:[%s4 + $0xb8] sm:$0xff]
  %v530 = vld [vmem:[%s4 + $0xc0] sm:$0xff]
  %v531 = vld [vmem:[%s4 + $0xc8] sm:$0xff]
  %v532 = vld [vmem:[%s4 + $0xd0] sm:$0xff]
  %v533 = vld [vmem:[%s4 + $0xd8] sm:$0xff]
  %v534 = vld [vmem:[%s4 + $0xe0] sm:$0xff]
  %v535 = vld [vmem:[%s4 + $0xe8] sm:$0xff]
  %v536 = vld [vmem:[%s4 + $0xf0] sm:$0xff]
  %v537 = vld [vmem:[%s4 + $0xf8] sm:$0xff]
  %v538 = vunpack.c.0.s8 %v506
  %v539 = vunpack.c.0.s8 %v507
  %v540 = vunpack.c.0.s8 %v508
  %v541 = vunpack.c.0.s8 %v509
  %v542 = vunpack.c.1.s8 %v506
  %v543 = vunpack.c.1.s8 %v507
  %v544 = vunpack.c.1.s8 %v508
  %v545 = vunpack.c.1.s8 %v509
  %v546 = vunpack.c.2.s8 %v506
  %v547 = vunpack.c.2.s8 %v507
  %v548 = vunpack.c.2.s8 %v508
  %v549 = vunpack.c.2.s8 %v509
  %v550 = vunpack.c.3.s8 %v506
  %v551 = vunpack.c.3.s8 %v507
  %v552 = vunpack.c.3.s8 %v508
  %v553 = vunpack.c.3.s8 %v509
  %v554 = vunpack.c.0.s8 %v510
  %v555 = vunpack.c.0.s8 %v511
  %v556 = vunpack.c.0.s8 %v512
  %v557 = vunpack.c.0.s8 %v513
  %v558 = vunpack.c.1.s8 %v510
  %v559 = vunpack.c.1.s8 %v511
  %v560 = vunpack.c.1.s8 %v512
  %v561 = vunpack.c.1.s8 %v513
  %v562 = vunpack.c.2.s8 %v510
  %v563 = vunpack.c.2.s8 %v511
  %v564 = vunpack.c.2.s8 %v512
  %v565 = vunpack.c.2.s8 %v513
  %v566 = vunpack.c.3.s8 %v510
  %v567 = vunpack.c.3.s8 %v511
  %v568 = vunpack.c.3.s8 %v512
  %v569 = vunpack.c.3.s8 %v513
  %v570 = vunpack.c.0.s8 %v514
  %v571 = vunpack.c.0.s8 %v515
  %v572 = vunpack.c.0.s8 %v516
  %v573 = vunpack.c.0.s8 %v517
  %v574 = vunpack.c.1.s8 %v514
  %v575 = vunpack.c.1.s8 %v515
  %v576 = vunpack.c.1.s8 %v516
  %v577 = vunpack.c.1.s8 %v517
  %v578 = vunpack.c.2.s8 %v514
  %v579 = vunpack.c.2.s8 %v515
  %v580 = vunpack.c.2.s8 %v516
  %v581 = vunpack.c.2.s8 %v517
  %v582 = vunpack.c.3.s8 %v514
  %v583 = vunpack.c.3.s8 %v515
  %v584 = vunpack.c.3.s8 %v516
  %v585 = vunpack.c.3.s8 %v517
  %v586 = vunpack.c.0.s8 %v518
  %v587 = vunpack.c.0.s8 %v519
  %v588 = vunpack.c.0.s8 %v520
  %v589 = vunpack.c.0.s8 %v521
  %v590 = vunpack.c.1.s8 %v518
  %v591 = vunpack.c.1.s8 %v519
  %v592 = vunpack.c.1.s8 %v520
  %v593 = vunpack.c.1.s8 %v521
  %v594 = vunpack.c.2.s8 %v518
  %v595 = vunpack.c.2.s8 %v519
  %v596 = vunpack.c.2.s8 %v520
  %v597 = vunpack.c.2.s8 %v521
  %v598 = vunpack.c.3.s8 %v518
  %v599 = vunpack.c.3.s8 %v519
  %v600 = vunpack.c.3.s8 %v520
  %v601 = vunpack.c.3.s8 %v521
  %v602 = vunpack.c.0.s8 %v522
  %v603 = vunpack.c.0.s8 %v523
  %v604 = vunpack.c.0.s8 %v524
  %v605 = vunpack.c.0.s8 %v525
  %v606 = vunpack.c.1.s8 %v522
  %v607 = vunpack.c.1.s8 %v523
  %v608 = vunpack.c.1.s8 %v524
  %v609 = vunpack.c.1.s8 %v525
  %v610 = vunpack.c.2.s8 %v522
  %v611 = vunpack.c.2.s8 %v523
  %v612 = vunpack.c.2.s8 %v524
  %v613 = vunpack.c.2.s8 %v525
  %v614 = vunpack.c.3.s8 %v522
  %v615 = vunpack.c.3.s8 %v523
  %v616 = vunpack.c.3.s8 %v524
  %v617 = vunpack.c.3.s8 %v525
  %v618 = vunpack.c.0.s8 %v526
  %v619 = vunpack.c.0.s8 %v527
  %v620 = vunpack.c.0.s8 %v528
  %v621 = vunpack.c.0.s8 %v529
  %v622 = vunpack.c.1.s8 %v526
  %v623 = vunpack.c.1.s8 %v527
  %v624 = vunpack.c.1.s8 %v528
  %v625 = vunpack.c.1.s8 %v529
  %v626 = vunpack.c.2.s8 %v526
  %v627 = vunpack.c.2.s8 %v527
  %v628 = vunpack.c.2.s8 %v528
  %v629 = vunpack.c.2.s8 %v529
  %v630 = vunpack.c.3.s8 %v526
  %v631 = vunpack.c.3.s8 %v527
  %v632 = vunpack.c.3.s8 %v528
  %v633 = vunpack.c.3.s8 %v529
  %v634 = vunpack.c.0.s8 %v530
  %v635 = vunpack.c.0.s8 %v531
  %v636 = vunpack.c.0.s8 %v532
  %v637 = vunpack.c.0.s8 %v533
  %v638 = vunpack.c.1.s8 %v530
  %v639 = vunpack.c.1.s8 %v531
  %v640 = vunpack.c.1.s8 %v532
  %v641 = vunpack.c.1.s8 %v533
  %v642 = vunpack.c.2.s8 %v530
  %v643 = vunpack.c.2.s8 %v531
  %v644 = vunpack.c.2.s8 %v532
  %v645 = vunpack.c.2.s8 %v533
  %v646 = vunpack.c.3.s8 %v530
  %v647 = vunpack.c.3.s8 %v531
  %v648 = vunpack.c.3.s8 %v532
  %v649 = vunpack.c.3.s8 %v533
  %v650 = vunpack.c.0.s8 %v534
  %v651 = vunpack.c.0.s8 %v535
  %v652 = vunpack.c.0.s8 %v536
  %v653 = vunpack.c.0.s8 %v537
  %v654 = vunpack.c.1.s8 %v534
  %v655 = vunpack.c.1.s8 %v535
  %v656 = vunpack.c.1.s8 %v536
  %v657 = vunpack.c.1.s8 %v537
  %v658 = vunpack.c.2.s8 %v534
  %v659 = vunpack.c.2.s8 %v535
  %v660 = vunpack.c.2.s8 %v536
  %v661 = vunpack.c.2.s8 %v537
  %v662 = vunpack.c.3.s8 %v534
  %v663 = vunpack.c.3.s8 %v535
  %v664 = vunpack.c.3.s8 %v536
  %v665 = vunpack.c.3.s8 %v537
  %v666 = vcvt.s32.f32 %v538
  %v667 = vcvt.s32.f32 %v539
  %v668 = vcvt.s32.f32 %v540
  %v669 = vcvt.s32.f32 %v541
  %v670 = vcvt.s32.f32 %v542
  %v671 = vcvt.s32.f32 %v543
  %v672 = vcvt.s32.f32 %v544
  %v673 = vcvt.s32.f32 %v545
  %v674 = vcvt.s32.f32 %v546
  %v675 = vcvt.s32.f32 %v547
  %v676 = vcvt.s32.f32 %v548
  %v677 = vcvt.s32.f32 %v549
  %v678 = vcvt.s32.f32 %v550
  %v679 = vcvt.s32.f32 %v551
  %v680 = vcvt.s32.f32 %v552
  %v681 = vcvt.s32.f32 %v553
  %v682 = vcvt.s32.f32 %v554
  %v683 = vcvt.s32.f32 %v555
  %v684 = vcvt.s32.f32 %v556
  %v685 = vcvt.s32.f32 %v557
  %v686 = vcvt.s32.f32 %v558
  %v687 = vcvt.s32.f32 %v559
  %v688 = vcvt.s32.f32 %v560
  %v689 = vcvt.s32.f32 %v561
  %v690 = vcvt.s32.f32 %v562
  %v691 = vcvt.s32.f32 %v563
  %v692 = vcvt.s32.f32 %v564
  %v693 = vcvt.s32.f32 %v565
  %v694 = vcvt.s32.f32 %v566
  %v695 = vcvt.s32.f32 %v567
  %v696 = vcvt.s32.f32 %v568
  %v697 = vcvt.s32.f32 %v569
  %v698 = vcvt.s32.f32 %v570
  %v699 = vcvt.s32.f32 %v571
  %v700 = vcvt.s32.f32 %v572
  %v701 = vcvt.s32.f32 %v573
  %v702 = vcvt.s32.f32 %v574
  %v703 = vcvt.s32.f32 %v575
  %v704 = vcvt.s32.f32 %v576
  %v705 = vcvt.s32.f32 %v577
  %v706 = vcvt.s32.f32 %v578
  %v707 = vcvt.s32.f32 %v579
  %v708 = vcvt.s32.f32 %v580
  %v709 = vcvt.s32.f32 %v581
  %v710 = vcvt.s32.f32 %v582
  %v711 = vcvt.s32.f32 %v583
  %v712 = vcvt.s32.f32 %v584
  %v713 = vcvt.s32.f32 %v585
  %v714 = vcvt.s32.f32 %v586
  %v715 = vcvt.s32.f32 %v587
  %v716 = vcvt.s32.f32 %v588
  %v717 = vcvt.s32.f32 %v589
  %v718 = vcvt.s32.f32 %v590
  %v719 = vcvt.s32.f32 %v591
  %v720 = vcvt.s32.f32 %v592
  %v721 = vcvt.s32.f32 %v593
  %v722 = vcvt.s32.f32 %v594
  %v723 = vcvt.s32.f32 %v595
  %v724 = vcvt.s32.f32 %v596
  %v725 = vcvt.s32.f32 %v597
  %v726 = vcvt.s32.f32 %v598
  %v727 = vcvt.s32.f32 %v599
  %v728 = vcvt.s32.f32 %v600
  %v729 = vcvt.s32.f32 %v601
  %v730 = vcvt.s32.f32 %v602
  %v731 = vcvt.s32.f32 %v603
  %v732 = vcvt.s32.f32 %v604
  %v733 = vcvt.s32.f32 %v605
  %v734 = vcvt.s32.f32 %v606
  %v735 = vcvt.s32.f32 %v607
  %v736 = vcvt.s32.f32 %v608
  %v737 = vcvt.s32.f32 %v609
  %v738 = vcvt.s32.f32 %v610
  %v739 = vcvt.s32.f32 %v611
  %v740 = vcvt.s32.f32 %v612
  %v741 = vcvt.s32.f32 %v613
  %v742 = vcvt.s32.f32 %v614
  %v743 = vcvt.s32.f32 %v615
  %v744 = vcvt.s32.f32 %v616
  %v745 = vcvt.s32.f32 %v617
  %v746 = vcvt.s32.f32 %v618
  %v747 = vcvt.s32.f32 %v619
  %v748 = vcvt.s32.f32 %v620
  %v749 = vcvt.s32.f32 %v621
  %v750 = vcvt.s32.f32 %v622
  %v751 = vcvt.s32.f32 %v623
  %v752 = vcvt.s32.f32 %v624
  %v753 = vcvt.s32.f32 %v625
  %v754 = vcvt.s32.f32 %v626
  %v755 = vcvt.s32.f32 %v627
  %v756 = vcvt.s32.f32 %v628
  %v757 = vcvt.s32.f32 %v629
  %v758 = vcvt.s32.f32 %v630
  %v759 = vcvt.s32.f32 %v631
  %v760 = vcvt.s32.f32 %v632
  %v761 = vcvt.s32.f32 %v633
  %v762 = vcvt.s32.f32 %v634
  %v763 = vcvt.s32.f32 %v635
  %v764 = vcvt.s32.f32 %v636
  %v765 = vcvt.s32.f32 %v637
  %v766 = vcvt.s32.f32 %v638
  %v767 = vcvt.s32.f32 %v639
  %v768 = vcvt.s32.f32 %v640
  %v769 = vcvt.s32.f32 %v641
  %v770 = vcvt.s32.f32 %v642
  %v771 = vcvt.s32.f32 %v643
  %v772 = vcvt.s32.f32 %v644
  %v773 = vcvt.s32.f32 %v645
  %v774 = vcvt.s32.f32 %v646
  %v775 = vcvt.s32.f32 %v647
  %v776 = vcvt.s32.f32 %v648
  %v777 = vcvt.s32.f32 %v649
  %v778 = vcvt.s32.f32 %v650
  %v779 = vcvt.s32.f32 %v651
  %v780 = vcvt.s32.f32 %v652
  %v781 = vcvt.s32.f32 %v653
  %v782 = vcvt.s32.f32 %v654
  %v783 = vcvt.s32.f32 %v655
  %v784 = vcvt.s32.f32 %v656
  %v785 = vcvt.s32.f32 %v657
  %v786 = vcvt.s32.f32 %v658
  %v787 = vcvt.s32.f32 %v659
  %v788 = vcvt.s32.f32 %v660
  %v789 = vcvt.s32.f32 %v661
  %v790 = vcvt.s32.f32 %v662
  %v791 = vcvt.s32.f32 %v663
  %v792 = vcvt.s32.f32 %v664
  %v793 = vcvt.s32.f32 %v665
  %v794 = vpack.c.bf16 %v670, %v666
  %v795 = vpack.c.bf16 %v671, %v667
  %v796 = vpack.c.bf16 %v672, %v668
  %v797 = vpack.c.bf16 %v673, %v669
  %v798 = vpack.c.bf16 %v678, %v674
  %v799 = vpack.c.bf16 %v679, %v675
  %v800 = vpack.c.bf16 %v680, %v676
  %v801 = vpack.c.bf16 %v681, %v677
  %v802 = vpack.c.bf16 %v686, %v682
  %v803 = vpack.c.bf16 %v687, %v683
  %v804 = vpack.c.bf16 %v688, %v684
  %v805 = vpack.c.bf16 %v689, %v685
  %v806 = vpack.c.bf16 %v694, %v690
  %v807 = vpack.c.bf16 %v695, %v691
  %v808 = vpack.c.bf16 %v696, %v692
  %v809 = vpack.c.bf16 %v697, %v693
  %v810 = vpack.c.bf16 %v702, %v698
  %v811 = vpack.c.bf16 %v703, %v699
  %v812 = vpack.c.bf16 %v704, %v700
  %v813 = vpack.c.bf16 %v705, %v701
  %v814 = vpack.c.bf16 %v710, %v706
  %v815 = vpack.c.bf16 %v711, %v707
  %v816 = vpack.c.bf16 %v712, %v708
  %v817 = vpack.c.bf16 %v713, %v709
  %v818 = vpack.c.bf16 %v718, %v714
  %v819 = vpack.c.bf16 %v719, %v715
  %v820 = vpack.c.bf16 %v720, %v716
  %v821 = vpack.c.bf16 %v721, %v717
  %v822 = vpack.c.bf16 %v726, %v722
  %v823 = vpack.c.bf16 %v727, %v723
  %v824 = vpack.c.bf16 %v728, %v724
  %v825 = vpack.c.bf16 %v729, %v725
  %v826 = vpack.c.bf16 %v734, %v730
  %v827 = vpack.c.bf16 %v735, %v731
  %v828 = vpack.c.bf16 %v736, %v732
  %v829 = vpack.c.bf16 %v737, %v733
  %v830 = vpack.c.bf16 %v742, %v738
  %v831 = vpack.c.bf16 %v743, %v739
  %v832 = vpack.c.bf16 %v744, %v740
  %v833 = vpack.c.bf16 %v745, %v741
  %v834 = vpack.c.bf16 %v750, %v746
  %v835 = vpack.c.bf16 %v751, %v747
  %v836 = vpack.c.bf16 %v752, %v748
  %v837 = vpack.c.bf16 %v753, %v749
  %v838 = vpack.c.bf16 %v758, %v754
  %v839 = vpack.c.bf16 %v759, %v755
  %v840 = vpack.c.bf16 %v760, %v756
  %v841 = vpack.c.bf16 %v761, %v757
  %v842 = vpack.c.bf16 %v766, %v762
  %v843 = vpack.c.bf16 %v767, %v763
  %v844 = vpack.c.bf16 %v768, %v764
  %v845 = vpack.c.bf16 %v769, %v765
  %v846 = vpack.c.bf16 %v774, %v770
  %v847 = vpack.c.bf16 %v775, %v771
  %v848 = vpack.c.bf16 %v776, %v772
  %v849 = vpack.c.bf16 %v777, %v773
  %v850 = vpack.c.bf16 %v782, %v778
  %v851 = vpack.c.bf16 %v783, %v779
  %v852 = vpack.c.bf16 %v784, %v780
  %v853 = vpack.c.bf16 %v785, %v781
  %v854 = vpack.c.bf16 %v790, %v786
  %v855 = vpack.c.bf16 %v791, %v787
  %v856 = vpack.c.bf16 %v792, %v788
  %v857 = vpack.c.bf16 %v793, %v789
  %858 = vmatpush.bf16.msra.mxu0 %v822
  %859 = vmatpush.bf16.msra.mxu0 %v818
  %860 = vmatpush.bf16.msra.mxu0 %v814
  %861 = vmatpush.bf16.msra.mxu0 %v810
  %862 = vmatpush.bf16.msra.mxu0 %v806
  %863 = vmatpush.bf16.msra.mxu0 %v802
  %864 = vmatpush.bf16.msra.mxu0 %v798
  %865 = vmatpush.bf16.msra.mxu0 %v794
  %866 = vmatmul.bf16.gmra.mxu0 %v504
  %v867 = vpop.f32.mrf.mxu0
  %v868 = vadd.f32 0.0, %v867
  %v869 = vpop.f32.mrf.mxu0
  %870 = vdwg.mxu0
  %871 = vmatpush.bf16.msra.mxu0 %v854
  %872 = vmatpush.bf16.msra.mxu0 %v850
  %873 = vmatpush.bf16.msra.mxu0 %v846
  %874 = vmatpush.bf16.msra.mxu0 %v842
  %875 = vmatpush.bf16.msra.mxu0 %v838
  %876 = vmatpush.bf16.msra.mxu0 %v834
  %877 = vmatpush.bf16.msra.mxu0 %v830
  %878 = vmatpush.bf16.msra.mxu0 %v826
  %879 = vmatmul.bf16.gmra.mxu0 %v505
  %v880 = vpop.f32.mrf.mxu0
  %v881 = vadd.f32 %v868, %v880
  %v882 = vpop.f32.mrf.mxu0
  %883 = vdwg.mxu0
  %884 = vmatpush.bf16.msra.mxu0 %v823
  %885 = vmatpush.bf16.msra.mxu0 %v819
  %886 = vmatpush.bf16.msra.mxu0 %v815
  %887 = vmatpush.bf16.msra.mxu0 %v811
  %888 = vmatpush.bf16.msra.mxu0 %v807
  %889 = vmatpush.bf16.msra.mxu0 %v803
  %890 = vmatpush.bf16.msra.mxu0 %v799
  %891 = vmatpush.bf16.msra.mxu0 %v795
  %892 = vmatmul.bf16.gmra.mxu0 %v504
  %v893 = vpop.f32.mrf.mxu0
  %v894 = vadd.f32 0.0, %v893
  %v895 = vpop.f32.mrf.mxu0
  %896 = vdwg.mxu0
  %897 = vmatpush.bf16.msra.mxu0 %v855
  %898 = vmatpush.bf16.msra.mxu0 %v851
  %899 = vmatpush.bf16.msra.mxu0 %v847
  %900 = vmatpush.bf16.msra.mxu0 %v843
  %901 = vmatpush.bf16.msra.mxu0 %v839
  %902 = vmatpush.bf16.msra.mxu0 %v835
  %903 = vmatpush.bf16.msra.mxu0 %v831
  %904 = vmatpush.bf16.msra.mxu0 %v827
  %905 = vmatmul.bf16.gmra.mxu0 %v505
  %v906 = vpop.f32.mrf.mxu0
  %v907 = vadd.f32 %v894, %v906
  %v908 = vpop.f32.mrf.mxu0
  %909 = vdwg.mxu0
  %910 = vmatpush.bf16.msra.mxu0 %v824
  %911 = vmatpush.bf16.msra.mxu0 %v820
  %912 = vmatpush.bf16.msra.mxu0 %v816
  %913 = vmatpush.bf16.msra.mxu0 %v812
  %914 = vmatpush.bf16.msra.mxu0 %v808
  %915 = vmatpush.bf16.msra.mxu0 %v804
  %916 = vmatpush.bf16.msra.mxu0 %v800
  %917 = vmatpush.bf16.msra.mxu0 %v796
  %918 = vmatmul.bf16.gmra.mxu0 %v504
  %v919 = vpop.f32.mrf.mxu0
  %v920 = vadd.f32 0.0, %v919
  %v921 = vpop.f32.mrf.mxu0
  %922 = vdwg.mxu0
  %923 = vmatpush.bf16.msra.mxu0 %v856
  %924 = vmatpush.bf16.msra.mxu0 %v852
  %925 = vmatpush.bf16.msra.mxu0 %v848
  %926 = vmatpush.bf16.msra.mxu0 %v844
  %927 = vmatpush.bf16.msra.mxu0 %v840
  %928 = vmatpush.bf16.msra.mxu0 %v836
  %929 = vmatpush.bf16.msra.mxu0 %v832
  %930 = vmatpush.bf16.msra.mxu0 %v828
  %931 = vmatmul.bf16.gmra.mxu0 %v505
  %v932 = vpop.f32.mrf.mxu0
  %v933 = vadd.f32 %v920, %v932
  %v934 = vpop.f32.mrf.mxu0
  %935 = vdwg.mxu0
  %936 = vmatpush.bf16.msra.mxu0 %v825
  %937 = vmatpush.bf16.msra.mxu0 %v821
  %938 = vmatpush.bf16.msra.mxu0 %v817
  %939 = vmatpush.bf16.msra.mxu0 %v813
  %940 = vmatpush.bf16.msra.mxu0 %v809
  %941 = vmatpush.bf16.msra.mxu0 %v805
  %942 = vmatpush.bf16.msra.mxu0 %v801
  %943 = vmatpush.bf16.msra.mxu0 %v797
  %944 = vmatmul.bf16.gmra.mxu0 %v504
  %v945 = vpop.f32.mrf.mxu0
  %v946 = vadd.f32 0.0, %v945
  %v947 = vpop.f32.mrf.mxu0
  %948 = vdwg.mxu0
  %949 = vmatpush.bf16.msra.mxu0 %v857
  %950 = vmatpush.bf16.msra.mxu0 %v853
  %951 = vmatpush.bf16.msra.mxu0 %v849
  %952 = vmatpush.bf16.msra.mxu0 %v845
  %953 = vmatpush.bf16.msra.mxu0 %v841
  %954 = vmatpush.bf16.msra.mxu0 %v837
  %955 = vmatpush.bf16.msra.mxu0 %v833
  %956 = vmatpush.bf16.msra.mxu0 %v829
  %957 = vmatmul.bf16.gmra.mxu0 %v505
  %v958 = vpop.f32.mrf.mxu0
  %v959 = vadd.f32 %v946, %v958
  %v960 = vpop.f32.mrf.mxu0
  %961 = vdwg.mxu0
  %v962 = vld [vmem:[%s7 + $0x3] sm:$0xf]
  %v963 = vld [vmem:[%s7 + $0x12] sm:$0xf]
  %v964 = vrot.slane %v881, 4
  %v965 = vadd.f32 %v881, %v964
  %v966 = vrot.slane %v965, 2
  %v967 = vadd.f32 %v965, %v966
  %v968 = vrot.slane %v967, 1
  %v969 = vadd.f32 %v967, %v968
  %v970 = vrot.slane %v907, 4
  %v971 = vadd.f32 %v907, %v970
  %v972 = vrot.slane %v971, 2
  %v973 = vadd.f32 %v971, %v972
  %v974 = vrot.slane %v973, 1
  %v975 = vadd.f32 %v973, %v974
  %v976 = vrot.slane %v933, 4
  %v977 = vadd.f32 %v933, %v976
  %v978 = vrot.slane %v977, 2
  %v979 = vadd.f32 %v977, %v978
  %v980 = vrot.slane %v979, 1
  %v981 = vadd.f32 %v979, %v980
  %v982 = vrot.slane %v959, 4
  %v983 = vadd.f32 %v959, %v982
  %v984 = vrot.slane %v983, 2
  %v985 = vadd.f32 %v983, %v984
  %v986 = vrot.slane %v985, 1
  %v987 = vadd.f32 %v985, %v986
  %v988 = vmul.f32 %v969, %v146
  %v989 = vmul.f32 %v975, %v146
  %v990 = vmul.f32 %v981, %v146
  %v991 = vmul.f32 %v987, %v146
  %v992 = vsub.f32 %v881, %v988
  %v993 = vsub.f32 %v907, %v989
  %v994 = vsub.f32 %v933, %v990
  %v995 = vsub.f32 %v959, %v991
  %v996 = vmul.f32 %v992, %v992
  %v997 = vmul.f32 %v993, %v993
  %v998 = vmul.f32 %v994, %v994
  %v999 = vmul.f32 %v995, %v995
  %v1000 = vrot.slane %v996, 4
  %v1001 = vadd.f32 %v996, %v1000
  %v1002 = vrot.slane %v1001, 2
  %v1003 = vadd.f32 %v1001, %v1002
  %v1004 = vrot.slane %v1003, 1
  %v1005 = vadd.f32 %v1003, %v1004
  %v1006 = vrot.slane %v997, 4
  %v1007 = vadd.f32 %v997, %v1006
  %v1008 = vrot.slane %v1007, 2
  %v1009 = vadd.f32 %v1007, %v1008
  %v1010 = vrot.slane %v1009, 1
  %v1011 = vadd.f32 %v1009, %v1010
  %v1012 = vrot.slane %v998, 4
  %v1013 = vadd.f32 %v998, %v1012
  %v1014 = vrot.slane %v1013, 2
  %v1015 = vadd.f32 %v1013, %v1014
  %v1016 = vrot.slane %v1015, 1
  %v1017 = vadd.f32 %v1015, %v1016
  %v1018 = vrot.slane %v999, 4
  %v1019 = vadd.f32 %v999, %v1018
  %v1020 = vrot.slane %v1019, 2
  %v1021 = vadd.f32 %v1019, %v1020
  %v1022 = vrot.slane %v1021, 1
  %v1023 = vadd.f32 %v1021, %v1022
  %v1024 = vmul.f32 %v1005, %v146
  %v1025 = vmul.f32 %v1011, %v146
  %v1026 = vmul.f32 %v1017, %v146
  %v1027 = vmul.f32 %v1023, %v146
  %v1028 = vadd.f32 %v1024, 1e-05
  %v1029 = vadd.f32 %v1025, 1e-05
  %v1030 = vadd.f32 %v1026, 1e-05
  %v1031 = vadd.f32 %v1027, 1e-05
  %v1032 = vrsqrt.pop %v1028
  %v1033 = vmul.f32 %v1032, %v1028
  %v1034 = vmul.f32 %v1033, %v1032
  %v1035 = vmul.f32 0.5, %v1034
  %v1036 = vsub.f32 1.5, %v1035
  %v1037 = vmul.f32 %v1032, %v1036
  %vm1038 = vweird.f32 %v1028
  %vm1039 = vweird.f32 %v1032
  %vm1040 = vmor %vm1038, %vm1039
  %v1041 = vsel %vm1040, %v1032, %v1037
  %v1042 = vrsqrt.pop %v1029
  %v1043 = vmul.f32 %v1042, %v1029
  %v1044 = vmul.f32 %v1043, %v1042
  %v1045 = vmul.f32 0.5, %v1044
  %v1046 = vsub.f32 1.5, %v1045
  %v1047 = vmul.f32 %v1042, %v1046
  %vm1048 = vweird.f32 %v1029
  %vm1049 = vweird.f32 %v1042
  %vm1050 = vmor %vm1048, %vm1049
  %v1051 = vsel %vm1050, %v1042, %v1047
  %v1052 = vrsqrt.pop %v1030
  %v1053 = vmul.f32 %v1052, %v1030
  %v1054 = vmul.f32 %v1053, %v1052
  %v1055 = vmul.f32 0.5, %v1054
  %v1056 = vsub.f32 1.5, %v1055
  %v1057 = vmul.f32 %v1052, %v1056
  %vm1058 = vweird.f32 %v1030
  %vm1059 = vweird.f32 %v1052
  %vm1060 = vmor %vm1058, %vm1059
  %v1061 = vsel %vm1060, %v1052, %v1057
  %v1062 = vrsqrt.pop %v1031
  %v1063 = vmul.f32 %v1062, %v1031
  %v1064 = vmul.f32 %v1063, %v1062
  %v1065 = vmul.f32 0.5, %v1064
  %v1066 = vsub.f32 1.5, %v1065
  %v1067 = vmul.f32 %v1062, %v1066
  %vm1068 = vweird.f32 %v1031
  %vm1069 = vweird.f32 %v1062
  %vm1070 = vmor %vm1068, %vm1069
  %v1071 = vsel %vm1070, %v1062, %v1067
  %v1072 = vmul.f32 %v992, %v1041
  %v1073 = vmul.f32 %v993, %v1051
  %v1074 = vmul.f32 %v994, %v1061
  %v1075 = vmul.f32 %v995, %v1071
  %v1077 = vperm.slane %v962, 0
  %v1078 = vperm.slane %v962, 1
  %v1079 = vperm.slane %v962, 2
  %v1080 = vperm.slane %v962, 3
  %v1085 = vmul.f32 %v1072, %v1077
  %v1086 = vmul.f32 %v1073, %v1078
  %v1087 = vmul.f32 %v1074, %v1079
  %v1088 = vmul.f32 %v1075, %v1080
  %v1090 = vperm.slane %v963, 0
  %v1091 = vperm.slane %v963, 1
  %v1092 = vperm.slane %v963, 2
  %v1093 = vperm.slane %v963, 3
  %v1098 = vadd.f32 %v1085, %v1090
  %v1099 = vadd.f32 %v1086, %v1091
  %v1100 = vadd.f32 %v1087, %v1092
  %v1101 = vadd.f32 %v1088, %v1093
  %v1102 = vmul.f32 %v1098, 0.5
  %v1103 = vmul.f32 %v1099, 0.5
  %v1104 = vmul.f32 %v1100, 0.5
  %v1105 = vmul.f32 %v1101, 0.5
  %v1106 = vmul.f32 %v1098, 0.70710677
  %v1107 = vmul.f32 %v1099, 0.70710677
  %v1108 = vmul.f32 %v1100, 0.70710677
  %v1109 = vmul.f32 %v1101, 0.70710677
  %v1110 = vmul.f32 %v1106, %v1106
  %v1111 = vmin.f32 16.0, %v1110
  %v1112 = vmul.f32 %v1111, 2.1237322e-06
  %v1113 = vadd.f32 %v1112, 0.00028619796
  %v1114 = vmul.f32 %v1111, %v1113
  %v1115 = vadd.f32 %v1114, 0.0036580483
  %v1116 = vmul.f32 %v1111, %v1115
  %v1117 = vadd.f32 %v1116, 0.05243302
  %v1118 = vmul.f32 %v1111, %v1117
  %v1119 = vadd.f32 %v1118, 0.18741608
  %v1120 = vmul.f32 %v1111, %v1119
  %v1121 = vadd.f32 %v1120, 1.1283791
  %v1122 = vmul.f32 %v1106, %v1121
  %v1123 = vmul.f32 %v1111, 3.8918573e-05
  %v1124 = vadd.f32 %v1123, 0.001143296
  %v1125 = vmul.f32 %v1111, %v1124
  %v1126 = vadd.f32 %v1125, 0.014752088
  %v1127 = vmul.f32 %v1111, %v1126
  %v1128 = vadd.f32 %v1127, 0.112945676
  %v1129 = vmul.f32 %v1111, %v1128
  %v1130 = vadd.f32 %v1129, 0.4994258
  %v1131 = vmul.f32 %v1111, %v1130
  %v1132 = vadd.f32 %v1131, 1.0
  %v1133 = vrcp.pop %v1132
  %v1134 = vmul.f32 %v1132, %v1133
  %v1135 = vsub.f32 1.0, %v1134
  %v1136 = vmul.f32 %v1133, %v1135
  %v1137 = vadd.f32 %v1133, %v1136
  %vm1138 = vweird.f32 %v1132
  %vm1139 = vweird.f32 %v1133
  %vm1140 = vmor %vm1138, %vm1139
  %v1141 = vsel %vm1140, %v1133, %v1137
  %v1142 = vand.u32 2147483647, %v1132
  %vm1143 = vcmp.eq.f32.partialorder %v1142, 8.507059e+37
  %v1144 = vand.u32 %v1132, 2147483648
  %v1145 = vor.u32 1.1754944e-38, %v1144
  %v1146 = vsel %vm1143, %v1145, %v1141
  %v1147 = vmul.f32 %v1122, %v1146
  %v1148 = vmin.f32 %v1147, 1.0
  %v1149 = vmax.f32 %v1148, -1.0
  %v1150 = vmul.f32 %v1107, %v1107
  %v1151 = vmin.f32 16.0, %v1150
  %v1152 = vmul.f32 %v1151, 2.1237322e-06
  %v1153 = vadd.f32 %v1152, 0.00028619796
  %v1154 = vmul.f32 %v1151, %v1153
  %v1155 = vadd.f32 %v1154, 0.0036580483
  %v1156 = vmul.f32 %v1151, %v1155
  %v1157 = vadd.f32 %v1156, 0.05243302
  %v1158 = vmul.f32 %v1151, %v1157
  %v1159 = vadd.f32 %v1158, 0.18741608
  %v1160 = vmul.f32 %v1151, %v1159
  %v1161 = vadd.f32 %v1160, 1.1283791
  %v1162 = vmul.f32 %v1107, %v1161
  %v1163 = vmul.f32 %v1151, 3.8918573e-05
  %v1164 = vadd.f32 %v1163, 0.001143296
  %v1165 = vmul.f32 %v1151, %v1164
  %v1166 = vadd.f32 %v1165, 0.014752088
  %v1167 = vmul.f32 %v1151, %v1166
  %v1168 = vadd.f32 %v1167, 0.112945676
  %v1169 = vmul.f32 %v1151, %v1168
  %v1170 = vadd.f32 %v1169, 0.4994258
  %v1171 = vmul.f32 %v1151, %v1170
  %v1172 = vadd.f32 %v1171, 1.0
  %v1173 = vrcp.pop %v1172
  %v1174 = vmul.f32 %v1172, %v1173
  %v1175 = vsub.f32 1.0, %v1174
  %v1176 = vmul.f32 %v1173, %v1175
  %v1177 = vadd.f32 %v1173, %v1176
  %vm1178 = vweird.f32 %v1172
  %vm1179 = vweird.f32 %v1173
  %vm1180 = vmor %vm1178, %vm1179
  %v1181 = vsel %vm1180, %v1173, %v1177
  %v1182 = vand.u32 2147483647, %v1172
  %vm1183 = vcmp.eq.f32.partialorder %v1182, 8.507059e+37
  %v1184 = vand.u32 %v1172, 2147483648
  %v1185 = vor.u32 1.1754944e-38, %v1184
  %v1186 = vsel %vm1183, %v1185, %v1181
  %v1187 = vmul.f32 %v1162, %v1186
  %v1188 = vmin.f32 %v1187, 1.0
  %v1189 = vmax.f32 %v1188, -1.0
  %v1190 = vmul.f32 %v1108, %v1108
  %v1191 = vmin.f32 16.0, %v1190
  %v1192 = vmul.f32 %v1191, 2.1237322e-06
  %v1193 = vadd.f32 %v1192, 0.00028619796
  %v1194 = vmul.f32 %v1191, %v1193
  %v1195 = vadd.f32 %v1194, 0.0036580483
  %v1196 = vmul.f32 %v1191, %v1195
  %v1197 = vadd.f32 %v1196, 0.05243302
  %v1198 = vmul.f32 %v1191, %v1197
  %v1199 = vadd.f32 %v1198, 0.18741608
  %v1200 = vmul.f32 %v1191, %v1199
  %v1201 = vadd.f32 %v1200, 1.1283791
  %v1202 = vmul.f32 %v1108, %v1201
  %v1203 = vmul.f32 %v1191, 3.8918573e-05
  %v1204 = vadd.f32 %v1203, 0.001143296
  %v1205 = vmul.f32 %v1191, %v1204
  %v1206 = vadd.f32 %v1205, 0.014752088
  %v1207 = vmul.f32 %v1191, %v1206
  %v1208 = vadd.f32 %v1207, 0.112945676
  %v1209 = vmul.f32 %v1191, %v1208
  %v1210 = vadd.f32 %v1209, 0.4994258
  %v1211 = vmul.f32 %v1191, %v1210
  %v1212 = vadd.f32 %v1211, 1.0
  %v1213 = vrcp.pop %v1212
  %v1214 = vmul.f32 %v1212, %v1213
  %v1215 = vsub.f32 1.0, %v1214
  %v1216 = vmul.f32 %v1213, %v1215
  %v1217 = vadd.f32 %v1213, %v1216
  %vm1218 = vweird.f32 %v1212
  %vm1219 = vweird.f32 %v1213
  %vm1220 = vmor %vm1218, %vm1219
  %v1221 = vsel %vm1220, %v1213, %v1217
  %v1222 = vand.u32 2147483647, %v1212
  %vm1223 = vcmp.eq.f32.partialorder %v1222, 8.507059e+37
  %v1224 = vand.u32 %v1212, 2147483648
  %v1225 = vor.u32 1.1754944e-38, %v1224
  %v1226 = vsel %vm1223, %v1225, %v1221
  %v1227 = vmul.f32 %v1202, %v1226
  %v1228 = vmin.f32 %v1227, 1.0
  %v1229 = vmax.f32 %v1228, -1.0
  %v1230 = vmul.f32 %v1109, %v1109
  %v1231 = vmin.f32 16.0, %v1230
  %v1232 = vmul.f32 %v1231, 2.1237322e-06
  %v1233 = vadd.f32 %v1232, 0.00028619796
  %v1234 = vmul.f32 %v1231, %v1233
  %v1235 = vadd.f32 %v1234, 0.0036580483
  %v1236 = vmul.f32 %v1231, %v1235
  %v1237 = vadd.f32 %v1236, 0.05243302
  %v1238 = vmul.f32 %v1231, %v1237
  %v1239 = vadd.f32 %v1238, 0.18741608
  %v1240 = vmul.f32 %v1231, %v1239
  %v1241 = vadd.f32 %v1240, 1.1283791
  %v1242 = vmul.f32 %v1109, %v1241
  %v1243 = vmul.f32 %v1231, 3.8918573e-05
  %v1244 = vadd.f32 %v1243, 0.001143296
  %v1245 = vmul.f32 %v1231, %v1244
  %v1246 = vadd.f32 %v1245, 0.014752088
  %v1247 = vmul.f32 %v1231, %v1246
  %v1248 = vadd.f32 %v1247, 0.112945676
  %v1249 = vmul.f32 %v1231, %v1248
  %v1250 = vadd.f32 %v1249, 0.4994258
  %v1251 = vmul.f32 %v1231, %v1250
  %v1252 = vadd.f32 %v1251, 1.0
  %v1253 = vrcp.pop %v1252
  %v1254 = vmul.f32 %v1252, %v1253
  %v1255 = vsub.f32 1.0, %v1254
  %v1256 = vmul.f32 %v1253, %v1255
  %v1257 = vadd.f32 %v1253, %v1256
  %vm1258 = vweird.f32 %v1252
  %vm1259 = vweird.f32 %v1253
  %vm1260 = vmor %vm1258, %vm1259
  %v1261 = vsel %vm1260, %v1253, %v1257
  %v1262 = vand.u32 2147483647, %v1252
  %vm1263 = vcmp.eq.f32.partialorder %v1262, 8.507059e+37
  %v1264 = vand.u32 %v1252, 2147483648
  %v1265 = vor.u32 1.1754944e-38, %v1264
  %v1266 = vsel %vm1263, %v1265, %v1261
  %v1267 = vmul.f32 %v1242, %v1266
  %v1268 = vmin.f32 %v1267, 1.0
  %v1269 = vmax.f32 %v1268, -1.0
  %v1270 = vadd.f32 %v1149, 1.0
  %v1271 = vadd.f32 %v1189, 1.0
  %v1272 = vadd.f32 %v1229, 1.0
  %v1273 = vadd.f32 %v1269, 1.0
  %v1274 = vmul.f32 %v1102, %v1270
  %v1275 = vmul.f32 %v1103, %v1271
  %v1276 = vmul.f32 %v1104, %v1272
  %v1277 = vmul.f32 %v1105, %v1273
  %v1278 = vpack.c.bf16 %v1274, %v1274
  %v1279 = vpack.c.bf16 %v1275, %v1275
  %v1280 = vpack.c.bf16 %v1276, %v1276
  %v1281 = vpack.c.bf16 %v1277, %v1277
  %v1282 = vld [vmem:[%s5] sm:$0xff]
  %v1283 = vld [vmem:[%s5 + $0x8] sm:$0xff]
  %v1284 = vld [vmem:[%s5 + $0x10] sm:$0xff]
  %v1285 = vld [vmem:[%s5 + $0x18] sm:$0xff]
  %v1286 = vld [vmem:[%s5 + $0x20] sm:$0xff]
  %v1287 = vld [vmem:[%s5 + $0x28] sm:$0xff]
  %v1288 = vld [vmem:[%s5 + $0x30] sm:$0xff]
  %v1289 = vld [vmem:[%s5 + $0x38] sm:$0xff]
  %v1290 = vld [vmem:[%s5 + $0x40] sm:$0xff]
  %v1291 = vld [vmem:[%s5 + $0x48] sm:$0xff]
  %v1292 = vld [vmem:[%s5 + $0x50] sm:$0xff]
  %v1293 = vld [vmem:[%s5 + $0x58] sm:$0xff]
  %v1294 = vld [vmem:[%s5 + $0x60] sm:$0xff]
  %v1295 = vld [vmem:[%s5 + $0x68] sm:$0xff]
  %v1296 = vld [vmem:[%s5 + $0x70] sm:$0xff]
  %v1297 = vld [vmem:[%s5 + $0x78] sm:$0xff]
  %v1298 = vld [vmem:[%s5 + $0x80] sm:$0xff]
  %v1299 = vld [vmem:[%s5 + $0x88] sm:$0xff]
  %v1300 = vld [vmem:[%s5 + $0x90] sm:$0xff]
  %v1301 = vld [vmem:[%s5 + $0x98] sm:$0xff]
  %v1302 = vld [vmem:[%s5 + $0xa0] sm:$0xff]
  %v1303 = vld [vmem:[%s5 + $0xa8] sm:$0xff]
  %v1304 = vld [vmem:[%s5 + $0xb0] sm:$0xff]
  %v1305 = vld [vmem:[%s5 + $0xb8] sm:$0xff]
  %v1306 = vld [vmem:[%s5 + $0xc0] sm:$0xff]
  %v1307 = vld [vmem:[%s5 + $0xc8] sm:$0xff]
  %v1308 = vld [vmem:[%s5 + $0xd0] sm:$0xff]
  %v1309 = vld [vmem:[%s5 + $0xd8] sm:$0xff]
  %v1310 = vld [vmem:[%s5 + $0xe0] sm:$0xff]
  %v1311 = vld [vmem:[%s5 + $0xe8] sm:$0xff]
  %v1312 = vld [vmem:[%s5 + $0xf0] sm:$0xff]
  %v1313 = vld [vmem:[%s5 + $0xf8] sm:$0xff]
  %v1314 = vld [vmem:[%s5 + $0x100] sm:$0xff]
  %v1315 = vld [vmem:[%s5 + $0x108] sm:$0xff]
  %v1316 = vld [vmem:[%s5 + $0x110] sm:$0xff]
  %v1317 = vld [vmem:[%s5 + $0x118] sm:$0xff]
  %v1318 = vld [vmem:[%s5 + $0x120] sm:$0xff]
  %v1319 = vld [vmem:[%s5 + $0x128] sm:$0xff]
  %v1320 = vld [vmem:[%s5 + $0x130] sm:$0xff]
  %v1321 = vld [vmem:[%s5 + $0x138] sm:$0xff]
  %v1322 = vld [vmem:[%s5 + $0x140] sm:$0xff]
  %v1323 = vld [vmem:[%s5 + $0x148] sm:$0xff]
  %v1324 = vld [vmem:[%s5 + $0x150] sm:$0xff]
  %v1325 = vld [vmem:[%s5 + $0x158] sm:$0xff]
  %v1326 = vld [vmem:[%s5 + $0x160] sm:$0xff]
  %v1327 = vld [vmem:[%s5 + $0x168] sm:$0xff]
  %v1328 = vld [vmem:[%s5 + $0x170] sm:$0xff]
  %v1329 = vld [vmem:[%s5 + $0x178] sm:$0xff]
  %v1330 = vld [vmem:[%s5 + $0x180] sm:$0xff]
  %v1331 = vld [vmem:[%s5 + $0x188] sm:$0xff]
  %v1332 = vld [vmem:[%s5 + $0x190] sm:$0xff]
  %v1333 = vld [vmem:[%s5 + $0x198] sm:$0xff]
  %v1334 = vld [vmem:[%s5 + $0x1a0] sm:$0xff]
  %v1335 = vld [vmem:[%s5 + $0x1a8] sm:$0xff]
  %v1336 = vld [vmem:[%s5 + $0x1b0] sm:$0xff]
  %v1337 = vld [vmem:[%s5 + $0x1b8] sm:$0xff]
  %v1338 = vld [vmem:[%s5 + $0x1c0] sm:$0xff]
  %v1339 = vld [vmem:[%s5 + $0x1c8] sm:$0xff]
  %v1340 = vld [vmem:[%s5 + $0x1d0] sm:$0xff]
  %v1341 = vld [vmem:[%s5 + $0x1d8] sm:$0xff]
  %v1342 = vld [vmem:[%s5 + $0x1e0] sm:$0xff]
  %v1343 = vld [vmem:[%s5 + $0x1e8] sm:$0xff]
  %v1344 = vld [vmem:[%s5 + $0x1f0] sm:$0xff]
  %v1345 = vld [vmem:[%s5 + $0x1f8] sm:$0xff]
  %v1346 = vld [vmem:[%s5 + $0x200] sm:$0xff]
  %v1347 = vld [vmem:[%s5 + $0x208] sm:$0xff]
  %v1348 = vld [vmem:[%s5 + $0x210] sm:$0xff]
  %v1349 = vld [vmem:[%s5 + $0x218] sm:$0xff]
  %v1350 = vld [vmem:[%s5 + $0x220] sm:$0xff]
  %v1351 = vld [vmem:[%s5 + $0x228] sm:$0xff]
  %v1352 = vld [vmem:[%s5 + $0x230] sm:$0xff]
  %v1353 = vld [vmem:[%s5 + $0x238] sm:$0xff]
  %v1354 = vld [vmem:[%s5 + $0x240] sm:$0xff]
  %v1355 = vld [vmem:[%s5 + $0x248] sm:$0xff]
  %v1356 = vld [vmem:[%s5 + $0x250] sm:$0xff]
  %v1357 = vld [vmem:[%s5 + $0x258] sm:$0xff]
  %v1358 = vld [vmem:[%s5 + $0x260] sm:$0xff]
  %v1359 = vld [vmem:[%s5 + $0x268] sm:$0xff]
  %v1360 = vld [vmem:[%s5 + $0x270] sm:$0xff]
  %v1361 = vld [vmem:[%s5 + $0x278] sm:$0xff]
  %v1362 = vld [vmem:[%s5 + $0x280] sm:$0xff]
  %v1363 = vld [vmem:[%s5 + $0x288] sm:$0xff]
  %v1364 = vld [vmem:[%s5 + $0x290] sm:$0xff]
  %v1365 = vld [vmem:[%s5 + $0x298] sm:$0xff]
  %v1366 = vld [vmem:[%s5 + $0x2a0] sm:$0xff]
  %v1367 = vld [vmem:[%s5 + $0x2a8] sm:$0xff]
  %v1368 = vld [vmem:[%s5 + $0x2b0] sm:$0xff]
  %v1369 = vld [vmem:[%s5 + $0x2b8] sm:$0xff]
  %v1370 = vld [vmem:[%s5 + $0x2c0] sm:$0xff]
  %v1371 = vld [vmem:[%s5 + $0x2c8] sm:$0xff]
  %v1372 = vld [vmem:[%s5 + $0x2d0] sm:$0xff]
  %v1373 = vld [vmem:[%s5 + $0x2d8] sm:$0xff]
  %v1374 = vld [vmem:[%s5 + $0x2e0] sm:$0xff]
  %v1375 = vld [vmem:[%s5 + $0x2e8] sm:$0xff]
  %v1376 = vld [vmem:[%s5 + $0x2f0] sm:$0xff]
  %v1377 = vld [vmem:[%s5 + $0x2f8] sm:$0xff]
  %v1378 = vld [vmem:[%s5 + $0x300] sm:$0xff]
  %v1379 = vld [vmem:[%s5 + $0x308] sm:$0xff]
  %v1380 = vld [vmem:[%s5 + $0x310] sm:$0xff]
  %v1381 = vld [vmem:[%s5 + $0x318] sm:$0xff]
  %v1382 = vld [vmem:[%s5 + $0x320] sm:$0xff]
  %v1383 = vld [vmem:[%s5 + $0x328] sm:$0xff]
  %v1384 = vld [vmem:[%s5 + $0x330] sm:$0xff]
  %v1385 = vld [vmem:[%s5 + $0x338] sm:$0xff]
  %v1386 = vld [vmem:[%s5 + $0x340] sm:$0xff]
  %v1387 = vld [vmem:[%s5 + $0x348] sm:$0xff]
  %v1388 = vld [vmem:[%s5 + $0x350] sm:$0xff]
  %v1389 = vld [vmem:[%s5 + $0x358] sm:$0xff]
  %v1390 = vld [vmem:[%s5 + $0x360] sm:$0xff]
  %v1391 = vld [vmem:[%s5 + $0x368] sm:$0xff]
  %v1392 = vld [vmem:[%s5 + $0x370] sm:$0xff]
  %v1393 = vld [vmem:[%s5 + $0x378] sm:$0xff]
  %v1394 = vld [vmem:[%s5 + $0x380] sm:$0xff]
  %v1395 = vld [vmem:[%s5 + $0x388] sm:$0xff]
  %v1396 = vld [vmem:[%s5 + $0x390] sm:$0xff]
  %v1397 = vld [vmem:[%s5 + $0x398] sm:$0xff]
  %v1398 = vld [vmem:[%s5 + $0x3a0] sm:$0xff]
  %v1399 = vld [vmem:[%s5 + $0x3a8] sm:$0xff]
  %v1400 = vld [vmem:[%s5 + $0x3b0] sm:$0xff]
  %v1401 = vld [vmem:[%s5 + $0x3b8] sm:$0xff]
  %v1402 = vld [vmem:[%s5 + $0x3c0] sm:$0xff]
  %v1403 = vld [vmem:[%s5 + $0x3c8] sm:$0xff]
  %v1404 = vld [vmem:[%s5 + $0x3d0] sm:$0xff]
  %v1405 = vld [vmem:[%s5 + $0x3d8] sm:$0xff]
  %v1406 = vld [vmem:[%s5 + $0x3e0] sm:$0xff]
  %v1407 = vld [vmem:[%s5 + $0x3e8] sm:$0xff]
  %v1408 = vld [vmem:[%s5 + $0x3f0] sm:$0xff]
  %v1409 = vld [vmem:[%s5 + $0x3f8] sm:$0xff]
  %v1410 = vunpack.c.0.s8 %v1282
  %v1411 = vunpack.c.0.s8 %v1283
  %v1412 = vunpack.c.0.s8 %v1284
  %v1413 = vunpack.c.0.s8 %v1285
  %v1414 = vunpack.c.0.s8 %v1286
  %v1415 = vunpack.c.0.s8 %v1287
  %v1416 = vunpack.c.0.s8 %v1288
  %v1417 = vunpack.c.0.s8 %v1289
  %v1418 = vunpack.c.1.s8 %v1282
  %v1419 = vunpack.c.1.s8 %v1283
  %v1420 = vunpack.c.1.s8 %v1284
  %v1421 = vunpack.c.1.s8 %v1285
  %v1422 = vunpack.c.1.s8 %v1286
  %v1423 = vunpack.c.1.s8 %v1287
  %v1424 = vunpack.c.1.s8 %v1288
  %v1425 = vunpack.c.1.s8 %v1289
  %v1426 = vunpack.c.2.s8 %v1282
  %v1427 = vunpack.c.2.s8 %v1283
  %v1428 = vunpack.c.2.s8 %v1284
  %v1429 = vunpack.c.2.s8 %v1285
  %v1430 = vunpack.c.2.s8 %v1286
  %v1431 = vunpack.c.2.s8 %v1287
  %v1432 = vunpack.c.2.s8 %v1288
  %v1433 = vunpack.c.2.s8 %v1289
  %v1434 = vunpack.c.3.s8 %v1282
  %v1435 = vunpack.c.3.s8 %v1283
  %v1436 = vunpack.c.3.s8 %v1284
  %v1437 = vunpack.c.3.s8 %v1285
  %v1438 = vunpack.c.3.s8 %v1286
  %v1439 = vunpack.c.3.s8 %v1287
  %v1440 = vunpack.c.3.s8 %v1288
  %v1441 = vunpack.c.3.s8 %v1289
  %v1442 = vunpack.c.0.s8 %v1290
  %v1443 = vunpack.c.0.s8 %v1291
  %v1444 = vunpack.c.0.s8 %v1292
  %v1445 = vunpack.c.0.s8 %v1293
  %v1446 = vunpack.c.0.s8 %v1294
  %v1447 = vunpack.c.0.s8 %v1295
  %v1448 = vunpack.c.0.s8 %v1296
  %v1449 = vunpack.c.0.s8 %v1297
  %v1450 = vunpack.c.1.s8 %v1290
  %v1451 = vunpack.c.1.s8 %v1291
  %v1452 = vunpack.c.1.s8 %v1292
  %v1453 = vunpack.c.1.s8 %v1293
  %v1454 = vunpack.c.1.s8 %v1294
  %v1455 = vunpack.c.1.s8 %v1295
  %v1456 = vunpack.c.1.s8 %v1296
  %v1457 = vunpack.c.1.s8 %v1297
  %v1458 = vunpack.c.2.s8 %v1290
  %v1459 = vunpack.c.2.s8 %v1291
  %v1460 = vunpack.c.2.s8 %v1292
  %v1461 = vunpack.c.2.s8 %v1293
  %v1462 = vunpack.c.2.s8 %v1294
  %v1463 = vunpack.c.2.s8 %v1295
  %v1464 = vunpack.c.2.s8 %v1296
  %v1465 = vunpack.c.2.s8 %v1297
  %v1466 = vunpack.c.3.s8 %v1290
  %v1467 = vunpack.c.3.s8 %v1291
  %v1468 = vunpack.c.3.s8 %v1292
  %v1469 = vunpack.c.3.s8 %v1293
  %v1470 = vunpack.c.3.s8 %v1294
  %v1471 = vunpack.c.3.s8 %v1295
  %v1472 = vunpack.c.3.s8 %v1296
  %v1473 = vunpack.c.3.s8 %v1297
  %v1474 = vunpack.c.0.s8 %v1298
  %v1475 = vunpack.c.0.s8 %v1299
  %v1476 = vunpack.c.0.s8 %v1300
  %v1477 = vunpack.c.0.s8 %v1301
  %v1478 = vunpack.c.0.s8 %v1302
  %v1479 = vunpack.c.0.s8 %v1303
  %v1480 = vunpack.c.0.s8 %v1304
  %v1481 = vunpack.c.0.s8 %v1305
  %v1482 = vunpack.c.1.s8 %v1298
  %v1483 = vunpack.c.1.s8 %v1299
  %v1484 = vunpack.c.1.s8 %v1300
  %v1485 = vunpack.c.1.s8 %v1301
  %v1486 = vunpack.c.1.s8 %v1302
  %v1487 = vunpack.c.1.s8 %v1303
  %v1488 = vunpack.c.1.s8 %v1304
  %v1489 = vunpack.c.1.s8 %v1305
  %v1490 = vunpack.c.2.s8 %v1298
  %v1491 = vunpack.c.2.s8 %v1299
  %v1492 = vunpack.c.2.s8 %v1300
  %v1493 = vunpack.c.2.s8 %v1301
  %v1494 = vunpack.c.2.s8 %v1302
  %v1495 = vunpack.c.2.s8 %v1303
  %v1496 = vunpack.c.2.s8 %v1304
  %v1497 = vunpack.c.2.s8 %v1305
  %v1498 = vunpack.c.3.s8 %v1298
  %v1499 = vunpack.c.3.s8 %v1299
  %v1500 = vunpack.c.3.s8 %v1300
  %v1501 = vunpack.c.3.s8 %v1301
  %v1502 = vunpack.c.3.s8 %v1302
  %v1503 = vunpack.c.3.s8 %v1303
  %v1504 = vunpack.c.3.s8 %v1304
  %v1505 = vunpack.c.3.s8 %v1305
  %v1506 = vunpack.c.0.s8 %v1306
  %v1507 = vunpack.c.0.s8 %v1307
  %v1508 = vunpack.c.0.s8 %v1308
  %v1509 = vunpack.c.0.s8 %v1309
  %v1510 = vunpack.c.0.s8 %v1310
  %v1511 = vunpack.c.0.s8 %v1311
  %v1512 = vunpack.c.0.s8 %v1312
  %v1513 = vunpack.c.0.s8 %v1313
  %v1514 = vunpack.c.1.s8 %v1306
  %v1515 = vunpack.c.1.s8 %v1307
  %v1516 = vunpack.c.1.s8 %v1308
  %v1517 = vunpack.c.1.s8 %v1309
  %v1518 = vunpack.c.1.s8 %v1310
  %v1519 = vunpack.c.1.s8 %v1311
  %v1520 = vunpack.c.1.s8 %v1312
  %v1521 = vunpack.c.1.s8 %v1313
  %v1522 = vunpack.c.2.s8 %v1306
  %v1523 = vunpack.c.2.s8 %v1307
  %v1524 = vunpack.c.2.s8 %v1308
  %v1525 = vunpack.c.2.s8 %v1309
  %v1526 = vunpack.c.2.s8 %v1310
  %v1527 = vunpack.c.2.s8 %v1311
  %v1528 = vunpack.c.2.s8 %v1312
  %v1529 = vunpack.c.2.s8 %v1313
  %v1530 = vunpack.c.3.s8 %v1306
  %v1531 = vunpack.c.3.s8 %v1307
  %v1532 = vunpack.c.3.s8 %v1308
  %v1533 = vunpack.c.3.s8 %v1309
  %v1534 = vunpack.c.3.s8 %v1310
  %v1535 = vunpack.c.3.s8 %v1311
  %v1536 = vunpack.c.3.s8 %v1312
  %v1537 = vunpack.c.3.s8 %v1313
  %v1538 = vunpack.c.0.s8 %v1314
  %v1539 = vunpack.c.0.s8 %v1315
  %v1540 = vunpack.c.0.s8 %v1316
  %v1541 = vunpack.c.0.s8 %v1317
  %v1542 = vunpack.c.0.s8 %v1318
  %v1543 = vunpack.c.0.s8 %v1319
  %v1544 = vunpack.c.0.s8 %v1320
  %v1545 = vunpack.c.0.s8 %v1321
  %v1546 = vunpack.c.1.s8 %v1314
  %v1547 = vunpack.c.1.s8 %v1315
  %v1548 = vunpack.c.1.s8 %v1316
  %v1549 = vunpack.c.1.s8 %v1317
  %v1550 = vunpack.c.1.s8 %v1318
  %v1551 = vunpack.c.1.s8 %v1319
  %v1552 = vunpack.c.1.s8 %v1320
  %v1553 = vunpack.c.1.s8 %v1321
  %v1554 = vunpack.c.2.s8 %v1314
  %v1555 = vunpack.c.2.s8 %v1315
  %v1556 = vunpack.c.2.s8 %v1316
  %v1557 = vunpack.c.2.s8 %v1317
  %v1558 = vunpack.c.2.s8 %v1318
  %v1559 = vunpack.c.2.s8 %v1319
  %v1560 = vunpack.c.2.s8 %v1320
  %v1561 = vunpack.c.2.s8 %v1321
  %v1562 = vunpack.c.3.s8 %v1314
  %v1563 = vunpack.c.3.s8 %v1315
  %v1564 = vunpack.c.3.s8 %v1316
  %v1565 = vunpack.c.3.s8 %v1317
  %v1566 = vunpack.c.3.s8 %v1318
  %v1567 = vunpack.c.3.s8 %v1319
  %v1568 = vunpack.c.3.s8 %v1320
  %v1569 = vunpack.c.3.s8 %v1321
  %v1570 = vunpack.c.0.s8 %v1322
  %v1571 = vunpack.c.0.s8 %v1323
  %v1572 = vunpack.c.0.s8 %v1324
  %v1573 = vunpack.c.0.s8 %v1325
  %v1574 = vunpack.c.0.s8 %v1326
  %v1575 = vunpack.c.0.s8 %v1327
  %v1576 = vunpack.c.0.s8 %v1328
  %v1577 = vunpack.c.0.s8 %v1329
  %v1578 = vunpack.c.1.s8 %v1322
  %v1579 = vunpack.c.1.s8 %v1323
  %v1580 = vunpack.c.1.s8 %v1324
  %v1581 = vunpack.c.1.s8 %v1325
  %v1582 = vunpack.c.1.s8 %v1326
  %v1583 = vunpack.c.1.s8 %v1327
  %v1584 = vunpack.c.1.s8 %v1328
  %v1585 = vunpack.c.1.s8 %v1329
  %v1586 = vunpack.c.2.s8 %v1322
  %v1587 = vunpack.c.2.s8 %v1323
  %v1588 = vunpack.c.2.s8 %v1324
  %v1589 = vunpack.c.2.s8 %v1325
  %v1590 = vunpack.c.2.s8 %v1326
  %v1591 = vunpack.c.2.s8 %v1327
  %v1592 = vunpack.c.2.s8 %v1328
  %v1593 = vunpack.c.2.s8 %v1329
  %v1594 = vunpack.c.3.s8 %v1322
  %v1595 = vunpack.c.3.s8 %v1323
  %v1596 = vunpack.c.3.s8 %v1324
  %v1597 = vunpack.c.3.s8 %v1325
  %v1598 = vunpack.c.3.s8 %v1326
  %v1599 = vunpack.c.3.s8 %v1327
  %v1600 = vunpack.c.3.s8 %v1328
  %v1601 = vunpack.c.3.s8 %v1329
  %v1602 = vunpack.c.0.s8 %v1330
  %v1603 = vunpack.c.0.s8 %v1331
  %v1604 = vunpack.c.0.s8 %v1332
  %v1605 = vunpack.c.0.s8 %v1333
  %v1606 = vunpack.c.0.s8 %v1334
  %v1607 = vunpack.c.0.s8 %v1335
  %v1608 = vunpack.c.0.s8 %v1336
  %v1609 = vunpack.c.0.s8 %v1337
  %v1610 = vunpack.c.1.s8 %v1330
  %v1611 = vunpack.c.1.s8 %v1331
  %v1612 = vunpack.c.1.s8 %v1332
  %v1613 = vunpack.c.1.s8 %v1333
  %v1614 = vunpack.c.1.s8 %v1334
  %v1615 = vunpack.c.1.s8 %v1335
  %v1616 = vunpack.c.1.s8 %v1336
  %v1617 = vunpack.c.1.s8 %v1337
  %v1618 = vunpack.c.2.s8 %v1330
  %v1619 = vunpack.c.2.s8 %v1331
  %v1620 = vunpack.c.2.s8 %v1332
  %v1621 = vunpack.c.2.s8 %v1333
  %v1622 = vunpack.c.2.s8 %v1334
  %v1623 = vunpack.c.2.s8 %v1335
  %v1624 = vunpack.c.2.s8 %v1336
  %v1625 = vunpack.c.2.s8 %v1337
  %v1626 = vunpack.c.3.s8 %v1330
  %v1627 = vunpack.c.3.s8 %v1331
  %v1628 = vunpack.c.3.s8 %v1332
  %v1629 = vunpack.c.3.s8 %v1333
  %v1630 = vunpack.c.3.s8 %v1334
  %v1631 = vunpack.c.3.s8 %v1335
  %v1632 = vunpack.c.3.s8 %v1336
  %v1633 = vunpack.c.3.s8 %v1337
  %v1634 = vunpack.c.0.s8 %v1338
  %v1635 = vunpack.c.0.s8 %v1339
  %v1636 = vunpack.c.0.s8 %v1340
  %v1637 = vunpack.c.0.s8 %v1341
  %v1638 = vunpack.c.0.s8 %v1342
  %v1639 = vunpack.c.0.s8 %v1343
  %v1640 = vunpack.c.0.s8 %v1344
  %v1641 = vunpack.c.0.s8 %v1345
  %v1642 = vunpack.c.1.s8 %v1338
  %v1643 = vunpack.c.1.s8 %v1339
  %v1644 = vunpack.c.1.s8 %v1340
  %v1645 = vunpack.c.1.s8 %v1341
  %v1646 = vunpack.c.1.s8 %v1342
  %v1647 = vunpack.c.1.s8 %v1343
  %v1648 = vunpack.c.1.s8 %v1344
  %v1649 = vunpack.c.1.s8 %v1345
  %v1650 = vunpack.c.2.s8 %v1338
  %v1651 = vunpack.c.2.s8 %v1339
  %v1652 = vunpack.c.2.s8 %v1340
  %v1653 = vunpack.c.2.s8 %v1341
  %v1654 = vunpack.c.2.s8 %v1342
  %v1655 = vunpack.c.2.s8 %v1343
  %v1656 = vunpack.c.2.s8 %v1344
  %v1657 = vunpack.c.2.s8 %v1345
  %v1658 = vunpack.c.3.s8 %v1338
  %v1659 = vunpack.c.3.s8 %v1339
  %v1660 = vunpack.c.3.s8 %v1340
  %v1661 = vunpack.c.3.s8 %v1341
  %v1662 = vunpack.c.3.s8 %v1342
  %v1663 = vunpack.c.3.s8 %v1343
  %v1664 = vunpack.c.3.s8 %v1344
  %v1665 = vunpack.c.3.s8 %v1345
  %v1666 = vunpack.c.0.s8 %v1346
  %v1667 = vunpack.c.0.s8 %v1347
  %v1668 = vunpack.c.0.s8 %v1348
  %v1669 = vunpack.c.0.s8 %v1349
  %v1670 = vunpack.c.0.s8 %v1350
  %v1671 = vunpack.c.0.s8 %v1351
  %v1672 = vunpack.c.0.s8 %v1352
  %v1673 = vunpack.c.0.s8 %v1353
  %v1674 = vunpack.c.1.s8 %v1346
  %v1675 = vunpack.c.1.s8 %v1347
  %v1676 = vunpack.c.1.s8 %v1348
  %v1677 = vunpack.c.1.s8 %v1349
  %v1678 = vunpack.c.1.s8 %v1350
  %v1679 = vunpack.c.1.s8 %v1351
  %v1680 = vunpack.c.1.s8 %v1352
  %v1681 = vunpack.c.1.s8 %v1353
  %v1682 = vunpack.c.2.s8 %v1346
  %v1683 = vunpack.c.2.s8 %v1347
  %v1684 = vunpack.c.2.s8 %v1348
  %v1685 = vunpack.c.2.s8 %v1349
  %v1686 = vunpack.c.2.s8 %v1350
  %v1687 = vunpack.c.2.s8 %v1351
  %v1688 = vunpack.c.2.s8 %v1352
  %v1689 = vunpack.c.2.s8 %v1353
  %v1690 = vunpack.c.3.s8 %v1346
  %v1691 = vunpack.c.3.s8 %v1347
  %v1692 = vunpack.c.3.s8 %v1348
  %v1693 = vunpack.c.3.s8 %v1349
  %v1694 = vunpack.c.3.s8 %v1350
  %v1695 = vunpack.c.3.s8 %v1351
  %v1696 = vunpack.c.3.s8 %v1352
  %v1697 = vunpack.c.3.s8 %v1353
  %v1698 = vunpack.c.0.s8 %v1354
  %v1699 = vunpack.c.0.s8 %v1355
  %v1700 = vunpack.c.0.s8 %v1356
  %v1701 = vunpack.c.0.s8 %v1357
  %v1702 = vunpack.c.0.s8 %v1358
  %v1703 = vunpack.c.0.s8 %v1359
  %v1704 = vunpack.c.0.s8 %v1360
  %v1705 = vunpack.c.0.s8 %v1361
  %v1706 = vunpack.c.1.s8 %v1354
  %v1707 = vunpack.c.1.s8 %v1355
  %v1708 = vunpack.c.1.s8 %v1356
  %v1709 = vunpack.c.1.s8 %v1357
  %v1710 = vunpack.c.1.s8 %v1358
  %v1711 = vunpack.c.1.s8 %v1359
  %v1712 = vunpack.c.1.s8 %v1360
  %v1713 = vunpack.c.1.s8 %v1361
  %v1714 = vunpack.c.2.s8 %v1354
  %v1715 = vunpack.c.2.s8 %v1355
  %v1716 = vunpack.c.2.s8 %v1356
  %v1717 = vunpack.c.2.s8 %v1357
  %v1718 = vunpack.c.2.s8 %v1358
  %v1719 = vunpack.c.2.s8 %v1359
  %v1720 = vunpack.c.2.s8 %v1360
  %v1721 = vunpack.c.2.s8 %v1361
  %v1722 = vunpack.c.3.s8 %v1354
  %v1723 = vunpack.c.3.s8 %v1355
  %v1724 = vunpack.c.3.s8 %v1356
  %v1725 = vunpack.c.3.s8 %v1357
  %v1726 = vunpack.c.3.s8 %v1358
  %v1727 = vunpack.c.3.s8 %v1359
  %v1728 = vunpack.c.3.s8 %v1360
  %v1729 = vunpack.c.3.s8 %v1361
  %v1730 = vunpack.c.0.s8 %v1362
  %v1731 = vunpack.c.0.s8 %v1363
  %v1732 = vunpack.c.0.s8 %v1364
  %v1733 = vunpack.c.0.s8 %v1365
  %v1734 = vunpack.c.0.s8 %v1366
  %v1735 = vunpack.c.0.s8 %v1367
  %v1736 = vunpack.c.0.s8 %v1368
  %v1737 = vunpack.c.0.s8 %v1369
  %v1738 = vunpack.c.1.s8 %v1362
  %v1739 = vunpack.c.1.s8 %v1363
  %v1740 = vunpack.c.1.s8 %v1364
  %v1741 = vunpack.c.1.s8 %v1365
  %v1742 = vunpack.c.1.s8 %v1366
  %v1743 = vunpack.c.1.s8 %v1367
  %v1744 = vunpack.c.1.s8 %v1368
  %v1745 = vunpack.c.1.s8 %v1369
  %v1746 = vunpack.c.2.s8 %v1362
  %v1747 = vunpack.c.2.s8 %v1363
  %v1748 = vunpack.c.2.s8 %v1364
  %v1749 = vunpack.c.2.s8 %v1365
  %v1750 = vunpack.c.2.s8 %v1366
  %v1751 = vunpack.c.2.s8 %v1367
  %v1752 = vunpack.c.2.s8 %v1368
  %v1753 = vunpack.c.2.s8 %v1369
  %v1754 = vunpack.c.3.s8 %v1362
  %v1755 = vunpack.c.3.s8 %v1363
  %v1756 = vunpack.c.3.s8 %v1364
  %v1757 = vunpack.c.3.s8 %v1365
  %v1758 = vunpack.c.3.s8 %v1366
  %v1759 = vunpack.c.3.s8 %v1367
  %v1760 = vunpack.c.3.s8 %v1368
  %v1761 = vunpack.c.3.s8 %v1369
  %v1762 = vunpack.c.0.s8 %v1370
  %v1763 = vunpack.c.0.s8 %v1371
  %v1764 = vunpack.c.0.s8 %v1372
  %v1765 = vunpack.c.0.s8 %v1373
  %v1766 = vunpack.c.0.s8 %v1374
  %v1767 = vunpack.c.0.s8 %v1375
  %v1768 = vunpack.c.0.s8 %v1376
  %v1769 = vunpack.c.0.s8 %v1377
  %v1770 = vunpack.c.1.s8 %v1370
  %v1771 = vunpack.c.1.s8 %v1371
  %v1772 = vunpack.c.1.s8 %v1372
  %v1773 = vunpack.c.1.s8 %v1373
  %v1774 = vunpack.c.1.s8 %v1374
  %v1775 = vunpack.c.1.s8 %v1375
  %v1776 = vunpack.c.1.s8 %v1376
  %v1777 = vunpack.c.1.s8 %v1377
  %v1778 = vunpack.c.2.s8 %v1370
  %v1779 = vunpack.c.2.s8 %v1371
  %v1780 = vunpack.c.2.s8 %v1372
  %v1781 = vunpack.c.2.s8 %v1373
  %v1782 = vunpack.c.2.s8 %v1374
  %v1783 = vunpack.c.2.s8 %v1375
  %v1784 = vunpack.c.2.s8 %v1376
  %v1785 = vunpack.c.2.s8 %v1377
  %v1786 = vunpack.c.3.s8 %v1370
  %v1787 = vunpack.c.3.s8 %v1371
  %v1788 = vunpack.c.3.s8 %v1372
  %v1789 = vunpack.c.3.s8 %v1373
  %v1790 = vunpack.c.3.s8 %v1374
  %v1791 = vunpack.c.3.s8 %v1375
  %v1792 = vunpack.c.3.s8 %v1376
  %v1793 = vunpack.c.3.s8 %v1377
  %v1794 = vunpack.c.0.s8 %v1378
  %v1795 = vunpack.c.0.s8 %v1379
  %v1796 = vunpack.c.0.s8 %v1380
  %v1797 = vunpack.c.0.s8 %v1381
  %v1798 = vunpack.c.0.s8 %v1382
  %v1799 = vunpack.c.0.s8 %v1383
  %v1800 = vunpack.c.0.s8 %v1384
  %v1801 = vunpack.c.0.s8 %v1385
  %v1802 = vunpack.c.1.s8 %v1378
  %v1803 = vunpack.c.1.s8 %v1379
  %v1804 = vunpack.c.1.s8 %v1380
  %v1805 = vunpack.c.1.s8 %v1381
  %v1806 = vunpack.c.1.s8 %v1382
  %v1807 = vunpack.c.1.s8 %v1383
  %v1808 = vunpack.c.1.s8 %v1384
  %v1809 = vunpack.c.1.s8 %v1385
  %v1810 = vunpack.c.2.s8 %v1378
  %v1811 = vunpack.c.2.s8 %v1379
  %v1812 = vunpack.c.2.s8 %v1380
  %v1813 = vunpack.c.2.s8 %v1381
  %v1814 = vunpack.c.2.s8 %v1382
  %v1815 = vunpack.c.2.s8 %v1383
  %v1816 = vunpack.c.2.s8 %v1384
  %v1817 = vunpack.c.2.s8 %v1385
  %v1818 = vunpack.c.3.s8 %v1378
  %v1819 = vunpack.c.3.s8 %v1379
  %v1820 = vunpack.c.3.s8 %v1380
  %v1821 = vunpack.c.3.s8 %v1381
  %v1822 = vunpack.c.3.s8 %v1382
  %v1823 = vunpack.c.3.s8 %v1383
  %v1824 = vunpack.c.3.s8 %v1384
  %v1825 = vunpack.c.3.s8 %v1385
  %v1826 = vunpack.c.0.s8 %v1386
  %v1827 = vunpack.c.0.s8 %v1387
  %v1828 = vunpack.c.0.s8 %v1388
  %v1829 = vunpack.c.0.s8 %v1389
  %v1830 = vunpack.c.0.s8 %v1390
  %v1831 = vunpack.c.0.s8 %v1391
  %v1832 = vunpack.c.0.s8 %v1392
  %v1833 = vunpack.c.0.s8 %v1393
  %v1834 = vunpack.c.1.s8 %v1386
  %v1835 = vunpack.c.1.s8 %v1387
  %v1836 = vunpack.c.1.s8 %v1388
  %v1837 = vunpack.c.1.s8 %v1389
  %v1838 = vunpack.c.1.s8 %v1390
  %v1839 = vunpack.c.1.s8 %v1391
  %v1840 = vunpack.c.1.s8 %v1392
  %v1841 = vunpack.c.1.s8 %v1393
  %v1842 = vunpack.c.2.s8 %v1386
  %v1843 = vunpack.c.2.s8 %v1387
  %v1844 = vunpack.c.2.s8 %v1388
  %v1845 = vunpack.c.2.s8 %v1389
  %v1846 = vunpack.c.2.s8 %v1390
  %v1847 = vunpack.c.2.s8 %v1391
  %v1848 = vunpack.c.2.s8 %v1392
  %v1849 = vunpack.c.2.s8 %v1393
  %v1850 = vunpack.c.3.s8 %v1386
  %v1851 = vunpack.c.3.s8 %v1387
  %v1852 = vunpack.c.3.s8 %v1388
  %v1853 = vunpack.c.3.s8 %v1389
  %v1854 = vunpack.c.3.s8 %v1390
  %v1855 = vunpack.c.3.s8 %v1391
  %v1856 = vunpack.c.3.s8 %v1392
  %v1857 = vunpack.c.3.s8 %v1393
  %v1858 = vunpack.c.0.s8 %v1394
  %v1859 = vunpack.c.0.s8 %v1395
  %v1860 = vunpack.c.0.s8 %v1396
  %v1861 = vunpack.c.0.s8 %v1397
  %v1862 = vunpack.c.0.s8 %v1398
  %v1863 = vunpack.c.0.s8 %v1399
  %v1864 = vunpack.c.0.s8 %v1400
  %v1865 = vunpack.c.0.s8 %v1401
  %v1866 = vunpack.c.1.s8 %v1394
  %v1867 = vunpack.c.1.s8 %v1395
  %v1868 = vunpack.c.1.s8 %v1396
  %v1869 = vunpack.c.1.s8 %v1397
  %v1870 = vunpack.c.1.s8 %v1398
  %v1871 = vunpack.c.1.s8 %v1399
  %v1872 = vunpack.c.1.s8 %v1400
  %v1873 = vunpack.c.1.s8 %v1401
  %v1874 = vunpack.c.2.s8 %v1394
  %v1875 = vunpack.c.2.s8 %v1395
  %v1876 = vunpack.c.2.s8 %v1396
  %v1877 = vunpack.c.2.s8 %v1397
  %v1878 = vunpack.c.2.s8 %v1398
  %v1879 = vunpack.c.2.s8 %v1399
  %v1880 = vunpack.c.2.s8 %v1400
  %v1881 = vunpack.c.2.s8 %v1401
  %v1882 = vunpack.c.3.s8 %v1394
  %v1883 = vunpack.c.3.s8 %v1395
  %v1884 = vunpack.c.3.s8 %v1396
  %v1885 = vunpack.c.3.s8 %v1397
  %v1886 = vunpack.c.3.s8 %v1398
  %v1887 = vunpack.c.3.s8 %v1399
  %v1888 = vunpack.c.3.s8 %v1400
  %v1889 = vunpack.c.3.s8 %v1401
  %v1890 = vunpack.c.0.s8 %v1402
  %v1891 = vunpack.c.0.s8 %v1403
  %v1892 = vunpack.c.0.s8 %v1404
  %v1893 = vunpack.c.0.s8 %v1405
  %v1894 = vunpack.c.0.s8 %v1406
  %v1895 = vunpack.c.0.s8 %v1407
  %v1896 = vunpack.c.0.s8 %v1408
  %v1897 = vunpack.c.0.s8 %v1409
  %v1898 = vunpack.c.1.s8 %v1402
  %v1899 = vunpack.c.1.s8 %v1403
  %v1900 = vunpack.c.1.s8 %v1404
  %v1901 = vunpack.c.1.s8 %v1405
  %v1902 = vunpack.c.1.s8 %v1406
  %v1903 = vunpack.c.1.s8 %v1407
  %v1904 = vunpack.c.1.s8 %v1408
  %v1905 = vunpack.c.1.s8 %v1409
  %v1906 = vunpack.c.2.s8 %v1402
  %v1907 = vunpack.c.2.s8 %v1403
  %v1908 = vunpack.c.2.s8 %v1404
  %v1909 = vunpack.c.2.s8 %v1405
  %v1910 = vunpack.c.2.s8 %v1406
  %v1911 = vunpack.c.2.s8 %v1407
  %v1912 = vunpack.c.2.s8 %v1408
  %v1913 = vunpack.c.2.s8 %v1409
  %v1914 = vunpack.c.3.s8 %v1402
  %v1915 = vunpack.c.3.s8 %v1403
  %v1916 = vunpack.c.3.s8 %v1404
  %v1917 = vunpack.c.3.s8 %v1405
  %v1918 = vunpack.c.3.s8 %v1406
  %v1919 = vunpack.c.3.s8 %v1407
  %v1920 = vunpack.c.3.s8 %v1408
  %v1921 = vunpack.c.3.s8 %v1409
  %v1922 = vcvt.s32.f32 %v1410
  %v1923 = vcvt.s32.f32 %v1411
  %v1924 = vcvt.s32.f32 %v1412
  %v1925 = vcvt.s32.f32 %v1413
  %v1926 = vcvt.s32.f32 %v1414
  %v1927 = vcvt.s32.f32 %v1415
  %v1928 = vcvt.s32.f32 %v1416
  %v1929 = vcvt.s32.f32 %v1417
  %v1930 = vcvt.s32.f32 %v1418
  %v1931 = vcvt.s32.f32 %v1419
  %v1932 = vcvt.s32.f32 %v1420
  %v1933 = vcvt.s32.f32 %v1421
  %v1934 = vcvt.s32.f32 %v1422
  %v1935 = vcvt.s32.f32 %v1423
  %v1936 = vcvt.s32.f32 %v1424
  %v1937 = vcvt.s32.f32 %v1425
  %v1938 = vcvt.s32.f32 %v1426
  %v1939 = vcvt.s32.f32 %v1427
  %v1940 = vcvt.s32.f32 %v1428
  %v1941 = vcvt.s32.f32 %v1429
  %v1942 = vcvt.s32.f32 %v1430
  %v1943 = vcvt.s32.f32 %v1431
  %v1944 = vcvt.s32.f32 %v1432
  %v1945 = vcvt.s32.f32 %v1433
  %v1946 = vcvt.s32.f32 %v1434
  %v1947 = vcvt.s32.f32 %v1435
  %v1948 = vcvt.s32.f32 %v1436
  %v1949 = vcvt.s32.f32 %v1437
  %v1950 = vcvt.s32.f32 %v1438
  %v1951 = vcvt.s32.f32 %v1439
  %v1952 = vcvt.s32.f32 %v1440
  %v1953 = vcvt.s32.f32 %v1441
  %v1954 = vcvt.s32.f32 %v1442
  %v1955 = vcvt.s32.f32 %v1443
  %v1956 = vcvt.s32.f32 %v1444
  %v1957 = vcvt.s32.f32 %v1445
  %v1958 = vcvt.s32.f32 %v1446
  %v1959 = vcvt.s32.f32 %v1447
  %v1960 = vcvt.s32.f32 %v1448
  %v1961 = vcvt.s32.f32 %v1449
  %v1962 = vcvt.s32.f32 %v1450
  %v1963 = vcvt.s32.f32 %v1451
  %v1964 = vcvt.s32.f32 %v1452
  %v1965 = vcvt.s32.f32 %v1453
  %v1966 = vcvt.s32.f32 %v1454
  %v1967 = vcvt.s32.f32 %v1455
  %v1968 = vcvt.s32.f32 %v1456
  %v1969 = vcvt.s32.f32 %v1457
  %v1970 = vcvt.s32.f32 %v1458
  %v1971 = vcvt.s32.f32 %v1459
  %v1972 = vcvt.s32.f32 %v1460
  %v1973 = vcvt.s32.f32 %v1461
  %v1974 = vcvt.s32.f32 %v1462
  %v1975 = vcvt.s32.f32 %v1463
  %v1976 = vcvt.s32.f32 %v1464
  %v1977 = vcvt.s32.f32 %v1465
  %v1978 = vcvt.s32.f32 %v1466
  %v1979 = vcvt.s32.f32 %v1467
  %v1980 = vcvt.s32.f32 %v1468
  %v1981 = vcvt.s32.f32 %v1469
  %v1982 = vcvt.s32.f32 %v1470
  %v1983 = vcvt.s32.f32 %v1471
  %v1984 = vcvt.s32.f32 %v1472
  %v1985 = vcvt.s32.f32 %v1473
  %v1986 = vcvt.s32.f32 %v1474
  %v1987 = vcvt.s32.f32 %v1475
  %v1988 = vcvt.s32.f32 %v1476
  %v1989 = vcvt.s32.f32 %v1477
  %v1990 = vcvt.s32.f32 %v1478
  %v1991 = vcvt.s32.f32 %v1479
  %v1992 = vcvt.s32.f32 %v1480
  %v1993 = vcvt.s32.f32 %v1481
  %v1994 = vcvt.s32.f32 %v1482
  %v1995 = vcvt.s32.f32 %v1483
  %v1996 = vcvt.s32.f32 %v1484
  %v1997 = vcvt.s32.f32 %v1485
  %v1998 = vcvt.s32.f32 %v1486
  %v1999 = vcvt.s32.f32 %v1487
  %v2000 = vcvt.s32.f32 %v1488
  %v2001 = vcvt.s32.f32 %v1489
  %v2002 = vcvt.s32.f32 %v1490
  %v2003 = vcvt.s32.f32 %v1491
  %v2004 = vcvt.s32.f32 %v1492
  %v2005 = vcvt.s32.f32 %v1493
  %v2006 = vcvt.s32.f32 %v1494
  %v2007 = vcvt.s32.f32 %v1495
  %v2008 = vcvt.s32.f32 %v1496
  %v2009 = vcvt.s32.f32 %v1497
  %v2010 = vcvt.s32.f32 %v1498
  %v2011 = vcvt.s32.f32 %v1499
  %v2012 = vcvt.s32.f32 %v1500
  %v2013 = vcvt.s32.f32 %v1501
  %v2014 = vcvt.s32.f32 %v1502
  %v2015 = vcvt.s32.f32 %v1503
  %v2016 = vcvt.s32.f32 %v1504
  %v2017 = vcvt.s32.f32 %v1505
  %v2018 = vcvt.s32.f32 %v1506
  %v2019 = vcvt.s32.f32 %v1507
  %v2020 = vcvt.s32.f32 %v1508
  %v2021 = vcvt.s32.f32 %v1509
  %v2022 = vcvt.s32.f32 %v1510
  %v2023 = vcvt.s32.f32 %v1511
  %v2024 = vcvt.s32.f32 %v1512
  %v2025 = vcvt.s32.f32 %v1513
  %v2026 = vcvt.s32.f32 %v1514
  %v2027 = vcvt.s32.f32 %v1515
  %v2028 = vcvt.s32.f32 %v1516
  %v2029 = vcvt.s32.f32 %v1517
  %v2030 = vcvt.s32.f32 %v1518
  %v2031 = vcvt.s32.f32 %v1519
  %v2032 = vcvt.s32.f32 %v1520
  %v2033 = vcvt.s32.f32 %v1521
  %v2034 = vcvt.s32.f32 %v1522
  %v2035 = vcvt.s32.f32 %v1523
  %v2036 = vcvt.s32.f32 %v1524
  %v2037 = vcvt.s32.f32 %v1525
  %v2038 = vcvt.s32.f32 %v1526
  %v2039 = vcvt.s32.f32 %v1527
  %v2040 = vcvt.s32.f32 %v1528
  %v2041 = vcvt.s32.f32 %v1529
  %v2042 = vcvt.s32.f32 %v1530
  %v2043 = vcvt.s32.f32 %v1531
  %v2044 = vcvt.s32.f32 %v1532
  %v2045 = vcvt.s32.f32 %v1533
  %v2046 = vcvt.s32.f32 %v1534
  %v2047 = vcvt.s32.f32 %v1535
  %v2048 = vcvt.s32.f32 %v1536
  %v2049 = vcvt.s32.f32 %v1537
  %v2050 = vcvt.s32.f32 %v1538
  %v2051 = vcvt.s32.f32 %v1539
  %v2052 = vcvt.s32.f32 %v1540
  %v2053 = vcvt.s32.f32 %v1541
  %v2054 = vcvt.s32.f32 %v1542
  %v2055 = vcvt.s32.f32 %v1543
  %v2056 = vcvt.s32.f32 %v1544
  %v2057 = vcvt.s32.f32 %v1545
  %v2058 = vcvt.s32.f32 %v1546
  %v2059 = vcvt.s32.f32 %v1547
  %v2060 = vcvt.s32.f32 %v1548
  %v2061 = vcvt.s32.f32 %v1549
  %v2062 = vcvt.s32.f32 %v1550
  %v2063 = vcvt.s32.f32 %v1551
  %v2064 = vcvt.s32.f32 %v1552
  %v2065 = vcvt.s32.f32 %v1553
  %v2066 = vcvt.s32.f32 %v1554
  %v2067 = vcvt.s32.f32 %v1555
  %v2068 = vcvt.s32.f32 %v1556
  %v2069 = vcvt.s32.f32 %v1557
  %v2070 = vcvt.s32.f32 %v1558
  %v2071 = vcvt.s32.f32 %v1559
  %v2072 = vcvt.s32.f32 %v1560
  %v2073 = vcvt.s32.f32 %v1561
  %v2074 = vcvt.s32.f32 %v1562
  %v2075 = vcvt.s32.f32 %v1563
  %v2076 = vcvt.s32.f32 %v1564
  %v2077 = vcvt.s32.f32 %v1565
  %v2078 = vcvt.s32.f32 %v1566
  %v2079 = vcvt.s32.f32 %v1567
  %v2080 = vcvt.s32.f32 %v1568
  %v2081 = vcvt.s32.f32 %v1569
  %v2082 = vcvt.s32.f32 %v1570
  %v2083 = vcvt.s32.f32 %v1571
  %v2084 = vcvt.s32.f32 %v1572
  %v2085 = vcvt.s32.f32 %v1573
  %v2086 = vcvt.s32.f32 %v1574
  %v2087 = vcvt.s32.f32 %v1575
  %v2088 = vcvt.s32.f32 %v1576
  %v2089 = vcvt.s32.f32 %v1577
  %v2090 = vcvt.s32.f32 %v1578
  %v2091 = vcvt.s32.f32 %v1579
  %v2092 = vcvt.s32.f32 %v1580
  %v2093 = vcvt.s32.f32 %v1581
  %v2094 = vcvt.s32.f32 %v1582
  %v2095 = vcvt.s32.f32 %v1583
  %v2096 = vcvt.s32.f32 %v1584
  %v2097 = vcvt.s32.f32 %v1585
  %v2098 = vcvt.s32.f32 %v1586
  %v2099 = vcvt.s32.f32 %v1587
  %v2100 = vcvt.s32.f32 %v1588
  %v2101 = vcvt.s32.f32 %v1589
  %v2102 = vcvt.s32.f32 %v1590
  %v2103 = vcvt.s32.f32 %v1591
  %v2104 = vcvt.s32.f32 %v1592
  %v2105 = vcvt.s32.f32 %v1593
  %v2106 = vcvt.s32.f32 %v1594
  %v2107 = vcvt.s32.f32 %v1595
  %v2108 = vcvt.s32.f32 %v1596
  %v2109 = vcvt.s32.f32 %v1597
  %v2110 = vcvt.s32.f32 %v1598
  %v2111 = vcvt.s32.f32 %v1599
  %v2112 = vcvt.s32.f32 %v1600
  %v2113 = vcvt.s32.f32 %v1601
  %v2114 = vcvt.s32.f32 %v1602
  %v2115 = vcvt.s32.f32 %v1603
  %v2116 = vcvt.s32.f32 %v1604
  %v2117 = vcvt.s32.f32 %v1605
  %v2118 = vcvt.s32.f32 %v1606
  %v2119 = vcvt.s32.f32 %v1607
  %v2120 = vcvt.s32.f32 %v1608
  %v2121 = vcvt.s32.f32 %v1609
  %v2122 = vcvt.s32.f32 %v1610
  %v2123 = vcvt.s32.f32 %v1611
  %v2124 = vcvt.s32.f32 %v1612
  %v2125 = vcvt.s32.f32 %v1613
  %v2126 = vcvt.s32.f32 %v1614
  %v2127 = vcvt.s32.f32 %v1615
  %v2128 = vcvt.s32.f32 %v1616
  %v2129 = vcvt.s32.f32 %v1617
  %v2130 = vcvt.s32.f32 %v1618
  %v2131 = vcvt.s32.f32 %v1619
  %v2132 = vcvt.s32.f32 %v1620
  %v2133 = vcvt.s32.f32 %v1621
  %v2134 = vcvt.s32.f32 %v1622
  %v2135 = vcvt.s32.f32 %v1623
  %v2136 = vcvt.s32.f32 %v1624
  %v2137 = vcvt.s32.f32 %v1625
  %v2138 = vcvt.s32.f32 %v1626
  %v2139 = vcvt.s32.f32 %v1627
  %v2140 = vcvt.s32.f32 %v1628
  %v2141 = vcvt.s32.f32 %v1629
  %v2142 = vcvt.s32.f32 %v1630
  %v2143 = vcvt.s32.f32 %v1631
  %v2144 = vcvt.s32.f32 %v1632
  %v2145 = vcvt.s32.f32 %v1633
  %v2146 = vcvt.s32.f32 %v1634
  %v2147 = vcvt.s32.f32 %v1635
  %v2148 = vcvt.s32.f32 %v1636
  %v2149 = vcvt.s32.f32 %v1637
  %v2150 = vcvt.s32.f32 %v1638
  %v2151 = vcvt.s32.f32 %v1639
  %v2152 = vcvt.s32.f32 %v1640
  %v2153 = vcvt.s32.f32 %v1641
  %v2154 = vcvt.s32.f32 %v1642
  %v2155 = vcvt.s32.f32 %v1643
  %v2156 = vcvt.s32.f32 %v1644
  %v2157 = vcvt.s32.f32 %v1645
  %v2158 = vcvt.s32.f32 %v1646
  %v2159 = vcvt.s32.f32 %v1647
  %v2160 = vcvt.s32.f32 %v1648
  %v2161 = vcvt.s32.f32 %v1649
  %v2162 = vcvt.s32.f32 %v1650
  %v2163 = vcvt.s32.f32 %v1651
  %v2164 = vcvt.s32.f32 %v1652
  %v2165 = vcvt.s32.f32 %v1653
  %v2166 = vcvt.s32.f32 %v1654
  %v2167 = vcvt.s32.f32 %v1655
  %v2168 = vcvt.s32.f32 %v1656
  %v2169 = vcvt.s32.f32 %v1657
  %v2170 = vcvt.s32.f32 %v1658
  %v2171 = vcvt.s32.f32 %v1659
  %v2172 = vcvt.s32.f32 %v1660
  %v2173 = vcvt.s32.f32 %v1661
  %v2174 = vcvt.s32.f32 %v1662
  %v2175 = vcvt.s32.f32 %v1663
  %v2176 = vcvt.s32.f32 %v1664
  %v2177 = vcvt.s32.f32 %v1665
  %v2178 = vcvt.s32.f32 %v1666
  %v2179 = vcvt.s32.f32 %v1667
  %v2180 = vcvt.s32.f32 %v1668
  %v2181 = vcvt.s32.f32 %v1669
  %v2182 = vcvt.s32.f32 %v1670
  %v2183 = vcvt.s32.f32 %v1671
  %v2184 = vcvt.s32.f32 %v1672
  %v2185 = vcvt.s32.f32 %v1673
  %v2186 = vcvt.s32.f32 %v1674
  %v2187 = vcvt.s32.f32 %v1675
  %v2188 = vcvt.s32.f32 %v1676
  %v2189 = vcvt.s32.f32 %v1677
  %v2190 = vcvt.s32.f32 %v1678
  %v2191 = vcvt.s32.f32 %v1679
  %v2192 = vcvt.s32.f32 %v1680
  %v2193 = vcvt.s32.f32 %v1681
  %v2194 = vcvt.s32.f32 %v1682
  %v2195 = vcvt.s32.f32 %v1683
  %v2196 = vcvt.s32.f32 %v1684
  %v2197 = vcvt.s32.f32 %v1685
  %v2198 = vcvt.s32.f32 %v1686
  %v2199 = vcvt.s32.f32 %v1687
  %v2200 = vcvt.s32.f32 %v1688
  %v2201 = vcvt.s32.f32 %v1689
  %v2202 = vcvt.s32.f32 %v1690
  %v2203 = vcvt.s32.f32 %v1691
  %v2204 = vcvt.s32.f32 %v1692
  %v2205 = vcvt.s32.f32 %v1693
  %v2206 = vcvt.s32.f32 %v1694
  %v2207 = vcvt.s32.f32 %v1695
  %v2208 = vcvt.s32.f32 %v1696
  %v2209 = vcvt.s32.f32 %v1697
  %v2210 = vcvt.s32.f32 %v1698
  %v2211 = vcvt.s32.f32 %v1699
  %v2212 = vcvt.s32.f32 %v1700
  %v2213 = vcvt.s32.f32 %v1701
  %v2214 = vcvt.s32.f32 %v1702
  %v2215 = vcvt.s32.f32 %v1703
  %v2216 = vcvt.s32.f32 %v1704
  %v2217 = vcvt.s32.f32 %v1705
  %v2218 = vcvt.s32.f32 %v1706
  %v2219 = vcvt.s32.f32 %v1707
  %v2220 = vcvt.s32.f32 %v1708
  %v2221 = vcvt.s32.f32 %v1709
  %v2222 = vcvt.s32.f32 %v1710
  %v2223 = vcvt.s32.f32 %v1711
  %v2224 = vcvt.s32.f32 %v1712
  %v2225 = vcvt.s32.f32 %v1713
  %v2226 = vcvt.s32.f32 %v1714
  %v2227 = vcvt.s32.f32 %v1715
  %v2228 = vcvt.s32.f32 %v1716
  %v2229 = vcvt.s32.f32 %v1717
  %v2230 = vcvt.s32.f32 %v1718
  %v2231 = vcvt.s32.f32 %v1719
  %v2232 = vcvt.s32.f32 %v1720
  %v2233 = vcvt.s32.f32 %v1721
  %v2234 = vcvt.s32.f32 %v1722
  %v2235 = vcvt.s32.f32 %v1723
  %v2236 = vcvt.s32.f32 %v1724
  %v2237 = vcvt.s32.f32 %v1725
  %v2238 = vcvt.s32.f32 %v1726
  %v2239 = vcvt.s32.f32 %v1727
  %v2240 = vcvt.s32.f32 %v1728
  %v2241 = vcvt.s32.f32 %v1729
  %v2242 = vcvt.s32.f32 %v1730
  %v2243 = vcvt.s32.f32 %v1731
  %v2244 = vcvt.s32.f32 %v1732
  %v2245 = vcvt.s32.f32 %v1733
  %v2246 = vcvt.s32.f32 %v1734
  %v2247 = vcvt.s32.f32 %v1735
  %v2248 = vcvt.s32.f32 %v1736
  %v2249 = vcvt.s32.f32 %v1737
  %v2250 = vcvt.s32.f32 %v1738
  %v2251 = vcvt.s32.f32 %v1739
  %v2252 = vcvt.s32.f32 %v1740
  %v2253 = vcvt.s32.f32 %v1741
  %v2254 = vcvt.s32.f32 %v1742
  %v2255 = vcvt.s32.f32 %v1743
  %v2256 = vcvt.s32.f32 %v1744
  %v2257 = vcvt.s32.f32 %v1745
  %v2258 = vcvt.s32.f32 %v1746
  %v2259 = vcvt.s32.f32 %v1747
  %v2260 = vcvt.s32.f32 %v1748
  %v2261 = vcvt.s32.f32 %v1749
  %v2262 = vcvt.s32.f32 %v1750
  %v2263 = vcvt.s32.f32 %v1751
  %v2264 = vcvt.s32.f32 %v1752
  %v2265 = vcvt.s32.f32 %v1753
  %v2266 = vcvt.s32.f32 %v1754
  %v2267 = vcvt.s32.f32 %v1755
  %v2268 = vcvt.s32.f32 %v1756
  %v2269 = vcvt.s32.f32 %v1757
  %v2270 = vcvt.s32.f32 %v1758
  %v2271 = vcvt.s32.f32 %v1759
  %v2272 = vcvt.s32.f32 %v1760
  %v2273 = vcvt.s32.f32 %v1761
  %v2274 = vcvt.s32.f32 %v1762
  %v2275 = vcvt.s32.f32 %v1763
  %v2276 = vcvt.s32.f32 %v1764
  %v2277 = vcvt.s32.f32 %v1765
  %v2278 = vcvt.s32.f32 %v1766
  %v2279 = vcvt.s32.f32 %v1767
  %v2280 = vcvt.s32.f32 %v1768
  %v2281 = vcvt.s32.f32 %v1769
  %v2282 = vcvt.s32.f32 %v1770
  %v2283 = vcvt.s32.f32 %v1771
  %v2284 = vcvt.s32.f32 %v1772
  %v2285 = vcvt.s32.f32 %v1773
  %v2286 = vcvt.s32.f32 %v1774
  %v2287 = vcvt.s32.f32 %v1775
  %v2288 = vcvt.s32.f32 %v1776
  %v2289 = vcvt.s32.f32 %v1777
  %v2290 = vcvt.s32.f32 %v1778
  %v2291 = vcvt.s32.f32 %v1779
  %v2292 = vcvt.s32.f32 %v1780
  %v2293 = vcvt.s32.f32 %v1781
  %v2294 = vcvt.s32.f32 %v1782
  %v2295 = vcvt.s32.f32 %v1783
  %v2296 = vcvt.s32.f32 %v1784
  %v2297 = vcvt.s32.f32 %v1785
  %v2298 = vcvt.s32.f32 %v1786
  %v2299 = vcvt.s32.f32 %v1787
  %v2300 = vcvt.s32.f32 %v1788
  %v2301 = vcvt.s32.f32 %v1789
  %v2302 = vcvt.s32.f32 %v1790
  %v2303 = vcvt.s32.f32 %v1791
  %v2304 = vcvt.s32.f32 %v1792
  %v2305 = vcvt.s32.f32 %v1793
  %v2306 = vcvt.s32.f32 %v1794
  %v2307 = vcvt.s32.f32 %v1795
  %v2308 = vcvt.s32.f32 %v1796
  %v2309 = vcvt.s32.f32 %v1797
  %v2310 = vcvt.s32.f32 %v1798
  %v2311 = vcvt.s32.f32 %v1799
  %v2312 = vcvt.s32.f32 %v1800
  %v2313 = vcvt.s32.f32 %v1801
  %v2314 = vcvt.s32.f32 %v1802
  %v2315 = vcvt.s32.f32 %v1803
  %v2316 = vcvt.s32.f32 %v1804
  %v2317 = vcvt.s32.f32 %v1805
  %v2318 = vcvt.s32.f32 %v1806
  %v2319 = vcvt.s32.f32 %v1807
  %v2320 = vcvt.s32.f32 %v1808
  %v2321 = vcvt.s32.f32 %v1809
  %v2322 = vcvt.s32.f32 %v1810
  %v2323 = vcvt.s32.f32 %v1811
  %v2324 = vcvt.s32.f32 %v1812
  %v2325 = vcvt.s32.f32 %v1813
  %v2326 = vcvt.s32.f32 %v1814
  %v2327 = vcvt.s32.f32 %v1815
  %v2328 = vcvt.s32.f32 %v1816
  %v2329 = vcvt.s32.f32 %v1817
  %v2330 = vcvt.s32.f32 %v1818
  %v2331 = vcvt.s32.f32 %v1819
  %v2332 = vcvt.s32.f32 %v1820
  %v2333 = vcvt.s32.f32 %v1821
  %v2334 = vcvt.s32.f32 %v1822
  %v2335 = vcvt.s32.f32 %v1823
  %v2336 = vcvt.s32.f32 %v1824
  %v2337 = vcvt.s32.f32 %v1825
  %v2338 = vcvt.s32.f32 %v1826
  %v2339 = vcvt.s32.f32 %v1827
  %v2340 = vcvt.s32.f32 %v1828
  %v2341 = vcvt.s32.f32 %v1829
  %v2342 = vcvt.s32.f32 %v1830
  %v2343 = vcvt.s32.f32 %v1831
  %v2344 = vcvt.s32.f32 %v1832
  %v2345 = vcvt.s32.f32 %v1833
  %v2346 = vcvt.s32.f32 %v1834
  %v2347 = vcvt.s32.f32 %v1835
  %v2348 = vcvt.s32.f32 %v1836
  %v2349 = vcvt.s32.f32 %v1837
  %v2350 = vcvt.s32.f32 %v1838
  %v2351 = vcvt.s32.f32 %v1839
  %v2352 = vcvt.s32.f32 %v1840
  %v2353 = vcvt.s32.f32 %v1841
  %v2354 = vcvt.s32.f32 %v1842
  %v2355 = vcvt.s32.f32 %v1843
  %v2356 = vcvt.s32.f32 %v1844
  %v2357 = vcvt.s32.f32 %v1845
  %v2358 = vcvt.s32.f32 %v1846
  %v2359 = vcvt.s32.f32 %v1847
  %v2360 = vcvt.s32.f32 %v1848
  %v2361 = vcvt.s32.f32 %v1849
  %v2362 = vcvt.s32.f32 %v1850
  %v2363 = vcvt.s32.f32 %v1851
  %v2364 = vcvt.s32.f32 %v1852
  %v2365 = vcvt.s32.f32 %v1853
  %v2366 = vcvt.s32.f32 %v1854
  %v2367 = vcvt.s32.f32 %v1855
  %v2368 = vcvt.s32.f32 %v1856
  %v2369 = vcvt.s32.f32 %v1857
  %v2370 = vcvt.s32.f32 %v1858
  %v2371 = vcvt.s32.f32 %v1859
  %v2372 = vcvt.s32.f32 %v1860
  %v2373 = vcvt.s32.f32 %v1861
  %v2374 = vcvt.s32.f32 %v1862
  %v2375 = vcvt.s32.f32 %v1863
  %v2376 = vcvt.s32.f32 %v1864
  %v2377 = vcvt.s32.f32 %v1865
  %v2378 = vcvt.s32.f32 %v1866
  %v2379 = vcvt.s32.f32 %v1867
  %v2380 = vcvt.s32.f32 %v1868
  %v2381 = vcvt.s32.f32 %v1869
  %v2382 = vcvt.s32.f32 %v1870
  %v2383 = vcvt.s32.f32 %v1871
  %v2384 = vcvt.s32.f32 %v1872
  %v2385 = vcvt.s32.f32 %v1873
  %v2386 = vcvt.s32.f32 %v1874
  %v2387 = vcvt.s32.f32 %v1875
  %v2388 = vcvt.s32.f32 %v1876
  %v2389 = vcvt.s32.f32 %v1877
  %v2390 = vcvt.s32.f32 %v1878
  %v2391 = vcvt.s32.f32 %v1879
  %v2392 = vcvt.s32.f32 %v1880
  %v2393 = vcvt.s32.f32 %v1881
  %v2394 = vcvt.s32.f32 %v1882
  %v2395 = vcvt.s32.f32 %v1883
  %v2396 = vcvt.s32.f32 %v1884
  %v2397 = vcvt.s32.f32 %v1885
  %v2398 = vcvt.s32.f32 %v1886
  %v2399 = vcvt.s32.f32 %v1887
  %v2400 = vcvt.s32.f32 %v1888
  %v2401 = vcvt.s32.f32 %v1889
  %v2402 = vcvt.s32.f32 %v1890
  %v2403 = vcvt.s32.f32 %v1891
  %v2404 = vcvt.s32.f32 %v1892
  %v2405 = vcvt.s32.f32 %v1893
  %v2406 = vcvt.s32.f32 %v1894
  %v2407 = vcvt.s32.f32 %v1895
  %v2408 = vcvt.s32.f32 %v1896
  %v2409 = vcvt.s32.f32 %v1897
  %v2410 = vcvt.s32.f32 %v1898
  %v2411 = vcvt.s32.f32 %v1899
  %v2412 = vcvt.s32.f32 %v1900
  %v2413 = vcvt.s32.f32 %v1901
  %v2414 = vcvt.s32.f32 %v1902
  %v2415 = vcvt.s32.f32 %v1903
  %v2416 = vcvt.s32.f32 %v1904
  %v2417 = vcvt.s32.f32 %v1905
  %v2418 = vcvt.s32.f32 %v1906
  %v2419 = vcvt.s32.f32 %v1907
  %v2420 = vcvt.s32.f32 %v1908
  %v2421 = vcvt.s32.f32 %v1909
  %v2422 = vcvt.s32.f32 %v1910
  %v2423 = vcvt.s32.f32 %v1911
  %v2424 = vcvt.s32.f32 %v1912
  %v2425 = vcvt.s32.f32 %v1913
  %v2426 = vcvt.s32.f32 %v1914
  %v2427 = vcvt.s32.f32 %v1915
  %v2428 = vcvt.s32.f32 %v1916
  %v2429 = vcvt.s32.f32 %v1917
  %v2430 = vcvt.s32.f32 %v1918
  %v2431 = vcvt.s32.f32 %v1919
  %v2432 = vcvt.s32.f32 %v1920
  %v2433 = vcvt.s32.f32 %v1921
  %v2434 = vpack.c.bf16 %v1930, %v1922
  %v2435 = vpack.c.bf16 %v1931, %v1923
  %v2436 = vpack.c.bf16 %v1932, %v1924
  %v2437 = vpack.c.bf16 %v1933, %v1925
  %v2438 = vpack.c.bf16 %v1934, %v1926
  %v2439 = vpack.c.bf16 %v1935, %v1927
  %v2440 = vpack.c.bf16 %v1936, %v1928
  %v2441 = vpack.c.bf16 %v1937, %v1929
  %v2442 = vpack.c.bf16 %v1946, %v1938
  %v2443 = vpack.c.bf16 %v1947, %v1939
  %v2444 = vpack.c.bf16 %v1948, %v1940
  %v2445 = vpack.c.bf16 %v1949, %v1941
  %v2446 = vpack.c.bf16 %v1950, %v1942
  %v2447 = vpack.c.bf16 %v1951, %v1943
  %v2448 = vpack.c.bf16 %v1952, %v1944
  %v2449 = vpack.c.bf16 %v1953, %v1945
  %v2450 = vpack.c.bf16 %v1962, %v1954
  %v2451 = vpack.c.bf16 %v1963, %v1955
  %v2452 = vpack.c.bf16 %v1964, %v1956
  %v2453 = vpack.c.bf16 %v1965, %v1957
  %v2454 = vpack.c.bf16 %v1966, %v1958
  %v2455 = vpack.c.bf16 %v1967, %v1959
  %v2456 = vpack.c.bf16 %v1968, %v1960
  %v2457 = vpack.c.bf16 %v1969, %v1961
  %v2458 = vpack.c.bf16 %v1978, %v1970
  %v2459 = vpack.c.bf16 %v1979, %v1971
  %v2460 = vpack.c.bf16 %v1980, %v1972
  %v2461 = vpack.c.bf16 %v1981, %v1973
  %v2462 = vpack.c.bf16 %v1982, %v1974
  %v2463 = vpack.c.bf16 %v1983, %v1975
  %v2464 = vpack.c.bf16 %v1984, %v1976
  %v2465 = vpack.c.bf16 %v1985, %v1977
  %v2466 = vpack.c.bf16 %v1994, %v1986
  %v2467 = vpack.c.bf16 %v1995, %v1987
  %v2468 = vpack.c.bf16 %v1996, %v1988
  %v2469 = vpack.c.bf16 %v1997, %v1989
  %v2470 = vpack.c.bf16 %v1998, %v1990
  %v2471 = vpack.c.bf16 %v1999, %v1991
  %v2472 = vpack.c.bf16 %v2000, %v1992
  %v2473 = vpack.c.bf16 %v2001, %v1993
  %v2474 = vpack.c.bf16 %v2010, %v2002
  %v2475 = vpack.c.bf16 %v2011, %v2003
  %v2476 = vpack.c.bf16 %v2012, %v2004
  %v2477 = vpack.c.bf16 %v2013, %v2005
  %v2478 = vpack.c.bf16 %v2014, %v2006
  %v2479 = vpack.c.bf16 %v2015, %v2007
  %v2480 = vpack.c.bf16 %v2016, %v2008
  %v2481 = vpack.c.bf16 %v2017, %v2009
  %v2482 = vpack.c.bf16 %v2026, %v2018
  %v2483 = vpack.c.bf16 %v2027, %v2019
  %v2484 = vpack.c.bf16 %v2028, %v2020
  %v2485 = vpack.c.bf16 %v2029, %v2021
  %v2486 = vpack.c.bf16 %v2030, %v2022
  %v2487 = vpack.c.bf16 %v2031, %v2023
  %v2488 = vpack.c.bf16 %v2032, %v2024
  %v2489 = vpack.c.bf16 %v2033, %v2025
  %v2490 = vpack.c.bf16 %v2042, %v2034
  %v2491 = vpack.c.bf16 %v2043, %v2035
  %v2492 = vpack.c.bf16 %v2044, %v2036
  %v2493 = vpack.c.bf16 %v2045, %v2037
  %v2494 = vpack.c.bf16 %v2046, %v2038
  %v2495 = vpack.c.bf16 %v2047, %v2039
  %v2496 = vpack.c.bf16 %v2048, %v2040
  %v2497 = vpack.c.bf16 %v2049, %v2041
  %v2498 = vpack.c.bf16 %v2058, %v2050
  %v2499 = vpack.c.bf16 %v2059, %v2051
  %v2500 = vpack.c.bf16 %v2060, %v2052
  %v2501 = vpack.c.bf16 %v2061, %v2053
  %v2502 = vpack.c.bf16 %v2062, %v2054
  %v2503 = vpack.c.bf16 %v2063, %v2055
  %v2504 = vpack.c.bf16 %v2064, %v2056
  %v2505 = vpack.c.bf16 %v2065, %v2057
  %v2506 = vpack.c.bf16 %v2074, %v2066
  %v2507 = vpack.c.bf16 %v2075, %v2067
  %v2508 = vpack.c.bf16 %v2076, %v2068
  %v2509 = vpack.c.bf16 %v2077, %v2069
  %v2510 = vpack.c.bf16 %v2078, %v2070
  %v2511 = vpack.c.bf16 %v2079, %v2071
  %v2512 = vpack.c.bf16 %v2080, %v2072
  %v2513 = vpack.c.bf16 %v2081, %v2073
  %v2514 = vpack.c.bf16 %v2090, %v2082
  %v2515 = vpack.c.bf16 %v2091, %v2083
  %v2516 = vpack.c.bf16 %v2092, %v2084
  %v2517 = vpack.c.bf16 %v2093, %v2085
  %v2518 = vpack.c.bf16 %v2094, %v2086
  %v2519 = vpack.c.bf16 %v2095, %v2087
  %v2520 = vpack.c.bf16 %v2096, %v2088
  %v2521 = vpack.c.bf16 %v2097, %v2089
  %v2522 = vpack.c.bf16 %v2106, %v2098
  %v2523 = vpack.c.bf16 %v2107, %v2099
  %v2524 = vpack.c.bf16 %v2108, %v2100
  %v2525 = vpack.c.bf16 %v2109, %v2101
  %v2526 = vpack.c.bf16 %v2110, %v2102
  %v2527 = vpack.c.bf16 %v2111, %v2103
  %v2528 = vpack.c.bf16 %v2112, %v2104
  %v2529 = vpack.c.bf16 %v2113, %v2105
  %v2530 = vpack.c.bf16 %v2122, %v2114
  %v2531 = vpack.c.bf16 %v2123, %v2115
  %v2532 = vpack.c.bf16 %v2124, %v2116
  %v2533 = vpack.c.bf16 %v2125, %v2117
  %v2534 = vpack.c.bf16 %v2126, %v2118
  %v2535 = vpack.c.bf16 %v2127, %v2119
  %v2536 = vpack.c.bf16 %v2128, %v2120
  %v2537 = vpack.c.bf16 %v2129, %v2121
  %v2538 = vpack.c.bf16 %v2138, %v2130
  %v2539 = vpack.c.bf16 %v2139, %v2131
  %v2540 = vpack.c.bf16 %v2140, %v2132
  %v2541 = vpack.c.bf16 %v2141, %v2133
  %v2542 = vpack.c.bf16 %v2142, %v2134
  %v2543 = vpack.c.bf16 %v2143, %v2135
  %v2544 = vpack.c.bf16 %v2144, %v2136
  %v2545 = vpack.c.bf16 %v2145, %v2137
  %v2546 = vpack.c.bf16 %v2154, %v2146
  %v2547 = vpack.c.bf16 %v2155, %v2147
  %v2548 = vpack.c.bf16 %v2156, %v2148
  %v2549 = vpack.c.bf16 %v2157, %v2149
  %v2550 = vpack.c.bf16 %v2158, %v2150
  %v2551 = vpack.c.bf16 %v2159, %v2151
  %v2552 = vpack.c.bf16 %v2160, %v2152
  %v2553 = vpack.c.bf16 %v2161, %v2153
  %v2554 = vpack.c.bf16 %v2170, %v2162
  %v2555 = vpack.c.bf16 %v2171, %v2163
  %v2556 = vpack.c.bf16 %v2172, %v2164
  %v2557 = vpack.c.bf16 %v2173, %v2165
  %v2558 = vpack.c.bf16 %v2174, %v2166
  %v2559 = vpack.c.bf16 %v2175, %v2167
  %v2560 = vpack.c.bf16 %v2176, %v2168
  %v2561 = vpack.c.bf16 %v2177, %v2169
  %v2562 = vpack.c.bf16 %v2186, %v2178
  %v2563 = vpack.c.bf16 %v2187, %v2179
  %v2564 = vpack.c.bf16 %v2188, %v2180
  %v2565 = vpack.c.bf16 %v2189, %v2181
  %v2566 = vpack.c.bf16 %v2190, %v2182
  %v2567 = vpack.c.bf16 %v2191, %v2183
  %v2568 = vpack.c.bf16 %v2192, %v2184
  %v2569 = vpack.c.bf16 %v2193, %v2185
  %v2570 = vpack.c.bf16 %v2202, %v2194
  %v2571 = vpack.c.bf16 %v2203, %v2195
  %v2572 = vpack.c.bf16 %v2204, %v2196
  %v2573 = vpack.c.bf16 %v2205, %v2197
  %v2574 = vpack.c.bf16 %v2206, %v2198
  %v2575 = vpack.c.bf16 %v2207, %v2199
  %v2576 = vpack.c.bf16 %v2208, %v2200
  %v2577 = vpack.c.bf16 %v2209, %v2201
  %v2578 = vpack.c.bf16 %v2218, %v2210
  %v2579 = vpack.c.bf16 %v2219, %v2211
  %v2580 = vpack.c.bf16 %v2220, %v2212
  %v2581 = vpack.c.bf16 %v2221, %v2213
  %v2582 = vpack.c.bf16 %v2222, %v2214
  %v2583 = vpack.c.bf16 %v2223, %v2215
  %v2584 = vpack.c.bf16 %v2224, %v2216
  %v2585 = vpack.c.bf16 %v2225, %v2217
  %v2586 = vpack.c.bf16 %v2234, %v2226
  %v2587 = vpack.c.bf16 %v2235, %v2227
  %v2588 = vpack.c.bf16 %v2236, %v2228
  %v2589 = vpack.c.bf16 %v2237, %v2229
  %v2590 = vpack.c.bf16 %v2238, %v2230
  %v2591 = vpack.c.bf16 %v2239, %v2231
  %v2592 = vpack.c.bf16 %v2240, %v2232
  %v2593 = vpack.c.bf16 %v2241, %v2233
  %v2594 = vpack.c.bf16 %v2250, %v2242
  %v2595 = vpack.c.bf16 %v2251, %v2243
  %v2596 = vpack.c.bf16 %v2252, %v2244
  %v2597 = vpack.c.bf16 %v2253, %v2245
  %v2598 = vpack.c.bf16 %v2254, %v2246
  %v2599 = vpack.c.bf16 %v2255, %v2247
  %v2600 = vpack.c.bf16 %v2256, %v2248
  %v2601 = vpack.c.bf16 %v2257, %v2249
  %v2602 = vpack.c.bf16 %v2266, %v2258
  %v2603 = vpack.c.bf16 %v2267, %v2259
  %v2604 = vpack.c.bf16 %v2268, %v2260
  %v2605 = vpack.c.bf16 %v2269, %v2261
  %v2606 = vpack.c.bf16 %v2270, %v2262
  %v2607 = vpack.c.bf16 %v2271, %v2263
  %v2608 = vpack.c.bf16 %v2272, %v2264
  %v2609 = vpack.c.bf16 %v2273, %v2265
  %v2610 = vpack.c.bf16 %v2282, %v2274
  %v2611 = vpack.c.bf16 %v2283, %v2275
  %v2612 = vpack.c.bf16 %v2284, %v2276
  %v2613 = vpack.c.bf16 %v2285, %v2277
  %v2614 = vpack.c.bf16 %v2286, %v2278
  %v2615 = vpack.c.bf16 %v2287, %v2279
  %v2616 = vpack.c.bf16 %v2288, %v2280
  %v2617 = vpack.c.bf16 %v2289, %v2281
  %v2618 = vpack.c.bf16 %v2298, %v2290
  %v2619 = vpack.c.bf16 %v2299, %v2291
  %v2620 = vpack.c.bf16 %v2300, %v2292
  %v2621 = vpack.c.bf16 %v2301, %v2293
  %v2622 = vpack.c.bf16 %v2302, %v2294
  %v2623 = vpack.c.bf16 %v2303, %v2295
  %v2624 = vpack.c.bf16 %v2304, %v2296
  %v2625 = vpack.c.bf16 %v2305, %v2297
  %v2626 = vpack.c.bf16 %v2314, %v2306
  %v2627 = vpack.c.bf16 %v2315, %v2307
  %v2628 = vpack.c.bf16 %v2316, %v2308
  %v2629 = vpack.c.bf16 %v2317, %v2309
  %v2630 = vpack.c.bf16 %v2318, %v2310
  %v2631 = vpack.c.bf16 %v2319, %v2311
  %v2632 = vpack.c.bf16 %v2320, %v2312
  %v2633 = vpack.c.bf16 %v2321, %v2313
  %v2634 = vpack.c.bf16 %v2330, %v2322
  %v2635 = vpack.c.bf16 %v2331, %v2323
  %v2636 = vpack.c.bf16 %v2332, %v2324
  %v2637 = vpack.c.bf16 %v2333, %v2325
  %v2638 = vpack.c.bf16 %v2334, %v2326
  %v2639 = vpack.c.bf16 %v2335, %v2327
  %v2640 = vpack.c.bf16 %v2336, %v2328
  %v2641 = vpack.c.bf16 %v2337, %v2329
  %v2642 = vpack.c.bf16 %v2346, %v2338
  %v2643 = vpack.c.bf16 %v2347, %v2339
  %v2644 = vpack.c.bf16 %v2348, %v2340
  %v2645 = vpack.c.bf16 %v2349, %v2341
  %v2646 = vpack.c.bf16 %v2350, %v2342
  %v2647 = vpack.c.bf16 %v2351, %v2343
  %v2648 = vpack.c.bf16 %v2352, %v2344
  %v2649 = vpack.c.bf16 %v2353, %v2345
  %v2650 = vpack.c.bf16 %v2362, %v2354
  %v2651 = vpack.c.bf16 %v2363, %v2355
  %v2652 = vpack.c.bf16 %v2364, %v2356
  %v2653 = vpack.c.bf16 %v2365, %v2357
  %v2654 = vpack.c.bf16 %v2366, %v2358
  %v2655 = vpack.c.bf16 %v2367, %v2359
  %v2656 = vpack.c.bf16 %v2368, %v2360
  %v2657 = vpack.c.bf16 %v2369, %v2361
  %v2658 = vpack.c.bf16 %v2378, %v2370
  %v2659 = vpack.c.bf16 %v2379, %v2371
  %v2660 = vpack.c.bf16 %v2380, %v2372
  %v2661 = vpack.c.bf16 %v2381, %v2373
  %v2662 = vpack.c.bf16 %v2382, %v2374
  %v2663 = vpack.c.bf16 %v2383, %v2375
  %v2664 = vpack.c.bf16 %v2384, %v2376
  %v2665 = vpack.c.bf16 %v2385, %v2377
  %v2666 = vpack.c.bf16 %v2394, %v2386
  %v2667 = vpack.c.bf16 %v2395, %v2387
  %v2668 = vpack.c.bf16 %v2396, %v2388
  %v2669 = vpack.c.bf16 %v2397, %v2389
  %v2670 = vpack.c.bf16 %v2398, %v2390
  %v2671 = vpack.c.bf16 %v2399, %v2391
  %v2672 = vpack.c.bf16 %v2400, %v2392
  %v2673 = vpack.c.bf16 %v2401, %v2393
  %v2674 = vpack.c.bf16 %v2410, %v2402
  %v2675 = vpack.c.bf16 %v2411, %v2403
  %v2676 = vpack.c.bf16 %v2412, %v2404
  %v2677 = vpack.c.bf16 %v2413, %v2405
  %v2678 = vpack.c.bf16 %v2414, %v2406
  %v2679 = vpack.c.bf16 %v2415, %v2407
  %v2680 = vpack.c.bf16 %v2416, %v2408
  %v2681 = vpack.c.bf16 %v2417, %v2409
  %v2682 = vpack.c.bf16 %v2426, %v2418
  %v2683 = vpack.c.bf16 %v2427, %v2419
  %v2684 = vpack.c.bf16 %v2428, %v2420
  %v2685 = vpack.c.bf16 %v2429, %v2421
  %v2686 = vpack.c.bf16 %v2430, %v2422
  %v2687 = vpack.c.bf16 %v2431, %v2423
  %v2688 = vpack.c.bf16 %v2432, %v2424
  %v2689 = vpack.c.bf16 %v2433, %v2425
  %2690 = vmatpush.bf16.msra.mxu0 %v2490
  %2691 = vmatpush.bf16.msra.mxu0 %v2482
  %2692 = vmatpush.bf16.msra.mxu0 %v2474
  %2693 = vmatpush.bf16.msra.mxu0 %v2466
  %2694 = vmatpush.bf16.msra.mxu0 %v2458
  %2695 = vmatpush.bf16.msra.mxu0 %v2450
  %2696 = vmatpush.bf16.msra.mxu0 %v2442
  %2697 = vmatpush.bf16.msra.mxu0 %v2434
  %2698 = vmatmul.bf16.gmra.mxu0 %v1278
  %v2699 = vpop.f32.mrf.mxu0
  %v2700 = vadd.f32 0.0, %v2699
  %v2701 = vpop.f32.mrf.mxu0
  %2702 = vdwg.mxu0
  %2703 = vmatpush.bf16.msra.mxu0 %v2554
  %2704 = vmatpush.bf16.msra.mxu0 %v2546
  %2705 = vmatpush.bf16.msra.mxu0 %v2538
  %2706 = vmatpush.bf16.msra.mxu0 %v2530
  %2707 = vmatpush.bf16.msra.mxu0 %v2522
  %2708 = vmatpush.bf16.msra.mxu0 %v2514
  %2709 = vmatpush.bf16.msra.mxu0 %v2506
  %2710 = vmatpush.bf16.msra.mxu0 %v2498
  %2711 = vmatmul.bf16.gmra.mxu0 %v1279
  %v2712 = vpop.f32.mrf.mxu0
  %v2713 = vadd.f32 %v2700, %v2712
  %v2714 = vpop.f32.mrf.mxu0
  %2715 = vdwg.mxu0
  %2716 = vmatpush.bf16.msra.mxu0 %v2618
  %2717 = vmatpush.bf16.msra.mxu0 %v2610
  %2718 = vmatpush.bf16.msra.mxu0 %v2602
  %2719 = vmatpush.bf16.msra.mxu0 %v2594
  %2720 = vmatpush.bf16.msra.mxu0 %v2586
  %2721 = vmatpush.bf16.msra.mxu0 %v2578
  %2722 = vmatpush.bf16.msra.mxu0 %v2570
  %2723 = vmatpush.bf16.msra.mxu0 %v2562
  %2724 = vmatmul.bf16.gmra.mxu0 %v1280
  %v2725 = vpop.f32.mrf.mxu0
  %v2726 = vadd.f32 %v2713, %v2725
  %v2727 = vpop.f32.mrf.mxu0
  %2728 = vdwg.mxu0
  %2729 = vmatpush.bf16.msra.mxu0 %v2682
  %2730 = vmatpush.bf16.msra.mxu0 %v2674
  %2731 = vmatpush.bf16.msra.mxu0 %v2666
  %2732 = vmatpush.bf16.msra.mxu0 %v2658
  %2733 = vmatpush.bf16.msra.mxu0 %v2650
  %2734 = vmatpush.bf16.msra.mxu0 %v2642
  %2735 = vmatpush.bf16.msra.mxu0 %v2634
  %2736 = vmatpush.bf16.msra.mxu0 %v2626
  %2737 = vmatmul.bf16.gmra.mxu0 %v1281
  %v2738 = vpop.f32.mrf.mxu0
  %v2739 = vadd.f32 %v2726, %v2738
  %v2740 = vpop.f32.mrf.mxu0
  %2741 = vdwg.mxu0
  %2742 = vmatpush.bf16.msra.mxu0 %v2491
  %2743 = vmatpush.bf16.msra.mxu0 %v2483
  %2744 = vmatpush.bf16.msra.mxu0 %v2475
  %2745 = vmatpush.bf16.msra.mxu0 %v2467
  %2746 = vmatpush.bf16.msra.mxu0 %v2459
  %2747 = vmatpush.bf16.msra.mxu0 %v2451
  %2748 = vmatpush.bf16.msra.mxu0 %v2443
  %2749 = vmatpush.bf16.msra.mxu0 %v2435
  %2750 = vmatmul.bf16.gmra.mxu0 %v1278
  %v2751 = vpop.f32.mrf.mxu0
  %v2752 = vadd.f32 0.0, %v2751
  %v2753 = vpop.f32.mrf.mxu0
  %2754 = vdwg.mxu0
  %2755 = vmatpush.bf16.msra.mxu0 %v2555
  %2756 = vmatpush.bf16.msra.mxu0 %v2547
  %2757 = vmatpush.bf16.msra.mxu0 %v2539
  %2758 = vmatpush.bf16.msra.mxu0 %v2531
  %2759 = vmatpush.bf16.msra.mxu0 %v2523
  %2760 = vmatpush.bf16.msra.mxu0 %v2515
  %2761 = vmatpush.bf16.msra.mxu0 %v2507
  %2762 = vmatpush.bf16.msra.mxu0 %v2499
  %2763 = vmatmul.bf16.gmra.mxu0 %v1279
  %v2764 = vpop.f32.mrf.mxu0
  %v2765 = vadd.f32 %v2752, %v2764
  %v2766 = vpop.f32.mrf.mxu0
  %2767 = vdwg.mxu0
  %2768 = vmatpush.bf16.msra.mxu0 %v2619
  %2769 = vmatpush.bf16.msra.mxu0 %v2611
  %2770 = vmatpush.bf16.msra.mxu0 %v2603
  %2771 = vmatpush.bf16.msra.mxu0 %v2595
  %2772 = vmatpush.bf16.msra.mxu0 %v2587
  %2773 = vmatpush.bf16.msra.mxu0 %v2579
  %2774 = vmatpush.bf16.msra.mxu0 %v2571
  %2775 = vmatpush.bf16.msra.mxu0 %v2563
  %2776 = vmatmul.bf16.gmra.mxu0 %v1280
  %v2777 = vpop.f32.mrf.mxu0
  %v2778 = vadd.f32 %v2765, %v2777
  %v2779 = vpop.f32.mrf.mxu0
  %2780 = vdwg.mxu0
  %2781 = vmatpush.bf16.msra.mxu0 %v2683
  %2782 = vmatpush.bf16.msra.mxu0 %v2675
  %2783 = vmatpush.bf16.msra.mxu0 %v2667
  %2784 = vmatpush.bf16.msra.mxu0 %v2659
  %2785 = vmatpush.bf16.msra.mxu0 %v2651
  %2786 = vmatpush.bf16.msra.mxu0 %v2643
  %2787 = vmatpush.bf16.msra.mxu0 %v2635
  %2788 = vmatpush.bf16.msra.mxu0 %v2627
  %2789 = vmatmul.bf16.gmra.mxu0 %v1281
  %v2790 = vpop.f32.mrf.mxu0
  %v2791 = vadd.f32 %v2778, %v2790
  %v2792 = vpop.f32.mrf.mxu0
  %2793 = vdwg.mxu0
  %2794 = vmatpush.bf16.msra.mxu0 %v2492
  %2795 = vmatpush.bf16.msra.mxu0 %v2484
  %2796 = vmatpush.bf16.msra.mxu0 %v2476
  %2797 = vmatpush.bf16.msra.mxu0 %v2468
  %2798 = vmatpush.bf16.msra.mxu0 %v2460
  %2799 = vmatpush.bf16.msra.mxu0 %v2452
  %2800 = vmatpush.bf16.msra.mxu0 %v2444
  %2801 = vmatpush.bf16.msra.mxu0 %v2436
  %2802 = vmatmul.bf16.gmra.mxu0 %v1278
  %v2803 = vpop.f32.mrf.mxu0
  %v2804 = vadd.f32 0.0, %v2803
  %v2805 = vpop.f32.mrf.mxu0
  %2806 = vdwg.mxu0
  %2807 = vmatpush.bf16.msra.mxu0 %v2556
  %2808 = vmatpush.bf16.msra.mxu0 %v2548
  %2809 = vmatpush.bf16.msra.mxu0 %v2540
  %2810 = vmatpush.bf16.msra.mxu0 %v2532
  %2811 = vmatpush.bf16.msra.mxu0 %v2524
  %2812 = vmatpush.bf16.msra.mxu0 %v2516
  %2813 = vmatpush.bf16.msra.mxu0 %v2508
  %2814 = vmatpush.bf16.msra.mxu0 %v2500
  %2815 = vmatmul.bf16.gmra.mxu0 %v1279
  %v2816 = vpop.f32.mrf.mxu0
  %v2817 = vadd.f32 %v2804, %v2816
  %v2818 = vpop.f32.mrf.mxu0
  %2819 = vdwg.mxu0
  %2820 = vmatpush.bf16.msra.mxu0 %v2620
  %2821 = vmatpush.bf16.msra.mxu0 %v2612
  %2822 = vmatpush.bf16.msra.mxu0 %v2604
  %2823 = vmatpush.bf16.msra.mxu0 %v2596
  %2824 = vmatpush.bf16.msra.mxu0 %v2588
  %2825 = vmatpush.bf16.msra.mxu0 %v2580
  %2826 = vmatpush.bf16.msra.mxu0 %v2572
  %2827 = vmatpush.bf16.msra.mxu0 %v2564
  %2828 = vmatmul.bf16.gmra.mxu0 %v1280
  %v2829 = vpop.f32.mrf.mxu0
  %v2830 = vadd.f32 %v2817, %v2829
  %v2831 = vpop.f32.mrf.mxu0
  %2832 = vdwg.mxu0
  %2833 = vmatpush.bf16.msra.mxu0 %v2684
  %2834 = vmatpush.bf16.msra.mxu0 %v2676
  %2835 = vmatpush.bf16.msra.mxu0 %v2668
  %2836 = vmatpush.bf16.msra.mxu0 %v2660
  %2837 = vmatpush.bf16.msra.mxu0 %v2652
  %2838 = vmatpush.bf16.msra.mxu0 %v2644
  %2839 = vmatpush.bf16.msra.mxu0 %v2636
  %2840 = vmatpush.bf16.msra.mxu0 %v2628
  %2841 = vmatmul.bf16.gmra.mxu0 %v1281
  %v2842 = vpop.f32.mrf.mxu0
  %v2843 = vadd.f32 %v2830, %v2842
  %v2844 = vpop.f32.mrf.mxu0
  %2845 = vdwg.mxu0
  %2846 = vmatpush.bf16.msra.mxu0 %v2493
  %2847 = vmatpush.bf16.msra.mxu0 %v2485
  %2848 = vmatpush.bf16.msra.mxu0 %v2477
  %2849 = vmatpush.bf16.msra.mxu0 %v2469
  %2850 = vmatpush.bf16.msra.mxu0 %v2461
  %2851 = vmatpush.bf16.msra.mxu0 %v2453
  %2852 = vmatpush.bf16.msra.mxu0 %v2445
  %2853 = vmatpush.bf16.msra.mxu0 %v2437
  %2854 = vmatmul.bf16.gmra.mxu0 %v1278
  %v2855 = vpop.f32.mrf.mxu0
  %v2856 = vadd.f32 0.0, %v2855
  %v2857 = vpop.f32.mrf.mxu0
  %2858 = vdwg.mxu0
  %2859 = vmatpush.bf16.msra.mxu0 %v2557
  %2860 = vmatpush.bf16.msra.mxu0 %v2549
  %2861 = vmatpush.bf16.msra.mxu0 %v2541
  %2862 = vmatpush.bf16.msra.mxu0 %v2533
  %2863 = vmatpush.bf16.msra.mxu0 %v2525
  %2864 = vmatpush.bf16.msra.mxu0 %v2517
  %2865 = vmatpush.bf16.msra.mxu0 %v2509
  %2866 = vmatpush.bf16.msra.mxu0 %v2501
  %2867 = vmatmul.bf16.gmra.mxu0 %v1279
  %v2868 = vpop.f32.mrf.mxu0
  %v2869 = vadd.f32 %v2856, %v2868
  %v2870 = vpop.f32.mrf.mxu0
  %2871 = vdwg.mxu0
  %2872 = vmatpush.bf16.msra.mxu0 %v2621
  %2873 = vmatpush.bf16.msra.mxu0 %v2613
  %2874 = vmatpush.bf16.msra.mxu0 %v2605
  %2875 = vmatpush.bf16.msra.mxu0 %v2597
  %2876 = vmatpush.bf16.msra.mxu0 %v2589
  %2877 = vmatpush.bf16.msra.mxu0 %v2581
  %2878 = vmatpush.bf16.msra.mxu0 %v2573
  %2879 = vmatpush.bf16.msra.mxu0 %v2565
  %2880 = vmatmul.bf16.gmra.mxu0 %v1280
  %v2881 = vpop.f32.mrf.mxu0
  %v2882 = vadd.f32 %v2869, %v2881
  %v2883 = vpop.f32.mrf.mxu0
  %2884 = vdwg.mxu0
  %2885 = vmatpush.bf16.msra.mxu0 %v2685
  %2886 = vmatpush.bf16.msra.mxu0 %v2677
  %2887 = vmatpush.bf16.msra.mxu0 %v2669
  %2888 = vmatpush.bf16.msra.mxu0 %v2661
  %2889 = vmatpush.bf16.msra.mxu0 %v2653
  %2890 = vmatpush.bf16.msra.mxu0 %v2645
  %2891 = vmatpush.bf16.msra.mxu0 %v2637
  %2892 = vmatpush.bf16.msra.mxu0 %v2629
  %2893 = vmatmul.bf16.gmra.mxu0 %v1281
  %v2894 = vpop.f32.mrf.mxu0
  %v2895 = vadd.f32 %v2882, %v2894
  %v2896 = vpop.f32.mrf.mxu0
  %2897 = vdwg.mxu0
  %2898 = vmatpush.bf16.msra.mxu0 %v2494
  %2899 = vmatpush.bf16.msra.mxu0 %v2486
  %2900 = vmatpush.bf16.msra.mxu0 %v2478
  %2901 = vmatpush.bf16.msra.mxu0 %v2470
  %2902 = vmatpush.bf16.msra.mxu0 %v2462
  %2903 = vmatpush.bf16.msra.mxu0 %v2454
  %2904 = vmatpush.bf16.msra.mxu0 %v2446
  %2905 = vmatpush.bf16.msra.mxu0 %v2438
  %2906 = vmatmul.bf16.gmra.mxu0 %v1278
  %v2907 = vpop.f32.mrf.mxu0
  %v2908 = vadd.f32 0.0, %v2907
  %v2909 = vpop.f32.mrf.mxu0
  %2910 = vdwg.mxu0
  %2911 = vmatpush.bf16.msra.mxu0 %v2558
  %2912 = vmatpush.bf16.msra.mxu0 %v2550
  %2913 = vmatpush.bf16.msra.mxu0 %v2542
  %2914 = vmatpush.bf16.msra.mxu0 %v2534
  %2915 = vmatpush.bf16.msra.mxu0 %v2526
  %2916 = vmatpush.bf16.msra.mxu0 %v2518
  %2917 = vmatpush.bf16.msra.mxu0 %v2510
  %2918 = vmatpush.bf16.msra.mxu0 %v2502
  %2919 = vmatmul.bf16.gmra.mxu0 %v1279
  %v2920 = vpop.f32.mrf.mxu0
  %v2921 = vadd.f32 %v2908, %v2920
  %v2922 = vpop.f32.mrf.mxu0
  %2923 = vdwg.mxu0
  %2924 = vmatpush.bf16.msra.mxu0 %v2622
  %2925 = vmatpush.bf16.msra.mxu0 %v2614
  %2926 = vmatpush.bf16.msra.mxu0 %v2606
  %2927 = vmatpush.bf16.msra.mxu0 %v2598
  %2928 = vmatpush.bf16.msra.mxu0 %v2590
  %2929 = vmatpush.bf16.msra.mxu0 %v2582
  %2930 = vmatpush.bf16.msra.mxu0 %v2574
  %2931 = vmatpush.bf16.msra.mxu0 %v2566
  %2932 = vmatmul.bf16.gmra.mxu0 %v1280
  %v2933 = vpop.f32.mrf.mxu0
  %v2934 = vadd.f32 %v2921, %v2933
  %v2935 = vpop.f32.mrf.mxu0
  %2936 = vdwg.mxu0
  %2937 = vmatpush.bf16.msra.mxu0 %v2686
  %2938 = vmatpush.bf16.msra.mxu0 %v2678
  %2939 = vmatpush.bf16.msra.mxu0 %v2670
  %2940 = vmatpush.bf16.msra.mxu0 %v2662
  %2941 = vmatpush.bf16.msra.mxu0 %v2654
  %2942 = vmatpush.bf16.msra.mxu0 %v2646
  %2943 = vmatpush.bf16.msra.mxu0 %v2638
  %2944 = vmatpush.bf16.msra.mxu0 %v2630
  %2945 = vmatmul.bf16.gmra.mxu0 %v1281
  %v2946 = vpop.f32.mrf.mxu0
  %v2947 = vadd.f32 %v2934, %v2946
  %v2948 = vpop.f32.mrf.mxu0
  %2949 = vdwg.mxu0
  %2950 = vmatpush.bf16.msra.mxu0 %v2495
  %2951 = vmatpush.bf16.msra.mxu0 %v2487
  %2952 = vmatpush.bf16.msra.mxu0 %v2479
  %2953 = vmatpush.bf16.msra.mxu0 %v2471
  %2954 = vmatpush.bf16.msra.mxu0 %v2463
  %2955 = vmatpush.bf16.msra.mxu0 %v2455
  %2956 = vmatpush.bf16.msra.mxu0 %v2447
  %2957 = vmatpush.bf16.msra.mxu0 %v2439
  %2958 = vmatmul.bf16.gmra.mxu0 %v1278
  %v2959 = vpop.f32.mrf.mxu0
  %v2960 = vadd.f32 0.0, %v2959
  %v2961 = vpop.f32.mrf.mxu0
  %2962 = vdwg.mxu0
  %2963 = vmatpush.bf16.msra.mxu0 %v2559
  %2964 = vmatpush.bf16.msra.mxu0 %v2551
  %2965 = vmatpush.bf16.msra.mxu0 %v2543
  %2966 = vmatpush.bf16.msra.mxu0 %v2535
  %2967 = vmatpush.bf16.msra.mxu0 %v2527
  %2968 = vmatpush.bf16.msra.mxu0 %v2519
  %2969 = vmatpush.bf16.msra.mxu0 %v2511
  %2970 = vmatpush.bf16.msra.mxu0 %v2503
  %2971 = vmatmul.bf16.gmra.mxu0 %v1279
  %v2972 = vpop.f32.mrf.mxu0
  %v2973 = vadd.f32 %v2960, %v2972
  %v2974 = vpop.f32.mrf.mxu0
  %2975 = vdwg.mxu0
  %2976 = vmatpush.bf16.msra.mxu0 %v2623
  %2977 = vmatpush.bf16.msra.mxu0 %v2615
  %2978 = vmatpush.bf16.msra.mxu0 %v2607
  %2979 = vmatpush.bf16.msra.mxu0 %v2599
  %2980 = vmatpush.bf16.msra.mxu0 %v2591
  %2981 = vmatpush.bf16.msra.mxu0 %v2583
  %2982 = vmatpush.bf16.msra.mxu0 %v2575
  %2983 = vmatpush.bf16.msra.mxu0 %v2567
  %2984 = vmatmul.bf16.gmra.mxu0 %v1280
  %v2985 = vpop.f32.mrf.mxu0
  %v2986 = vadd.f32 %v2973, %v2985
  %v2987 = vpop.f32.mrf.mxu0
  %2988 = vdwg.mxu0
  %2989 = vmatpush.bf16.msra.mxu0 %v2687
  %2990 = vmatpush.bf16.msra.mxu0 %v2679
  %2991 = vmatpush.bf16.msra.mxu0 %v2671
  %2992 = vmatpush.bf16.msra.mxu0 %v2663
  %2993 = vmatpush.bf16.msra.mxu0 %v2655
  %2994 = vmatpush.bf16.msra.mxu0 %v2647
  %2995 = vmatpush.bf16.msra.mxu0 %v2639
  %2996 = vmatpush.bf16.msra.mxu0 %v2631
  %2997 = vmatmul.bf16.gmra.mxu0 %v1281
  %v2998 = vpop.f32.mrf.mxu0
  %v2999 = vadd.f32 %v2986, %v2998
  %v3000 = vpop.f32.mrf.mxu0
  %3001 = vdwg.mxu0
  %3002 = vmatpush.bf16.msra.mxu0 %v2496
  %3003 = vmatpush.bf16.msra.mxu0 %v2488
  %3004 = vmatpush.bf16.msra.mxu0 %v2480
  %3005 = vmatpush.bf16.msra.mxu0 %v2472
  %3006 = vmatpush.bf16.msra.mxu0 %v2464
  %3007 = vmatpush.bf16.msra.mxu0 %v2456
  %3008 = vmatpush.bf16.msra.mxu0 %v2448
  %3009 = vmatpush.bf16.msra.mxu0 %v2440
  %3010 = vmatmul.bf16.gmra.mxu0 %v1278
  %v3011 = vpop.f32.mrf.mxu0
  %v3012 = vadd.f32 0.0, %v3011
  %v3013 = vpop.f32.mrf.mxu0
  %3014 = vdwg.mxu0
  %3015 = vmatpush.bf16.msra.mxu0 %v2560
  %3016 = vmatpush.bf16.msra.mxu0 %v2552
  %3017 = vmatpush.bf16.msra.mxu0 %v2544
  %3018 = vmatpush.bf16.msra.mxu0 %v2536
  %3019 = vmatpush.bf16.msra.mxu0 %v2528
  %3020 = vmatpush.bf16.msra.mxu0 %v2520
  %3021 = vmatpush.bf16.msra.mxu0 %v2512
  %3022 = vmatpush.bf16.msra.mxu0 %v2504
  %3023 = vmatmul.bf16.gmra.mxu0 %v1279
  %v3024 = vpop.f32.mrf.mxu0
  %v3025 = vadd.f32 %v3012, %v3024
  %v3026 = vpop.f32.mrf.mxu0
  %3027 = vdwg.mxu0
  %3028 = vmatpush.bf16.msra.mxu0 %v2624
  %3029 = vmatpush.bf16.msra.mxu0 %v2616
  %3030 = vmatpush.bf16.msra.mxu0 %v2608
  %3031 = vmatpush.bf16.msra.mxu0 %v2600
  %3032 = vmatpush.bf16.msra.mxu0 %v2592
  %3033 = vmatpush.bf16.msra.mxu0 %v2584
  %3034 = vmatpush.bf16.msra.mxu0 %v2576
  %3035 = vmatpush.bf16.msra.mxu0 %v2568
  %3036 = vmatmul.bf16.gmra.mxu0 %v1280
  %v3037 = vpop.f32.mrf.mxu0
  %v3038 = vadd.f32 %v3025, %v3037
  %v3039 = vpop.f32.mrf.mxu0
  %3040 = vdwg.mxu0
  %3041 = vmatpush.bf16.msra.mxu0 %v2688
  %3042 = vmatpush.bf16.msra.mxu0 %v2680
  %3043 = vmatpush.bf16.msra.mxu0 %v2672
  %3044 = vmatpush.bf16.msra.mxu0 %v2664
  %3045 = vmatpush.bf16.msra.mxu0 %v2656
  %3046 = vmatpush.bf16.msra.mxu0 %v2648
  %3047 = vmatpush.bf16.msra.mxu0 %v2640
  %3048 = vmatpush.bf16.msra.mxu0 %v2632
  %3049 = vmatmul.bf16.gmra.mxu0 %v1281
  %v3050 = vpop.f32.mrf.mxu0
  %v3051 = vadd.f32 %v3038, %v3050
  %v3052 = vpop.f32.mrf.mxu0
  %3053 = vdwg.mxu0
  %3054 = vmatpush.bf16.msra.mxu0 %v2497
  %3055 = vmatpush.bf16.msra.mxu0 %v2489
  %3056 = vmatpush.bf16.msra.mxu0 %v2481
  %3057 = vmatpush.bf16.msra.mxu0 %v2473
  %3058 = vmatpush.bf16.msra.mxu0 %v2465
  %3059 = vmatpush.bf16.msra.mxu0 %v2457
  %3060 = vmatpush.bf16.msra.mxu0 %v2449
  %3061 = vmatpush.bf16.msra.mxu0 %v2441
  %3062 = vmatmul.bf16.gmra.mxu0 %v1278
  %v3063 = vpop.f32.mrf.mxu0
  %v3064 = vadd.f32 0.0, %v3063
  %v3065 = vpop.f32.mrf.mxu0
  %3066 = vdwg.mxu0
  %3067 = vmatpush.bf16.msra.mxu0 %v2561
  %3068 = vmatpush.bf16.msra.mxu0 %v2553
  %3069 = vmatpush.bf16.msra.mxu0 %v2545
  %3070 = vmatpush.bf16.msra.mxu0 %v2537
  %3071 = vmatpush.bf16.msra.mxu0 %v2529
  %3072 = vmatpush.bf16.msra.mxu0 %v2521
  %3073 = vmatpush.bf16.msra.mxu0 %v2513
  %3074 = vmatpush.bf16.msra.mxu0 %v2505
  %3075 = vmatmul.bf16.gmra.mxu0 %v1279
  %v3076 = vpop.f32.mrf.mxu0
  %v3077 = vadd.f32 %v3064, %v3076
  %v3078 = vpop.f32.mrf.mxu0
  %3079 = vdwg.mxu0
  %3080 = vmatpush.bf16.msra.mxu0 %v2625
  %3081 = vmatpush.bf16.msra.mxu0 %v2617
  %3082 = vmatpush.bf16.msra.mxu0 %v2609
  %3083 = vmatpush.bf16.msra.mxu0 %v2601
  %3084 = vmatpush.bf16.msra.mxu0 %v2593
  %3085 = vmatpush.bf16.msra.mxu0 %v2585
  %3086 = vmatpush.bf16.msra.mxu0 %v2577
  %3087 = vmatpush.bf16.msra.mxu0 %v2569
  %3088 = vmatmul.bf16.gmra.mxu0 %v1280
  %v3089 = vpop.f32.mrf.mxu0
  %v3090 = vadd.f32 %v3077, %v3089
  %v3091 = vpop.f32.mrf.mxu0
  %3092 = vdwg.mxu0
  %3093 = vmatpush.bf16.msra.mxu0 %v2689
  %3094 = vmatpush.bf16.msra.mxu0 %v2681
  %3095 = vmatpush.bf16.msra.mxu0 %v2673
  %3096 = vmatpush.bf16.msra.mxu0 %v2665
  %3097 = vmatpush.bf16.msra.mxu0 %v2657
  %3098 = vmatpush.bf16.msra.mxu0 %v2649
  %3099 = vmatpush.bf16.msra.mxu0 %v2641
  %3100 = vmatpush.bf16.msra.mxu0 %v2633
  %3101 = vmatmul.bf16.gmra.mxu0 %v1281
  %v3102 = vpop.f32.mrf.mxu0
  %v3103 = vadd.f32 %v3090, %v3102
  %v3104 = vpop.f32.mrf.mxu0
  %3105 = vdwg.mxu0
  %v3106 = vld [vmem:[%s7 + $0x7] sm:$0xff]
  %v3107 = vld [vmem:[%s7 + $0x16] sm:$0xff]
  %v3108 = vrot.slane %v2739, 4
  %v3109 = vadd.f32 %v2739, %v3108
  %v3110 = vrot.slane %v3109, 2
  %v3111 = vadd.f32 %v3109, %v3110
  %v3112 = vrot.slane %v3111, 1
  %v3113 = vadd.f32 %v3111, %v3112
  %v3114 = vrot.slane %v2791, 4
  %v3115 = vadd.f32 %v2791, %v3114
  %v3116 = vrot.slane %v3115, 2
  %v3117 = vadd.f32 %v3115, %v3116
  %v3118 = vrot.slane %v3117, 1
  %v3119 = vadd.f32 %v3117, %v3118
  %v3120 = vrot.slane %v2843, 4
  %v3121 = vadd.f32 %v2843, %v3120
  %v3122 = vrot.slane %v3121, 2
  %v3123 = vadd.f32 %v3121, %v3122
  %v3124 = vrot.slane %v3123, 1
  %v3125 = vadd.f32 %v3123, %v3124
  %v3126 = vrot.slane %v2895, 4
  %v3127 = vadd.f32 %v2895, %v3126
  %v3128 = vrot.slane %v3127, 2
  %v3129 = vadd.f32 %v3127, %v3128
  %v3130 = vrot.slane %v3129, 1
  %v3131 = vadd.f32 %v3129, %v3130
  %v3132 = vrot.slane %v2947, 4
  %v3133 = vadd.f32 %v2947, %v3132
  %v3134 = vrot.slane %v3133, 2
  %v3135 = vadd.f32 %v3133, %v3134
  %v3136 = vrot.slane %v3135, 1
  %v3137 = vadd.f32 %v3135, %v3136
  %v3138 = vrot.slane %v2999, 4
  %v3139 = vadd.f32 %v2999, %v3138
  %v3140 = vrot.slane %v3139, 2
  %v3141 = vadd.f32 %v3139, %v3140
  %v3142 = vrot.slane %v3141, 1
  %v3143 = vadd.f32 %v3141, %v3142
  %v3144 = vrot.slane %v3051, 4
  %v3145 = vadd.f32 %v3051, %v3144
  %v3146 = vrot.slane %v3145, 2
  %v3147 = vadd.f32 %v3145, %v3146
  %v3148 = vrot.slane %v3147, 1
  %v3149 = vadd.f32 %v3147, %v3148
  %v3150 = vrot.slane %v3103, 4
  %v3151 = vadd.f32 %v3103, %v3150
  %v3152 = vrot.slane %v3151, 2
  %v3153 = vadd.f32 %v3151, %v3152
  %v3154 = vrot.slane %v3153, 1
  %v3155 = vadd.f32 %v3153, %v3154
  %v3156 = vmul.f32 %v3113, %v146
  %v3157 = vmul.f32 %v3119, %v146
  %v3158 = vmul.f32 %v3125, %v146
  %v3159 = vmul.f32 %v3131, %v146
  %v3160 = vmul.f32 %v3137, %v146
  %v3161 = vmul.f32 %v3143, %v146
  %v3162 = vmul.f32 %v3149, %v146
  %v3163 = vmul.f32 %v3155, %v146
  %v3164 = vsub.f32 %v2739, %v3156
  %v3165 = vsub.f32 %v2791, %v3157
  %v3166 = vsub.f32 %v2843, %v3158
  %v3167 = vsub.f32 %v2895, %v3159
  %v3168 = vsub.f32 %v2947, %v3160
  %v3169 = vsub.f32 %v2999, %v3161
  %v3170 = vsub.f32 %v3051, %v3162
  %v3171 = vsub.f32 %v3103, %v3163
  %v3172 = vmul.f32 %v3164, %v3164
  %v3173 = vmul.f32 %v3165, %v3165
  %v3174 = vmul.f32 %v3166, %v3166
  %v3175 = vmul.f32 %v3167, %v3167
  %v3176 = vmul.f32 %v3168, %v3168
  %v3177 = vmul.f32 %v3169, %v3169
  %v3178 = vmul.f32 %v3170, %v3170
  %v3179 = vmul.f32 %v3171, %v3171
  %v3180 = vrot.slane %v3172, 4
  %v3181 = vadd.f32 %v3172, %v3180
  %v3182 = vrot.slane %v3181, 2
  %v3183 = vadd.f32 %v3181, %v3182
  %v3184 = vrot.slane %v3183, 1
  %v3185 = vadd.f32 %v3183, %v3184
  %v3186 = vrot.slane %v3173, 4
  %v3187 = vadd.f32 %v3173, %v3186
  %v3188 = vrot.slane %v3187, 2
  %v3189 = vadd.f32 %v3187, %v3188
  %v3190 = vrot.slane %v3189, 1
  %v3191 = vadd.f32 %v3189, %v3190
  %v3192 = vrot.slane %v3174, 4
  %v3193 = vadd.f32 %v3174, %v3192
  %v3194 = vrot.slane %v3193, 2
  %v3195 = vadd.f32 %v3193, %v3194
  %v3196 = vrot.slane %v3195, 1
  %v3197 = vadd.f32 %v3195, %v3196
  %v3198 = vrot.slane %v3175, 4
  %v3199 = vadd.f32 %v3175, %v3198
  %v3200 = vrot.slane %v3199, 2
  %v3201 = vadd.f32 %v3199, %v3200
  %v3202 = vrot.slane %v3201, 1
  %v3203 = vadd.f32 %v3201, %v3202
  %v3204 = vrot.slane %v3176, 4
  %v3205 = vadd.f32 %v3176, %v3204
  %v3206 = vrot.slane %v3205, 2
  %v3207 = vadd.f32 %v3205, %v3206
  %v3208 = vrot.slane %v3207, 1
  %v3209 = vadd.f32 %v3207, %v3208
  %v3210 = vrot.slane %v3177, 4
  %v3211 = vadd.f32 %v3177, %v3210
  %v3212 = vrot.slane %v3211, 2
  %v3213 = vadd.f32 %v3211, %v3212
  %v3214 = vrot.slane %v3213, 1
  %v3215 = vadd.f32 %v3213, %v3214
  %v3216 = vrot.slane %v3178, 4
  %v3217 = vadd.f32 %v3178, %v3216
  %v3218 = vrot.slane %v3217, 2
  %v3219 = vadd.f32 %v3217, %v3218
  %v3220 = vrot.slane %v3219, 1
  %v3221 = vadd.f32 %v3219, %v3220
  %v3222 = vrot.slane %v3179, 4
  %v3223 = vadd.f32 %v3179, %v3222
  %v3224 = vrot.slane %v3223, 2
  %v3225 = vadd.f32 %v3223, %v3224
  %v3226 = vrot.slane %v3225, 1
  %v3227 = vadd.f32 %v3225, %v3226
  %v3228 = vmul.f32 %v3185, %v146
  %v3229 = vmul.f32 %v3191, %v146
  %v3230 = vmul.f32 %v3197, %v146
  %v3231 = vmul.f32 %v3203, %v146
  %v3232 = vmul.f32 %v3209, %v146
  %v3233 = vmul.f32 %v3215, %v146
  %v3234 = vmul.f32 %v3221, %v146
  %v3235 = vmul.f32 %v3227, %v146
  %v3236 = vadd.f32 %v3228, 1e-05
  %v3237 = vadd.f32 %v3229, 1e-05
  %v3238 = vadd.f32 %v3230, 1e-05
  %v3239 = vadd.f32 %v3231, 1e-05
  %v3240 = vadd.f32 %v3232, 1e-05
  %v3241 = vadd.f32 %v3233, 1e-05
  %v3242 = vadd.f32 %v3234, 1e-05
  %v3243 = vadd.f32 %v3235, 1e-05
  %v3244 = vrsqrt.pop %v3236
  %v3245 = vmul.f32 %v3244, %v3236
  %v3246 = vmul.f32 %v3245, %v3244
  %v3247 = vmul.f32 0.5, %v3246
  %v3248 = vsub.f32 1.5, %v3247
  %v3249 = vmul.f32 %v3244, %v3248
  %vm3250 = vweird.f32 %v3236
  %vm3251 = vweird.f32 %v3244
  %vm3252 = vmor %vm3250, %vm3251
  %v3253 = vsel %vm3252, %v3244, %v3249
  %v3254 = vrsqrt.pop %v3237
  %v3255 = vmul.f32 %v3254, %v3237
  %v3256 = vmul.f32 %v3255, %v3254
  %v3257 = vmul.f32 0.5, %v3256
  %v3258 = vsub.f32 1.5, %v3257
  %v3259 = vmul.f32 %v3254, %v3258
  %vm3260 = vweird.f32 %v3237
  %vm3261 = vweird.f32 %v3254
  %vm3262 = vmor %vm3260, %vm3261
  %v3263 = vsel %vm3262, %v3254, %v3259
  %v3264 = vrsqrt.pop %v3238
  %v3265 = vmul.f32 %v3264, %v3238
  %v3266 = vmul.f32 %v3265, %v3264
  %v3267 = vmul.f32 0.5, %v3266
  %v3268 = vsub.f32 1.5, %v3267
  %v3269 = vmul.f32 %v3264, %v3268
  %vm3270 = vweird.f32 %v3238
  %vm3271 = vweird.f32 %v3264
  %vm3272 = vmor %vm3270, %vm3271
  %v3273 = vsel %vm3272, %v3264, %v3269
  %v3274 = vrsqrt.pop %v3239
  %v3275 = vmul.f32 %v3274, %v3239
  %v3276 = vmul.f32 %v3275, %v3274
  %v3277 = vmul.f32 0.5, %v3276
  %v3278 = vsub.f32 1.5, %v3277
  %v3279 = vmul.f32 %v3274, %v3278
  %vm3280 = vweird.f32 %v3239
  %vm3281 = vweird.f32 %v3274
  %vm3282 = vmor %vm3280, %vm3281
  %v3283 = vsel %vm3282, %v3274, %v3279
  %v3284 = vrsqrt.pop %v3240
  %v3285 = vmul.f32 %v3284, %v3240
  %v3286 = vmul.f32 %v3285, %v3284
  %v3287 = vmul.f32 0.5, %v3286
  %v3288 = vsub.f32 1.5, %v3287
  %v3289 = vmul.f32 %v3284, %v3288
  %vm3290 = vweird.f32 %v3240
  %vm3291 = vweird.f32 %v3284
  %vm3292 = vmor %vm3290, %vm3291
  %v3293 = vsel %vm3292, %v3284, %v3289
  %v3294 = vrsqrt.pop %v3241
  %v3295 = vmul.f32 %v3294, %v3241
  %v3296 = vmul.f32 %v3295, %v3294
  %v3297 = vmul.f32 0.5, %v3296
  %v3298 = vsub.f32 1.5, %v3297
  %v3299 = vmul.f32 %v3294, %v3298
  %vm3300 = vweird.f32 %v3241
  %vm3301 = vweird.f32 %v3294
  %vm3302 = vmor %vm3300, %vm3301
  %v3303 = vsel %vm3302, %v3294, %v3299
  %v3304 = vrsqrt.pop %v3242
  %v3305 = vmul.f32 %v3304, %v3242
  %v3306 = vmul.f32 %v3305, %v3304
  %v3307 = vmul.f32 0.5, %v3306
  %v3308 = vsub.f32 1.5, %v3307
  %v3309 = vmul.f32 %v3304, %v3308
  %vm3310 = vweird.f32 %v3242
  %vm3311 = vweird.f32 %v3304
  %vm3312 = vmor %vm3310, %vm3311
  %v3313 = vsel %vm3312, %v3304, %v3309
  %v3314 = vrsqrt.pop %v3243
  %v3315 = vmul.f32 %v3314, %v3243
  %v3316 = vmul.f32 %v3315, %v3314
  %v3317 = vmul.f32 0.5, %v3316
  %v3318 = vsub.f32 1.5, %v3317
  %v3319 = vmul.f32 %v3314, %v3318
  %vm3320 = vweird.f32 %v3243
  %vm3321 = vweird.f32 %v3314
  %vm3322 = vmor %vm3320, %vm3321
  %v3323 = vsel %vm3322, %v3314, %v3319
  %v3324 = vmul.f32 %v3164, %v3253
  %v3325 = vmul.f32 %v3165, %v3263
  %v3326 = vmul.f32 %v3166, %v3273
  %v3327 = vmul.f32 %v3167, %v3283
  %v3328 = vmul.f32 %v3168, %v3293
  %v3329 = vmul.f32 %v3169, %v3303
  %v3330 = vmul.f32 %v3170, %v3313
  %v3331 = vmul.f32 %v3171, %v3323
  %v3333 = vperm.slane %v3106, 0
  %v3334 = vperm.slane %v3106, 1
  %v3335 = vperm.slane %v3106, 2
  %v3336 = vperm.slane %v3106, 3
  %v3337 = vperm.slane %v3106, 4
  %v3338 = vperm.slane %v3106, 5
  %v3339 = vperm.slane %v3106, 6
  %v3340 = vperm.slane %v3106, 7
  %v3349 = vmul.f32 %v3324, %v3333
  %v3350 = vmul.f32 %v3325, %v3334
  %v3351 = vmul.f32 %v3326, %v3335
  %v3352 = vmul.f32 %v3327, %v3336
  %v3353 = vmul.f32 %v3328, %v3337
  %v3354 = vmul.f32 %v3329, %v3338
  %v3355 = vmul.f32 %v3330, %v3339
  %v3356 = vmul.f32 %v3331, %v3340
  %v3358 = vperm.slane %v3107, 0
  %v3359 = vperm.slane %v3107, 1
  %v3360 = vperm.slane %v3107, 2
  %v3361 = vperm.slane %v3107, 3
  %v3362 = vperm.slane %v3107, 4
  %v3363 = vperm.slane %v3107, 5
  %v3364 = vperm.slane %v3107, 6
  %v3365 = vperm.slane %v3107, 7
  %v3374 = vadd.f32 %v3349, %v3358
  %v3375 = vadd.f32 %v3350, %v3359
  %v3376 = vadd.f32 %v3351, %v3360
  %v3377 = vadd.f32 %v3352, %v3361
  %v3378 = vadd.f32 %v3353, %v3362
  %v3379 = vadd.f32 %v3354, %v3363
  %v3380 = vadd.f32 %v3355, %v3364
  %v3381 = vadd.f32 %v3356, %v3365
  %v3382 = vmul.f32 %v3374, 0.5
  %v3383 = vmul.f32 %v3375, 0.5
  %v3384 = vmul.f32 %v3376, 0.5
  %v3385 = vmul.f32 %v3377, 0.5
  %v3386 = vmul.f32 %v3378, 0.5
  %v3387 = vmul.f32 %v3379, 0.5
  %v3388 = vmul.f32 %v3380, 0.5
  %v3389 = vmul.f32 %v3381, 0.5
  %v3390 = vmul.f32 %v3374, 0.70710677
  %v3391 = vmul.f32 %v3375, 0.70710677
  %v3392 = vmul.f32 %v3376, 0.70710677
  %v3393 = vmul.f32 %v3377, 0.70710677
  %v3394 = vmul.f32 %v3378, 0.70710677
  %v3395 = vmul.f32 %v3379, 0.70710677
  %v3396 = vmul.f32 %v3380, 0.70710677
  %v3397 = vmul.f32 %v3381, 0.70710677
  %v3398 = vmul.f32 %v3390, %v3390
  %v3399 = vmin.f32 16.0, %v3398
  %v3400 = vmul.f32 %v3399, 2.1237322e-06
  %v3401 = vadd.f32 %v3400, 0.00028619796
  %v3402 = vmul.f32 %v3399, %v3401
  %v3403 = vadd.f32 %v3402, 0.0036580483
  %v3404 = vmul.f32 %v3399, %v3403
  %v3405 = vadd.f32 %v3404, 0.05243302
  %v3406 = vmul.f32 %v3399, %v3405
  %v3407 = vadd.f32 %v3406, 0.18741608
  %v3408 = vmul.f32 %v3399, %v3407
  %v3409 = vadd.f32 %v3408, 1.1283791
  %v3410 = vmul.f32 %v3390, %v3409
  %v3411 = vmul.f32 %v3399, 3.8918573e-05
  %v3412 = vadd.f32 %v3411, 0.001143296
  %v3413 = vmul.f32 %v3399, %v3412
  %v3414 = vadd.f32 %v3413, 0.014752088
  %v3415 = vmul.f32 %v3399, %v3414
  %v3416 = vadd.f32 %v3415, 0.112945676
  %v3417 = vmul.f32 %v3399, %v3416
  %v3418 = vadd.f32 %v3417, 0.4994258
  %v3419 = vmul.f32 %v3399, %v3418
  %v3420 = vadd.f32 %v3419, 1.0
  %v3421 = vrcp.pop %v3420
  %v3422 = vmul.f32 %v3420, %v3421
  %v3423 = vsub.f32 1.0, %v3422
  %v3424 = vmul.f32 %v3421, %v3423
  %v3425 = vadd.f32 %v3421, %v3424
  %vm3426 = vweird.f32 %v3420
  %vm3427 = vweird.f32 %v3421
  %vm3428 = vmor %vm3426, %vm3427
  %v3429 = vsel %vm3428, %v3421, %v3425
  %v3430 = vand.u32 2147483647, %v3420
  %vm3431 = vcmp.eq.f32.partialorder %v3430, 8.507059e+37
  %v3432 = vand.u32 %v3420, 2147483648
  %v3433 = vor.u32 1.1754944e-38, %v3432
  %v3434 = vsel %vm3431, %v3433, %v3429
  %v3435 = vmul.f32 %v3410, %v3434
  %v3436 = vmin.f32 %v3435, 1.0
  %v3437 = vmax.f32 %v3436, -1.0
  %v3438 = vmul.f32 %v3391, %v3391
  %v3439 = vmin.f32 16.0, %v3438
  %v3440 = vmul.f32 %v3439, 2.1237322e-06
  %v3441 = vadd.f32 %v3440, 0.00028619796
  %v3442 = vmul.f32 %v3439, %v3441
  %v3443 = vadd.f32 %v3442, 0.0036580483
  %v3444 = vmul.f32 %v3439, %v3443
  %v3445 = vadd.f32 %v3444, 0.05243302
  %v3446 = vmul.f32 %v3439, %v3445
  %v3447 = vadd.f32 %v3446, 0.18741608
  %v3448 = vmul.f32 %v3439, %v3447
  %v3449 = vadd.f32 %v3448, 1.1283791
  %v3450 = vmul.f32 %v3391, %v3449
  %v3451 = vmul.f32 %v3439, 3.8918573e-05
  %v3452 = vadd.f32 %v3451, 0.001143296
  %v3453 = vmul.f32 %v3439, %v3452
  %v3454 = vadd.f32 %v3453, 0.014752088
  %v3455 = vmul.f32 %v3439, %v3454
  %v3456 = vadd.f32 %v3455, 0.112945676
  %v3457 = vmul.f32 %v3439, %v3456
  %v3458 = vadd.f32 %v3457, 0.4994258
  %v3459 = vmul.f32 %v3439, %v3458
  %v3460 = vadd.f32 %v3459, 1.0
  %v3461 = vrcp.pop %v3460
  %v3462 = vmul.f32 %v3460, %v3461
  %v3463 = vsub.f32 1.0, %v3462
  %v3464 = vmul.f32 %v3461, %v3463
  %v3465 = vadd.f32 %v3461, %v3464
  %vm3466 = vweird.f32 %v3460
  %vm3467 = vweird.f32 %v3461
  %vm3468 = vmor %vm3466, %vm3467
  %v3469 = vsel %vm3468, %v3461, %v3465
  %v3470 = vand.u32 2147483647, %v3460
  %vm3471 = vcmp.eq.f32.partialorder %v3470, 8.507059e+37
  %v3472 = vand.u32 %v3460, 2147483648
  %v3473 = vor.u32 1.1754944e-38, %v3472
  %v3474 = vsel %vm3471, %v3473, %v3469
  %v3475 = vmul.f32 %v3450, %v3474
  %v3476 = vmin.f32 %v3475, 1.0
  %v3477 = vmax.f32 %v3476, -1.0
  %v3478 = vmul.f32 %v3392, %v3392
  %v3479 = vmin.f32 16.0, %v3478
  %v3480 = vmul.f32 %v3479, 2.1237322e-06
  %v3481 = vadd.f32 %v3480, 0.00028619796
  %v3482 = vmul.f32 %v3479, %v3481
  %v3483 = vadd.f32 %v3482, 0.0036580483
  %v3484 = vmul.f32 %v3479, %v3483
  %v3485 = vadd.f32 %v3484, 0.05243302
  %v3486 = vmul.f32 %v3479, %v3485
  %v3487 = vadd.f32 %v3486, 0.18741608
  %v3488 = vmul.f32 %v3479, %v3487
  %v3489 = vadd.f32 %v3488, 1.1283791
  %v3490 = vmul.f32 %v3392, %v3489
  %v3491 = vmul.f32 %v3479, 3.8918573e-05
  %v3492 = vadd.f32 %v3491, 0.001143296
  %v3493 = vmul.f32 %v3479, %v3492
  %v3494 = vadd.f32 %v3493, 0.014752088
  %v3495 = vmul.f32 %v3479, %v3494
  %v3496 = vadd.f32 %v3495, 0.112945676
  %v3497 = vmul.f32 %v3479, %v3496
  %v3498 = vadd.f32 %v3497, 0.4994258
  %v3499 = vmul.f32 %v3479, %v3498
  %v3500 = vadd.f32 %v3499, 1.0
  %v3501 = vrcp.pop %v3500
  %v3502 = vmul.f32 %v3500, %v3501
  %v3503 = vsub.f32 1.0, %v3502
  %v3504 = vmul.f32 %v3501, %v3503
  %v3505 = vadd.f32 %v3501, %v3504
  %vm3506 = vweird.f32 %v3500
  %vm3507 = vweird.f32 %v3501
  %vm3508 = vmor %vm3506, %vm3507
  %v3509 = vsel %vm3508, %v3501, %v3505
  %v3510 = vand.u32 2147483647, %v3500
  %vm3511 = vcmp.eq.f32.partialorder %v3510, 8.507059e+37
  %v3512 = vand.u32 %v3500, 2147483648
  %v3513 = vor.u32 1.1754944e-38, %v3512
  %v3514 = vsel %vm3511, %v3513, %v3509
  %v3515 = vmul.f32 %v3490, %v3514
  %v3516 = vmin.f32 %v3515, 1.0
  %v3517 = vmax.f32 %v3516, -1.0
  %v3518 = vmul.f32 %v3393, %v3393
  %v3519 = vmin.f32 16.0, %v3518
  %v3520 = vmul.f32 %v3519, 2.1237322e-06
  %v3521 = vadd.f32 %v3520, 0.00028619796
  %v3522 = vmul.f32 %v3519, %v3521
  %v3523 = vadd.f32 %v3522, 0.0036580483
  %v3524 = vmul.f32 %v3519, %v3523
  %v3525 = vadd.f32 %v3524, 0.05243302
  %v3526 = vmul.f32 %v3519, %v3525
  %v3527 = vadd.f32 %v3526, 0.18741608
  %v3528 = vmul.f32 %v3519, %v3527
  %v3529 = vadd.f32 %v3528, 1.1283791
  %v3530 = vmul.f32 %v3393, %v3529
  %v3531 = vmul.f32 %v3519, 3.8918573e-05
  %v3532 = vadd.f32 %v3531, 0.001143296
  %v3533 = vmul.f32 %v3519, %v3532
  %v3534 = vadd.f32 %v3533, 0.014752088
  %v3535 = vmul.f32 %v3519, %v3534
  %v3536 = vadd.f32 %v3535, 0.112945676
  %v3537 = vmul.f32 %v3519, %v3536
  %v3538 = vadd.f32 %v3537, 0.4994258
  %v3539 = vmul.f32 %v3519, %v3538
  %v3540 = vadd.f32 %v3539, 1.0
  %v3541 = vrcp.pop %v3540
  %v3542 = vmul.f32 %v3540, %v3541
  %v3543 = vsub.f32 1.0, %v3542
  %v3544 = vmul.f32 %v3541, %v3543
  %v3545 = vadd.f32 %v3541, %v3544
  %vm3546 = vweird.f32 %v3540
  %vm3547 = vweird.f32 %v3541
  %vm3548 = vmor %vm3546, %vm3547
  %v3549 = vsel %vm3548, %v3541, %v3545
  %v3550 = vand.u32 2147483647, %v3540
  %vm3551 = vcmp.eq.f32.partialorder %v3550, 8.507059e+37
  %v3552 = vand.u32 %v3540, 2147483648
  %v3553 = vor.u32 1.1754944e-38, %v3552
  %v3554 = vsel %vm3551, %v3553, %v3549
  %v3555 = vmul.f32 %v3530, %v3554
  %v3556 = vmin.f32 %v3555, 1.0
  %v3557 = vmax.f32 %v3556, -1.0
  %v3558 = vmul.f32 %v3394, %v3394
  %v3559 = vmin.f32 16.0, %v3558
  %v3560 = vmul.f32 %v3559, 2.1237322e-06
  %v3561 = vadd.f32 %v3560, 0.00028619796
  %v3562 = vmul.f32 %v3559, %v3561
  %v3563 = vadd.f32 %v3562, 0.0036580483
  %v3564 = vmul.f32 %v3559, %v3563
  %v3565 = vadd.f32 %v3564, 0.05243302
  %v3566 = vmul.f32 %v3559, %v3565
  %v3567 = vadd.f32 %v3566, 0.18741608
  %v3568 = vmul.f32 %v3559, %v3567
  %v3569 = vadd.f32 %v3568, 1.1283791
  %v3570 = vmul.f32 %v3394, %v3569
  %v3571 = vmul.f32 %v3559, 3.8918573e-05
  %v3572 = vadd.f32 %v3571, 0.001143296
  %v3573 = vmul.f32 %v3559, %v3572
  %v3574 = vadd.f32 %v3573, 0.014752088
  %v3575 = vmul.f32 %v3559, %v3574
  %v3576 = vadd.f32 %v3575, 0.112945676
  %v3577 = vmul.f32 %v3559, %v3576
  %v3578 = vadd.f32 %v3577, 0.4994258
  %v3579 = vmul.f32 %v3559, %v3578
  %v3580 = vadd.f32 %v3579, 1.0
  %v3581 = vrcp.pop %v3580
  %v3582 = vmul.f32 %v3580, %v3581
  %v3583 = vsub.f32 1.0, %v3582
  %v3584 = vmul.f32 %v3581, %v3583
  %v3585 = vadd.f32 %v3581, %v3584
  %vm3586 = vweird.f32 %v3580
  %vm3587 = vweird.f32 %v3581
  %vm3588 = vmor %vm3586, %vm3587
  %v3589 = vsel %vm3588, %v3581, %v3585
  %v3590 = vand.u32 2147483647, %v3580
  %vm3591 = vcmp.eq.f32.partialorder %v3590, 8.507059e+37
  %v3592 = vand.u32 %v3580, 2147483648
  %v3593 = vor.u32 1.1754944e-38, %v3592
  %v3594 = vsel %vm3591, %v3593, %v3589
  %v3595 = vmul.f32 %v3570, %v3594
  %v3596 = vmin.f32 %v3595, 1.0
  %v3597 = vmax.f32 %v3596, -1.0
  %v3598 = vmul.f32 %v3395, %v3395
  %v3599 = vmin.f32 16.0, %v3598
  %v3600 = vmul.f32 %v3599, 2.1237322e-06
  %v3601 = vadd.f32 %v3600, 0.00028619796
  %v3602 = vmul.f32 %v3599, %v3601
  %v3603 = vadd.f32 %v3602, 0.0036580483
  %v3604 = vmul.f32 %v3599, %v3603
  %v3605 = vadd.f32 %v3604, 0.05243302
  %v3606 = vmul.f32 %v3599, %v3605
  %v3607 = vadd.f32 %v3606, 0.18741608
  %v3608 = vmul.f32 %v3599, %v3607
  %v3609 = vadd.f32 %v3608, 1.1283791
  %v3610 = vmul.f32 %v3395, %v3609
  %v3611 = vmul.f32 %v3599, 3.8918573e-05
  %v3612 = vadd.f32 %v3611, 0.001143296
  %v3613 = vmul.f32 %v3599, %v3612
  %v3614 = vadd.f32 %v3613, 0.014752088
  %v3615 = vmul.f32 %v3599, %v3614
  %v3616 = vadd.f32 %v3615, 0.112945676
  %v3617 = vmul.f32 %v3599, %v3616
  %v3618 = vadd.f32 %v3617, 0.4994258
  %v3619 = vmul.f32 %v3599, %v3618
  %v3620 = vadd.f32 %v3619, 1.0
  %v3621 = vrcp.pop %v3620
  %v3622 = vmul.f32 %v3620, %v3621
  %v3623 = vsub.f32 1.0, %v3622
  %v3624 = vmul.f32 %v3621, %v3623
  %v3625 = vadd.f32 %v3621, %v3624
  %vm3626 = vweird.f32 %v3620
  %vm3627 = vweird.f32 %v3621
  %vm3628 = vmor %vm3626, %vm3627
  %v3629 = vsel %vm3628, %v3621, %v3625
  %v3630 = vand.u32 2147483647, %v3620
  %vm3631 = vcmp.eq.f32.partialorder %v3630, 8.507059e+37
  %v3632 = vand.u32 %v3620, 2147483648
  %v3633 = vor.u32 1.1754944e-38, %v3632
  %v3634 = vsel %vm3631, %v3633, %v3629
  %v3635 = vmul.f32 %v3610, %v3634
  %v3636 = vmin.f32 %v3635, 1.0
  %v3637 = vmax.f32 %v3636, -1.0
  %v3638 = vmul.f32 %v3396, %v3396
  %v3639 = vmin.f32 16.0, %v3638
  %v3640 = vmul.f32 %v3639, 2.1237322e-06
  %v3641 = vadd.f32 %v3640, 0.00028619796
  %v3642 = vmul.f32 %v3639, %v3641
  %v3643 = vadd.f32 %v3642, 0.0036580483
  %v3644 = vmul.f32 %v3639, %v3643
  %v3645 = vadd.f32 %v3644, 0.05243302
  %v3646 = vmul.f32 %v3639, %v3645
  %v3647 = vadd.f32 %v3646, 0.18741608
  %v3648 = vmul.f32 %v3639, %v3647
  %v3649 = vadd.f32 %v3648, 1.1283791
  %v3650 = vmul.f32 %v3396, %v3649
  %v3651 = vmul.f32 %v3639, 3.8918573e-05
  %v3652 = vadd.f32 %v3651, 0.001143296
  %v3653 = vmul.f32 %v3639, %v3652
  %v3654 = vadd.f32 %v3653, 0.014752088
  %v3655 = vmul.f32 %v3639, %v3654
  %v3656 = vadd.f32 %v3655, 0.112945676
  %v3657 = vmul.f32 %v3639, %v3656
  %v3658 = vadd.f32 %v3657, 0.4994258
  %v3659 = vmul.f32 %v3639, %v3658
  %v3660 = vadd.f32 %v3659, 1.0
  %v3661 = vrcp.pop %v3660
  %v3662 = vmul.f32 %v3660, %v3661
  %v3663 = vsub.f32 1.0, %v3662
  %v3664 = vmul.f32 %v3661, %v3663
  %v3665 = vadd.f32 %v3661, %v3664
  %vm3666 = vweird.f32 %v3660
  %vm3667 = vweird.f32 %v3661
  %vm3668 = vmor %vm3666, %vm3667
  %v3669 = vsel %vm3668, %v3661, %v3665
  %v3670 = vand.u32 2147483647, %v3660
  %vm3671 = vcmp.eq.f32.partialorder %v3670, 8.507059e+37
  %v3672 = vand.u32 %v3660, 2147483648
  %v3673 = vor.u32 1.1754944e-38, %v3672
  %v3674 = vsel %vm3671, %v3673, %v3669
  %v3675 = vmul.f32 %v3650, %v3674
  %v3676 = vmin.f32 %v3675, 1.0
  %v3677 = vmax.f32 %v3676, -1.0
  %v3678 = vmul.f32 %v3397, %v3397
  %v3679 = vmin.f32 16.0, %v3678
  %v3680 = vmul.f32 %v3679, 2.1237322e-06
  %v3681 = vadd.f32 %v3680, 0.00028619796
  %v3682 = vmul.f32 %v3679, %v3681
  %v3683 = vadd.f32 %v3682, 0.0036580483
  %v3684 = vmul.f32 %v3679, %v3683
  %v3685 = vadd.f32 %v3684, 0.05243302
  %v3686 = vmul.f32 %v3679, %v3685
  %v3687 = vadd.f32 %v3686, 0.18741608
  %v3688 = vmul.f32 %v3679, %v3687
  %v3689 = vadd.f32 %v3688, 1.1283791
  %v3690 = vmul.f32 %v3397, %v3689
  %v3691 = vmul.f32 %v3679, 3.8918573e-05
  %v3692 = vadd.f32 %v3691, 0.001143296
  %v3693 = vmul.f32 %v3679, %v3692
  %v3694 = vadd.f32 %v3693, 0.014752088
  %v3695 = vmul.f32 %v3679, %v3694
  %v3696 = vadd.f32 %v3695, 0.112945676
  %v3697 = vmul.f32 %v3679, %v3696
  %v3698 = vadd.f32 %v3697, 0.4994258
  %v3699 = vmul.f32 %v3679, %v3698
  %v3700 = vadd.f32 %v3699, 1.0
  %v3701 = vrcp.pop %v3700
  %v3702 = vmul.f32 %v3700, %v3701
  %v3703 = vsub.f32 1.0, %v3702
  %v3704 = vmul.f32 %v3701, %v3703
  %v3705 = vadd.f32 %v3701, %v3704
  %vm3706 = vweird.f32 %v3700
  %vm3707 = vweird.f32 %v3701
  %vm3708 = vmor %vm3706, %vm3707
  %v3709 = vsel %vm3708, %v3701, %v3705
  %v3710 = vand.u32 2147483647, %v3700
  %vm3711 = vcmp.eq.f32.partialorder %v3710, 8.507059e+37
  %v3712 = vand.u32 %v3700, 2147483648
  %v3713 = vor.u32 1.1754944e-38, %v3712
  %v3714 = vsel %vm3711, %v3713, %v3709
  %v3715 = vmul.f32 %v3690, %v3714
  %v3716 = vmin.f32 %v3715, 1.0
  %v3717 = vmax.f32 %v3716, -1.0
  %v3718 = vadd.f32 %v3437, 1.0
  %v3719 = vadd.f32 %v3477, 1.0
  %v3720 = vadd.f32 %v3517, 1.0
  %v3721 = vadd.f32 %v3557, 1.0
  %v3722 = vadd.f32 %v3597, 1.0
  %v3723 = vadd.f32 %v3637, 1.0
  %v3724 = vadd.f32 %v3677, 1.0
  %v3725 = vadd.f32 %v3717, 1.0
  %v3726 = vmul.f32 %v3382, %v3718
  %v3727 = vmul.f32 %v3383, %v3719
  %v3728 = vmul.f32 %v3384, %v3720
  %v3729 = vmul.f32 %v3385, %v3721
  %v3730 = vmul.f32 %v3386, %v3722
  %v3731 = vmul.f32 %v3387, %v3723
  %v3732 = vmul.f32 %v3388, %v3724
  %v3733 = vmul.f32 %v3389, %v3725
  %v3734 = vpack.c.bf16 %v3726, %v3726
  %v3735 = vpack.c.bf16 %v3727, %v3727
  %v3736 = vpack.c.bf16 %v3728, %v3728
  %v3737 = vpack.c.bf16 %v3729, %v3729
  %v3738 = vpack.c.bf16 %v3730, %v3730
  %v3739 = vpack.c.bf16 %v3731, %v3731
  %v3740 = vpack.c.bf16 %v3732, %v3732
  %v3741 = vpack.c.bf16 %v3733, %v3733
  %v3742 = vld [vmem:[%s6] sm:$0xff]
  %v3743 = vld [vmem:[%s6 + $0x8] sm:$0xff]
  %v3744 = vld [vmem:[%s6 + $0x10] sm:$0xff]
  %v3745 = vld [vmem:[%s6 + $0x18] sm:$0xff]
  %v3746 = vld [vmem:[%s6 + $0x20] sm:$0xff]
  %v3747 = vld [vmem:[%s6 + $0x28] sm:$0xff]
  %v3748 = vld [vmem:[%s6 + $0x30] sm:$0xff]
  %v3749 = vld [vmem:[%s6 + $0x38] sm:$0xff]
  %v3750 = vld [vmem:[%s6 + $0x40] sm:$0xff]
  %v3751 = vld [vmem:[%s6 + $0x48] sm:$0xff]
  %v3752 = vld [vmem:[%s6 + $0x50] sm:$0xff]
  %v3753 = vld [vmem:[%s6 + $0x58] sm:$0xff]
  %v3754 = vld [vmem:[%s6 + $0x60] sm:$0xff]
  %v3755 = vld [vmem:[%s6 + $0x68] sm:$0xff]
  %v3756 = vld [vmem:[%s6 + $0x70] sm:$0xff]
  %v3757 = vld [vmem:[%s6 + $0x78] sm:$0xff]
  %v3758 = vld [vmem:[%s6 + $0x80] sm:$0xff]
  %v3759 = vld [vmem:[%s6 + $0x88] sm:$0xff]
  %v3760 = vld [vmem:[%s6 + $0x90] sm:$0xff]
  %v3761 = vld [vmem:[%s6 + $0x98] sm:$0xff]
  %v3762 = vld [vmem:[%s6 + $0xa0] sm:$0xff]
  %v3763 = vld [vmem:[%s6 + $0xa8] sm:$0xff]
  %v3764 = vld [vmem:[%s6 + $0xb0] sm:$0xff]
  %v3765 = vld [vmem:[%s6 + $0xb8] sm:$0xff]
  %v3766 = vld [vmem:[%s6 + $0xc0] sm:$0xff]
  %v3767 = vld [vmem:[%s6 + $0xc8] sm:$0xff]
  %v3768 = vld [vmem:[%s6 + $0xd0] sm:$0xff]
  %v3769 = vld [vmem:[%s6 + $0xd8] sm:$0xff]
  %v3770 = vld [vmem:[%s6 + $0xe0] sm:$0xff]
  %v3771 = vld [vmem:[%s6 + $0xe8] sm:$0xff]
  %v3772 = vld [vmem:[%s6 + $0xf0] sm:$0xff]
  %v3773 = vld [vmem:[%s6 + $0xf8] sm:$0xff]
  %v3774 = vld [vmem:[%s6 + $0x100] sm:$0xff]
  %v3775 = vld [vmem:[%s6 + $0x108] sm:$0xff]
  %v3776 = vld [vmem:[%s6 + $0x110] sm:$0xff]
  %v3777 = vld [vmem:[%s6 + $0x118] sm:$0xff]
  %v3778 = vld [vmem:[%s6 + $0x120] sm:$0xff]
  %v3779 = vld [vmem:[%s6 + $0x128] sm:$0xff]
  %v3780 = vld [vmem:[%s6 + $0x130] sm:$0xff]
  %v3781 = vld [vmem:[%s6 + $0x138] sm:$0xff]
  %v3782 = vld [vmem:[%s6 + $0x140] sm:$0xff]
  %v3783 = vld [vmem:[%s6 + $0x148] sm:$0xff]
  %v3784 = vld [vmem:[%s6 + $0x150] sm:$0xff]
  %v3785 = vld [vmem:[%s6 + $0x158] sm:$0xff]
  %v3786 = vld [vmem:[%s6 + $0x160] sm:$0xff]
  %v3787 = vld [vmem:[%s6 + $0x168] sm:$0xff]
  %v3788 = vld [vmem:[%s6 + $0x170] sm:$0xff]
  %v3789 = vld [vmem:[%s6 + $0x178] sm:$0xff]
  %v3790 = vld [vmem:[%s6 + $0x180] sm:$0xff]
  %v3791 = vld [vmem:[%s6 + $0x188] sm:$0xff]
  %v3792 = vld [vmem:[%s6 + $0x190] sm:$0xff]
  %v3793 = vld [vmem:[%s6 + $0x198] sm:$0xff]
  %v3794 = vld [vmem:[%s6 + $0x1a0] sm:$0xff]
  %v3795 = vld [vmem:[%s6 + $0x1a8] sm:$0xff]
  %v3796 = vld [vmem:[%s6 + $0x1b0] sm:$0xff]
  %v3797 = vld [vmem:[%s6 + $0x1b8] sm:$0xff]
  %v3798 = vld [vmem:[%s6 + $0x1c0] sm:$0xff]
  %v3799 = vld [vmem:[%s6 + $0x1c8] sm:$0xff]
  %v3800 = vld [vmem:[%s6 + $0x1d0] sm:$0xff]
  %v3801 = vld [vmem:[%s6 + $0x1d8] sm:$0xff]
  %v3802 = vld [vmem:[%s6 + $0x1e0] sm:$0xff]
  %v3803 = vld [vmem:[%s6 + $0x1e8] sm:$0xff]
  %v3804 = vld [vmem:[%s6 + $0x1f0] sm:$0xff]
  %v3805 = vld [vmem:[%s6 + $0x1f8] sm:$0xff]
  %v3806 = vld [vmem:[%s6 + $0x200] sm:$0xff]
  %v3807 = vld [vmem:[%s6 + $0x208] sm:$0xff]
  %v3808 = vld [vmem:[%s6 + $0x210] sm:$0xff]
  %v3809 = vld [vmem:[%s6 + $0x218] sm:$0xff]
  %v3810 = vld [vmem:[%s6 + $0x220] sm:$0xff]
  %v3811 = vld [vmem:[%s6 + $0x228] sm:$0xff]
  %v3812 = vld [vmem:[%s6 + $0x230] sm:$0xff]
  %v3813 = vld [vmem:[%s6 + $0x238] sm:$0xff]
  %v3814 = vld [vmem:[%s6 + $0x240] sm:$0xff]
  %v3815 = vld [vmem:[%s6 + $0x248] sm:$0xff]
  %v3816 = vld [vmem:[%s6 + $0x250] sm:$0xff]
  %v3817 = vld [vmem:[%s6 + $0x258] sm:$0xff]
  %v3818 = vld [vmem:[%s6 + $0x260] sm:$0xff]
  %v3819 = vld [vmem:[%s6 + $0x268] sm:$0xff]
  %v3820 = vld [vmem:[%s6 + $0x270] sm:$0xff]
  %v3821 = vld [vmem:[%s6 + $0x278] sm:$0xff]
  %v3822 = vld [vmem:[%s6 + $0x280] sm:$0xff]
  %v3823 = vld [vmem:[%s6 + $0x288] sm:$0xff]
  %v3824 = vld [vmem:[%s6 + $0x290] sm:$0xff]
  %v3825 = vld [vmem:[%s6 + $0x298] sm:$0xff]
  %v3826 = vld [vmem:[%s6 + $0x2a0] sm:$0xff]
  %v3827 = vld [vmem:[%s6 + $0x2a8] sm:$0xff]
  %v3828 = vld [vmem:[%s6 + $0x2b0] sm:$0xff]
  %v3829 = vld [vmem:[%s6 + $0x2b8] sm:$0xff]
  %v3830 = vld [vmem:[%s6 + $0x2c0] sm:$0xff]
  %v3831 = vld [vmem:[%s6 + $0x2c8] sm:$0xff]
  %v3832 = vld [vmem:[%s6 + $0x2d0] sm:$0xff]
  %v3833 = vld [vmem:[%s6 + $0x2d8] sm:$0xff]
  %v3834 = vld [vmem:[%s6 + $0x2e0] sm:$0xff]
  %v3835 = vld [vmem:[%s6 + $0x2e8] sm:$0xff]
  %v3836 = vld [vmem:[%s6 + $0x2f0] sm:$0xff]
  %v3837 = vld [vmem:[%s6 + $0x2f8] sm:$0xff]
  %v3838 = vld [vmem:[%s6 + $0x300] sm:$0xff]
  %v3839 = vld [vmem:[%s6 + $0x308] sm:$0xff]
  %v3840 = vld [vmem:[%s6 + $0x310] sm:$0xff]
  %v3841 = vld [vmem:[%s6 + $0x318] sm:$0xff]
  %v3842 = vld [vmem:[%s6 + $0x320] sm:$0xff]
  %v3843 = vld [vmem:[%s6 + $0x328] sm:$0xff]
  %v3844 = vld [vmem:[%s6 + $0x330] sm:$0xff]
  %v3845 = vld [vmem:[%s6 + $0x338] sm:$0xff]
  %v3846 = vld [vmem:[%s6 + $0x340] sm:$0xff]
  %v3847 = vld [vmem:[%s6 + $0x348] sm:$0xff]
  %v3848 = vld [vmem:[%s6 + $0x350] sm:$0xff]
  %v3849 = vld [vmem:[%s6 + $0x358] sm:$0xff]
  %v3850 = vld [vmem:[%s6 + $0x360] sm:$0xff]
  %v3851 = vld [vmem:[%s6 + $0x368] sm:$0xff]
  %v3852 = vld [vmem:[%s6 + $0x370] sm:$0xff]
  %v3853 = vld [vmem:[%s6 + $0x378] sm:$0xff]
  %v3854 = vld [vmem:[%s6 + $0x380] sm:$0xff]
  %v3855 = vld [vmem:[%s6 + $0x388] sm:$0xff]
  %v3856 = vld [vmem:[%s6 + $0x390] sm:$0xff]
  %v3857 = vld [vmem:[%s6 + $0x398] sm:$0xff]
  %v3858 = vld [vmem:[%s6 + $0x3a0] sm:$0xff]
  %v3859 = vld [vmem:[%s6 + $0x3a8] sm:$0xff]
  %v3860 = vld [vmem:[%s6 + $0x3b0] sm:$0xff]
  %v3861 = vld [vmem:[%s6 + $0x3b8] sm:$0xff]
  %v3862 = vld [vmem:[%s6 + $0x3c0] sm:$0xff]
  %v3863 = vld [vmem:[%s6 + $0x3c8] sm:$0xff]
  %v3864 = vld [vmem:[%s6 + $0x3d0] sm:$0xff]
  %v3865 = vld [vmem:[%s6 + $0x3d8] sm:$0xff]
  %v3866 = vld [vmem:[%s6 + $0x3e0] sm:$0xff]
  %v3867 = vld [vmem:[%s6 + $0x3e8] sm:$0xff]
  %v3868 = vld [vmem:[%s6 + $0x3f0] sm:$0xff]
  %v3869 = vld [vmem:[%s6 + $0x3f8] sm:$0xff]
  %v3870 = vld [vmem:[%s6 + $0x400] sm:$0xff]
  %v3871 = vld [vmem:[%s6 + $0x408] sm:$0xff]
  %v3872 = vld [vmem:[%s6 + $0x410] sm:$0xff]
  %v3873 = vld [vmem:[%s6 + $0x418] sm:$0xff]
  %v3874 = vld [vmem:[%s6 + $0x420] sm:$0xff]
  %v3875 = vld [vmem:[%s6 + $0x428] sm:$0xff]
  %v3876 = vld [vmem:[%s6 + $0x430] sm:$0xff]
  %v3877 = vld [vmem:[%s6 + $0x438] sm:$0xff]
  %v3878 = vld [vmem:[%s6 + $0x440] sm:$0xff]
  %v3879 = vld [vmem:[%s6 + $0x448] sm:$0xff]
  %v3880 = vld [vmem:[%s6 + $0x450] sm:$0xff]
  %v3881 = vld [vmem:[%s6 + $0x458] sm:$0xff]
  %v3882 = vld [vmem:[%s6 + $0x460] sm:$0xff]
  %v3883 = vld [vmem:[%s6 + $0x468] sm:$0xff]
  %v3884 = vld [vmem:[%s6 + $0x470] sm:$0xff]
  %v3885 = vld [vmem:[%s6 + $0x478] sm:$0xff]
  %v3886 = vld [vmem:[%s6 + $0x480] sm:$0xff]
  %v3887 = vld [vmem:[%s6 + $0x488] sm:$0xff]
  %v3888 = vld [vmem:[%s6 + $0x490] sm:$0xff]
  %v3889 = vld [vmem:[%s6 + $0x498] sm:$0xff]
  %v3890 = vld [vmem:[%s6 + $0x4a0] sm:$0xff]
  %v3891 = vld [vmem:[%s6 + $0x4a8] sm:$0xff]
  %v3892 = vld [vmem:[%s6 + $0x4b0] sm:$0xff]
  %v3893 = vld [vmem:[%s6 + $0x4b8] sm:$0xff]
  %v3894 = vld [vmem:[%s6 + $0x4c0] sm:$0xff]
  %v3895 = vld [vmem:[%s6 + $0x4c8] sm:$0xff]
  %v3896 = vld [vmem:[%s6 + $0x4d0] sm:$0xff]
  %v3897 = vld [vmem:[%s6 + $0x4d8] sm:$0xff]
  %v3898 = vld [vmem:[%s6 + $0x4e0] sm:$0xff]
  %v3899 = vld [vmem:[%s6 + $0x4e8] sm:$0xff]
  %v3900 = vld [vmem:[%s6 + $0x4f0] sm:$0xff]
  %v3901 = vld [vmem:[%s6 + $0x4f8] sm:$0xff]
  %v3902 = vld [vmem:[%s6 + $0x500] sm:$0xff]
  %v3903 = vld [vmem:[%s6 + $0x508] sm:$0xff]
  %v3904 = vld [vmem:[%s6 + $0x510] sm:$0xff]
  %v3905 = vld [vmem:[%s6 + $0x518] sm:$0xff]
  %v3906 = vld [vmem:[%s6 + $0x520] sm:$0xff]
  %v3907 = vld [vmem:[%s6 + $0x528] sm:$0xff]
  %v3908 = vld [vmem:[%s6 + $0x530] sm:$0xff]
  %v3909 = vld [vmem:[%s6 + $0x538] sm:$0xff]
  %v3910 = vld [vmem:[%s6 + $0x540] sm:$0xff]
  %v3911 = vld [vmem:[%s6 + $0x548] sm:$0xff]
  %v3912 = vld [vmem:[%s6 + $0x550] sm:$0xff]
  %v3913 = vld [vmem:[%s6 + $0x558] sm:$0xff]
  %v3914 = vld [vmem:[%s6 + $0x560] sm:$0xff]
  %v3915 = vld [vmem:[%s6 + $0x568] sm:$0xff]
  %v3916 = vld [vmem:[%s6 + $0x570] sm:$0xff]
  %v3917 = vld [vmem:[%s6 + $0x578] sm:$0xff]
  %v3918 = vld [vmem:[%s6 + $0x580] sm:$0xff]
  %v3919 = vld [vmem:[%s6 + $0x588] sm:$0xff]
  %v3920 = vld [vmem:[%s6 + $0x590] sm:$0xff]
  %v3921 = vld [vmem:[%s6 + $0x598] sm:$0xff]
  %v3922 = vld [vmem:[%s6 + $0x5a0] sm:$0xff]
  %v3923 = vld [vmem:[%s6 + $0x5a8] sm:$0xff]
  %v3924 = vld [vmem:[%s6 + $0x5b0] sm:$0xff]
  %v3925 = vld [vmem:[%s6 + $0x5b8] sm:$0xff]
  %v3926 = vld [vmem:[%s6 + $0x5c0] sm:$0xff]
  %v3927 = vld [vmem:[%s6 + $0x5c8] sm:$0xff]
  %v3928 = vld [vmem:[%s6 + $0x5d0] sm:$0xff]
  %v3929 = vld [vmem:[%s6 + $0x5d8] sm:$0xff]
  %v3930 = vld [vmem:[%s6 + $0x5e0] sm:$0xff]
  %v3931 = vld [vmem:[%s6 + $0x5e8] sm:$0xff]
  %v3932 = vld [vmem:[%s6 + $0x5f0] sm:$0xff]
  %v3933 = vld [vmem:[%s6 + $0x5f8] sm:$0xff]
  %v3934 = vld [vmem:[%s6 + $0x600] sm:$0xff]
  %v3935 = vld [vmem:[%s6 + $0x608] sm:$0xff]
  %v3936 = vld [vmem:[%s6 + $0x610] sm:$0xff]
  %v3937 = vld [vmem:[%s6 + $0x618] sm:$0xff]
  %v3938 = vld [vmem:[%s6 + $0x620] sm:$0xff]
  %v3939 = vld [vmem:[%s6 + $0x628] sm:$0xff]
  %v3940 = vld [vmem:[%s6 + $0x630] sm:$0xff]
  %v3941 = vld [vmem:[%s6 + $0x638] sm:$0xff]
  %v3942 = vld [vmem:[%s6 + $0x640] sm:$0xff]
  %v3943 = vld [vmem:[%s6 + $0x648] sm:$0xff]
  %v3944 = vld [vmem:[%s6 + $0x650] sm:$0xff]
  %v3945 = vld [vmem:[%s6 + $0x658] sm:$0xff]
  %v3946 = vld [vmem:[%s6 + $0x660] sm:$0xff]
  %v3947 = vld [vmem:[%s6 + $0x668] sm:$0xff]
  %v3948 = vld [vmem:[%s6 + $0x670] sm:$0xff]
  %v3949 = vld [vmem:[%s6 + $0x678] sm:$0xff]
  %v3950 = vld [vmem:[%s6 + $0x680] sm:$0xff]
  %v3951 = vld [vmem:[%s6 + $0x688] sm:$0xff]
  %v3952 = vld [vmem:[%s6 + $0x690] sm:$0xff]
  %v3953 = vld [vmem:[%s6 + $0x698] sm:$0xff]
  %v3954 = vld [vmem:[%s6 + $0x6a0] sm:$0xff]
  %v3955 = vld [vmem:[%s6 + $0x6a8] sm:$0xff]
  %v3956 = vld [vmem:[%s6 + $0x6b0] sm:$0xff]
  %v3957 = vld [vmem:[%s6 + $0x6b8] sm:$0xff]
  %v3958 = vld [vmem:[%s6 + $0x6c0] sm:$0xff]
  %v3959 = vld [vmem:[%s6 + $0x6c8] sm:$0xff]
  %v3960 = vld [vmem:[%s6 + $0x6d0] sm:$0xff]
  %v3961 = vld [vmem:[%s6 + $0x6d8] sm:$0xff]
  %v3962 = vld [vmem:[%s6 + $0x6e0] sm:$0xff]
  %v3963 = vld [vmem:[%s6 + $0x6e8] sm:$0xff]
  %v3964 = vld [vmem:[%s6 + $0x6f0] sm:$0xff]
  %v3965 = vld [vmem:[%s6 + $0x6f8] sm:$0xff]
  %v3966 = vunpack.c.0.s8 %v3742
  %v3967 = vunpack.c.0.s8 %v3743
  %v3968 = vunpack.c.0.s8 %v3744
  %v3969 = vunpack.c.0.s8 %v3745
  %v3970 = vunpack.c.0.s8 %v3746
  %v3971 = vunpack.c.0.s8 %v3747
  %v3972 = vunpack.c.0.s8 %v3748
  %v3973 = vunpack.c.1.s8 %v3742
  %v3974 = vunpack.c.1.s8 %v3743
  %v3975 = vunpack.c.1.s8 %v3744
  %v3976 = vunpack.c.1.s8 %v3745
  %v3977 = vunpack.c.1.s8 %v3746
  %v3978 = vunpack.c.1.s8 %v3747
  %v3979 = vunpack.c.1.s8 %v3748
  %v3980 = vunpack.c.2.s8 %v3742
  %v3981 = vunpack.c.2.s8 %v3743
  %v3982 = vunpack.c.2.s8 %v3744
  %v3983 = vunpack.c.2.s8 %v3745
  %v3984 = vunpack.c.2.s8 %v3746
  %v3985 = vunpack.c.2.s8 %v3747
  %v3986 = vunpack.c.2.s8 %v3748
  %v3987 = vunpack.c.3.s8 %v3742
  %v3988 = vunpack.c.3.s8 %v3743
  %v3989 = vunpack.c.3.s8 %v3744
  %v3990 = vunpack.c.3.s8 %v3745
  %v3991 = vunpack.c.3.s8 %v3746
  %v3992 = vunpack.c.3.s8 %v3747
  %v3993 = vunpack.c.3.s8 %v3748
  %v3994 = vunpack.c.0.s8 %v3749
  %v3995 = vunpack.c.0.s8 %v3750
  %v3996 = vunpack.c.0.s8 %v3751
  %v3997 = vunpack.c.0.s8 %v3752
  %v3998 = vunpack.c.0.s8 %v3753
  %v3999 = vunpack.c.0.s8 %v3754
  %v4000 = vunpack.c.0.s8 %v3755
  %v4001 = vunpack.c.1.s8 %v3749
  %v4002 = vunpack.c.1.s8 %v3750
  %v4003 = vunpack.c.1.s8 %v3751
  %v4004 = vunpack.c.1.s8 %v3752
  %v4005 = vunpack.c.1.s8 %v3753
  %v4006 = vunpack.c.1.s8 %v3754
  %v4007 = vunpack.c.1.s8 %v3755
  %v4008 = vunpack.c.2.s8 %v3749
  %v4009 = vunpack.c.2.s8 %v3750
  %v4010 = vunpack.c.2.s8 %v3751
  %v4011 = vunpack.c.2.s8 %v3752
  %v4012 = vunpack.c.2.s8 %v3753
  %v4013 = vunpack.c.2.s8 %v3754
  %v4014 = vunpack.c.2.s8 %v3755
  %v4015 = vunpack.c.3.s8 %v3749
  %v4016 = vunpack.c.3.s8 %v3750
  %v4017 = vunpack.c.3.s8 %v3751
  %v4018 = vunpack.c.3.s8 %v3752
  %v4019 = vunpack.c.3.s8 %v3753
  %v4020 = vunpack.c.3.s8 %v3754
  %v4021 = vunpack.c.3.s8 %v3755
  %v4022 = vunpack.c.0.s8 %v3756
  %v4023 = vunpack.c.0.s8 %v3757
  %v4024 = vunpack.c.0.s8 %v3758
  %v4025 = vunpack.c.0.s8 %v3759
  %v4026 = vunpack.c.0.s8 %v3760
  %v4027 = vunpack.c.0.s8 %v3761
  %v4028 = vunpack.c.0.s8 %v3762
  %v4029 = vunpack.c.1.s8 %v3756
  %v4030 = vunpack.c.1.s8 %v3757
  %v4031 = vunpack.c.1.s8 %v3758
  %v4032 = vunpack.c.1.s8 %v3759
  %v4033 = vunpack.c.1.s8 %v3760
  %v4034 = vunpack.c.1.s8 %v3761
  %v4035 = vunpack.c.1.s8 %v3762
  %v4036 = vunpack.c.2.s8 %v3756
  %v4037 = vunpack.c.2.s8 %v3757
  %v4038 = vunpack.c.2.s8 %v3758
  %v4039 = vunpack.c.2.s8 %v3759
  %v4040 = vunpack.c.2.s8 %v3760
  %v4041 = vunpack.c.2.s8 %v3761
  %v4042 = vunpack.c.2.s8 %v3762
  %v4043 = vunpack.c.3.s8 %v3756
  %v4044 = vunpack.c.3.s8 %v3757
  %v4045 = vunpack.c.3.s8 %v3758
  %v4046 = vunpack.c.3.s8 %v3759
  %v4047 = vunpack.c.3.s8 %v3760
  %v4048 = vunpack.c.3.s8 %v3761
  %v4049 = vunpack.c.3.s8 %v3762
  %v4050 = vunpack.c.0.s8 %v3763
  %v4051 = vunpack.c.0.s8 %v3764
  %v4052 = vunpack.c.0.s8 %v3765
  %v4053 = vunpack.c.0.s8 %v3766
  %v4054 = vunpack.c.0.s8 %v3767
  %v4055 = vunpack.c.0.s8 %v3768
  %v4056 = vunpack.c.0.s8 %v3769
  %v4057 = vunpack.c.1.s8 %v3763
  %v4058 = vunpack.c.1.s8 %v3764
  %v4059 = vunpack.c.1.s8 %v3765
  %v4060 = vunpack.c.1.s8 %v3766
  %v4061 = vunpack.c.1.s8 %v3767
  %v4062 = vunpack.c.1.s8 %v3768
  %v4063 = vunpack.c.1.s8 %v3769
  %v4064 = vunpack.c.2.s8 %v3763
  %v4065 = vunpack.c.2.s8 %v3764
  %v4066 = vunpack.c.2.s8 %v3765
  %v4067 = vunpack.c.2.s8 %v3766
  %v4068 = vunpack.c.2.s8 %v3767
  %v4069 = vunpack.c.2.s8 %v3768
  %v4070 = vunpack.c.2.s8 %v3769
  %v4071 = vunpack.c.3.s8 %v3763
  %v4072 = vunpack.c.3.s8 %v3764
  %v4073 = vunpack.c.3.s8 %v3765
  %v4074 = vunpack.c.3.s8 %v3766
  %v4075 = vunpack.c.3.s8 %v3767
  %v4076 = vunpack.c.3.s8 %v3768
  %v4077 = vunpack.c.3.s8 %v3769
  %v4078 = vunpack.c.0.s8 %v3770
  %v4079 = vunpack.c.0.s8 %v3771
  %v4080 = vunpack.c.0.s8 %v3772
  %v4081 = vunpack.c.0.s8 %v3773
  %v4082 = vunpack.c.0.s8 %v3774
  %v4083 = vunpack.c.0.s8 %v3775
  %v4084 = vunpack.c.0.s8 %v3776
  %v4085 = vunpack.c.1.s8 %v3770
  %v4086 = vunpack.c.1.s8 %v3771
  %v4087 = vunpack.c.1.s8 %v3772
  %v4088 = vunpack.c.1.s8 %v3773
  %v4089 = vunpack.c.1.s8 %v3774
  %v4090 = vunpack.c.1.s8 %v3775
  %v4091 = vunpack.c.1.s8 %v3776
  %v4092 = vunpack.c.2.s8 %v3770
  %v4093 = vunpack.c.2.s8 %v3771
  %v4094 = vunpack.c.2.s8 %v3772
  %v4095 = vunpack.c.2.s8 %v3773
  %v4096 = vunpack.c.2.s8 %v3774
  %v4097 = vunpack.c.2.s8 %v3775
  %v4098 = vunpack.c.2.s8 %v3776
  %v4099 = vunpack.c.3.s8 %v3770
  %v4100 = vunpack.c.3.s8 %v3771
  %v4101 = vunpack.c.3.s8 %v3772
  %v4102 = vunpack.c.3.s8 %v3773
  %v4103 = vunpack.c.3.s8 %v3774
  %v4104 = vunpack.c.3.s8 %v3775
  %v4105 = vunpack.c.3.s8 %v3776
  %v4106 = vunpack.c.0.s8 %v3777
  %v4107 = vunpack.c.0.s8 %v3778
  %v4108 = vunpack.c.0.s8 %v3779
  %v4109 = vunpack.c.0.s8 %v3780
  %v4110 = vunpack.c.0.s8 %v3781
  %v4111 = vunpack.c.0.s8 %v3782
  %v4112 = vunpack.c.0.s8 %v3783
  %v4113 = vunpack.c.1.s8 %v3777
  %v4114 = vunpack.c.1.s8 %v3778
  %v4115 = vunpack.c.1.s8 %v3779
  %v4116 = vunpack.c.1.s8 %v3780
  %v4117 = vunpack.c.1.s8 %v3781
  %v4118 = vunpack.c.1.s8 %v3782
  %v4119 = vunpack.c.1.s8 %v3783
  %v4120 = vunpack.c.2.s8 %v3777
  %v4121 = vunpack.c.2.s8 %v3778
  %v4122 = vunpack.c.2.s8 %v3779
  %v4123 = vunpack.c.2.s8 %v3780
  %v4124 = vunpack.c.2.s8 %v3781
  %v4125 = vunpack.c.2.s8 %v3782
  %v4126 = vunpack.c.2.s8 %v3783
  %v4127 = vunpack.c.3.s8 %v3777
  %v4128 = vunpack.c.3.s8 %v3778
  %v4129 = vunpack.c.3.s8 %v3779
  %v4130 = vunpack.c.3.s8 %v3780
  %v4131 = vunpack.c.3.s8 %v3781
  %v4132 = vunpack.c.3.s8 %v3782
  %v4133 = vunpack.c.3.s8 %v3783
  %v4134 = vunpack.c.0.s8 %v3784
  %v4135 = vunpack.c.0.s8 %v3785
  %v4136 = vunpack.c.0.s8 %v3786
  %v4137 = vunpack.c.0.s8 %v3787
  %v4138 = vunpack.c.0.s8 %v3788
  %v4139 = vunpack.c.0.s8 %v3789
  %v4140 = vunpack.c.0.s8 %v3790
  %v4141 = vunpack.c.1.s8 %v3784
  %v4142 = vunpack.c.1.s8 %v3785
  %v4143 = vunpack.c.1.s8 %v3786
  %v4144 = vunpack.c.1.s8 %v3787
  %v4145 = vunpack.c.1.s8 %v3788
  %v4146 = vunpack.c.1.s8 %v3789
  %v4147 = vunpack.c.1.s8 %v3790
  %v4148 = vunpack.c.2.s8 %v3784
  %v4149 = vunpack.c.2.s8 %v3785
  %v4150 = vunpack.c.2.s8 %v3786
  %v4151 = vunpack.c.2.s8 %v3787
  %v4152 = vunpack.c.2.s8 %v3788
  %v4153 = vunpack.c.2.s8 %v3789
  %v4154 = vunpack.c.2.s8 %v3790
  %v4155 = vunpack.c.3.s8 %v3784
  %v4156 = vunpack.c.3.s8 %v3785
  %v4157 = vunpack.c.3.s8 %v3786
  %v4158 = vunpack.c.3.s8 %v3787
  %v4159 = vunpack.c.3.s8 %v3788
  %v4160 = vunpack.c.3.s8 %v3789
  %v4161 = vunpack.c.3.s8 %v3790
  %v4162 = vunpack.c.0.s8 %v3791
  %v4163 = vunpack.c.0.s8 %v3792
  %v4164 = vunpack.c.0.s8 %v3793
  %v4165 = vunpack.c.0.s8 %v3794
  %v4166 = vunpack.c.0.s8 %v3795
  %v4167 = vunpack.c.0.s8 %v3796
  %v4168 = vunpack.c.0.s8 %v3797
  %v4169 = vunpack.c.1.s8 %v3791
  %v4170 = vunpack.c.1.s8 %v3792
  %v4171 = vunpack.c.1.s8 %v3793
  %v4172 = vunpack.c.1.s8 %v3794
  %v4173 = vunpack.c.1.s8 %v3795
  %v4174 = vunpack.c.1.s8 %v3796
  %v4175 = vunpack.c.1.s8 %v3797
  %v4176 = vunpack.c.2.s8 %v3791
  %v4177 = vunpack.c.2.s8 %v3792
  %v4178 = vunpack.c.2.s8 %v3793
  %v4179 = vunpack.c.2.s8 %v3794
  %v4180 = vunpack.c.2.s8 %v3795
  %v4181 = vunpack.c.2.s8 %v3796
  %v4182 = vunpack.c.2.s8 %v3797
  %v4183 = vunpack.c.3.s8 %v3791
  %v4184 = vunpack.c.3.s8 %v3792
  %v4185 = vunpack.c.3.s8 %v3793
  %v4186 = vunpack.c.3.s8 %v3794
  %v4187 = vunpack.c.3.s8 %v3795
  %v4188 = vunpack.c.3.s8 %v3796
  %v4189 = vunpack.c.3.s8 %v3797
  %v4190 = vunpack.c.0.s8 %v3798
  %v4191 = vunpack.c.0.s8 %v3799
  %v4192 = vunpack.c.0.s8 %v3800
  %v4193 = vunpack.c.0.s8 %v3801
  %v4194 = vunpack.c.0.s8 %v3802
  %v4195 = vunpack.c.0.s8 %v3803
  %v4196 = vunpack.c.0.s8 %v3804
  %v4197 = vunpack.c.1.s8 %v3798
  %v4198 = vunpack.c.1.s8 %v3799
  %v4199 = vunpack.c.1.s8 %v3800
  %v4200 = vunpack.c.1.s8 %v3801
  %v4201 = vunpack.c.1.s8 %v3802
  %v4202 = vunpack.c.1.s8 %v3803
  %v4203 = vunpack.c.1.s8 %v3804
  %v4204 = vunpack.c.2.s8 %v3798
  %v4205 = vunpack.c.2.s8 %v3799
  %v4206 = vunpack.c.2.s8 %v3800
  %v4207 = vunpack.c.2.s8 %v3801
  %v4208 = vunpack.c.2.s8 %v3802
  %v4209 = vunpack.c.2.s8 %v3803
  %v4210 = vunpack.c.2.s8 %v3804
  %v4211 = vunpack.c.3.s8 %v3798
  %v4212 = vunpack.c.3.s8 %v3799
  %v4213 = vunpack.c.3.s8 %v3800
  %v4214 = vunpack.c.3.s8 %v3801
  %v4215 = vunpack.c.3.s8 %v3802
  %v4216 = vunpack.c.3.s8 %v3803
  %v4217 = vunpack.c.3.s8 %v3804
  %v4218 = vunpack.c.0.s8 %v3805
  %v4219 = vunpack.c.0.s8 %v3806
  %v4220 = vunpack.c.0.s8 %v3807
  %v4221 = vunpack.c.0.s8 %v3808
  %v4222 = vunpack.c.0.s8 %v3809
  %v4223 = vunpack.c.0.s8 %v3810
  %v4224 = vunpack.c.0.s8 %v3811
  %v4225 = vunpack.c.1.s8 %v3805
  %v4226 = vunpack.c.1.s8 %v3806
  %v4227 = vunpack.c.1.s8 %v3807
  %v4228 = vunpack.c.1.s8 %v3808
  %v4229 = vunpack.c.1.s8 %v3809
  %v4230 = vunpack.c.1.s8 %v3810
  %v4231 = vunpack.c.1.s8 %v3811
  %v4232 = vunpack.c.2.s8 %v3805
  %v4233 = vunpack.c.2.s8 %v3806
  %v4234 = vunpack.c.2.s8 %v3807
  %v4235 = vunpack.c.2.s8 %v3808
  %v4236 = vunpack.c.2.s8 %v3809
  %v4237 = vunpack.c.2.s8 %v3810
  %v4238 = vunpack.c.2.s8 %v3811
  %v4239 = vunpack.c.3.s8 %v3805
  %v4240 = vunpack.c.3.s8 %v3806
  %v4241 = vunpack.c.3.s8 %v3807
  %v4242 = vunpack.c.3.s8 %v3808
  %v4243 = vunpack.c.3.s8 %v3809
  %v4244 = vunpack.c.3.s8 %v3810
  %v4245 = vunpack.c.3.s8 %v3811
  %v4246 = vunpack.c.0.s8 %v3812
  %v4247 = vunpack.c.0.s8 %v3813
  %v4248 = vunpack.c.0.s8 %v3814
  %v4249 = vunpack.c.0.s8 %v3815
  %v4250 = vunpack.c.0.s8 %v3816
  %v4251 = vunpack.c.0.s8 %v3817
  %v4252 = vunpack.c.0.s8 %v3818
  %v4253 = vunpack.c.1.s8 %v3812
  %v4254 = vunpack.c.1.s8 %v3813
  %v4255 = vunpack.c.1.s8 %v3814
  %v4256 = vunpack.c.1.s8 %v3815
  %v4257 = vunpack.c.1.s8 %v3816
  %v4258 = vunpack.c.1.s8 %v3817
  %v4259 = vunpack.c.1.s8 %v3818
  %v4260 = vunpack.c.2.s8 %v3812
  %v4261 = vunpack.c.2.s8 %v3813
  %v4262 = vunpack.c.2.s8 %v3814
  %v4263 = vunpack.c.2.s8 %v3815
  %v4264 = vunpack.c.2.s8 %v3816
  %v4265 = vunpack.c.2.s8 %v3817
  %v4266 = vunpack.c.2.s8 %v3818
  %v4267 = vunpack.c.3.s8 %v3812
  %v4268 = vunpack.c.3.s8 %v3813
  %v4269 = vunpack.c.3.s8 %v3814
  %v4270 = vunpack.c.3.s8 %v3815
  %v4271 = vunpack.c.3.s8 %v3816
  %v4272 = vunpack.c.3.s8 %v3817
  %v4273 = vunpack.c.3.s8 %v3818
  %v4274 = vunpack.c.0.s8 %v3819
  %v4275 = vunpack.c.0.s8 %v3820
  %v4276 = vunpack.c.0.s8 %v3821
  %v4277 = vunpack.c.0.s8 %v3822
  %v4278 = vunpack.c.0.s8 %v3823
  %v4279 = vunpack.c.0.s8 %v3824
  %v4280 = vunpack.c.0.s8 %v3825
  %v4281 = vunpack.c.1.s8 %v3819
  %v4282 = vunpack.c.1.s8 %v3820
  %v4283 = vunpack.c.1.s8 %v3821
  %v4284 = vunpack.c.1.s8 %v3822
  %v4285 = vunpack.c.1.s8 %v3823
  %v4286 = vunpack.c.1.s8 %v3824
  %v4287 = vunpack.c.1.s8 %v3825
  %v4288 = vunpack.c.2.s8 %v3819
  %v4289 = vunpack.c.2.s8 %v3820
  %v4290 = vunpack.c.2.s8 %v3821
  %v4291 = vunpack.c.2.s8 %v3822
  %v4292 = vunpack.c.2.s8 %v3823
  %v4293 = vunpack.c.2.s8 %v3824
  %v4294 = vunpack.c.2.s8 %v3825
  %v4295 = vunpack.c.3.s8 %v3819
  %v4296 = vunpack.c.3.s8 %v3820
  %v4297 = vunpack.c.3.s8 %v3821
  %v4298 = vunpack.c.3.s8 %v3822
  %v4299 = vunpack.c.3.s8 %v3823
  %v4300 = vunpack.c.3.s8 %v3824
  %v4301 = vunpack.c.3.s8 %v3825
  %v4302 = vunpack.c.0.s8 %v3826
  %v4303 = vunpack.c.0.s8 %v3827
  %v4304 = vunpack.c.0.s8 %v3828
  %v4305 = vunpack.c.0.s8 %v3829
  %v4306 = vunpack.c.0.s8 %v3830
  %v4307 = vunpack.c.0.s8 %v3831
  %v4308 = vunpack.c.0.s8 %v3832
  %v4309 = vunpack.c.1.s8 %v3826
  %v4310 = vunpack.c.1.s8 %v3827
  %v4311 = vunpack.c.1.s8 %v3828
  %v4312 = vunpack.c.1.s8 %v3829
  %v4313 = vunpack.c.1.s8 %v3830
  %v4314 = vunpack.c.1.s8 %v3831
  %v4315 = vunpack.c.1.s8 %v3832
  %v4316 = vunpack.c.2.s8 %v3826
  %v4317 = vunpack.c.2.s8 %v3827
  %v4318 = vunpack.c.2.s8 %v3828
  %v4319 = vunpack.c.2.s8 %v3829
  %v4320 = vunpack.c.2.s8 %v3830
  %v4321 = vunpack.c.2.s8 %v3831
  %v4322 = vunpack.c.2.s8 %v3832
  %v4323 = vunpack.c.3.s8 %v3826
  %v4324 = vunpack.c.3.s8 %v3827
  %v4325 = vunpack.c.3.s8 %v3828
  %v4326 = vunpack.c.3.s8 %v3829
  %v4327 = vunpack.c.3.s8 %v3830
  %v4328 = vunpack.c.3.s8 %v3831
  %v4329 = vunpack.c.3.s8 %v3832
  %v4330 = vunpack.c.0.s8 %v3833
  %v4331 = vunpack.c.0.s8 %v3834
  %v4332 = vunpack.c.0.s8 %v3835
  %v4333 = vunpack.c.0.s8 %v3836
  %v4334 = vunpack.c.0.s8 %v3837
  %v4335 = vunpack.c.0.s8 %v3838
  %v4336 = vunpack.c.0.s8 %v3839
  %v4337 = vunpack.c.1.s8 %v3833
  %v4338 = vunpack.c.1.s8 %v3834
  %v4339 = vunpack.c.1.s8 %v3835
  %v4340 = vunpack.c.1.s8 %v3836
  %v4341 = vunpack.c.1.s8 %v3837
  %v4342 = vunpack.c.1.s8 %v3838
  %v4343 = vunpack.c.1.s8 %v3839
  %v4344 = vunpack.c.2.s8 %v3833
  %v4345 = vunpack.c.2.s8 %v3834
  %v4346 = vunpack.c.2.s8 %v3835
  %v4347 = vunpack.c.2.s8 %v3836
  %v4348 = vunpack.c.2.s8 %v3837
  %v4349 = vunpack.c.2.s8 %v3838
  %v4350 = vunpack.c.2.s8 %v3839
  %v4351 = vunpack.c.3.s8 %v3833
  %v4352 = vunpack.c.3.s8 %v3834
  %v4353 = vunpack.c.3.s8 %v3835
  %v4354 = vunpack.c.3.s8 %v3836
  %v4355 = vunpack.c.3.s8 %v3837
  %v4356 = vunpack.c.3.s8 %v3838
  %v4357 = vunpack.c.3.s8 %v3839
  %v4358 = vunpack.c.0.s8 %v3840
  %v4359 = vunpack.c.0.s8 %v3841
  %v4360 = vunpack.c.0.s8 %v3842
  %v4361 = vunpack.c.0.s8 %v3843
  %v4362 = vunpack.c.0.s8 %v3844
  %v4363 = vunpack.c.0.s8 %v3845
  %v4364 = vunpack.c.0.s8 %v3846
  %v4365 = vunpack.c.1.s8 %v3840
  %v4366 = vunpack.c.1.s8 %v3841
  %v4367 = vunpack.c.1.s8 %v3842
  %v4368 = vunpack.c.1.s8 %v3843
  %v4369 = vunpack.c.1.s8 %v3844
  %v4370 = vunpack.c.1.s8 %v3845
  %v4371 = vunpack.c.1.s8 %v3846
  %v4372 = vunpack.c.2.s8 %v3840
  %v4373 = vunpack.c.2.s8 %v3841
  %v4374 = vunpack.c.2.s8 %v3842
  %v4375 = vunpack.c.2.s8 %v3843
  %v4376 = vunpack.c.2.s8 %v3844
  %v4377 = vunpack.c.2.s8 %v3845
  %v4378 = vunpack.c.2.s8 %v3846
  %v4379 = vunpack.c.3.s8 %v3840
  %v4380 = vunpack.c.3.s8 %v3841
  %v4381 = vunpack.c.3.s8 %v3842
  %v4382 = vunpack.c.3.s8 %v3843
  %v4383 = vunpack.c.3.s8 %v3844
  %v4384 = vunpack.c.3.s8 %v3845
  %v4385 = vunpack.c.3.s8 %v3846
  %v4386 = vunpack.c.0.s8 %v3847
  %v4387 = vunpack.c.0.s8 %v3848
  %v4388 = vunpack.c.0.s8 %v3849
  %v4389 = vunpack.c.0.s8 %v3850
  %v4390 = vunpack.c.0.s8 %v3851
  %v4391 = vunpack.c.0.s8 %v3852
  %v4392 = vunpack.c.0.s8 %v3853
  %v4393 = vunpack.c.1.s8 %v3847
  %v4394 = vunpack.c.1.s8 %v3848
  %v4395 = vunpack.c.1.s8 %v3849
  %v4396 = vunpack.c.1.s8 %v3850
  %v4397 = vunpack.c.1.s8 %v3851
  %v4398 = vunpack.c.1.s8 %v3852
  %v4399 = vunpack.c.1.s8 %v3853
  %v4400 = vunpack.c.2.s8 %v3847
  %v4401 = vunpack.c.2.s8 %v3848
  %v4402 = vunpack.c.2.s8 %v3849
  %v4403 = vunpack.c.2.s8 %v3850
  %v4404 = vunpack.c.2.s8 %v3851
  %v4405 = vunpack.c.2.s8 %v3852
  %v4406 = vunpack.c.2.s8 %v3853
  %v4407 = vunpack.c.3.s8 %v3847
  %v4408 = vunpack.c.3.s8 %v3848
  %v4409 = vunpack.c.3.s8 %v3849
  %v4410 = vunpack.c.3.s8 %v3850
  %v4411 = vunpack.c.3.s8 %v3851
  %v4412 = vunpack.c.3.s8 %v3852
  %v4413 = vunpack.c.3.s8 %v3853
  %v4414 = vunpack.c.0.s8 %v3854
  %v4415 = vunpack.c.0.s8 %v3855
  %v4416 = vunpack.c.0.s8 %v3856
  %v4417 = vunpack.c.0.s8 %v3857
  %v4418 = vunpack.c.0.s8 %v3858
  %v4419 = vunpack.c.0.s8 %v3859
  %v4420 = vunpack.c.0.s8 %v3860
  %v4421 = vunpack.c.1.s8 %v3854
  %v4422 = vunpack.c.1.s8 %v3855
  %v4423 = vunpack.c.1.s8 %v3856
  %v4424 = vunpack.c.1.s8 %v3857
  %v4425 = vunpack.c.1.s8 %v3858
  %v4426 = vunpack.c.1.s8 %v3859
  %v4427 = vunpack.c.1.s8 %v3860
  %v4428 = vunpack.c.2.s8 %v3854
  %v4429 = vunpack.c.2.s8 %v3855
  %v4430 = vunpack.c.2.s8 %v3856
  %v4431 = vunpack.c.2.s8 %v3857
  %v4432 = vunpack.c.2.s8 %v3858
  %v4433 = vunpack.c.2.s8 %v3859
  %v4434 = vunpack.c.2.s8 %v3860
  %v4435 = vunpack.c.3.s8 %v3854
  %v4436 = vunpack.c.3.s8 %v3855
  %v4437 = vunpack.c.3.s8 %v3856
  %v4438 = vunpack.c.3.s8 %v3857
  %v4439 = vunpack.c.3.s8 %v3858
  %v4440 = vunpack.c.3.s8 %v3859
  %v4441 = vunpack.c.3.s8 %v3860
  %v4442 = vunpack.c.0.s8 %v3861
  %v4443 = vunpack.c.0.s8 %v3862
  %v4444 = vunpack.c.0.s8 %v3863
  %v4445 = vunpack.c.0.s8 %v3864
  %v4446 = vunpack.c.0.s8 %v3865
  %v4447 = vunpack.c.0.s8 %v3866
  %v4448 = vunpack.c.0.s8 %v3867
  %v4449 = vunpack.c.1.s8 %v3861
  %v4450 = vunpack.c.1.s8 %v3862
  %v4451 = vunpack.c.1.s8 %v3863
  %v4452 = vunpack.c.1.s8 %v3864
  %v4453 = vunpack.c.1.s8 %v3865
  %v4454 = vunpack.c.1.s8 %v3866
  %v4455 = vunpack.c.1.s8 %v3867
  %v4456 = vunpack.c.2.s8 %v3861
  %v4457 = vunpack.c.2.s8 %v3862
  %v4458 = vunpack.c.2.s8 %v3863
  %v4459 = vunpack.c.2.s8 %v3864
  %v4460 = vunpack.c.2.s8 %v3865
  %v4461 = vunpack.c.2.s8 %v3866
  %v4462 = vunpack.c.2.s8 %v3867
  %v4463 = vunpack.c.3.s8 %v3861
  %v4464 = vunpack.c.3.s8 %v3862
  %v4465 = vunpack.c.3.s8 %v3863
  %v4466 = vunpack.c.3.s8 %v3864
  %v4467 = vunpack.c.3.s8 %v3865
  %v4468 = vunpack.c.3.s8 %v3866
  %v4469 = vunpack.c.3.s8 %v3867
  %v4470 = vunpack.c.0.s8 %v3868
  %v4471 = vunpack.c.0.s8 %v3869
  %v4472 = vunpack.c.0.s8 %v3870
  %v4473 = vunpack.c.0.s8 %v3871
  %v4474 = vunpack.c.0.s8 %v3872
  %v4475 = vunpack.c.0.s8 %v3873
  %v4476 = vunpack.c.0.s8 %v3874
  %v4477 = vunpack.c.1.s8 %v3868
  %v4478 = vunpack.c.1.s8 %v3869
  %v4479 = vunpack.c.1.s8 %v3870
  %v4480 = vunpack.c.1.s8 %v3871
  %v4481 = vunpack.c.1.s8 %v3872
  %v4482 = vunpack.c.1.s8 %v3873
  %v4483 = vunpack.c.1.s8 %v3874
  %v4484 = vunpack.c.2.s8 %v3868
  %v4485 = vunpack.c.2.s8 %v3869
  %v4486 = vunpack.c.2.s8 %v3870
  %v4487 = vunpack.c.2.s8 %v3871
  %v4488 = vunpack.c.2.s8 %v3872
  %v4489 = vunpack.c.2.s8 %v3873
  %v4490 = vunpack.c.2.s8 %v3874
  %v4491 = vunpack.c.3.s8 %v3868
  %v4492 = vunpack.c.3.s8 %v3869
  %v4493 = vunpack.c.3.s8 %v3870
  %v4494 = vunpack.c.3.s8 %v3871
  %v4495 = vunpack.c.3.s8 %v3872
  %v4496 = vunpack.c.3.s8 %v3873
  %v4497 = vunpack.c.3.s8 %v3874
  %v4498 = vunpack.c.0.s8 %v3875
  %v4499 = vunpack.c.0.s8 %v3876
  %v4500 = vunpack.c.0.s8 %v3877
  %v4501 = vunpack.c.0.s8 %v3878
  %v4502 = vunpack.c.0.s8 %v3879
  %v4503 = vunpack.c.0.s8 %v3880
  %v4504 = vunpack.c.0.s8 %v3881
  %v4505 = vunpack.c.1.s8 %v3875
  %v4506 = vunpack.c.1.s8 %v3876
  %v4507 = vunpack.c.1.s8 %v3877
  %v4508 = vunpack.c.1.s8 %v3878
  %v4509 = vunpack.c.1.s8 %v3879
  %v4510 = vunpack.c.1.s8 %v3880
  %v4511 = vunpack.c.1.s8 %v3881
  %v4512 = vunpack.c.2.s8 %v3875
  %v4513 = vunpack.c.2.s8 %v3876
  %v4514 = vunpack.c.2.s8 %v3877
  %v4515 = vunpack.c.2.s8 %v3878
  %v4516 = vunpack.c.2.s8 %v3879
  %v4517 = vunpack.c.2.s8 %v3880
  %v4518 = vunpack.c.2.s8 %v3881
  %v4519 = vunpack.c.3.s8 %v3875
  %v4520 = vunpack.c.3.s8 %v3876
  %v4521 = vunpack.c.3.s8 %v3877
  %v4522 = vunpack.c.3.s8 %v3878
  %v4523 = vunpack.c.3.s8 %v3879
  %v4524 = vunpack.c.3.s8 %v3880
  %v4525 = vunpack.c.3.s8 %v3881
  %v4526 = vunpack.c.0.s8 %v3882
  %v4527 = vunpack.c.0.s8 %v3883
  %v4528 = vunpack.c.0.s8 %v3884
  %v4529 = vunpack.c.0.s8 %v3885
  %v4530 = vunpack.c.0.s8 %v3886
  %v4531 = vunpack.c.0.s8 %v3887
  %v4532 = vunpack.c.0.s8 %v3888
  %v4533 = vunpack.c.1.s8 %v3882
  %v4534 = vunpack.c.1.s8 %v3883
  %v4535 = vunpack.c.1.s8 %v3884
  %v4536 = vunpack.c.1.s8 %v3885
  %v4537 = vunpack.c.1.s8 %v3886
  %v4538 = vunpack.c.1.s8 %v3887
  %v4539 = vunpack.c.1.s8 %v3888
  %v4540 = vunpack.c.2.s8 %v3882
  %v4541 = vunpack.c.2.s8 %v3883
  %v4542 = vunpack.c.2.s8 %v3884
  %v4543 = vunpack.c.2.s8 %v3885
  %v4544 = vunpack.c.2.s8 %v3886
  %v4545 = vunpack.c.2.s8 %v3887
  %v4546 = vunpack.c.2.s8 %v3888
  %v4547 = vunpack.c.3.s8 %v3882
  %v4548 = vunpack.c.3.s8 %v3883
  %v4549 = vunpack.c.3.s8 %v3884
  %v4550 = vunpack.c.3.s8 %v3885
  %v4551 = vunpack.c.3.s8 %v3886
  %v4552 = vunpack.c.3.s8 %v3887
  %v4553 = vunpack.c.3.s8 %v3888
  %v4554 = vunpack.c.0.s8 %v3889
  %v4555 = vunpack.c.0.s8 %v3890
  %v4556 = vunpack.c.0.s8 %v3891
  %v4557 = vunpack.c.0.s8 %v3892
  %v4558 = vunpack.c.0.s8 %v3893
  %v4559 = vunpack.c.0.s8 %v3894
  %v4560 = vunpack.c.0.s8 %v3895
  %v4561 = vunpack.c.1.s8 %v3889
  %v4562 = vunpack.c.1.s8 %v3890
  %v4563 = vunpack.c.1.s8 %v3891
  %v4564 = vunpack.c.1.s8 %v3892
  %v4565 = vunpack.c.1.s8 %v3893
  %v4566 = vunpack.c.1.s8 %v3894
  %v4567 = vunpack.c.1.s8 %v3895
  %v4568 = vunpack.c.2.s8 %v3889
  %v4569 = vunpack.c.2.s8 %v3890
  %v4570 = vunpack.c.2.s8 %v3891
  %v4571 = vunpack.c.2.s8 %v3892
  %v4572 = vunpack.c.2.s8 %v3893
  %v4573 = vunpack.c.2.s8 %v3894
  %v4574 = vunpack.c.2.s8 %v3895
  %v4575 = vunpack.c.3.s8 %v3889
  %v4576 = vunpack.c.3.s8 %v3890
  %v4577 = vunpack.c.3.s8 %v3891
  %v4578 = vunpack.c.3.s8 %v3892
  %v4579 = vunpack.c.3.s8 %v3893
  %v4580 = vunpack.c.3.s8 %v3894
  %v4581 = vunpack.c.3.s8 %v3895
  %v4582 = vunpack.c.0.s8 %v3896
  %v4583 = vunpack.c.0.s8 %v3897
  %v4584 = vunpack.c.0.s8 %v3898
  %v4585 = vunpack.c.0.s8 %v3899
  %v4586 = vunpack.c.0.s8 %v3900
  %v4587 = vunpack.c.0.s8 %v3901
  %v4588 = vunpack.c.0.s8 %v3902
  %v4589 = vunpack.c.1.s8 %v3896
  %v4590 = vunpack.c.1.s8 %v3897
  %v4591 = vunpack.c.1.s8 %v3898
  %v4592 = vunpack.c.1.s8 %v3899
  %v4593 = vunpack.c.1.s8 %v3900
  %v4594 = vunpack.c.1.s8 %v3901
  %v4595 = vunpack.c.1.s8 %v3902
  %v4596 = vunpack.c.2.s8 %v3896
  %v4597 = vunpack.c.2.s8 %v3897
  %v4598 = vunpack.c.2.s8 %v3898
  %v4599 = vunpack.c.2.s8 %v3899
  %v4600 = vunpack.c.2.s8 %v3900
  %v4601 = vunpack.c.2.s8 %v3901
  %v4602 = vunpack.c.2.s8 %v3902
  %v4603 = vunpack.c.3.s8 %v3896
  %v4604 = vunpack.c.3.s8 %v3897
  %v4605 = vunpack.c.3.s8 %v3898
  %v4606 = vunpack.c.3.s8 %v3899
  %v4607 = vunpack.c.3.s8 %v3900
  %v4608 = vunpack.c.3.s8 %v3901
  %v4609 = vunpack.c.3.s8 %v3902
  %v4610 = vunpack.c.0.s8 %v3903
  %v4611 = vunpack.c.0.s8 %v3904
  %v4612 = vunpack.c.0.s8 %v3905
  %v4613 = vunpack.c.0.s8 %v3906
  %v4614 = vunpack.c.0.s8 %v3907
  %v4615 = vunpack.c.0.s8 %v3908
  %v4616 = vunpack.c.0.s8 %v3909
  %v4617 = vunpack.c.1.s8 %v3903
  %v4618 = vunpack.c.1.s8 %v3904
  %v4619 = vunpack.c.1.s8 %v3905
  %v4620 = vunpack.c.1.s8 %v3906
  %v4621 = vunpack.c.1.s8 %v3907
  %v4622 = vunpack.c.1.s8 %v3908
  %v4623 = vunpack.c.1.s8 %v3909
  %v4624 = vunpack.c.2.s8 %v3903
  %v4625 = vunpack.c.2.s8 %v3904
  %v4626 = vunpack.c.2.s8 %v3905
  %v4627 = vunpack.c.2.s8 %v3906
  %v4628 = vunpack.c.2.s8 %v3907
  %v4629 = vunpack.c.2.s8 %v3908
  %v4630 = vunpack.c.2.s8 %v3909
  %v4631 = vunpack.c.3.s8 %v3903
  %v4632 = vunpack.c.3.s8 %v3904
  %v4633 = vunpack.c.3.s8 %v3905
  %v4634 = vunpack.c.3.s8 %v3906
  %v4635 = vunpack.c.3.s8 %v3907
  %v4636 = vunpack.c.3.s8 %v3908
  %v4637 = vunpack.c.3.s8 %v3909
  %v4638 = vunpack.c.0.s8 %v3910
  %v4639 = vunpack.c.0.s8 %v3911
  %v4640 = vunpack.c.0.s8 %v3912
  %v4641 = vunpack.c.0.s8 %v3913
  %v4642 = vunpack.c.0.s8 %v3914
  %v4643 = vunpack.c.0.s8 %v3915
  %v4644 = vunpack.c.0.s8 %v3916
  %v4645 = vunpack.c.1.s8 %v3910
  %v4646 = vunpack.c.1.s8 %v3911
  %v4647 = vunpack.c.1.s8 %v3912
  %v4648 = vunpack.c.1.s8 %v3913
  %v4649 = vunpack.c.1.s8 %v3914
  %v4650 = vunpack.c.1.s8 %v3915
  %v4651 = vunpack.c.1.s8 %v3916
  %v4652 = vunpack.c.2.s8 %v3910
  %v4653 = vunpack.c.2.s8 %v3911
  %v4654 = vunpack.c.2.s8 %v3912
  %v4655 = vunpack.c.2.s8 %v3913
  %v4656 = vunpack.c.2.s8 %v3914
  %v4657 = vunpack.c.2.s8 %v3915
  %v4658 = vunpack.c.2.s8 %v3916
  %v4659 = vunpack.c.3.s8 %v3910
  %v4660 = vunpack.c.3.s8 %v3911
  %v4661 = vunpack.c.3.s8 %v3912
  %v4662 = vunpack.c.3.s8 %v3913
  %v4663 = vunpack.c.3.s8 %v3914
  %v4664 = vunpack.c.3.s8 %v3915
  %v4665 = vunpack.c.3.s8 %v3916
  %v4666 = vunpack.c.0.s8 %v3917
  %v4667 = vunpack.c.0.s8 %v3918
  %v4668 = vunpack.c.0.s8 %v3919
  %v4669 = vunpack.c.0.s8 %v3920
  %v4670 = vunpack.c.0.s8 %v3921
  %v4671 = vunpack.c.0.s8 %v3922
  %v4672 = vunpack.c.0.s8 %v3923
  %v4673 = vunpack.c.1.s8 %v3917
  %v4674 = vunpack.c.1.s8 %v3918
  %v4675 = vunpack.c.1.s8 %v3919
  %v4676 = vunpack.c.1.s8 %v3920
  %v4677 = vunpack.c.1.s8 %v3921
  %v4678 = vunpack.c.1.s8 %v3922
  %v4679 = vunpack.c.1.s8 %v3923
  %v4680 = vunpack.c.2.s8 %v3917
  %v4681 = vunpack.c.2.s8 %v3918
  %v4682 = vunpack.c.2.s8 %v3919
  %v4683 = vunpack.c.2.s8 %v3920
  %v4684 = vunpack.c.2.s8 %v3921
  %v4685 = vunpack.c.2.s8 %v3922
  %v4686 = vunpack.c.2.s8 %v3923
  %v4687 = vunpack.c.3.s8 %v3917
  %v4688 = vunpack.c.3.s8 %v3918
  %v4689 = vunpack.c.3.s8 %v3919
  %v4690 = vunpack.c.3.s8 %v3920
  %v4691 = vunpack.c.3.s8 %v3921
  %v4692 = vunpack.c.3.s8 %v3922
  %v4693 = vunpack.c.3.s8 %v3923
  %v4694 = vunpack.c.0.s8 %v3924
  %v4695 = vunpack.c.0.s8 %v3925
  %v4696 = vunpack.c.0.s8 %v3926
  %v4697 = vunpack.c.0.s8 %v3927
  %v4698 = vunpack.c.0.s8 %v3928
  %v4699 = vunpack.c.0.s8 %v3929
  %v4700 = vunpack.c.0.s8 %v3930
  %v4701 = vunpack.c.1.s8 %v3924
  %v4702 = vunpack.c.1.s8 %v3925
  %v4703 = vunpack.c.1.s8 %v3926
  %v4704 = vunpack.c.1.s8 %v3927
  %v4705 = vunpack.c.1.s8 %v3928
  %v4706 = vunpack.c.1.s8 %v3929
  %v4707 = vunpack.c.1.s8 %v3930
  %v4708 = vunpack.c.2.s8 %v3924
  %v4709 = vunpack.c.2.s8 %v3925
  %v4710 = vunpack.c.2.s8 %v3926
  %v4711 = vunpack.c.2.s8 %v3927
  %v4712 = vunpack.c.2.s8 %v3928
  %v4713 = vunpack.c.2.s8 %v3929
  %v4714 = vunpack.c.2.s8 %v3930
  %v4715 = vunpack.c.3.s8 %v3924
  %v4716 = vunpack.c.3.s8 %v3925
  %v4717 = vunpack.c.3.s8 %v3926
  %v4718 = vunpack.c.3.s8 %v3927
  %v4719 = vunpack.c.3.s8 %v3928
  %v4720 = vunpack.c.3.s8 %v3929
  %v4721 = vunpack.c.3.s8 %v3930
  %v4722 = vunpack.c.0.s8 %v3931
  %v4723 = vunpack.c.0.s8 %v3932
  %v4724 = vunpack.c.0.s8 %v3933
  %v4725 = vunpack.c.0.s8 %v3934
  %v4726 = vunpack.c.0.s8 %v3935
  %v4727 = vunpack.c.0.s8 %v3936
  %v4728 = vunpack.c.0.s8 %v3937
  %v4729 = vunpack.c.1.s8 %v3931
  %v4730 = vunpack.c.1.s8 %v3932
  %v4731 = vunpack.c.1.s8 %v3933
  %v4732 = vunpack.c.1.s8 %v3934
  %v4733 = vunpack.c.1.s8 %v3935
  %v4734 = vunpack.c.1.s8 %v3936
  %v4735 = vunpack.c.1.s8 %v3937
  %v4736 = vunpack.c.2.s8 %v3931
  %v4737 = vunpack.c.2.s8 %v3932
  %v4738 = vunpack.c.2.s8 %v3933
  %v4739 = vunpack.c.2.s8 %v3934
  %v4740 = vunpack.c.2.s8 %v3935
  %v4741 = vunpack.c.2.s8 %v3936
  %v4742 = vunpack.c.2.s8 %v3937
  %v4743 = vunpack.c.3.s8 %v3931
  %v4744 = vunpack.c.3.s8 %v3932
  %v4745 = vunpack.c.3.s8 %v3933
  %v4746 = vunpack.c.3.s8 %v3934
  %v4747 = vunpack.c.3.s8 %v3935
  %v4748 = vunpack.c.3.s8 %v3936
  %v4749 = vunpack.c.3.s8 %v3937
  %v4750 = vunpack.c.0.s8 %v3938
  %v4751 = vunpack.c.0.s8 %v3939
  %v4752 = vunpack.c.0.s8 %v3940
  %v4753 = vunpack.c.0.s8 %v3941
  %v4754 = vunpack.c.0.s8 %v3942
  %v4755 = vunpack.c.0.s8 %v3943
  %v4756 = vunpack.c.0.s8 %v3944
  %v4757 = vunpack.c.1.s8 %v3938
  %v4758 = vunpack.c.1.s8 %v3939
  %v4759 = vunpack.c.1.s8 %v3940
  %v4760 = vunpack.c.1.s8 %v3941
  %v4761 = vunpack.c.1.s8 %v3942
  %v4762 = vunpack.c.1.s8 %v3943
  %v4763 = vunpack.c.1.s8 %v3944
  %v4764 = vunpack.c.2.s8 %v3938
  %v4765 = vunpack.c.2.s8 %v3939
  %v4766 = vunpack.c.2.s8 %v3940
  %v4767 = vunpack.c.2.s8 %v3941
  %v4768 = vunpack.c.2.s8 %v3942
  %v4769 = vunpack.c.2.s8 %v3943
  %v4770 = vunpack.c.2.s8 %v3944
  %v4771 = vunpack.c.3.s8 %v3938
  %v4772 = vunpack.c.3.s8 %v3939
  %v4773 = vunpack.c.3.s8 %v3940
  %v4774 = vunpack.c.3.s8 %v3941
  %v4775 = vunpack.c.3.s8 %v3942
  %v4776 = vunpack.c.3.s8 %v3943
  %v4777 = vunpack.c.3.s8 %v3944
  %v4778 = vunpack.c.0.s8 %v3945
  %v4779 = vunpack.c.0.s8 %v3946
  %v4780 = vunpack.c.0.s8 %v3947
  %v4781 = vunpack.c.0.s8 %v3948
  %v4782 = vunpack.c.0.s8 %v3949
  %v4783 = vunpack.c.0.s8 %v3950
  %v4784 = vunpack.c.0.s8 %v3951
  %v4785 = vunpack.c.1.s8 %v3945
  %v4786 = vunpack.c.1.s8 %v3946
  %v4787 = vunpack.c.1.s8 %v3947
  %v4788 = vunpack.c.1.s8 %v3948
  %v4789 = vunpack.c.1.s8 %v3949
  %v4790 = vunpack.c.1.s8 %v3950
  %v4791 = vunpack.c.1.s8 %v3951
  %v4792 = vunpack.c.2.s8 %v3945
  %v4793 = vunpack.c.2.s8 %v3946
  %v4794 = vunpack.c.2.s8 %v3947
  %v4795 = vunpack.c.2.s8 %v3948
  %v4796 = vunpack.c.2.s8 %v3949
  %v4797 = vunpack.c.2.s8 %v3950
  %v4798 = vunpack.c.2.s8 %v3951
  %v4799 = vunpack.c.3.s8 %v3945
  %v4800 = vunpack.c.3.s8 %v3946
  %v4801 = vunpack.c.3.s8 %v3947
  %v4802 = vunpack.c.3.s8 %v3948
  %v4803 = vunpack.c.3.s8 %v3949
  %v4804 = vunpack.c.3.s8 %v3950
  %v4805 = vunpack.c.3.s8 %v3951
  %v4806 = vunpack.c.0.s8 %v3952
  %v4807 = vunpack.c.0.s8 %v3953
  %v4808 = vunpack.c.0.s8 %v3954
  %v4809 = vunpack.c.0.s8 %v3955
  %v4810 = vunpack.c.0.s8 %v3956
  %v4811 = vunpack.c.0.s8 %v3957
  %v4812 = vunpack.c.0.s8 %v3958
  %v4813 = vunpack.c.1.s8 %v3952
  %v4814 = vunpack.c.1.s8 %v3953
  %v4815 = vunpack.c.1.s8 %v3954
  %v4816 = vunpack.c.1.s8 %v3955
  %v4817 = vunpack.c.1.s8 %v3956
  %v4818 = vunpack.c.1.s8 %v3957
  %v4819 = vunpack.c.1.s8 %v3958
  %v4820 = vunpack.c.2.s8 %v3952
  %v4821 = vunpack.c.2.s8 %v3953
  %v4822 = vunpack.c.2.s8 %v3954
  %v4823 = vunpack.c.2.s8 %v3955
  %v4824 = vunpack.c.2.s8 %v3956
  %v4825 = vunpack.c.2.s8 %v3957
  %v4826 = vunpack.c.2.s8 %v3958
  %v4827 = vunpack.c.3.s8 %v3952
  %v4828 = vunpack.c.3.s8 %v3953
  %v4829 = vunpack.c.3.s8 %v3954
  %v4830 = vunpack.c.3.s8 %v3955
  %v4831 = vunpack.c.3.s8 %v3956
  %v4832 = vunpack.c.3.s8 %v3957
  %v4833 = vunpack.c.3.s8 %v3958
  %v4834 = vunpack.c.0.s8 %v3959
  %v4835 = vunpack.c.0.s8 %v3960
  %v4836 = vunpack.c.0.s8 %v3961
  %v4837 = vunpack.c.0.s8 %v3962
  %v4838 = vunpack.c.0.s8 %v3963
  %v4839 = vunpack.c.0.s8 %v3964
  %v4840 = vunpack.c.0.s8 %v3965
  %v4841 = vunpack.c.1.s8 %v3959
  %v4842 = vunpack.c.1.s8 %v3960
  %v4843 = vunpack.c.1.s8 %v3961
  %v4844 = vunpack.c.1.s8 %v3962
  %v4845 = vunpack.c.1.s8 %v3963
  %v4846 = vunpack.c.1.s8 %v3964
  %v4847 = vunpack.c.1.s8 %v3965
  %v4848 = vunpack.c.2.s8 %v3959
  %v4849 = vunpack.c.2.s8 %v3960
  %v4850 = vunpack.c.2.s8 %v3961
  %v4851 = vunpack.c.2.s8 %v3962
  %v4852 = vunpack.c.2.s8 %v3963
  %v4853 = vunpack.c.2.s8 %v3964
  %v4854 = vunpack.c.2.s8 %v3965
  %v4855 = vunpack.c.3.s8 %v3959
  %v4856 = vunpack.c.3.s8 %v3960
  %v4857 = vunpack.c.3.s8 %v3961
  %v4858 = vunpack.c.3.s8 %v3962
  %v4859 = vunpack.c.3.s8 %v3963
  %v4860 = vunpack.c.3.s8 %v3964
  %v4861 = vunpack.c.3.s8 %v3965
  %v4862 = vcvt.s32.f32 %v3966
  %v4863 = vcvt.s32.f32 %v3967
  %v4864 = vcvt.s32.f32 %v3968
  %v4865 = vcvt.s32.f32 %v3969
  %v4866 = vcvt.s32.f32 %v3970
  %v4867 = vcvt.s32.f32 %v3971
  %v4868 = vcvt.s32.f32 %v3972
  %v4869 = vcvt.s32.f32 %v3973
  %v4870 = vcvt.s32.f32 %v3974
  %v4871 = vcvt.s32.f32 %v3975
  %v4872 = vcvt.s32.f32 %v3976
  %v4873 = vcvt.s32.f32 %v3977
  %v4874 = vcvt.s32.f32 %v3978
  %v4875 = vcvt.s32.f32 %v3979
  %v4876 = vcvt.s32.f32 %v3980
  %v4877 = vcvt.s32.f32 %v3981
  %v4878 = vcvt.s32.f32 %v3982
  %v4879 = vcvt.s32.f32 %v3983
  %v4880 = vcvt.s32.f32 %v3984
  %v4881 = vcvt.s32.f32 %v3985
  %v4882 = vcvt.s32.f32 %v3986
  %v4883 = vcvt.s32.f32 %v3987
  %v4884 = vcvt.s32.f32 %v3988
  %v4885 = vcvt.s32.f32 %v3989
  %v4886 = vcvt.s32.f32 %v3990
  %v4887 = vcvt.s32.f32 %v3991
  %v4888 = vcvt.s32.f32 %v3992
  %v4889 = vcvt.s32.f32 %v3993
  %v4890 = vcvt.s32.f32 %v3994
  %v4891 = vcvt.s32.f32 %v3995
  %v4892 = vcvt.s32.f32 %v3996
  %v4893 = vcvt.s32.f32 %v3997
  %v4894 = vcvt.s32.f32 %v3998
  %v4895 = vcvt.s32.f32 %v3999
  %v4896 = vcvt.s32.f32 %v4000
  %v4897 = vcvt.s32.f32 %v4001
  %v4898 = vcvt.s32.f32 %v4002
  %v4899 = vcvt.s32.f32 %v4003
  %v4900 = vcvt.s32.f32 %v4004
  %v4901 = vcvt.s32.f32 %v4005
  %v4902 = vcvt.s32.f32 %v4006
  %v4903 = vcvt.s32.f32 %v4007
  %v4904 = vcvt.s32.f32 %v4008
  %v4905 = vcvt.s32.f32 %v4009
  %v4906 = vcvt.s32.f32 %v4010
  %v4907 = vcvt.s32.f32 %v4011
  %v4908 = vcvt.s32.f32 %v4012
  %v4909 = vcvt.s32.f32 %v4013
  %v4910 = vcvt.s32.f32 %v4014
  %v4911 = vcvt.s32.f32 %v4015
  %v4912 = vcvt.s32.f32 %v4016
  %v4913 = vcvt.s32.f32 %v4017
  %v4914 = vcvt.s32.f32 %v4018
  %v4915 = vcvt.s32.f32 %v4019
  %v4916 = vcvt.s32.f32 %v4020
  %v4917 = vcvt.s32.f32 %v4021
  %v4918 = vcvt.s32.f32 %v4022
  %v4919 = vcvt.s32.f32 %v4023
  %v4920 = vcvt.s32.f32 %v4024
  %v4921 = vcvt.s32.f32 %v4025
  %v4922 = vcvt.s32.f32 %v4026
  %v4923 = vcvt.s32.f32 %v4027
  %v4924 = vcvt.s32.f32 %v4028
  %v4925 = vcvt.s32.f32 %v4029
  %v4926 = vcvt.s32.f32 %v4030
  %v4927 = vcvt.s32.f32 %v4031
  %v4928 = vcvt.s32.f32 %v4032
  %v4929 = vcvt.s32.f32 %v4033
  %v4930 = vcvt.s32.f32 %v4034
  %v4931 = vcvt.s32.f32 %v4035
  %v4932 = vcvt.s32.f32 %v4036
  %v4933 = vcvt.s32.f32 %v4037
  %v4934 = vcvt.s32.f32 %v4038
  %v4935 = vcvt.s32.f32 %v4039
  %v4936 = vcvt.s32.f32 %v4040
  %v4937 = vcvt.s32.f32 %v4041
  %v4938 = vcvt.s32.f32 %v4042
  %v4939 = vcvt.s32.f32 %v4043
  %v4940 = vcvt.s32.f32 %v4044
  %v4941 = vcvt.s32.f32 %v4045
  %v4942 = vcvt.s32.f32 %v4046
  %v4943 = vcvt.s32.f32 %v4047
  %v4944 = vcvt.s32.f32 %v4048
  %v4945 = vcvt.s32.f32 %v4049
  %v4946 = vcvt.s32.f32 %v4050
  %v4947 = vcvt.s32.f32 %v4051
  %v4948 = vcvt.s32.f32 %v4052
  %v4949 = vcvt.s32.f32 %v4053
  %v4950 = vcvt.s32.f32 %v4054
  %v4951 = vcvt.s32.f32 %v4055
  %v4952 = vcvt.s32.f32 %v4056
  %v4953 = vcvt.s32.f32 %v4057
  %v4954 = vcvt.s32.f32 %v4058
  %v4955 = vcvt.s32.f32 %v4059
  %v4956 = vcvt.s32.f32 %v4060
  %v4957 = vcvt.s32.f32 %v4061
  %v4958 = vcvt.s32.f32 %v4062
  %v4959 = vcvt.s32.f32 %v4063
  %v4960 = vcvt.s32.f32 %v4064
  %v4961 = vcvt.s32.f32 %v4065
  %v4962 = vcvt.s32.f32 %v4066
  %v4963 = vcvt.s32.f32 %v4067
  %v4964 = vcvt.s32.f32 %v4068
  %v4965 = vcvt.s32.f32 %v4069
  %v4966 = vcvt.s32.f32 %v4070
  %v4967 = vcvt.s32.f32 %v4071
  %v4968 = vcvt.s32.f32 %v4072
  %v4969 = vcvt.s32.f32 %v4073
  %v4970 = vcvt.s32.f32 %v4074
  %v4971 = vcvt.s32.f32 %v4075
  %v4972 = vcvt.s32.f32 %v4076
  %v4973 = vcvt.s32.f32 %v4077
  %v4974 = vcvt.s32.f32 %v4078
  %v4975 = vcvt.s32.f32 %v4079
  %v4976 = vcvt.s32.f32 %v4080
  %v4977 = vcvt.s32.f32 %v4081
  %v4978 = vcvt.s32.f32 %v4082
  %v4979 = vcvt.s32.f32 %v4083
  %v4980 = vcvt.s32.f32 %v4084
  %v4981 = vcvt.s32.f32 %v4085
  %v4982 = vcvt.s32.f32 %v4086
  %v4983 = vcvt.s32.f32 %v4087
  %v4984 = vcvt.s32.f32 %v4088
  %v4985 = vcvt.s32.f32 %v4089
  %v4986 = vcvt.s32.f32 %v4090
  %v4987 = vcvt.s32.f32 %v4091
  %v4988 = vcvt.s32.f32 %v4092
  %v4989 = vcvt.s32.f32 %v4093
  %v4990 = vcvt.s32.f32 %v4094
  %v4991 = vcvt.s32.f32 %v4095
  %v4992 = vcvt.s32.f32 %v4096
  %v4993 = vcvt.s32.f32 %v4097
  %v4994 = vcvt.s32.f32 %v4098
  %v4995 = vcvt.s32.f32 %v4099
  %v4996 = vcvt.s32.f32 %v4100
  %v4997 = vcvt.s32.f32 %v4101
  %v4998 = vcvt.s32.f32 %v4102
  %v4999 = vcvt.s32.f32 %v4103
  %v5000 = vcvt.s32.f32 %v4104
  %v5001 = vcvt.s32.f32 %v4105
  %v5002 = vcvt.s32.f32 %v4106
  %v5003 = vcvt.s32.f32 %v4107
  %v5004 = vcvt.s32.f32 %v4108
  %v5005 = vcvt.s32.f32 %v4109
  %v5006 = vcvt.s32.f32 %v4110
  %v5007 = vcvt.s32.f32 %v4111
  %v5008 = vcvt.s32.f32 %v4112
  %v5009 = vcvt.s32.f32 %v4113
  %v5010 = vcvt.s32.f32 %v4114
  %v5011 = vcvt.s32.f32 %v4115
  %v5012 = vcvt.s32.f32 %v4116
  %v5013 = vcvt.s32.f32 %v4117
  %v5014 = vcvt.s32.f32 %v4118
  %v5015 = vcvt.s32.f32 %v4119
  %v5016 = vcvt.s32.f32 %v4120
  %v5017 = vcvt.s32.f32 %v4121
  %v5018 = vcvt.s32.f32 %v4122
  %v5019 = vcvt.s32.f32 %v4123
  %v5020 = vcvt.s32.f32 %v4124
  %v5021 = vcvt.s32.f32 %v4125
  %v5022 = vcvt.s32.f32 %v4126
  %v5023 = vcvt.s32.f32 %v4127
  %v5024 = vcvt.s32.f32 %v4128
  %v5025 = vcvt.s32.f32 %v4129
  %v5026 = vcvt.s32.f32 %v4130
  %v5027 = vcvt.s32.f32 %v4131
  %v5028 = vcvt.s32.f32 %v4132
  %v5029 = vcvt.s32.f32 %v4133
  %v5030 = vcvt.s32.f32 %v4134
  %v5031 = vcvt.s32.f32 %v4135
  %v5032 = vcvt.s32.f32 %v4136
  %v5033 = vcvt.s32.f32 %v4137
  %v5034 = vcvt.s32.f32 %v4138
  %v5035 = vcvt.s32.f32 %v4139
  %v5036 = vcvt.s32.f32 %v4140
  %v5037 = vcvt.s32.f32 %v4141
  %v5038 = vcvt.s32.f32 %v4142
  %v5039 = vcvt.s32.f32 %v4143
  %v5040 = vcvt.s32.f32 %v4144
  %v5041 = vcvt.s32.f32 %v4145
  %v5042 = vcvt.s32.f32 %v4146
  %v5043 = vcvt.s32.f32 %v4147
  %v5044 = vcvt.s32.f32 %v4148
  %v5045 = vcvt.s32.f32 %v4149
  %v5046 = vcvt.s32.f32 %v4150
  %v5047 = vcvt.s32.f32 %v4151
  %v5048 = vcvt.s32.f32 %v4152
  %v5049 = vcvt.s32.f32 %v4153
  %v5050 = vcvt.s32.f32 %v4154
  %v5051 = vcvt.s32.f32 %v4155
  %v5052 = vcvt.s32.f32 %v4156
  %v5053 = vcvt.s32.f32 %v4157
  %v5054 = vcvt.s32.f32 %v4158
  %v5055 = vcvt.s32.f32 %v4159
  %v5056 = vcvt.s32.f32 %v4160
  %v5057 = vcvt.s32.f32 %v4161
  %v5058 = vcvt.s32.f32 %v4162
  %v5059 = vcvt.s32.f32 %v4163
  %v5060 = vcvt.s32.f32 %v4164
  %v5061 = vcvt.s32.f32 %v4165
  %v5062 = vcvt.s32.f32 %v4166
  %v5063 = vcvt.s32.f32 %v4167
  %v5064 = vcvt.s32.f32 %v4168
  %v5065 = vcvt.s32.f32 %v4169
  %v5066 = vcvt.s32.f32 %v4170
  %v5067 = vcvt.s32.f32 %v4171
  %v5068 = vcvt.s32.f32 %v4172
  %v5069 = vcvt.s32.f32 %v4173
  %v5070 = vcvt.s32.f32 %v4174
  %v5071 = vcvt.s32.f32 %v4175
  %v5072 = vcvt.s32.f32 %v4176
  %v5073 = vcvt.s32.f32 %v4177
  %v5074 = vcvt.s32.f32 %v4178
  %v5075 = vcvt.s32.f32 %v4179
  %v5076 = vcvt.s32.f32 %v4180
  %v5077 = vcvt.s32.f32 %v4181
  %v5078 = vcvt.s32.f32 %v4182
  %v5079 = vcvt.s32.f32 %v4183
  %v5080 = vcvt.s32.f32 %v4184
  %v5081 = vcvt.s32.f32 %v4185
  %v5082 = vcvt.s32.f32 %v4186
  %v5083 = vcvt.s32.f32 %v4187
  %v5084 = vcvt.s32.f32 %v4188
  %v5085 = vcvt.s32.f32 %v4189
  %v5086 = vcvt.s32.f32 %v4190
  %v5087 = vcvt.s32.f32 %v4191
  %v5088 = vcvt.s32.f32 %v4192
  %v5089 = vcvt.s32.f32 %v4193
  %v5090 = vcvt.s32.f32 %v4194
  %v5091 = vcvt.s32.f32 %v4195
  %v5092 = vcvt.s32.f32 %v4196
  %v5093 = vcvt.s32.f32 %v4197
  %v5094 = vcvt.s32.f32 %v4198
  %v5095 = vcvt.s32.f32 %v4199
  %v5096 = vcvt.s32.f32 %v4200
  %v5097 = vcvt.s32.f32 %v4201
  %v5098 = vcvt.s32.f32 %v4202
  %v5099 = vcvt.s32.f32 %v4203
  %v5100 = vcvt.s32.f32 %v4204
  %v5101 = vcvt.s32.f32 %v4205
  %v5102 = vcvt.s32.f32 %v4206
  %v5103 = vcvt.s32.f32 %v4207
  %v5104 = vcvt.s32.f32 %v4208
  %v5105 = vcvt.s32.f32 %v4209
  %v5106 = vcvt.s32.f32 %v4210
  %v5107 = vcvt.s32.f32 %v4211
  %v5108 = vcvt.s32.f32 %v4212
  %v5109 = vcvt.s32.f32 %v4213
  %v5110 = vcvt.s32.f32 %v4214
  %v5111 = vcvt.s32.f32 %v4215
  %v5112 = vcvt.s32.f32 %v4216
  %v5113 = vcvt.s32.f32 %v4217
  %v5114 = vcvt.s32.f32 %v4218
  %v5115 = vcvt.s32.f32 %v4219
  %v5116 = vcvt.s32.f32 %v4220
  %v5117 = vcvt.s32.f32 %v4221
  %v5118 = vcvt.s32.f32 %v4222
  %v5119 = vcvt.s32.f32 %v4223
  %v5120 = vcvt.s32.f32 %v4224
  %v5121 = vcvt.s32.f32 %v4225
  %v5122 = vcvt.s32.f32 %v4226
  %v5123 = vcvt.s32.f32 %v4227
  %v5124 = vcvt.s32.f32 %v4228
  %v5125 = vcvt.s32.f32 %v4229
  %v5126 = vcvt.s32.f32 %v4230
  %v5127 = vcvt.s32.f32 %v4231
  %v5128 = vcvt.s32.f32 %v4232
  %v5129 = vcvt.s32.f32 %v4233
  %v5130 = vcvt.s32.f32 %v4234
  %v5131 = vcvt.s32.f32 %v4235
  %v5132 = vcvt.s32.f32 %v4236
  %v5133 = vcvt.s32.f32 %v4237
  %v5134 = vcvt.s32.f32 %v4238
  %v5135 = vcvt.s32.f32 %v4239
  %v5136 = vcvt.s32.f32 %v4240
  %v5137 = vcvt.s32.f32 %v4241
  %v5138 = vcvt.s32.f32 %v4242
  %v5139 = vcvt.s32.f32 %v4243
  %v5140 = vcvt.s32.f32 %v4244
  %v5141 = vcvt.s32.f32 %v4245
  %v5142 = vcvt.s32.f32 %v4246
  %v5143 = vcvt.s32.f32 %v4247
  %v5144 = vcvt.s32.f32 %v4248
  %v5145 = vcvt.s32.f32 %v4249
  %v5146 = vcvt.s32.f32 %v4250
  %v5147 = vcvt.s32.f32 %v4251
  %v5148 = vcvt.s32.f32 %v4252
  %v5149 = vcvt.s32.f32 %v4253
  %v5150 = vcvt.s32.f32 %v4254
  %v5151 = vcvt.s32.f32 %v4255
  %v5152 = vcvt.s32.f32 %v4256
  %v5153 = vcvt.s32.f32 %v4257
  %v5154 = vcvt.s32.f32 %v4258
  %v5155 = vcvt.s32.f32 %v4259
  %v5156 = vcvt.s32.f32 %v4260
  %v5157 = vcvt.s32.f32 %v4261
  %v5158 = vcvt.s32.f32 %v4262
  %v5159 = vcvt.s32.f32 %v4263
  %v5160 = vcvt.s32.f32 %v4264
  %v5161 = vcvt.s32.f32 %v4265
  %v5162 = vcvt.s32.f32 %v4266
  %v5163 = vcvt.s32.f32 %v4267
  %v5164 = vcvt.s32.f32 %v4268
  %v5165 = vcvt.s32.f32 %v4269
  %v5166 = vcvt.s32.f32 %v4270
  %v5167 = vcvt.s32.f32 %v4271
  %v5168 = vcvt.s32.f32 %v4272
  %v5169 = vcvt.s32.f32 %v4273
  %v5170 = vcvt.s32.f32 %v4274
  %v5171 = vcvt.s32.f32 %v4275
  %v5172 = vcvt.s32.f32 %v4276
  %v5173 = vcvt.s32.f32 %v4277
  %v5174 = vcvt.s32.f32 %v4278
  %v5175 = vcvt.s32.f32 %v4279
  %v5176 = vcvt.s32.f32 %v4280
  %v5177 = vcvt.s32.f32 %v4281
  %v5178 = vcvt.s32.f32 %v4282
  %v5179 = vcvt.s32.f32 %v4283
  %v5180 = vcvt.s32.f32 %v4284
  %v5181 = vcvt.s32.f32 %v4285
  %v5182 = vcvt.s32.f32 %v4286
  %v5183 = vcvt.s32.f32 %v4287
  %v5184 = vcvt.s32.f32 %v4288
  %v5185 = vcvt.s32.f32 %v4289
  %v5186 = vcvt.s32.f32 %v4290
  %v5187 = vcvt.s32.f32 %v4291
  %v5188 = vcvt.s32.f32 %v4292
  %v5189 = vcvt.s32.f32 %v4293
  %v5190 = vcvt.s32.f32 %v4294
  %v5191 = vcvt.s32.f32 %v4295
  %v5192 = vcvt.s32.f32 %v4296
  %v5193 = vcvt.s32.f32 %v4297
  %v5194 = vcvt.s32.f32 %v4298
  %v5195 = vcvt.s32.f32 %v4299
  %v5196 = vcvt.s32.f32 %v4300
  %v5197 = vcvt.s32.f32 %v4301
  %v5198 = vcvt.s32.f32 %v4302
  %v5199 = vcvt.s32.f32 %v4303
  %v5200 = vcvt.s32.f32 %v4304
  %v5201 = vcvt.s32.f32 %v4305
  %v5202 = vcvt.s32.f32 %v4306
  %v5203 = vcvt.s32.f32 %v4307
  %v5204 = vcvt.s32.f32 %v4308
  %v5205 = vcvt.s32.f32 %v4309
  %v5206 = vcvt.s32.f32 %v4310
  %v5207 = vcvt.s32.f32 %v4311
  %v5208 = vcvt.s32.f32 %v4312
  %v5209 = vcvt.s32.f32 %v4313
  %v5210 = vcvt.s32.f32 %v4314
  %v5211 = vcvt.s32.f32 %v4315
  %v5212 = vcvt.s32.f32 %v4316
  %v5213 = vcvt.s32.f32 %v4317
  %v5214 = vcvt.s32.f32 %v4318
  %v5215 = vcvt.s32.f32 %v4319
  %v5216 = vcvt.s32.f32 %v4320
  %v5217 = vcvt.s32.f32 %v4321
  %v5218 = vcvt.s32.f32 %v4322
  %v5219 = vcvt.s32.f32 %v4323
  %v5220 = vcvt.s32.f32 %v4324
  %v5221 = vcvt.s32.f32 %v4325
  %v5222 = vcvt.s32.f32 %v4326
  %v5223 = vcvt.s32.f32 %v4327
  %v5224 = vcvt.s32.f32 %v4328
  %v5225 = vcvt.s32.f32 %v4329
  %v5226 = vcvt.s32.f32 %v4330
  %v5227 = vcvt.s32.f32 %v4331
  %v5228 = vcvt.s32.f32 %v4332
  %v5229 = vcvt.s32.f32 %v4333
  %v5230 = vcvt.s32.f32 %v4334
  %v5231 = vcvt.s32.f32 %v4335
  %v5232 = vcvt.s32.f32 %v4336
  %v5233 = vcvt.s32.f32 %v4337
  %v5234 = vcvt.s32.f32 %v4338
  %v5235 = vcvt.s32.f32 %v4339
  %v5236 = vcvt.s32.f32 %v4340
  %v5237 = vcvt.s32.f32 %v4341
  %v5238 = vcvt.s32.f32 %v4342
  %v5239 = vcvt.s32.f32 %v4343
  %v5240 = vcvt.s32.f32 %v4344
  %v5241 = vcvt.s32.f32 %v4345
  %v5242 = vcvt.s32.f32 %v4346
  %v5243 = vcvt.s32.f32 %v4347
  %v5244 = vcvt.s32.f32 %v4348
  %v5245 = vcvt.s32.f32 %v4349
  %v5246 = vcvt.s32.f32 %v4350
  %v5247 = vcvt.s32.f32 %v4351
  %v5248 = vcvt.s32.f32 %v4352
  %v5249 = vcvt.s32.f32 %v4353
  %v5250 = vcvt.s32.f32 %v4354
  %v5251 = vcvt.s32.f32 %v4355
  %v5252 = vcvt.s32.f32 %v4356
  %v5253 = vcvt.s32.f32 %v4357
  %v5254 = vcvt.s32.f32 %v4358
  %v5255 = vcvt.s32.f32 %v4359
  %v5256 = vcvt.s32.f32 %v4360
  %v5257 = vcvt.s32.f32 %v4361
  %v5258 = vcvt.s32.f32 %v4362
  %v5259 = vcvt.s32.f32 %v4363
  %v5260 = vcvt.s32.f32 %v4364
  %v5261 = vcvt.s32.f32 %v4365
  %v5262 = vcvt.s32.f32 %v4366
  %v5263 = vcvt.s32.f32 %v4367
  %v5264 = vcvt.s32.f32 %v4368
  %v5265 = vcvt.s32.f32 %v4369
  %v5266 = vcvt.s32.f32 %v4370
  %v5267 = vcvt.s32.f32 %v4371
  %v5268 = vcvt.s32.f32 %v4372
  %v5269 = vcvt.s32.f32 %v4373
  %v5270 = vcvt.s32.f32 %v4374
  %v5271 = vcvt.s32.f32 %v4375
  %v5272 = vcvt.s32.f32 %v4376
  %v5273 = vcvt.s32.f32 %v4377
  %v5274 = vcvt.s32.f32 %v4378
  %v5275 = vcvt.s32.f32 %v4379
  %v5276 = vcvt.s32.f32 %v4380
  %v5277 = vcvt.s32.f32 %v4381
  %v5278 = vcvt.s32.f32 %v4382
  %v5279 = vcvt.s32.f32 %v4383
  %v5280 = vcvt.s32.f32 %v4384
  %v5281 = vcvt.s32.f32 %v4385
  %v5282 = vcvt.s32.f32 %v4386
  %v5283 = vcvt.s32.f32 %v4387
  %v5284 = vcvt.s32.f32 %v4388
  %v5285 = vcvt.s32.f32 %v4389
  %v5286 = vcvt.s32.f32 %v4390
  %v5287 = vcvt.s32.f32 %v4391
  %v5288 = vcvt.s32.f32 %v4392
  %v5289 = vcvt.s32.f32 %v4393
  %v5290 = vcvt.s32.f32 %v4394
  %v5291 = vcvt.s32.f32 %v4395
  %v5292 = vcvt.s32.f32 %v4396
  %v5293 = vcvt.s32.f32 %v4397
  %v5294 = vcvt.s32.f32 %v4398
  %v5295 = vcvt.s32.f32 %v4399
  %v5296 = vcvt.s32.f32 %v4400
  %v5297 = vcvt.s32.f32 %v4401
  %v5298 = vcvt.s32.f32 %v4402
  %v5299 = vcvt.s32.f32 %v4403
  %v5300 = vcvt.s32.f32 %v4404
  %v5301 = vcvt.s32.f32 %v4405
  %v5302 = vcvt.s32.f32 %v4406
  %v5303 = vcvt.s32.f32 %v4407
  %v5304 = vcvt.s32.f32 %v4408
  %v5305 = vcvt.s32.f32 %v4409
  %v5306 = vcvt.s32.f32 %v4410
  %v5307 = vcvt.s32.f32 %v4411
  %v5308 = vcvt.s32.f32 %v4412
  %v5309 = vcvt.s32.f32 %v4413
  %v5310 = vcvt.s32.f32 %v4414
  %v5311 = vcvt.s32.f32 %v4415
  %v5312 = vcvt.s32.f32 %v4416
  %v5313 = vcvt.s32.f32 %v4417
  %v5314 = vcvt.s32.f32 %v4418
  %v5315 = vcvt.s32.f32 %v4419
  %v5316 = vcvt.s32.f32 %v4420
  %v5317 = vcvt.s32.f32 %v4421
  %v5318 = vcvt.s32.f32 %v4422
  %v5319 = vcvt.s32.f32 %v4423
  %v5320 = vcvt.s32.f32 %v4424
  %v5321 = vcvt.s32.f32 %v4425
  %v5322 = vcvt.s32.f32 %v4426
  %v5323 = vcvt.s32.f32 %v4427
  %v5324 = vcvt.s32.f32 %v4428
  %v5325 = vcvt.s32.f32 %v4429
  %v5326 = vcvt.s32.f32 %v4430
  %v5327 = vcvt.s32.f32 %v4431
  %v5328 = vcvt.s32.f32 %v4432
  %v5329 = vcvt.s32.f32 %v4433
  %v5330 = vcvt.s32.f32 %v4434
  %v5331 = vcvt.s32.f32 %v4435
  %v5332 = vcvt.s32.f32 %v4436
  %v5333 = vcvt.s32.f32 %v4437
  %v5334 = vcvt.s32.f32 %v4438
  %v5335 = vcvt.s32.f32 %v4439
  %v5336 = vcvt.s32.f32 %v4440
  %v5337 = vcvt.s32.f32 %v4441
  %v5338 = vcvt.s32.f32 %v4442
  %v5339 = vcvt.s32.f32 %v4443
  %v5340 = vcvt.s32.f32 %v4444
  %v5341 = vcvt.s32.f32 %v4445
  %v5342 = vcvt.s32.f32 %v4446
  %v5343 = vcvt.s32.f32 %v4447
  %v5344 = vcvt.s32.f32 %v4448
  %v5345 = vcvt.s32.f32 %v4449
  %v5346 = vcvt.s32.f32 %v4450
  %v5347 = vcvt.s32.f32 %v4451
  %v5348 = vcvt.s32.f32 %v4452
  %v5349 = vcvt.s32.f32 %v4453
  %v5350 = vcvt.s32.f32 %v4454
  %v5351 = vcvt.s32.f32 %v4455
  %v5352 = vcvt.s32.f32 %v4456
  %v5353 = vcvt.s32.f32 %v4457
  %v5354 = vcvt.s32.f32 %v4458
  %v5355 = vcvt.s32.f32 %v4459
  %v5356 = vcvt.s32.f32 %v4460
  %v5357 = vcvt.s32.f32 %v4461
  %v5358 = vcvt.s32.f32 %v4462
  %v5359 = vcvt.s32.f32 %v4463
  %v5360 = vcvt.s32.f32 %v4464
  %v5361 = vcvt.s32.f32 %v4465
  %v5362 = vcvt.s32.f32 %v4466
  %v5363 = vcvt.s32.f32 %v4467
  %v5364 = vcvt.s32.f32 %v4468
  %v5365 = vcvt.s32.f32 %v4469
  %v5366 = vcvt.s32.f32 %v4470
  %v5367 = vcvt.s32.f32 %v4471
  %v5368 = vcvt.s32.f32 %v4472
  %v5369 = vcvt.s32.f32 %v4473
  %v5370 = vcvt.s32.f32 %v4474
  %v5371 = vcvt.s32.f32 %v4475
  %v5372 = vcvt.s32.f32 %v4476
  %v5373 = vcvt.s32.f32 %v4477
  %v5374 = vcvt.s32.f32 %v4478
  %v5375 = vcvt.s32.f32 %v4479
  %v5376 = vcvt.s32.f32 %v4480
  %v5377 = vcvt.s32.f32 %v4481
  %v5378 = vcvt.s32.f32 %v4482
  %v5379 = vcvt.s32.f32 %v4483
  %v5380 = vcvt.s32.f32 %v4484
  %v5381 = vcvt.s32.f32 %v4485
  %v5382 = vcvt.s32.f32 %v4486
  %v5383 = vcvt.s32.f32 %v4487
  %v5384 = vcvt.s32.f32 %v4488
  %v5385 = vcvt.s32.f32 %v4489
  %v5386 = vcvt.s32.f32 %v4490
  %v5387 = vcvt.s32.f32 %v4491
  %v5388 = vcvt.s32.f32 %v4492
  %v5389 = vcvt.s32.f32 %v4493
  %v5390 = vcvt.s32.f32 %v4494
  %v5391 = vcvt.s32.f32 %v4495
  %v5392 = vcvt.s32.f32 %v4496
  %v5393 = vcvt.s32.f32 %v4497
  %v5394 = vcvt.s32.f32 %v4498
  %v5395 = vcvt.s32.f32 %v4499
  %v5396 = vcvt.s32.f32 %v4500
  %v5397 = vcvt.s32.f32 %v4501
  %v5398 = vcvt.s32.f32 %v4502
  %v5399 = vcvt.s32.f32 %v4503
  %v5400 = vcvt.s32.f32 %v4504
  %v5401 = vcvt.s32.f32 %v4505
  %v5402 = vcvt.s32.f32 %v4506
  %v5403 = vcvt.s32.f32 %v4507
  %v5404 = vcvt.s32.f32 %v4508
  %v5405 = vcvt.s32.f32 %v4509
  %v5406 = vcvt.s32.f32 %v4510
  %v5407 = vcvt.s32.f32 %v4511
  %v5408 = vcvt.s32.f32 %v4512
  %v5409 = vcvt.s32.f32 %v4513
  %v5410 = vcvt.s32.f32 %v4514
  %v5411 = vcvt.s32.f32 %v4515
  %v5412 = vcvt.s32.f32 %v4516
  %v5413 = vcvt.s32.f32 %v4517
  %v5414 = vcvt.s32.f32 %v4518
  %v5415 = vcvt.s32.f32 %v4519
  %v5416 = vcvt.s32.f32 %v4520
  %v5417 = vcvt.s32.f32 %v4521
  %v5418 = vcvt.s32.f32 %v4522
  %v5419 = vcvt.s32.f32 %v4523
  %v5420 = vcvt.s32.f32 %v4524
  %v5421 = vcvt.s32.f32 %v4525
  %v5422 = vcvt.s32.f32 %v4526
  %v5423 = vcvt.s32.f32 %v4527
  %v5424 = vcvt.s32.f32 %v4528
  %v5425 = vcvt.s32.f32 %v4529
  %v5426 = vcvt.s32.f32 %v4530
  %v5427 = vcvt.s32.f32 %v4531
  %v5428 = vcvt.s32.f32 %v4532
  %v5429 = vcvt.s32.f32 %v4533
  %v5430 = vcvt.s32.f32 %v4534
  %v5431 = vcvt.s32.f32 %v4535
  %v5432 = vcvt.s32.f32 %v4536
  %v5433 = vcvt.s32.f32 %v4537
  %v5434 = vcvt.s32.f32 %v4538
  %v5435 = vcvt.s32.f32 %v4539
  %v5436 = vcvt.s32.f32 %v4540
  %v5437 = vcvt.s32.f32 %v4541
  %v5438 = vcvt.s32.f32 %v4542
  %v5439 = vcvt.s32.f32 %v4543
  %v5440 = vcvt.s32.f32 %v4544
  %v5441 = vcvt.s32.f32 %v4545
  %v5442 = vcvt.s32.f32 %v4546
  %v5443 = vcvt.s32.f32 %v4547
  %v5444 = vcvt.s32.f32 %v4548
  %v5445 = vcvt.s32.f32 %v4549
  %v5446 = vcvt.s32.f32 %v4550
  %v5447 = vcvt.s32.f32 %v4551
  %v5448 = vcvt.s32.f32 %v4552
  %v5449 = vcvt.s32.f32 %v4553
  %v5450 = vcvt.s32.f32 %v4554
  %v5451 = vcvt.s32.f32 %v4555
  %v5452 = vcvt.s32.f32 %v4556
  %v5453 = vcvt.s32.f32 %v4557
  %v5454 = vcvt.s32.f32 %v4558
  %v5455 = vcvt.s32.f32 %v4559
  %v5456 = vcvt.s32.f32 %v4560
  %v5457 = vcvt.s32.f32 %v4561
  %v5458 = vcvt.s32.f32 %v4562
  %v5459 = vcvt.s32.f32 %v4563
  %v5460 = vcvt.s32.f32 %v4564
  %v5461 = vcvt.s32.f32 %v4565
  %v5462 = vcvt.s32.f32 %v4566
  %v5463 = vcvt.s32.f32 %v4567
  %v5464 = vcvt.s32.f32 %v4568
  %v5465 = vcvt.s32.f32 %v4569
  %v5466 = vcvt.s32.f32 %v4570
  %v5467 = vcvt.s32.f32 %v4571
  %v5468 = vcvt.s32.f32 %v4572
  %v5469 = vcvt.s32.f32 %v4573
  %v5470 = vcvt.s32.f32 %v4574
  %v5471 = vcvt.s32.f32 %v4575
  %v5472 = vcvt.s32.f32 %v4576
  %v5473 = vcvt.s32.f32 %v4577
  %v5474 = vcvt.s32.f32 %v4578
  %v5475 = vcvt.s32.f32 %v4579
  %v5476 = vcvt.s32.f32 %v4580
  %v5477 = vcvt.s32.f32 %v4581
  %v5478 = vcvt.s32.f32 %v4582
  %v5479 = vcvt.s32.f32 %v4583
  %v5480 = vcvt.s32.f32 %v4584
  %v5481 = vcvt.s32.f32 %v4585
  %v5482 = vcvt.s32.f32 %v4586
  %v5483 = vcvt.s32.f32 %v4587
  %v5484 = vcvt.s32.f32 %v4588
  %v5485 = vcvt.s32.f32 %v4589
  %v5486 = vcvt.s32.f32 %v4590
  %v5487 = vcvt.s32.f32 %v4591
  %v5488 = vcvt.s32.f32 %v4592
  %v5489 = vcvt.s32.f32 %v4593
  %v5490 = vcvt.s32.f32 %v4594
  %v5491 = vcvt.s32.f32 %v4595
  %v5492 = vcvt.s32.f32 %v4596
  %v5493 = vcvt.s32.f32 %v4597
  %v5494 = vcvt.s32.f32 %v4598
  %v5495 = vcvt.s32.f32 %v4599
  %v5496 = vcvt.s32.f32 %v4600
  %v5497 = vcvt.s32.f32 %v4601
  %v5498 = vcvt.s32.f32 %v4602
  %v5499 = vcvt.s32.f32 %v4603
  %v5500 = vcvt.s32.f32 %v4604
  %v5501 = vcvt.s32.f32 %v4605
  %v5502 = vcvt.s32.f32 %v4606
  %v5503 = vcvt.s32.f32 %v4607
  %v5504 = vcvt.s32.f32 %v4608
  %v5505 = vcvt.s32.f32 %v4609
  %v5506 = vcvt.s32.f32 %v4610
  %v5507 = vcvt.s32.f32 %v4611
  %v5508 = vcvt.s32.f32 %v4612
  %v5509 = vcvt.s32.f32 %v4613
  %v5510 = vcvt.s32.f32 %v4614
  %v5511 = vcvt.s32.f32 %v4615
  %v5512 = vcvt.s32.f32 %v4616
  %v5513 = vcvt.s32.f32 %v4617
  %v5514 = vcvt.s32.f32 %v4618
  %v5515 = vcvt.s32.f32 %v4619
  %v5516 = vcvt.s32.f32 %v4620
  %v5517 = vcvt.s32.f32 %v4621
  %v5518 = vcvt.s32.f32 %v4622
  %v5519 = vcvt.s32.f32 %v4623
  %v5520 = vcvt.s32.f32 %v4624
  %v5521 = vcvt.s32.f32 %v4625
  %v5522 = vcvt.s32.f32 %v4626
  %v5523 = vcvt.s32.f32 %v4627
  %v5524 = vcvt.s32.f32 %v4628
  %v5525 = vcvt.s32.f32 %v4629
  %v5526 = vcvt.s32.f32 %v4630
  %v5527 = vcvt.s32.f32 %v4631
  %v5528 = vcvt.s32.f32 %v4632
  %v5529 = vcvt.s32.f32 %v4633
  %v5530 = vcvt.s32.f32 %v4634
  %v5531 = vcvt.s32.f32 %v4635
  %v5532 = vcvt.s32.f32 %v4636
  %v5533 = vcvt.s32.f32 %v4637
  %v5534 = vcvt.s32.f32 %v4638
  %v5535 = vcvt.s32.f32 %v4639
  %v5536 = vcvt.s32.f32 %v4640
  %v5537 = vcvt.s32.f32 %v4641
  %v5538 = vcvt.s32.f32 %v4642
  %v5539 = vcvt.s32.f32 %v4643
  %v5540 = vcvt.s32.f32 %v4644
  %v5541 = vcvt.s32.f32 %v4645
  %v5542 = vcvt.s32.f32 %v4646
  %v5543 = vcvt.s32.f32 %v4647
  %v5544 = vcvt.s32.f32 %v4648
  %v5545 = vcvt.s32.f32 %v4649
  %v5546 = vcvt.s32.f32 %v4650
  %v5547 = vcvt.s32.f32 %v4651
  %v5548 = vcvt.s32.f32 %v4652
  %v5549 = vcvt.s32.f32 %v4653
  %v5550 = vcvt.s32.f32 %v4654
  %v5551 = vcvt.s32.f32 %v4655
  %v5552 = vcvt.s32.f32 %v4656
  %v5553 = vcvt.s32.f32 %v4657
  %v5554 = vcvt.s32.f32 %v4658
  %v5555 = vcvt.s32.f32 %v4659
  %v5556 = vcvt.s32.f32 %v4660
  %v5557 = vcvt.s32.f32 %v4661
  %v5558 = vcvt.s32.f32 %v4662
  %v5559 = vcvt.s32.f32 %v4663
  %v5560 = vcvt.s32.f32 %v4664
  %v5561 = vcvt.s32.f32 %v4665
  %v5562 = vcvt.s32.f32 %v4666
  %v5563 = vcvt.s32.f32 %v4667
  %v5564 = vcvt.s32.f32 %v4668
  %v5565 = vcvt.s32.f32 %v4669
  %v5566 = vcvt.s32.f32 %v4670
  %v5567 = vcvt.s32.f32 %v4671
  %v5568 = vcvt.s32.f32 %v4672
  %v5569 = vcvt.s32.f32 %v4673
  %v5570 = vcvt.s32.f32 %v4674
  %v5571 = vcvt.s32.f32 %v4675
  %v5572 = vcvt.s32.f32 %v4676
  %v5573 = vcvt.s32.f32 %v4677
  %v5574 = vcvt.s32.f32 %v4678
  %v5575 = vcvt.s32.f32 %v4679
  %v5576 = vcvt.s32.f32 %v4680
  %v5577 = vcvt.s32.f32 %v4681
  %v5578 = vcvt.s32.f32 %v4682
  %v5579 = vcvt.s32.f32 %v4683
  %v5580 = vcvt.s32.f32 %v4684
  %v5581 = vcvt.s32.f32 %v4685
  %v5582 = vcvt.s32.f32 %v4686
  %v5583 = vcvt.s32.f32 %v4687
  %v5584 = vcvt.s32.f32 %v4688
  %v5585 = vcvt.s32.f32 %v4689
  %v5586 = vcvt.s32.f32 %v4690
  %v5587 = vcvt.s32.f32 %v4691
  %v5588 = vcvt.s32.f32 %v4692
  %v5589 = vcvt.s32.f32 %v4693
  %v5590 = vcvt.s32.f32 %v4694
  %v5591 = vcvt.s32.f32 %v4695
  %v5592 = vcvt.s32.f32 %v4696
  %v5593 = vcvt.s32.f32 %v4697
  %v5594 = vcvt.s32.f32 %v4698
  %v5595 = vcvt.s32.f32 %v4699
  %v5596 = vcvt.s32.f32 %v4700
  %v5597 = vcvt.s32.f32 %v4701
  %v5598 = vcvt.s32.f32 %v4702
  %v5599 = vcvt.s32.f32 %v4703
  %v5600 = vcvt.s32.f32 %v4704
  %v5601 = vcvt.s32.f32 %v4705
  %v5602 = vcvt.s32.f32 %v4706
  %v5603 = vcvt.s32.f32 %v4707
  %v5604 = vcvt.s32.f32 %v4708
  %v5605 = vcvt.s32.f32 %v4709
  %v5606 = vcvt.s32.f32 %v4710
  %v5607 = vcvt.s32.f32 %v4711
  %v5608 = vcvt.s32.f32 %v4712
  %v5609 = vcvt.s32.f32 %v4713
  %v5610 = vcvt.s32.f32 %v4714
  %v5611 = vcvt.s32.f32 %v4715
  %v5612 = vcvt.s32.f32 %v4716
  %v5613 = vcvt.s32.f32 %v4717
  %v5614 = vcvt.s32.f32 %v4718
  %v5615 = vcvt.s32.f32 %v4719
  %v5616 = vcvt.s32.f32 %v4720
  %v5617 = vcvt.s32.f32 %v4721
  %v5618 = vcvt.s32.f32 %v4722
  %v5619 = vcvt.s32.f32 %v4723
  %v5620 = vcvt.s32.f32 %v4724
  %v5621 = vcvt.s32.f32 %v4725
  %v5622 = vcvt.s32.f32 %v4726
  %v5623 = vcvt.s32.f32 %v4727
  %v5624 = vcvt.s32.f32 %v4728
  %v5625 = vcvt.s32.f32 %v4729
  %v5626 = vcvt.s32.f32 %v4730
  %v5627 = vcvt.s32.f32 %v4731
  %v5628 = vcvt.s32.f32 %v4732
  %v5629 = vcvt.s32.f32 %v4733
  %v5630 = vcvt.s32.f32 %v4734
  %v5631 = vcvt.s32.f32 %v4735
  %v5632 = vcvt.s32.f32 %v4736
  %v5633 = vcvt.s32.f32 %v4737
  %v5634 = vcvt.s32.f32 %v4738
  %v5635 = vcvt.s32.f32 %v4739
  %v5636 = vcvt.s32.f32 %v4740
  %v5637 = vcvt.s32.f32 %v4741
  %v5638 = vcvt.s32.f32 %v4742
  %v5639 = vcvt.s32.f32 %v4743
  %v5640 = vcvt.s32.f32 %v4744
  %v5641 = vcvt.s32.f32 %v4745
  %v5642 = vcvt.s32.f32 %v4746
  %v5643 = vcvt.s32.f32 %v4747
  %v5644 = vcvt.s32.f32 %v4748
  %v5645 = vcvt.s32.f32 %v4749
  %v5646 = vcvt.s32.f32 %v4750
  %v5647 = vcvt.s32.f32 %v4751
  %v5648 = vcvt.s32.f32 %v4752
  %v5649 = vcvt.s32.f32 %v4753
  %v5650 = vcvt.s32.f32 %v4754
  %v5651 = vcvt.s32.f32 %v4755
  %v5652 = vcvt.s32.f32 %v4756
  %v5653 = vcvt.s32.f32 %v4757
  %v5654 = vcvt.s32.f32 %v4758
  %v5655 = vcvt.s32.f32 %v4759
  %v5656 = vcvt.s32.f32 %v4760
  %v5657 = vcvt.s32.f32 %v4761
  %v5658 = vcvt.s32.f32 %v4762
  %v5659 = vcvt.s32.f32 %v4763
  %v5660 = vcvt.s32.f32 %v4764
  %v5661 = vcvt.s32.f32 %v4765
  %v5662 = vcvt.s32.f32 %v4766
  %v5663 = vcvt.s32.f32 %v4767
  %v5664 = vcvt.s32.f32 %v4768
  %v5665 = vcvt.s32.f32 %v4769
  %v5666 = vcvt.s32.f32 %v4770
  %v5667 = vcvt.s32.f32 %v4771
  %v5668 = vcvt.s32.f32 %v4772
  %v5669 = vcvt.s32.f32 %v4773
  %v5670 = vcvt.s32.f32 %v4774
  %v5671 = vcvt.s32.f32 %v4775
  %v5672 = vcvt.s32.f32 %v4776
  %v5673 = vcvt.s32.f32 %v4777
  %v5674 = vcvt.s32.f32 %v4778
  %v5675 = vcvt.s32.f32 %v4779
  %v5676 = vcvt.s32.f32 %v4780
  %v5677 = vcvt.s32.f32 %v4781
  %v5678 = vcvt.s32.f32 %v4782
  %v5679 = vcvt.s32.f32 %v4783
  %v5680 = vcvt.s32.f32 %v4784
  %v5681 = vcvt.s32.f32 %v4785
  %v5682 = vcvt.s32.f32 %v4786
  %v5683 = vcvt.s32.f32 %v4787
  %v5684 = vcvt.s32.f32 %v4788
  %v5685 = vcvt.s32.f32 %v4789
  %v5686 = vcvt.s32.f32 %v4790
  %v5687 = vcvt.s32.f32 %v4791
  %v5688 = vcvt.s32.f32 %v4792
  %v5689 = vcvt.s32.f32 %v4793
  %v5690 = vcvt.s32.f32 %v4794
  %v5691 = vcvt.s32.f32 %v4795
  %v5692 = vcvt.s32.f32 %v4796
  %v5693 = vcvt.s32.f32 %v4797
  %v5694 = vcvt.s32.f32 %v4798
  %v5695 = vcvt.s32.f32 %v4799
  %v5696 = vcvt.s32.f32 %v4800
  %v5697 = vcvt.s32.f32 %v4801
  %v5698 = vcvt.s32.f32 %v4802
  %v5699 = vcvt.s32.f32 %v4803
  %v5700 = vcvt.s32.f32 %v4804
  %v5701 = vcvt.s32.f32 %v4805
  %v5702 = vcvt.s32.f32 %v4806
  %v5703 = vcvt.s32.f32 %v4807
  %v5704 = vcvt.s32.f32 %v4808
  %v5705 = vcvt.s32.f32 %v4809
  %v5706 = vcvt.s32.f32 %v4810
  %v5707 = vcvt.s32.f32 %v4811
  %v5708 = vcvt.s32.f32 %v4812
  %v5709 = vcvt.s32.f32 %v4813
  %v5710 = vcvt.s32.f32 %v4814
  %v5711 = vcvt.s32.f32 %v4815
  %v5712 = vcvt.s32.f32 %v4816
  %v5713 = vcvt.s32.f32 %v4817
  %v5714 = vcvt.s32.f32 %v4818
  %v5715 = vcvt.s32.f32 %v4819
  %v5716 = vcvt.s32.f32 %v4820
  %v5717 = vcvt.s32.f32 %v4821
  %v5718 = vcvt.s32.f32 %v4822
  %v5719 = vcvt.s32.f32 %v4823
  %v5720 = vcvt.s32.f32 %v4824
  %v5721 = vcvt.s32.f32 %v4825
  %v5722 = vcvt.s32.f32 %v4826
  %v5723 = vcvt.s32.f32 %v4827
  %v5724 = vcvt.s32.f32 %v4828
  %v5725 = vcvt.s32.f32 %v4829
  %v5726 = vcvt.s32.f32 %v4830
  %v5727 = vcvt.s32.f32 %v4831
  %v5728 = vcvt.s32.f32 %v4832
  %v5729 = vcvt.s32.f32 %v4833
  %v5730 = vcvt.s32.f32 %v4834
  %v5731 = vcvt.s32.f32 %v4835
  %v5732 = vcvt.s32.f32 %v4836
  %v5733 = vcvt.s32.f32 %v4837
  %v5734 = vcvt.s32.f32 %v4838
  %v5735 = vcvt.s32.f32 %v4839
  %v5736 = vcvt.s32.f32 %v4840
  %v5737 = vcvt.s32.f32 %v4841
  %v5738 = vcvt.s32.f32 %v4842
  %v5739 = vcvt.s32.f32 %v4843
  %v5740 = vcvt.s32.f32 %v4844
  %v5741 = vcvt.s32.f32 %v4845
  %v5742 = vcvt.s32.f32 %v4846
  %v5743 = vcvt.s32.f32 %v4847
  %v5744 = vcvt.s32.f32 %v4848
  %v5745 = vcvt.s32.f32 %v4849
  %v5746 = vcvt.s32.f32 %v4850
  %v5747 = vcvt.s32.f32 %v4851
  %v5748 = vcvt.s32.f32 %v4852
  %v5749 = vcvt.s32.f32 %v4853
  %v5750 = vcvt.s32.f32 %v4854
  %v5751 = vcvt.s32.f32 %v4855
  %v5752 = vcvt.s32.f32 %v4856
  %v5753 = vcvt.s32.f32 %v4857
  %v5754 = vcvt.s32.f32 %v4858
  %v5755 = vcvt.s32.f32 %v4859
  %v5756 = vcvt.s32.f32 %v4860
  %v5757 = vcvt.s32.f32 %v4861
  %v5758 = vpack.c.bf16 %v4869, %v4862
  %v5759 = vpack.c.bf16 %v4870, %v4863
  %v5760 = vpack.c.bf16 %v4871, %v4864
  %v5761 = vpack.c.bf16 %v4872, %v4865
  %v5762 = vpack.c.bf16 %v4873, %v4866
  %v5763 = vpack.c.bf16 %v4874, %v4867
  %v5764 = vpack.c.bf16 %v4875, %v4868
  %v5765 = vpack.c.bf16 %v4883, %v4876
  %v5766 = vpack.c.bf16 %v4884, %v4877
  %v5767 = vpack.c.bf16 %v4885, %v4878
  %v5768 = vpack.c.bf16 %v4886, %v4879
  %v5769 = vpack.c.bf16 %v4887, %v4880
  %v5770 = vpack.c.bf16 %v4888, %v4881
  %v5771 = vpack.c.bf16 %v4889, %v4882
  %v5772 = vpack.c.bf16 %v4897, %v4890
  %v5773 = vpack.c.bf16 %v4898, %v4891
  %v5774 = vpack.c.bf16 %v4899, %v4892
  %v5775 = vpack.c.bf16 %v4900, %v4893
  %v5776 = vpack.c.bf16 %v4901, %v4894
  %v5777 = vpack.c.bf16 %v4902, %v4895
  %v5778 = vpack.c.bf16 %v4903, %v4896
  %v5779 = vpack.c.bf16 %v4911, %v4904
  %v5780 = vpack.c.bf16 %v4912, %v4905
  %v5781 = vpack.c.bf16 %v4913, %v4906
  %v5782 = vpack.c.bf16 %v4914, %v4907
  %v5783 = vpack.c.bf16 %v4915, %v4908
  %v5784 = vpack.c.bf16 %v4916, %v4909
  %v5785 = vpack.c.bf16 %v4917, %v4910
  %v5786 = vpack.c.bf16 %v4925, %v4918
  %v5787 = vpack.c.bf16 %v4926, %v4919
  %v5788 = vpack.c.bf16 %v4927, %v4920
  %v5789 = vpack.c.bf16 %v4928, %v4921
  %v5790 = vpack.c.bf16 %v4929, %v4922
  %v5791 = vpack.c.bf16 %v4930, %v4923
  %v5792 = vpack.c.bf16 %v4931, %v4924
  %v5793 = vpack.c.bf16 %v4939, %v4932
  %v5794 = vpack.c.bf16 %v4940, %v4933
  %v5795 = vpack.c.bf16 %v4941, %v4934
  %v5796 = vpack.c.bf16 %v4942, %v4935
  %v5797 = vpack.c.bf16 %v4943, %v4936
  %v5798 = vpack.c.bf16 %v4944, %v4937
  %v5799 = vpack.c.bf16 %v4945, %v4938
  %v5800 = vpack.c.bf16 %v4953, %v4946
  %v5801 = vpack.c.bf16 %v4954, %v4947
  %v5802 = vpack.c.bf16 %v4955, %v4948
  %v5803 = vpack.c.bf16 %v4956, %v4949
  %v5804 = vpack.c.bf16 %v4957, %v4950
  %v5805 = vpack.c.bf16 %v4958, %v4951
  %v5806 = vpack.c.bf16 %v4959, %v4952
  %v5807 = vpack.c.bf16 %v4967, %v4960
  %v5808 = vpack.c.bf16 %v4968, %v4961
  %v5809 = vpack.c.bf16 %v4969, %v4962
  %v5810 = vpack.c.bf16 %v4970, %v4963
  %v5811 = vpack.c.bf16 %v4971, %v4964
  %v5812 = vpack.c.bf16 %v4972, %v4965
  %v5813 = vpack.c.bf16 %v4973, %v4966
  %v5814 = vpack.c.bf16 %v4981, %v4974
  %v5815 = vpack.c.bf16 %v4982, %v4975
  %v5816 = vpack.c.bf16 %v4983, %v4976
  %v5817 = vpack.c.bf16 %v4984, %v4977
  %v5818 = vpack.c.bf16 %v4985, %v4978
  %v5819 = vpack.c.bf16 %v4986, %v4979
  %v5820 = vpack.c.bf16 %v4987, %v4980
  %v5821 = vpack.c.bf16 %v4995, %v4988
  %v5822 = vpack.c.bf16 %v4996, %v4989
  %v5823 = vpack.c.bf16 %v4997, %v4990
  %v5824 = vpack.c.bf16 %v4998, %v4991
  %v5825 = vpack.c.bf16 %v4999, %v4992
  %v5826 = vpack.c.bf16 %v5000, %v4993
  %v5827 = vpack.c.bf16 %v5001, %v4994
  %v5828 = vpack.c.bf16 %v5009, %v5002
  %v5829 = vpack.c.bf16 %v5010, %v5003
  %v5830 = vpack.c.bf16 %v5011, %v5004
  %v5831 = vpack.c.bf16 %v5012, %v5005
  %v5832 = vpack.c.bf16 %v5013, %v5006
  %v5833 = vpack.c.bf16 %v5014, %v5007
  %v5834 = vpack.c.bf16 %v5015, %v5008
  %v5835 = vpack.c.bf16 %v5023, %v5016
  %v5836 = vpack.c.bf16 %v5024, %v5017
  %v5837 = vpack.c.bf16 %v5025, %v5018
  %v5838 = vpack.c.bf16 %v5026, %v5019
  %v5839 = vpack.c.bf16 %v5027, %v5020
  %v5840 = vpack.c.bf16 %v5028, %v5021
  %v5841 = vpack.c.bf16 %v5029, %v5022
  %v5842 = vpack.c.bf16 %v5037, %v5030
  %v5843 = vpack.c.bf16 %v5038, %v5031
  %v5844 = vpack.c.bf16 %v5039, %v5032
  %v5845 = vpack.c.bf16 %v5040, %v5033
  %v5846 = vpack.c.bf16 %v5041, %v5034
  %v5847 = vpack.c.bf16 %v5042, %v5035
  %v5848 = vpack.c.bf16 %v5043, %v5036
  %v5849 = vpack.c.bf16 %v5051, %v5044
  %v5850 = vpack.c.bf16 %v5052, %v5045
  %v5851 = vpack.c.bf16 %v5053, %v5046
  %v5852 = vpack.c.bf16 %v5054, %v5047
  %v5853 = vpack.c.bf16 %v5055, %v5048
  %v5854 = vpack.c.bf16 %v5056, %v5049
  %v5855 = vpack.c.bf16 %v5057, %v5050
  %v5856 = vpack.c.bf16 %v5065, %v5058
  %v5857 = vpack.c.bf16 %v5066, %v5059
  %v5858 = vpack.c.bf16 %v5067, %v5060
  %v5859 = vpack.c.bf16 %v5068, %v5061
  %v5860 = vpack.c.bf16 %v5069, %v5062
  %v5861 = vpack.c.bf16 %v5070, %v5063
  %v5862 = vpack.c.bf16 %v5071, %v5064
  %v5863 = vpack.c.bf16 %v5079, %v5072
  %v5864 = vpack.c.bf16 %v5080, %v5073
  %v5865 = vpack.c.bf16 %v5081, %v5074
  %v5866 = vpack.c.bf16 %v5082, %v5075
  %v5867 = vpack.c.bf16 %v5083, %v5076
  %v5868 = vpack.c.bf16 %v5084, %v5077
  %v5869 = vpack.c.bf16 %v5085, %v5078
  %v5870 = vpack.c.bf16 %v5093, %v5086
  %v5871 = vpack.c.bf16 %v5094, %v5087
  %v5872 = vpack.c.bf16 %v5095, %v5088
  %v5873 = vpack.c.bf16 %v5096, %v5089
  %v5874 = vpack.c.bf16 %v5097, %v5090
  %v5875 = vpack.c.bf16 %v5098, %v5091
  %v5876 = vpack.c.bf16 %v5099, %v5092
  %v5877 = vpack.c.bf16 %v5107, %v5100
  %v5878 = vpack.c.bf16 %v5108, %v5101
  %v5879 = vpack.c.bf16 %v5109, %v5102
  %v5880 = vpack.c.bf16 %v5110, %v5103
  %v5881 = vpack.c.bf16 %v5111, %v5104
  %v5882 = vpack.c.bf16 %v5112, %v5105
  %v5883 = vpack.c.bf16 %v5113, %v5106
  %v5884 = vpack.c.bf16 %v5121, %v5114
  %v5885 = vpack.c.bf16 %v5122, %v5115
  %v5886 = vpack.c.bf16 %v5123, %v5116
  %v5887 = vpack.c.bf16 %v5124, %v5117
  %v5888 = vpack.c.bf16 %v5125, %v5118
  %v5889 = vpack.c.bf16 %v5126, %v5119
  %v5890 = vpack.c.bf16 %v5127, %v5120
  %v5891 = vpack.c.bf16 %v5135, %v5128
  %v5892 = vpack.c.bf16 %v5136, %v5129
  %v5893 = vpack.c.bf16 %v5137, %v5130
  %v5894 = vpack.c.bf16 %v5138, %v5131
  %v5895 = vpack.c.bf16 %v5139, %v5132
  %v5896 = vpack.c.bf16 %v5140, %v5133
  %v5897 = vpack.c.bf16 %v5141, %v5134
  %v5898 = vpack.c.bf16 %v5149, %v5142
  %v5899 = vpack.c.bf16 %v5150, %v5143
  %v5900 = vpack.c.bf16 %v5151, %v5144
  %v5901 = vpack.c.bf16 %v5152, %v5145
  %v5902 = vpack.c.bf16 %v5153, %v5146
  %v5903 = vpack.c.bf16 %v5154, %v5147
  %v5904 = vpack.c.bf16 %v5155, %v5148
  %v5905 = vpack.c.bf16 %v5163, %v5156
  %v5906 = vpack.c.bf16 %v5164, %v5157
  %v5907 = vpack.c.bf16 %v5165, %v5158
  %v5908 = vpack.c.bf16 %v5166, %v5159
  %v5909 = vpack.c.bf16 %v5167, %v5160
  %v5910 = vpack.c.bf16 %v5168, %v5161
  %v5911 = vpack.c.bf16 %v5169, %v5162
  %v5912 = vpack.c.bf16 %v5177, %v5170
  %v5913 = vpack.c.bf16 %v5178, %v5171
  %v5914 = vpack.c.bf16 %v5179, %v5172
  %v5915 = vpack.c.bf16 %v5180, %v5173
  %v5916 = vpack.c.bf16 %v5181, %v5174
  %v5917 = vpack.c.bf16 %v5182, %v5175
  %v5918 = vpack.c.bf16 %v5183, %v5176
  %v5919 = vpack.c.bf16 %v5191, %v5184
  %v5920 = vpack.c.bf16 %v5192, %v5185
  %v5921 = vpack.c.bf16 %v5193, %v5186
  %v5922 = vpack.c.bf16 %v5194, %v5187
  %v5923 = vpack.c.bf16 %v5195, %v5188
  %v5924 = vpack.c.bf16 %v5196, %v5189
  %v5925 = vpack.c.bf16 %v5197, %v5190
  %v5926 = vpack.c.bf16 %v5205, %v5198
  %v5927 = vpack.c.bf16 %v5206, %v5199
  %v5928 = vpack.c.bf16 %v5207, %v5200
  %v5929 = vpack.c.bf16 %v5208, %v5201
  %v5930 = vpack.c.bf16 %v5209, %v5202
  %v5931 = vpack.c.bf16 %v5210, %v5203
  %v5932 = vpack.c.bf16 %v5211, %v5204
  %v5933 = vpack.c.bf16 %v5219, %v5212
  %v5934 = vpack.c.bf16 %v5220, %v5213
  %v5935 = vpack.c.bf16 %v5221, %v5214
  %v5936 = vpack.c.bf16 %v5222, %v5215
  %v5937 = vpack.c.bf16 %v5223, %v5216
  %v5938 = vpack.c.bf16 %v5224, %v5217
  %v5939 = vpack.c.bf16 %v5225, %v5218
  %v5940 = vpack.c.bf16 %v5233, %v5226
  %v5941 = vpack.c.bf16 %v5234, %v5227
  %v5942 = vpack.c.bf16 %v5235, %v5228
  %v5943 = vpack.c.bf16 %v5236, %v5229
  %v5944 = vpack.c.bf16 %v5237, %v5230
  %v5945 = vpack.c.bf16 %v5238, %v5231
  %v5946 = vpack.c.bf16 %v5239, %v5232
  %v5947 = vpack.c.bf16 %v5247, %v5240
  %v5948 = vpack.c.bf16 %v5248, %v5241
  %v5949 = vpack.c.bf16 %v5249, %v5242
  %v5950 = vpack.c.bf16 %v5250, %v5243
  %v5951 = vpack.c.bf16 %v5251, %v5244
  %v5952 = vpack.c.bf16 %v5252, %v5245
  %v5953 = vpack.c.bf16 %v5253, %v5246
  %v5954 = vpack.c.bf16 %v5261, %v5254
  %v5955 = vpack.c.bf16 %v5262, %v5255
  %v5956 = vpack.c.bf16 %v5263, %v5256
  %v5957 = vpack.c.bf16 %v5264, %v5257
  %v5958 = vpack.c.bf16 %v5265, %v5258
  %v5959 = vpack.c.bf16 %v5266, %v5259
  %v5960 = vpack.c.bf16 %v5267, %v5260
  %v5961 = vpack.c.bf16 %v5275, %v5268
  %v5962 = vpack.c.bf16 %v5276, %v5269
  %v5963 = vpack.c.bf16 %v5277, %v5270
  %v5964 = vpack.c.bf16 %v5278, %v5271
  %v5965 = vpack.c.bf16 %v5279, %v5272
  %v5966 = vpack.c.bf16 %v5280, %v5273
  %v5967 = vpack.c.bf16 %v5281, %v5274
  %v5968 = vpack.c.bf16 %v5289, %v5282
  %v5969 = vpack.c.bf16 %v5290, %v5283
  %v5970 = vpack.c.bf16 %v5291, %v5284
  %v5971 = vpack.c.bf16 %v5292, %v5285
  %v5972 = vpack.c.bf16 %v5293, %v5286
  %v5973 = vpack.c.bf16 %v5294, %v5287
  %v5974 = vpack.c.bf16 %v5295, %v5288
  %v5975 = vpack.c.bf16 %v5303, %v5296
  %v5976 = vpack.c.bf16 %v5304, %v5297
  %v5977 = vpack.c.bf16 %v5305, %v5298
  %v5978 = vpack.c.bf16 %v5306, %v5299
  %v5979 = vpack.c.bf16 %v5307, %v5300
  %v5980 = vpack.c.bf16 %v5308, %v5301
  %v5981 = vpack.c.bf16 %v5309, %v5302
  %v5982 = vpack.c.bf16 %v5317, %v5310
  %v5983 = vpack.c.bf16 %v5318, %v5311
  %v5984 = vpack.c.bf16 %v5319, %v5312
  %v5985 = vpack.c.bf16 %v5320, %v5313
  %v5986 = vpack.c.bf16 %v5321, %v5314
  %v5987 = vpack.c.bf16 %v5322, %v5315
  %v5988 = vpack.c.bf16 %v5323, %v5316
  %v5989 = vpack.c.bf16 %v5331, %v5324
  %v5990 = vpack.c.bf16 %v5332, %v5325
  %v5991 = vpack.c.bf16 %v5333, %v5326
  %v5992 = vpack.c.bf16 %v5334, %v5327
  %v5993 = vpack.c.bf16 %v5335, %v5328
  %v5994 = vpack.c.bf16 %v5336, %v5329
  %v5995 = vpack.c.bf16 %v5337, %v5330
  %v5996 = vpack.c.bf16 %v5345, %v5338
  %v5997 = vpack.c.bf16 %v5346, %v5339
  %v5998 = vpack.c.bf16 %v5347, %v5340
  %v5999 = vpack.c.bf16 %v5348, %v5341
  %v6000 = vpack.c.bf16 %v5349, %v5342
  %v6001 = vpack.c.bf16 %v5350, %v5343
  %v6002 = vpack.c.bf16 %v5351, %v5344
  %v6003 = vpack.c.bf16 %v5359, %v5352
  %v6004 = vpack.c.bf16 %v5360, %v5353
  %v6005 = vpack.c.bf16 %v5361, %v5354
  %v6006 = vpack.c.bf16 %v5362, %v5355
  %v6007 = vpack.c.bf16 %v5363, %v5356
  %v6008 = vpack.c.bf16 %v5364, %v5357
  %v6009 = vpack.c.bf16 %v5365, %v5358
  %v6010 = vpack.c.bf16 %v5373, %v5366
  %v6011 = vpack.c.bf16 %v5374, %v5367
  %v6012 = vpack.c.bf16 %v5375, %v5368
  %v6013 = vpack.c.bf16 %v5376, %v5369
  %v6014 = vpack.c.bf16 %v5377, %v5370
  %v6015 = vpack.c.bf16 %v5378, %v5371
  %v6016 = vpack.c.bf16 %v5379, %v5372
  %v6017 = vpack.c.bf16 %v5387, %v5380
  %v6018 = vpack.c.bf16 %v5388, %v5381
  %v6019 = vpack.c.bf16 %v5389, %v5382
  %v6020 = vpack.c.bf16 %v5390, %v5383
  %v6021 = vpack.c.bf16 %v5391, %v5384
  %v6022 = vpack.c.bf16 %v5392, %v5385
  %v6023 = vpack.c.bf16 %v5393, %v5386
  %v6024 = vpack.c.bf16 %v5401, %v5394
  %v6025 = vpack.c.bf16 %v5402, %v5395
  %v6026 = vpack.c.bf16 %v5403, %v5396
  %v6027 = vpack.c.bf16 %v5404, %v5397
  %v6028 = vpack.c.bf16 %v5405, %v5398
  %v6029 = vpack.c.bf16 %v5406, %v5399
  %v6030 = vpack.c.bf16 %v5407, %v5400
  %v6031 = vpack.c.bf16 %v5415, %v5408
  %v6032 = vpack.c.bf16 %v5416, %v5409
  %v6033 = vpack.c.bf16 %v5417, %v5410
  %v6034 = vpack.c.bf16 %v5418, %v5411
  %v6035 = vpack.c.bf16 %v5419, %v5412
  %v6036 = vpack.c.bf16 %v5420, %v5413
  %v6037 = vpack.c.bf16 %v5421, %v5414
  %v6038 = vpack.c.bf16 %v5429, %v5422
  %v6039 = vpack.c.bf16 %v5430, %v5423
  %v6040 = vpack.c.bf16 %v5431, %v5424
  %v6041 = vpack.c.bf16 %v5432, %v5425
  %v6042 = vpack.c.bf16 %v5433, %v5426
  %v6043 = vpack.c.bf16 %v5434, %v5427
  %v6044 = vpack.c.bf16 %v5435, %v5428
  %v6045 = vpack.c.bf16 %v5443, %v5436
  %v6046 = vpack.c.bf16 %v5444, %v5437
  %v6047 = vpack.c.bf16 %v5445, %v5438
  %v6048 = vpack.c.bf16 %v5446, %v5439
  %v6049 = vpack.c.bf16 %v5447, %v5440
  %v6050 = vpack.c.bf16 %v5448, %v5441
  %v6051 = vpack.c.bf16 %v5449, %v5442
  %v6052 = vpack.c.bf16 %v5457, %v5450
  %v6053 = vpack.c.bf16 %v5458, %v5451
  %v6054 = vpack.c.bf16 %v5459, %v5452
  %v6055 = vpack.c.bf16 %v5460, %v5453
  %v6056 = vpack.c.bf16 %v5461, %v5454
  %v6057 = vpack.c.bf16 %v5462, %v5455
  %v6058 = vpack.c.bf16 %v5463, %v5456
  %v6059 = vpack.c.bf16 %v5471, %v5464
  %v6060 = vpack.c.bf16 %v5472, %v5465
  %v6061 = vpack.c.bf16 %v5473, %v5466
  %v6062 = vpack.c.bf16 %v5474, %v5467
  %v6063 = vpack.c.bf16 %v5475, %v5468
  %v6064 = vpack.c.bf16 %v5476, %v5469
  %v6065 = vpack.c.bf16 %v5477, %v5470
  %v6066 = vpack.c.bf16 %v5485, %v5478
  %v6067 = vpack.c.bf16 %v5486, %v5479
  %v6068 = vpack.c.bf16 %v5487, %v5480
  %v6069 = vpack.c.bf16 %v5488, %v5481
  %v6070 = vpack.c.bf16 %v5489, %v5482
  %v6071 = vpack.c.bf16 %v5490, %v5483
  %v6072 = vpack.c.bf16 %v5491, %v5484
  %v6073 = vpack.c.bf16 %v5499, %v5492
  %v6074 = vpack.c.bf16 %v5500, %v5493
  %v6075 = vpack.c.bf16 %v5501, %v5494
  %v6076 = vpack.c.bf16 %v5502, %v5495
  %v6077 = vpack.c.bf16 %v5503, %v5496
  %v6078 = vpack.c.bf16 %v5504, %v5497
  %v6079 = vpack.c.bf16 %v5505, %v5498
  %v6080 = vpack.c.bf16 %v5513, %v5506
  %v6081 = vpack.c.bf16 %v5514, %v5507
  %v6082 = vpack.c.bf16 %v5515, %v5508
  %v6083 = vpack.c.bf16 %v5516, %v5509
  %v6084 = vpack.c.bf16 %v5517, %v5510
  %v6085 = vpack.c.bf16 %v5518, %v5511
  %v6086 = vpack.c.bf16 %v5519, %v5512
  %v6087 = vpack.c.bf16 %v5527, %v5520
  %v6088 = vpack.c.bf16 %v5528, %v5521
  %v6089 = vpack.c.bf16 %v5529, %v5522
  %v6090 = vpack.c.bf16 %v5530, %v5523
  %v6091 = vpack.c.bf16 %v5531, %v5524
  %v6092 = vpack.c.bf16 %v5532, %v5525
  %v6093 = vpack.c.bf16 %v5533, %v5526
  %v6094 = vpack.c.bf16 %v5541, %v5534
  %v6095 = vpack.c.bf16 %v5542, %v5535
  %v6096 = vpack.c.bf16 %v5543, %v5536
  %v6097 = vpack.c.bf16 %v5544, %v5537
  %v6098 = vpack.c.bf16 %v5545, %v5538
  %v6099 = vpack.c.bf16 %v5546, %v5539
  %v6100 = vpack.c.bf16 %v5547, %v5540
  %v6101 = vpack.c.bf16 %v5555, %v5548
  %v6102 = vpack.c.bf16 %v5556, %v5549
  %v6103 = vpack.c.bf16 %v5557, %v5550
  %v6104 = vpack.c.bf16 %v5558, %v5551
  %v6105 = vpack.c.bf16 %v5559, %v5552
  %v6106 = vpack.c.bf16 %v5560, %v5553
  %v6107 = vpack.c.bf16 %v5561, %v5554
  %v6108 = vpack.c.bf16 %v5569, %v5562
  %v6109 = vpack.c.bf16 %v5570, %v5563
  %v6110 = vpack.c.bf16 %v5571, %v5564
  %v6111 = vpack.c.bf16 %v5572, %v5565
  %v6112 = vpack.c.bf16 %v5573, %v5566
  %v6113 = vpack.c.bf16 %v5574, %v5567
  %v6114 = vpack.c.bf16 %v5575, %v5568
  %v6115 = vpack.c.bf16 %v5583, %v5576
  %v6116 = vpack.c.bf16 %v5584, %v5577
  %v6117 = vpack.c.bf16 %v5585, %v5578
  %v6118 = vpack.c.bf16 %v5586, %v5579
  %v6119 = vpack.c.bf16 %v5587, %v5580
  %v6120 = vpack.c.bf16 %v5588, %v5581
  %v6121 = vpack.c.bf16 %v5589, %v5582
  %v6122 = vpack.c.bf16 %v5597, %v5590
  %v6123 = vpack.c.bf16 %v5598, %v5591
  %v6124 = vpack.c.bf16 %v5599, %v5592
  %v6125 = vpack.c.bf16 %v5600, %v5593
  %v6126 = vpack.c.bf16 %v5601, %v5594
  %v6127 = vpack.c.bf16 %v5602, %v5595
  %v6128 = vpack.c.bf16 %v5603, %v5596
  %v6129 = vpack.c.bf16 %v5611, %v5604
  %v6130 = vpack.c.bf16 %v5612, %v5605
  %v6131 = vpack.c.bf16 %v5613, %v5606
  %v6132 = vpack.c.bf16 %v5614, %v5607
  %v6133 = vpack.c.bf16 %v5615, %v5608
  %v6134 = vpack.c.bf16 %v5616, %v5609
  %v6135 = vpack.c.bf16 %v5617, %v5610
  %v6136 = vpack.c.bf16 %v5625, %v5618
  %v6137 = vpack.c.bf16 %v5626, %v5619
  %v6138 = vpack.c.bf16 %v5627, %v5620
  %v6139 = vpack.c.bf16 %v5628, %v5621
  %v6140 = vpack.c.bf16 %v5629, %v5622
  %v6141 = vpack.c.bf16 %v5630, %v5623
  %v6142 = vpack.c.bf16 %v5631, %v5624
  %v6143 = vpack.c.bf16 %v5639, %v5632
  %v6144 = vpack.c.bf16 %v5640, %v5633
  %v6145 = vpack.c.bf16 %v5641, %v5634
  %v6146 = vpack.c.bf16 %v5642, %v5635
  %v6147 = vpack.c.bf16 %v5643, %v5636
  %v6148 = vpack.c.bf16 %v5644, %v5637
  %v6149 = vpack.c.bf16 %v5645, %v5638
  %v6150 = vpack.c.bf16 %v5653, %v5646
  %v6151 = vpack.c.bf16 %v5654, %v5647
  %v6152 = vpack.c.bf16 %v5655, %v5648
  %v6153 = vpack.c.bf16 %v5656, %v5649
  %v6154 = vpack.c.bf16 %v5657, %v5650
  %v6155 = vpack.c.bf16 %v5658, %v5651
  %v6156 = vpack.c.bf16 %v5659, %v5652
  %v6157 = vpack.c.bf16 %v5667, %v5660
  %v6158 = vpack.c.bf16 %v5668, %v5661
  %v6159 = vpack.c.bf16 %v5669, %v5662
  %v6160 = vpack.c.bf16 %v5670, %v5663
  %v6161 = vpack.c.bf16 %v5671, %v5664
  %v6162 = vpack.c.bf16 %v5672, %v5665
  %v6163 = vpack.c.bf16 %v5673, %v5666
  %v6164 = vpack.c.bf16 %v5681, %v5674
  %v6165 = vpack.c.bf16 %v5682, %v5675
  %v6166 = vpack.c.bf16 %v5683, %v5676
  %v6167 = vpack.c.bf16 %v5684, %v5677
  %v6168 = vpack.c.bf16 %v5685, %v5678
  %v6169 = vpack.c.bf16 %v5686, %v5679
  %v6170 = vpack.c.bf16 %v5687, %v5680
  %v6171 = vpack.c.bf16 %v5695, %v5688
  %v6172 = vpack.c.bf16 %v5696, %v5689
  %v6173 = vpack.c.bf16 %v5697, %v5690
  %v6174 = vpack.c.bf16 %v5698, %v5691
  %v6175 = vpack.c.bf16 %v5699, %v5692
  %v6176 = vpack.c.bf16 %v5700, %v5693
  %v6177 = vpack.c.bf16 %v5701, %v5694
  %v6178 = vpack.c.bf16 %v5709, %v5702
  %v6179 = vpack.c.bf16 %v5710, %v5703
  %v6180 = vpack.c.bf16 %v5711, %v5704
  %v6181 = vpack.c.bf16 %v5712, %v5705
  %v6182 = vpack.c.bf16 %v5713, %v5706
  %v6183 = vpack.c.bf16 %v5714, %v5707
  %v6184 = vpack.c.bf16 %v5715, %v5708
  %v6185 = vpack.c.bf16 %v5723, %v5716
  %v6186 = vpack.c.bf16 %v5724, %v5717
  %v6187 = vpack.c.bf16 %v5725, %v5718
  %v6188 = vpack.c.bf16 %v5726, %v5719
  %v6189 = vpack.c.bf16 %v5727, %v5720
  %v6190 = vpack.c.bf16 %v5728, %v5721
  %v6191 = vpack.c.bf16 %v5729, %v5722
  %v6192 = vpack.c.bf16 %v5737, %v5730
  %v6193 = vpack.c.bf16 %v5738, %v5731
  %v6194 = vpack.c.bf16 %v5739, %v5732
  %v6195 = vpack.c.bf16 %v5740, %v5733
  %v6196 = vpack.c.bf16 %v5741, %v5734
  %v6197 = vpack.c.bf16 %v5742, %v5735
  %v6198 = vpack.c.bf16 %v5743, %v5736
  %v6199 = vpack.c.bf16 %v5751, %v5744
  %v6200 = vpack.c.bf16 %v5752, %v5745
  %v6201 = vpack.c.bf16 %v5753, %v5746
  %v6202 = vpack.c.bf16 %v5754, %v5747
  %v6203 = vpack.c.bf16 %v5755, %v5748
  %v6204 = vpack.c.bf16 %v5756, %v5749
  %v6205 = vpack.c.bf16 %v5757, %v5750
  %6206 = vmatpush.bf16.msra.mxu0 %v5807
  %6207 = vmatpush.bf16.msra.mxu0 %v5800
  %6208 = vmatpush.bf16.msra.mxu0 %v5793
  %6209 = vmatpush.bf16.msra.mxu0 %v5786
  %6210 = vmatpush.bf16.msra.mxu0 %v5779
  %6211 = vmatpush.bf16.msra.mxu0 %v5772
  %6212 = vmatpush.bf16.msra.mxu0 %v5765
  %6213 = vmatpush.bf16.msra.mxu0 %v5758
  %6214 = vmatmul.bf16.gmra.mxu0 %v3734
  %v6215 = vpop.f32.mrf.mxu0
  %v6216 = vadd.f32 0.0, %v6215
  %v6217 = vpop.f32.mrf.mxu0
  %6218 = vdwg.mxu0
  %6219 = vmatpush.bf16.msra.mxu0 %v5863
  %6220 = vmatpush.bf16.msra.mxu0 %v5856
  %6221 = vmatpush.bf16.msra.mxu0 %v5849
  %6222 = vmatpush.bf16.msra.mxu0 %v5842
  %6223 = vmatpush.bf16.msra.mxu0 %v5835
  %6224 = vmatpush.bf16.msra.mxu0 %v5828
  %6225 = vmatpush.bf16.msra.mxu0 %v5821
  %6226 = vmatpush.bf16.msra.mxu0 %v5814
  %6227 = vmatmul.bf16.gmra.mxu0 %v3735
  %v6228 = vpop.f32.mrf.mxu0
  %v6229 = vadd.f32 %v6216, %v6228
  %v6230 = vpop.f32.mrf.mxu0
  %6231 = vdwg.mxu0
  %6232 = vmatpush.bf16.msra.mxu0 %v5919
  %6233 = vmatpush.bf16.msra.mxu0 %v5912
  %6234 = vmatpush.bf16.msra.mxu0 %v5905
  %6235 = vmatpush.bf16.msra.mxu0 %v5898
  %6236 = vmatpush.bf16.msra.mxu0 %v5891
  %6237 = vmatpush.bf16.msra.mxu0 %v5884
  %6238 = vmatpush.bf16.msra.mxu0 %v5877
  %6239 = vmatpush.bf16.msra.mxu0 %v5870
  %6240 = vmatmul.bf16.gmra.mxu0 %v3736
  %v6241 = vpop.f32.mrf.mxu0
  %v6242 = vadd.f32 %v6229, %v6241
  %v6243 = vpop.f32.mrf.mxu0
  %6244 = vdwg.mxu0
  %6245 = vmatpush.bf16.msra.mxu0 %v5975
  %6246 = vmatpush.bf16.msra.mxu0 %v5968
  %6247 = vmatpush.bf16.msra.mxu0 %v5961
  %6248 = vmatpush.bf16.msra.mxu0 %v5954
  %6249 = vmatpush.bf16.msra.mxu0 %v5947
  %6250 = vmatpush.bf16.msra.mxu0 %v5940
  %6251 = vmatpush.bf16.msra.mxu0 %v5933
  %6252 = vmatpush.bf16.msra.mxu0 %v5926
  %6253 = vmatmul.bf16.gmra.mxu0 %v3737
  %v6254 = vpop.f32.mrf.mxu0
  %v6255 = vadd.f32 %v6242, %v6254
  %v6256 = vpop.f32.mrf.mxu0
  %6257 = vdwg.mxu0
  %6258 = vmatpush.bf16.msra.mxu0 %v6031
  %6259 = vmatpush.bf16.msra.mxu0 %v6024
  %6260 = vmatpush.bf16.msra.mxu0 %v6017
  %6261 = vmatpush.bf16.msra.mxu0 %v6010
  %6262 = vmatpush.bf16.msra.mxu0 %v6003
  %6263 = vmatpush.bf16.msra.mxu0 %v5996
  %6264 = vmatpush.bf16.msra.mxu0 %v5989
  %6265 = vmatpush.bf16.msra.mxu0 %v5982
  %6266 = vmatmul.bf16.gmra.mxu0 %v3738
  %v6267 = vpop.f32.mrf.mxu0
  %v6268 = vadd.f32 %v6255, %v6267
  %v6269 = vpop.f32.mrf.mxu0
  %6270 = vdwg.mxu0
  %6271 = vmatpush.bf16.msra.mxu0 %v6087
  %6272 = vmatpush.bf16.msra.mxu0 %v6080
  %6273 = vmatpush.bf16.msra.mxu0 %v6073
  %6274 = vmatpush.bf16.msra.mxu0 %v6066
  %6275 = vmatpush.bf16.msra.mxu0 %v6059
  %6276 = vmatpush.bf16.msra.mxu0 %v6052
  %6277 = vmatpush.bf16.msra.mxu0 %v6045
  %6278 = vmatpush.bf16.msra.mxu0 %v6038
  %6279 = vmatmul.bf16.gmra.mxu0 %v3739
  %v6280 = vpop.f32.mrf.mxu0
  %v6281 = vadd.f32 %v6268, %v6280
  %v6282 = vpop.f32.mrf.mxu0
  %6283 = vdwg.mxu0
  %6284 = vmatpush.bf16.msra.mxu0 %v6143
  %6285 = vmatpush.bf16.msra.mxu0 %v6136
  %6286 = vmatpush.bf16.msra.mxu0 %v6129
  %6287 = vmatpush.bf16.msra.mxu0 %v6122
  %6288 = vmatpush.bf16.msra.mxu0 %v6115
  %6289 = vmatpush.bf16.msra.mxu0 %v6108
  %6290 = vmatpush.bf16.msra.mxu0 %v6101
  %6291 = vmatpush.bf16.msra.mxu0 %v6094
  %6292 = vmatmul.bf16.gmra.mxu0 %v3740
  %v6293 = vpop.f32.mrf.mxu0
  %v6294 = vadd.f32 %v6281, %v6293
  %v6295 = vpop.f32.mrf.mxu0
  %6296 = vdwg.mxu0
  %6297 = vmatpush.bf16.msra.mxu0 %v6199
  %6298 = vmatpush.bf16.msra.mxu0 %v6192
  %6299 = vmatpush.bf16.msra.mxu0 %v6185
  %6300 = vmatpush.bf16.msra.mxu0 %v6178
  %6301 = vmatpush.bf16.msra.mxu0 %v6171
  %6302 = vmatpush.bf16.msra.mxu0 %v6164
  %6303 = vmatpush.bf16.msra.mxu0 %v6157
  %6304 = vmatpush.bf16.msra.mxu0 %v6150
  %6305 = vmatmul.bf16.gmra.mxu0 %v3741
  %v6306 = vpop.f32.mrf.mxu0
  %v6307 = vadd.f32 %v6294, %v6306
  %v6308 = vpop.f32.mrf.mxu0
  %6309 = vdwg.mxu0
  %6310 = vmatpush.bf16.msra.mxu0 %v5808
  %6311 = vmatpush.bf16.msra.mxu0 %v5801
  %6312 = vmatpush.bf16.msra.mxu0 %v5794
  %6313 = vmatpush.bf16.msra.mxu0 %v5787
  %6314 = vmatpush.bf16.msra.mxu0 %v5780
  %6315 = vmatpush.bf16.msra.mxu0 %v5773
  %6316 = vmatpush.bf16.msra.mxu0 %v5766
  %6317 = vmatpush.bf16.msra.mxu0 %v5759
  %6318 = vmatmul.bf16.gmra.mxu0 %v3734
  %v6319 = vpop.f32.mrf.mxu0
  %v6320 = vadd.f32 0.0, %v6319
  %v6321 = vpop.f32.mrf.mxu0
  %6322 = vdwg.mxu0
  %6323 = vmatpush.bf16.msra.mxu0 %v5864
  %6324 = vmatpush.bf16.msra.mxu0 %v5857
  %6325 = vmatpush.bf16.msra.mxu0 %v5850
  %6326 = vmatpush.bf16.msra.mxu0 %v5843
  %6327 = vmatpush.bf16.msra.mxu0 %v5836
  %6328 = vmatpush.bf16.msra.mxu0 %v5829
  %6329 = vmatpush.bf16.msra.mxu0 %v5822
  %6330 = vmatpush.bf16.msra.mxu0 %v5815
  %6331 = vmatmul.bf16.gmra.mxu0 %v3735
  %v6332 = vpop.f32.mrf.mxu0
  %v6333 = vadd.f32 %v6320, %v6332
  %v6334 = vpop.f32.mrf.mxu0
  %6335 = vdwg.mxu0
  %6336 = vmatpush.bf16.msra.mxu0 %v5920
  %6337 = vmatpush.bf16.msra.mxu0 %v5913
  %6338 = vmatpush.bf16.msra.mxu0 %v5906
  %6339 = vmatpush.bf16.msra.mxu0 %v5899
  %6340 = vmatpush.bf16.msra.mxu0 %v5892
  %6341 = vmatpush.bf16.msra.mxu0 %v5885
  %6342 = vmatpush.bf16.msra.mxu0 %v5878
  %6343 = vmatpush.bf16.msra.mxu0 %v5871
  %6344 = vmatmul.bf16.gmra.mxu0 %v3736
  %v6345 = vpop.f32.mrf.mxu0
  %v6346 = vadd.f32 %v6333, %v6345
  %v6347 = vpop.f32.mrf.mxu0
  %6348 = vdwg.mxu0
  %6349 = vmatpush.bf16.msra.mxu0 %v5976
  %6350 = vmatpush.bf16.msra.mxu0 %v5969
  %6351 = vmatpush.bf16.msra.mxu0 %v5962
  %6352 = vmatpush.bf16.msra.mxu0 %v5955
  %6353 = vmatpush.bf16.msra.mxu0 %v5948
  %6354 = vmatpush.bf16.msra.mxu0 %v5941
  %6355 = vmatpush.bf16.msra.mxu0 %v5934
  %6356 = vmatpush.bf16.msra.mxu0 %v5927
  %6357 = vmatmul.bf16.gmra.mxu0 %v3737
  %v6358 = vpop.f32.mrf.mxu0
  %v6359 = vadd.f32 %v6346, %v6358
  %v6360 = vpop.f32.mrf.mxu0
  %6361 = vdwg.mxu0
  %6362 = vmatpush.bf16.msra.mxu0 %v6032
  %6363 = vmatpush.bf16.msra.mxu0 %v6025
  %6364 = vmatpush.bf16.msra.mxu0 %v6018
  %6365 = vmatpush.bf16.msra.mxu0 %v6011
  %6366 = vmatpush.bf16.msra.mxu0 %v6004
  %6367 = vmatpush.bf16.msra.mxu0 %v5997
  %6368 = vmatpush.bf16.msra.mxu0 %v5990
  %6369 = vmatpush.bf16.msra.mxu0 %v5983
  %6370 = vmatmul.bf16.gmra.mxu0 %v3738
  %v6371 = vpop.f32.mrf.mxu0
  %v6372 = vadd.f32 %v6359, %v6371
  %v6373 = vpop.f32.mrf.mxu0
  %6374 = vdwg.mxu0
  %6375 = vmatpush.bf16.msra.mxu0 %v6088
  %6376 = vmatpush.bf16.msra.mxu0 %v6081
  %6377 = vmatpush.bf16.msra.mxu0 %v6074
  %6378 = vmatpush.bf16.msra.mxu0 %v6067
  %6379 = vmatpush.bf16.msra.mxu0 %v6060
  %6380 = vmatpush.bf16.msra.mxu0 %v6053
  %6381 = vmatpush.bf16.msra.mxu0 %v6046
  %6382 = vmatpush.bf16.msra.mxu0 %v6039
  %6383 = vmatmul.bf16.gmra.mxu0 %v3739
  %v6384 = vpop.f32.mrf.mxu0
  %v6385 = vadd.f32 %v6372, %v6384
  %v6386 = vpop.f32.mrf.mxu0
  %6387 = vdwg.mxu0
  %6388 = vmatpush.bf16.msra.mxu0 %v6144
  %6389 = vmatpush.bf16.msra.mxu0 %v6137
  %6390 = vmatpush.bf16.msra.mxu0 %v6130
  %6391 = vmatpush.bf16.msra.mxu0 %v6123
  %6392 = vmatpush.bf16.msra.mxu0 %v6116
  %6393 = vmatpush.bf16.msra.mxu0 %v6109
  %6394 = vmatpush.bf16.msra.mxu0 %v6102
  %6395 = vmatpush.bf16.msra.mxu0 %v6095
  %6396 = vmatmul.bf16.gmra.mxu0 %v3740
  %v6397 = vpop.f32.mrf.mxu0
  %v6398 = vadd.f32 %v6385, %v6397
  %v6399 = vpop.f32.mrf.mxu0
  %6400 = vdwg.mxu0
  %6401 = vmatpush.bf16.msra.mxu0 %v6200
  %6402 = vmatpush.bf16.msra.mxu0 %v6193
  %6403 = vmatpush.bf16.msra.mxu0 %v6186
  %6404 = vmatpush.bf16.msra.mxu0 %v6179
  %6405 = vmatpush.bf16.msra.mxu0 %v6172
  %6406 = vmatpush.bf16.msra.mxu0 %v6165
  %6407 = vmatpush.bf16.msra.mxu0 %v6158
  %6408 = vmatpush.bf16.msra.mxu0 %v6151
  %6409 = vmatmul.bf16.gmra.mxu0 %v3741
  %v6410 = vpop.f32.mrf.mxu0
  %v6411 = vadd.f32 %v6398, %v6410
  %v6412 = vpop.f32.mrf.mxu0
  %6413 = vdwg.mxu0
  %6414 = vmatpush.bf16.msra.mxu0 %v5809
  %6415 = vmatpush.bf16.msra.mxu0 %v5802
  %6416 = vmatpush.bf16.msra.mxu0 %v5795
  %6417 = vmatpush.bf16.msra.mxu0 %v5788
  %6418 = vmatpush.bf16.msra.mxu0 %v5781
  %6419 = vmatpush.bf16.msra.mxu0 %v5774
  %6420 = vmatpush.bf16.msra.mxu0 %v5767
  %6421 = vmatpush.bf16.msra.mxu0 %v5760
  %6422 = vmatmul.bf16.gmra.mxu0 %v3734
  %v6423 = vpop.f32.mrf.mxu0
  %v6424 = vadd.f32 0.0, %v6423
  %v6425 = vpop.f32.mrf.mxu0
  %6426 = vdwg.mxu0
  %6427 = vmatpush.bf16.msra.mxu0 %v5865
  %6428 = vmatpush.bf16.msra.mxu0 %v5858
  %6429 = vmatpush.bf16.msra.mxu0 %v5851
  %6430 = vmatpush.bf16.msra.mxu0 %v5844
  %6431 = vmatpush.bf16.msra.mxu0 %v5837
  %6432 = vmatpush.bf16.msra.mxu0 %v5830
  %6433 = vmatpush.bf16.msra.mxu0 %v5823
  %6434 = vmatpush.bf16.msra.mxu0 %v5816
  %6435 = vmatmul.bf16.gmra.mxu0 %v3735
  %v6436 = vpop.f32.mrf.mxu0
  %v6437 = vadd.f32 %v6424, %v6436
  %v6438 = vpop.f32.mrf.mxu0
  %6439 = vdwg.mxu0
  %6440 = vmatpush.bf16.msra.mxu0 %v5921
  %6441 = vmatpush.bf16.msra.mxu0 %v5914
  %6442 = vmatpush.bf16.msra.mxu0 %v5907
  %6443 = vmatpush.bf16.msra.mxu0 %v5900
  %6444 = vmatpush.bf16.msra.mxu0 %v5893
  %6445 = vmatpush.bf16.msra.mxu0 %v5886
  %6446 = vmatpush.bf16.msra.mxu0 %v5879
  %6447 = vmatpush.bf16.msra.mxu0 %v5872
  %6448 = vmatmul.bf16.gmra.mxu0 %v3736
  %v6449 = vpop.f32.mrf.mxu0
  %v6450 = vadd.f32 %v6437, %v6449
  %v6451 = vpop.f32.mrf.mxu0
  %6452 = vdwg.mxu0
  %6453 = vmatpush.bf16.msra.mxu0 %v5977
  %6454 = vmatpush.bf16.msra.mxu0 %v5970
  %6455 = vmatpush.bf16.msra.mxu0 %v5963
  %6456 = vmatpush.bf16.msra.mxu0 %v5956
  %6457 = vmatpush.bf16.msra.mxu0 %v5949
  %6458 = vmatpush.bf16.msra.mxu0 %v5942
  %6459 = vmatpush.bf16.msra.mxu0 %v5935
  %6460 = vmatpush.bf16.msra.mxu0 %v5928
  %6461 = vmatmul.bf16.gmra.mxu0 %v3737
  %v6462 = vpop.f32.mrf.mxu0
  %v6463 = vadd.f32 %v6450, %v6462
  %v6464 = vpop.f32.mrf.mxu0
  %6465 = vdwg.mxu0
  %6466 = vmatpush.bf16.msra.mxu0 %v6033
  %6467 = vmatpush.bf16.msra.mxu0 %v6026
  %6468 = vmatpush.bf16.msra.mxu0 %v6019
  %6469 = vmatpush.bf16.msra.mxu0 %v6012
  %6470 = vmatpush.bf16.msra.mxu0 %v6005
  %6471 = vmatpush.bf16.msra.mxu0 %v5998
  %6472 = vmatpush.bf16.msra.mxu0 %v5991
  %6473 = vmatpush.bf16.msra.mxu0 %v5984
  %6474 = vmatmul.bf16.gmra.mxu0 %v3738
  %v6475 = vpop.f32.mrf.mxu0
  %v6476 = vadd.f32 %v6463, %v6475
  %v6477 = vpop.f32.mrf.mxu0
  %6478 = vdwg.mxu0
  %6479 = vmatpush.bf16.msra.mxu0 %v6089
  %6480 = vmatpush.bf16.msra.mxu0 %v6082
  %6481 = vmatpush.bf16.msra.mxu0 %v6075
  %6482 = vmatpush.bf16.msra.mxu0 %v6068
  %6483 = vmatpush.bf16.msra.mxu0 %v6061
  %6484 = vmatpush.bf16.msra.mxu0 %v6054
  %6485 = vmatpush.bf16.msra.mxu0 %v6047
  %6486 = vmatpush.bf16.msra.mxu0 %v6040
  %6487 = vmatmul.bf16.gmra.mxu0 %v3739
  %v6488 = vpop.f32.mrf.mxu0
  %v6489 = vadd.f32 %v6476, %v6488
  %v6490 = vpop.f32.mrf.mxu0
  %6491 = vdwg.mxu0
  %6492 = vmatpush.bf16.msra.mxu0 %v6145
  %6493 = vmatpush.bf16.msra.mxu0 %v6138
  %6494 = vmatpush.bf16.msra.mxu0 %v6131
  %6495 = vmatpush.bf16.msra.mxu0 %v6124
  %6496 = vmatpush.bf16.msra.mxu0 %v6117
  %6497 = vmatpush.bf16.msra.mxu0 %v6110
  %6498 = vmatpush.bf16.msra.mxu0 %v6103
  %6499 = vmatpush.bf16.msra.mxu0 %v6096
  %6500 = vmatmul.bf16.gmra.mxu0 %v3740
  %v6501 = vpop.f32.mrf.mxu0
  %v6502 = vadd.f32 %v6489, %v6501
  %v6503 = vpop.f32.mrf.mxu0
  %6504 = vdwg.mxu0
  %6505 = vmatpush.bf16.msra.mxu0 %v6201
  %6506 = vmatpush.bf16.msra.mxu0 %v6194
  %6507 = vmatpush.bf16.msra.mxu0 %v6187
  %6508 = vmatpush.bf16.msra.mxu0 %v6180
  %6509 = vmatpush.bf16.msra.mxu0 %v6173
  %6510 = vmatpush.bf16.msra.mxu0 %v6166
  %6511 = vmatpush.bf16.msra.mxu0 %v6159
  %6512 = vmatpush.bf16.msra.mxu0 %v6152
  %6513 = vmatmul.bf16.gmra.mxu0 %v3741
  %v6514 = vpop.f32.mrf.mxu0
  %v6515 = vadd.f32 %v6502, %v6514
  %v6516 = vpop.f32.mrf.mxu0
  %6517 = vdwg.mxu0
  %6518 = vmatpush.bf16.msra.mxu0 %v5810
  %6519 = vmatpush.bf16.msra.mxu0 %v5803
  %6520 = vmatpush.bf16.msra.mxu0 %v5796
  %6521 = vmatpush.bf16.msra.mxu0 %v5789
  %6522 = vmatpush.bf16.msra.mxu0 %v5782
  %6523 = vmatpush.bf16.msra.mxu0 %v5775
  %6524 = vmatpush.bf16.msra.mxu0 %v5768
  %6525 = vmatpush.bf16.msra.mxu0 %v5761
  %6526 = vmatmul.bf16.gmra.mxu0 %v3734
  %v6527 = vpop.f32.mrf.mxu0
  %v6528 = vadd.f32 0.0, %v6527
  %v6529 = vpop.f32.mrf.mxu0
  %6530 = vdwg.mxu0
  %6531 = vmatpush.bf16.msra.mxu0 %v5866
  %6532 = vmatpush.bf16.msra.mxu0 %v5859
  %6533 = vmatpush.bf16.msra.mxu0 %v5852
  %6534 = vmatpush.bf16.msra.mxu0 %v5845
  %6535 = vmatpush.bf16.msra.mxu0 %v5838
  %6536 = vmatpush.bf16.msra.mxu0 %v5831
  %6537 = vmatpush.bf16.msra.mxu0 %v5824
  %6538 = vmatpush.bf16.msra.mxu0 %v5817
  %6539 = vmatmul.bf16.gmra.mxu0 %v3735
  %v6540 = vpop.f32.mrf.mxu0
  %v6541 = vadd.f32 %v6528, %v6540
  %v6542 = vpop.f32.mrf.mxu0
  %6543 = vdwg.mxu0
  %6544 = vmatpush.bf16.msra.mxu0 %v5922
  %6545 = vmatpush.bf16.msra.mxu0 %v5915
  %6546 = vmatpush.bf16.msra.mxu0 %v5908
  %6547 = vmatpush.bf16.msra.mxu0 %v5901
  %6548 = vmatpush.bf16.msra.mxu0 %v5894
  %6549 = vmatpush.bf16.msra.mxu0 %v5887
  %6550 = vmatpush.bf16.msra.mxu0 %v5880
  %6551 = vmatpush.bf16.msra.mxu0 %v5873
  %6552 = vmatmul.bf16.gmra.mxu0 %v3736
  %v6553 = vpop.f32.mrf.mxu0
  %v6554 = vadd.f32 %v6541, %v6553
  %v6555 = vpop.f32.mrf.mxu0
  %6556 = vdwg.mxu0
  %6557 = vmatpush.bf16.msra.mxu0 %v5978
  %6558 = vmatpush.bf16.msra.mxu0 %v5971
  %6559 = vmatpush.bf16.msra.mxu0 %v5964
  %6560 = vmatpush.bf16.msra.mxu0 %v5957
  %6561 = vmatpush.bf16.msra.mxu0 %v5950
  %6562 = vmatpush.bf16.msra.mxu0 %v5943
  %6563 = vmatpush.bf16.msra.mxu0 %v5936
  %6564 = vmatpush.bf16.msra.mxu0 %v5929
  %6565 = vmatmul.bf16.gmra.mxu0 %v3737
  %v6566 = vpop.f32.mrf.mxu0
  %v6567 = vadd.f32 %v6554, %v6566
  %v6568 = vpop.f32.mrf.mxu0
  %6569 = vdwg.mxu0
  %6570 = vmatpush.bf16.msra.mxu0 %v6034
  %6571 = vmatpush.bf16.msra.mxu0 %v6027
  %6572 = vmatpush.bf16.msra.mxu0 %v6020
  %6573 = vmatpush.bf16.msra.mxu0 %v6013
  %6574 = vmatpush.bf16.msra.mxu0 %v6006
  %6575 = vmatpush.bf16.msra.mxu0 %v5999
  %6576 = vmatpush.bf16.msra.mxu0 %v5992
  %6577 = vmatpush.bf16.msra.mxu0 %v5985
  %6578 = vmatmul.bf16.gmra.mxu0 %v3738
  %v6579 = vpop.f32.mrf.mxu0
  %v6580 = vadd.f32 %v6567, %v6579
  %v6581 = vpop.f32.mrf.mxu0
  %6582 = vdwg.mxu0
  %6583 = vmatpush.bf16.msra.mxu0 %v6090
  %6584 = vmatpush.bf16.msra.mxu0 %v6083
  %6585 = vmatpush.bf16.msra.mxu0 %v6076
  %6586 = vmatpush.bf16.msra.mxu0 %v6069
  %6587 = vmatpush.bf16.msra.mxu0 %v6062
  %6588 = vmatpush.bf16.msra.mxu0 %v6055
  %6589 = vmatpush.bf16.msra.mxu0 %v6048
  %6590 = vmatpush.bf16.msra.mxu0 %v6041
  %6591 = vmatmul.bf16.gmra.mxu0 %v3739
  %v6592 = vpop.f32.mrf.mxu0
  %v6593 = vadd.f32 %v6580, %v6592
  %v6594 = vpop.f32.mrf.mxu0
  %6595 = vdwg.mxu0
  %6596 = vmatpush.bf16.msra.mxu0 %v6146
  %6597 = vmatpush.bf16.msra.mxu0 %v6139
  %6598 = vmatpush.bf16.msra.mxu0 %v6132
  %6599 = vmatpush.bf16.msra.mxu0 %v6125
  %6600 = vmatpush.bf16.msra.mxu0 %v6118
  %6601 = vmatpush.bf16.msra.mxu0 %v6111
  %6602 = vmatpush.bf16.msra.mxu0 %v6104
  %6603 = vmatpush.bf16.msra.mxu0 %v6097
  %6604 = vmatmul.bf16.gmra.mxu0 %v3740
  %v6605 = vpop.f32.mrf.mxu0
  %v6606 = vadd.f32 %v6593, %v6605
  %v6607 = vpop.f32.mrf.mxu0
  %6608 = vdwg.mxu0
  %6609 = vmatpush.bf16.msra.mxu0 %v6202
  %6610 = vmatpush.bf16.msra.mxu0 %v6195
  %6611 = vmatpush.bf16.msra.mxu0 %v6188
  %6612 = vmatpush.bf16.msra.mxu0 %v6181
  %6613 = vmatpush.bf16.msra.mxu0 %v6174
  %6614 = vmatpush.bf16.msra.mxu0 %v6167
  %6615 = vmatpush.bf16.msra.mxu0 %v6160
  %6616 = vmatpush.bf16.msra.mxu0 %v6153
  %6617 = vmatmul.bf16.gmra.mxu0 %v3741
  %v6618 = vpop.f32.mrf.mxu0
  %v6619 = vadd.f32 %v6606, %v6618
  %v6620 = vpop.f32.mrf.mxu0
  %6621 = vdwg.mxu0
  %6622 = vmatpush.bf16.msra.mxu0 %v5811
  %6623 = vmatpush.bf16.msra.mxu0 %v5804
  %6624 = vmatpush.bf16.msra.mxu0 %v5797
  %6625 = vmatpush.bf16.msra.mxu0 %v5790
  %6626 = vmatpush.bf16.msra.mxu0 %v5783
  %6627 = vmatpush.bf16.msra.mxu0 %v5776
  %6628 = vmatpush.bf16.msra.mxu0 %v5769
  %6629 = vmatpush.bf16.msra.mxu0 %v5762
  %6630 = vmatmul.bf16.gmra.mxu0 %v3734
  %v6631 = vpop.f32.mrf.mxu0
  %v6632 = vadd.f32 0.0, %v6631
  %v6633 = vpop.f32.mrf.mxu0
  %6634 = vdwg.mxu0
  %6635 = vmatpush.bf16.msra.mxu0 %v5867
  %6636 = vmatpush.bf16.msra.mxu0 %v5860
  %6637 = vmatpush.bf16.msra.mxu0 %v5853
  %6638 = vmatpush.bf16.msra.mxu0 %v5846
  %6639 = vmatpush.bf16.msra.mxu0 %v5839
  %6640 = vmatpush.bf16.msra.mxu0 %v5832
  %6641 = vmatpush.bf16.msra.mxu0 %v5825
  %6642 = vmatpush.bf16.msra.mxu0 %v5818
  %6643 = vmatmul.bf16.gmra.mxu0 %v3735
  %v6644 = vpop.f32.mrf.mxu0
  %v6645 = vadd.f32 %v6632, %v6644
  %v6646 = vpop.f32.mrf.mxu0
  %6647 = vdwg.mxu0
  %6648 = vmatpush.bf16.msra.mxu0 %v5923
  %6649 = vmatpush.bf16.msra.mxu0 %v5916
  %6650 = vmatpush.bf16.msra.mxu0 %v5909
  %6651 = vmatpush.bf16.msra.mxu0 %v5902
  %6652 = vmatpush.bf16.msra.mxu0 %v5895
  %6653 = vmatpush.bf16.msra.mxu0 %v5888
  %6654 = vmatpush.bf16.msra.mxu0 %v5881
  %6655 = vmatpush.bf16.msra.mxu0 %v5874
  %6656 = vmatmul.bf16.gmra.mxu0 %v3736
  %v6657 = vpop.f32.mrf.mxu0
  %v6658 = vadd.f32 %v6645, %v6657
  %v6659 = vpop.f32.mrf.mxu0
  %6660 = vdwg.mxu0
  %6661 = vmatpush.bf16.msra.mxu0 %v5979
  %6662 = vmatpush.bf16.msra.mxu0 %v5972
  %6663 = vmatpush.bf16.msra.mxu0 %v5965
  %6664 = vmatpush.bf16.msra.mxu0 %v5958
  %6665 = vmatpush.bf16.msra.mxu0 %v5951
  %6666 = vmatpush.bf16.msra.mxu0 %v5944
  %6667 = vmatpush.bf16.msra.mxu0 %v5937
  %6668 = vmatpush.bf16.msra.mxu0 %v5930
  %6669 = vmatmul.bf16.gmra.mxu0 %v3737
  %v6670 = vpop.f32.mrf.mxu0
  %v6671 = vadd.f32 %v6658, %v6670
  %v6672 = vpop.f32.mrf.mxu0
  %6673 = vdwg.mxu0
  %6674 = vmatpush.bf16.msra.mxu0 %v6035
  %6675 = vmatpush.bf16.msra.mxu0 %v6028
  %6676 = vmatpush.bf16.msra.mxu0 %v6021
  %6677 = vmatpush.bf16.msra.mxu0 %v6014
  %6678 = vmatpush.bf16.msra.mxu0 %v6007
  %6679 = vmatpush.bf16.msra.mxu0 %v6000
  %6680 = vmatpush.bf16.msra.mxu0 %v5993
  %6681 = vmatpush.bf16.msra.mxu0 %v5986
  %6682 = vmatmul.bf16.gmra.mxu0 %v3738
  %v6683 = vpop.f32.mrf.mxu0
  %v6684 = vadd.f32 %v6671, %v6683
  %v6685 = vpop.f32.mrf.mxu0
  %6686 = vdwg.mxu0
  %6687 = vmatpush.bf16.msra.mxu0 %v6091
  %6688 = vmatpush.bf16.msra.mxu0 %v6084
  %6689 = vmatpush.bf16.msra.mxu0 %v6077
  %6690 = vmatpush.bf16.msra.mxu0 %v6070
  %6691 = vmatpush.bf16.msra.mxu0 %v6063
  %6692 = vmatpush.bf16.msra.mxu0 %v6056
  %6693 = vmatpush.bf16.msra.mxu0 %v6049
  %6694 = vmatpush.bf16.msra.mxu0 %v6042
  %6695 = vmatmul.bf16.gmra.mxu0 %v3739
  %v6696 = vpop.f32.mrf.mxu0
  %v6697 = vadd.f32 %v6684, %v6696
  %v6698 = vpop.f32.mrf.mxu0
  %6699 = vdwg.mxu0
  %6700 = vmatpush.bf16.msra.mxu0 %v6147
  %6701 = vmatpush.bf16.msra.mxu0 %v6140
  %6702 = vmatpush.bf16.msra.mxu0 %v6133
  %6703 = vmatpush.bf16.msra.mxu0 %v6126
  %6704 = vmatpush.bf16.msra.mxu0 %v6119
  %6705 = vmatpush.bf16.msra.mxu0 %v6112
  %6706 = vmatpush.bf16.msra.mxu0 %v6105
  %6707 = vmatpush.bf16.msra.mxu0 %v6098
  %6708 = vmatmul.bf16.gmra.mxu0 %v3740
  %v6709 = vpop.f32.mrf.mxu0
  %v6710 = vadd.f32 %v6697, %v6709
  %v6711 = vpop.f32.mrf.mxu0
  %6712 = vdwg.mxu0
  %6713 = vmatpush.bf16.msra.mxu0 %v6203
  %6714 = vmatpush.bf16.msra.mxu0 %v6196
  %6715 = vmatpush.bf16.msra.mxu0 %v6189
  %6716 = vmatpush.bf16.msra.mxu0 %v6182
  %6717 = vmatpush.bf16.msra.mxu0 %v6175
  %6718 = vmatpush.bf16.msra.mxu0 %v6168
  %6719 = vmatpush.bf16.msra.mxu0 %v6161
  %6720 = vmatpush.bf16.msra.mxu0 %v6154
  %6721 = vmatmul.bf16.gmra.mxu0 %v3741
  %v6722 = vpop.f32.mrf.mxu0
  %v6723 = vadd.f32 %v6710, %v6722
  %v6724 = vpop.f32.mrf.mxu0
  %6725 = vdwg.mxu0
  %6726 = vmatpush.bf16.msra.mxu0 %v5812
  %6727 = vmatpush.bf16.msra.mxu0 %v5805
  %6728 = vmatpush.bf16.msra.mxu0 %v5798
  %6729 = vmatpush.bf16.msra.mxu0 %v5791
  %6730 = vmatpush.bf16.msra.mxu0 %v5784
  %6731 = vmatpush.bf16.msra.mxu0 %v5777
  %6732 = vmatpush.bf16.msra.mxu0 %v5770
  %6733 = vmatpush.bf16.msra.mxu0 %v5763
  %6734 = vmatmul.bf16.gmra.mxu0 %v3734
  %v6735 = vpop.f32.mrf.mxu0
  %v6736 = vadd.f32 0.0, %v6735
  %v6737 = vpop.f32.mrf.mxu0
  %6738 = vdwg.mxu0
  %6739 = vmatpush.bf16.msra.mxu0 %v5868
  %6740 = vmatpush.bf16.msra.mxu0 %v5861
  %6741 = vmatpush.bf16.msra.mxu0 %v5854
  %6742 = vmatpush.bf16.msra.mxu0 %v5847
  %6743 = vmatpush.bf16.msra.mxu0 %v5840
  %6744 = vmatpush.bf16.msra.mxu0 %v5833
  %6745 = vmatpush.bf16.msra.mxu0 %v5826
  %6746 = vmatpush.bf16.msra.mxu0 %v5819
  %6747 = vmatmul.bf16.gmra.mxu0 %v3735
  %v6748 = vpop.f32.mrf.mxu0
  %v6749 = vadd.f32 %v6736, %v6748
  %v6750 = vpop.f32.mrf.mxu0
  %6751 = vdwg.mxu0
  %6752 = vmatpush.bf16.msra.mxu0 %v5924
  %6753 = vmatpush.bf16.msra.mxu0 %v5917
  %6754 = vmatpush.bf16.msra.mxu0 %v5910
  %6755 = vmatpush.bf16.msra.mxu0 %v5903
  %6756 = vmatpush.bf16.msra.mxu0 %v5896
  %6757 = vmatpush.bf16.msra.mxu0 %v5889
  %6758 = vmatpush.bf16.msra.mxu0 %v5882
  %6759 = vmatpush.bf16.msra.mxu0 %v5875
  %6760 = vmatmul.bf16.gmra.mxu0 %v3736
  %v6761 = vpop.f32.mrf.mxu0
  %v6762 = vadd.f32 %v6749, %v6761
  %v6763 = vpop.f32.mrf.mxu0
  %6764 = vdwg.mxu0
  %6765 = vmatpush.bf16.msra.mxu0 %v5980
  %6766 = vmatpush.bf16.msra.mxu0 %v5973
  %6767 = vmatpush.bf16.msra.mxu0 %v5966
  %6768 = vmatpush.bf16.msra.mxu0 %v5959
  %6769 = vmatpush.bf16.msra.mxu0 %v5952
  %6770 = vmatpush.bf16.msra.mxu0 %v5945
  %6771 = vmatpush.bf16.msra.mxu0 %v5938
  %6772 = vmatpush.bf16.msra.mxu0 %v5931
  %6773 = vmatmul.bf16.gmra.mxu0 %v3737
  %v6774 = vpop.f32.mrf.mxu0
  %v6775 = vadd.f32 %v6762, %v6774
  %v6776 = vpop.f32.mrf.mxu0
  %6777 = vdwg.mxu0
  %6778 = vmatpush.bf16.msra.mxu0 %v6036
  %6779 = vmatpush.bf16.msra.mxu0 %v6029
  %6780 = vmatpush.bf16.msra.mxu0 %v6022
  %6781 = vmatpush.bf16.msra.mxu0 %v6015
  %6782 = vmatpush.bf16.msra.mxu0 %v6008
  %6783 = vmatpush.bf16.msra.mxu0 %v6001
  %6784 = vmatpush.bf16.msra.mxu0 %v5994
  %6785 = vmatpush.bf16.msra.mxu0 %v5987
  %6786 = vmatmul.bf16.gmra.mxu0 %v3738
  %v6787 = vpop.f32.mrf.mxu0
  %v6788 = vadd.f32 %v6775, %v6787
  %v6789 = vpop.f32.mrf.mxu0
  %6790 = vdwg.mxu0
  %6791 = vmatpush.bf16.msra.mxu0 %v6092
  %6792 = vmatpush.bf16.msra.mxu0 %v6085
  %6793 = vmatpush.bf16.msra.mxu0 %v6078
  %6794 = vmatpush.bf16.msra.mxu0 %v6071
  %6795 = vmatpush.bf16.msra.mxu0 %v6064
  %6796 = vmatpush.bf16.msra.mxu0 %v6057
  %6797 = vmatpush.bf16.msra.mxu0 %v6050
  %6798 = vmatpush.bf16.msra.mxu0 %v6043
  %6799 = vmatmul.bf16.gmra.mxu0 %v3739
  %v6800 = vpop.f32.mrf.mxu0
  %v6801 = vadd.f32 %v6788, %v6800
  %v6802 = vpop.f32.mrf.mxu0
  %6803 = vdwg.mxu0
  %6804 = vmatpush.bf16.msra.mxu0 %v6148
  %6805 = vmatpush.bf16.msra.mxu0 %v6141
  %6806 = vmatpush.bf16.msra.mxu0 %v6134
  %6807 = vmatpush.bf16.msra.mxu0 %v6127
  %6808 = vmatpush.bf16.msra.mxu0 %v6120
  %6809 = vmatpush.bf16.msra.mxu0 %v6113
  %6810 = vmatpush.bf16.msra.mxu0 %v6106
  %6811 = vmatpush.bf16.msra.mxu0 %v6099
  %6812 = vmatmul.bf16.gmra.mxu0 %v3740
  %v6813 = vpop.f32.mrf.mxu0
  %v6814 = vadd.f32 %v6801, %v6813
  %v6815 = vpop.f32.mrf.mxu0
  %6816 = vdwg.mxu0
  %6817 = vmatpush.bf16.msra.mxu0 %v6204
  %6818 = vmatpush.bf16.msra.mxu0 %v6197
  %6819 = vmatpush.bf16.msra.mxu0 %v6190
  %6820 = vmatpush.bf16.msra.mxu0 %v6183
  %6821 = vmatpush.bf16.msra.mxu0 %v6176
  %6822 = vmatpush.bf16.msra.mxu0 %v6169
  %6823 = vmatpush.bf16.msra.mxu0 %v6162
  %6824 = vmatpush.bf16.msra.mxu0 %v6155
  %6825 = vmatmul.bf16.gmra.mxu0 %v3741
  %v6826 = vpop.f32.mrf.mxu0
  %v6827 = vadd.f32 %v6814, %v6826
  %v6828 = vpop.f32.mrf.mxu0
  %6829 = vdwg.mxu0
  %6830 = vmatpush.bf16.msra.mxu0 %v5813
  %6831 = vmatpush.bf16.msra.mxu0 %v5806
  %6832 = vmatpush.bf16.msra.mxu0 %v5799
  %6833 = vmatpush.bf16.msra.mxu0 %v5792
  %6834 = vmatpush.bf16.msra.mxu0 %v5785
  %6835 = vmatpush.bf16.msra.mxu0 %v5778
  %6836 = vmatpush.bf16.msra.mxu0 %v5771
  %6837 = vmatpush.bf16.msra.mxu0 %v5764
  %6838 = vmatmul.bf16.gmra.mxu0 %v3734
  %v6839 = vpop.f32.mrf.mxu0
  %v6840 = vadd.f32 0.0, %v6839
  %v6841 = vpop.f32.mrf.mxu0
  %6842 = vdwg.mxu0
  %6843 = vmatpush.bf16.msra.mxu0 %v5869
  %6844 = vmatpush.bf16.msra.mxu0 %v5862
  %6845 = vmatpush.bf16.msra.mxu0 %v5855
  %6846 = vmatpush.bf16.msra.mxu0 %v5848
  %6847 = vmatpush.bf16.msra.mxu0 %v5841
  %6848 = vmatpush.bf16.msra.mxu0 %v5834
  %6849 = vmatpush.bf16.msra.mxu0 %v5827
  %6850 = vmatpush.bf16.msra.mxu0 %v5820
  %6851 = vmatmul.bf16.gmra.mxu0 %v3735
  %v6852 = vpop.f32.mrf.mxu0
  %v6853 = vadd.f32 %v6840, %v6852
  %v6854 = vpop.f32.mrf.mxu0
  %6855 = vdwg.mxu0
  %6856 = vmatpush.bf16.msra.mxu0 %v5925
  %6857 = vmatpush.bf16.msra.mxu0 %v5918
  %6858 = vmatpush.bf16.msra.mxu0 %v5911
  %6859 = vmatpush.bf16.msra.mxu0 %v5904
  %6860 = vmatpush.bf16.msra.mxu0 %v5897
  %6861 = vmatpush.bf16.msra.mxu0 %v5890
  %6862 = vmatpush.bf16.msra.mxu0 %v5883
  %6863 = vmatpush.bf16.msra.mxu0 %v5876
  %6864 = vmatmul.bf16.gmra.mxu0 %v3736
  %v6865 = vpop.f32.mrf.mxu0
  %v6866 = vadd.f32 %v6853, %v6865
  %v6867 = vpop.f32.mrf.mxu0
  %6868 = vdwg.mxu0
  %6869 = vmatpush.bf16.msra.mxu0 %v5981
  %6870 = vmatpush.bf16.msra.mxu0 %v5974
  %6871 = vmatpush.bf16.msra.mxu0 %v5967
  %6872 = vmatpush.bf16.msra.mxu0 %v5960
  %6873 = vmatpush.bf16.msra.mxu0 %v5953
  %6874 = vmatpush.bf16.msra.mxu0 %v5946
  %6875 = vmatpush.bf16.msra.mxu0 %v5939
  %6876 = vmatpush.bf16.msra.mxu0 %v5932
  %6877 = vmatmul.bf16.gmra.mxu0 %v3737
  %v6878 = vpop.f32.mrf.mxu0
  %v6879 = vadd.f32 %v6866, %v6878
  %v6880 = vpop.f32.mrf.mxu0
  %6881 = vdwg.mxu0
  %6882 = vmatpush.bf16.msra.mxu0 %v6037
  %6883 = vmatpush.bf16.msra.mxu0 %v6030
  %6884 = vmatpush.bf16.msra.mxu0 %v6023
  %6885 = vmatpush.bf16.msra.mxu0 %v6016
  %6886 = vmatpush.bf16.msra.mxu0 %v6009
  %6887 = vmatpush.bf16.msra.mxu0 %v6002
  %6888 = vmatpush.bf16.msra.mxu0 %v5995
  %6889 = vmatpush.bf16.msra.mxu0 %v5988
  %6890 = vmatmul.bf16.gmra.mxu0 %v3738
  %v6891 = vpop.f32.mrf.mxu0
  %v6892 = vadd.f32 %v6879, %v6891
  %v6893 = vpop.f32.mrf.mxu0
  %6894 = vdwg.mxu0
  %6895 = vmatpush.bf16.msra.mxu0 %v6093
  %6896 = vmatpush.bf16.msra.mxu0 %v6086
  %6897 = vmatpush.bf16.msra.mxu0 %v6079
  %6898 = vmatpush.bf16.msra.mxu0 %v6072
  %6899 = vmatpush.bf16.msra.mxu0 %v6065
  %6900 = vmatpush.bf16.msra.mxu0 %v6058
  %6901 = vmatpush.bf16.msra.mxu0 %v6051
  %6902 = vmatpush.bf16.msra.mxu0 %v6044
  %6903 = vmatmul.bf16.gmra.mxu0 %v3739
  %v6904 = vpop.f32.mrf.mxu0
  %v6905 = vadd.f32 %v6892, %v6904
  %v6906 = vpop.f32.mrf.mxu0
  %6907 = vdwg.mxu0
  %6908 = vmatpush.bf16.msra.mxu0 %v6149
  %6909 = vmatpush.bf16.msra.mxu0 %v6142
  %6910 = vmatpush.bf16.msra.mxu0 %v6135
  %6911 = vmatpush.bf16.msra.mxu0 %v6128
  %6912 = vmatpush.bf16.msra.mxu0 %v6121
  %6913 = vmatpush.bf16.msra.mxu0 %v6114
  %6914 = vmatpush.bf16.msra.mxu0 %v6107
  %6915 = vmatpush.bf16.msra.mxu0 %v6100
  %6916 = vmatmul.bf16.gmra.mxu0 %v3740
  %v6917 = vpop.f32.mrf.mxu0
  %v6918 = vadd.f32 %v6905, %v6917
  %v6919 = vpop.f32.mrf.mxu0
  %6920 = vdwg.mxu0
  %6921 = vmatpush.bf16.msra.mxu0 %v6205
  %6922 = vmatpush.bf16.msra.mxu0 %v6198
  %6923 = vmatpush.bf16.msra.mxu0 %v6191
  %6924 = vmatpush.bf16.msra.mxu0 %v6184
  %6925 = vmatpush.bf16.msra.mxu0 %v6177
  %6926 = vmatpush.bf16.msra.mxu0 %v6170
  %6927 = vmatpush.bf16.msra.mxu0 %v6163
  %6928 = vmatpush.bf16.msra.mxu0 %v6156
  %6929 = vmatmul.bf16.gmra.mxu0 %v3741
  %v6930 = vpop.f32.mrf.mxu0
  %v6931 = vadd.f32 %v6918, %v6930
  %v6932 = vpop.f32.mrf.mxu0
  %6933 = vdwg.mxu0
  %v6934 = vld [vmem:[%s7 + $0x25] sm:$0x7f]
  %v6936 = vperm.slane %v6934, 0
  %v6937 = vperm.slane %v6934, 1
  %v6938 = vperm.slane %v6934, 2
  %v6939 = vperm.slane %v6934, 3
  %v6940 = vperm.slane %v6934, 4
  %v6941 = vperm.slane %v6934, 5
  %v6942 = vperm.slane %v6934, 6
  %v6950 = vmul.f32 %v6307, %v6936
  %v6951 = vmul.f32 %v6411, %v6937
  %v6952 = vmul.f32 %v6515, %v6938
  %v6953 = vmul.f32 %v6619, %v6939
  %v6954 = vmul.f32 %v6723, %v6940
  %v6955 = vmul.f32 %v6827, %v6941
  %v6956 = vmul.f32 %v6931, %v6942
  %v6957 = vld [vmem:[%s7 + $0x1e] sm:$0x7f]
  %v6959 = vperm.slane %v6957, 0
  %v6960 = vperm.slane %v6957, 1
  %v6961 = vperm.slane %v6957, 2
  %v6962 = vperm.slane %v6957, 3
  %v6963 = vperm.slane %v6957, 4
  %v6964 = vperm.slane %v6957, 5
  %v6965 = vperm.slane %v6957, 6
  %v6973 = vadd.f32 %v6950, %v6959
  %v6974 = vadd.f32 %v6951, %v6960
  %v6975 = vadd.f32 %v6952, %v6961
  %v6976 = vadd.f32 %v6953, %v6962
  %v6977 = vadd.f32 %v6954, %v6963
  %v6978 = vadd.f32 %v6955, %v6964
  %v6979 = vadd.f32 %v6956, %v6965
  %v6980 = vxor.u32 %v6973, 2147483648
  %v6981 = vxor.u32 %v6974, 2147483648
  %v6982 = vxor.u32 %v6975, 2147483648
  %v6983 = vxor.u32 %v6976, 2147483648
  %v6984 = vxor.u32 %v6977, 2147483648
  %v6985 = vxor.u32 %v6978, 2147483648
  %v6986 = vxor.u32 %v6979, 2147483648
  %v6987 = vmul.f32 %v6980, 1.442695
  %v6988 = vpow.pop %v6987
  %v6989 = vmul.f32 %v6981, 1.442695
  %v6990 = vpow.pop %v6989
  %v6991 = vmul.f32 %v6982, 1.442695
  %v6992 = vpow.pop %v6991
  %v6993 = vmul.f32 %v6983, 1.442695
  %v6994 = vpow.pop %v6993
  %v6995 = vmul.f32 %v6984, 1.442695
  %v6996 = vpow.pop %v6995
  %v6997 = vmul.f32 %v6985, 1.442695
  %v6998 = vpow.pop %v6997
  %v6999 = vmul.f32 %v6986, 1.442695
  %v7000 = vpow.pop %v6999
  %v7001 = vadd.f32 %v6988, 1.0
  %v7002 = vadd.f32 %v6990, 1.0
  %v7003 = vadd.f32 %v6992, 1.0
  %v7004 = vadd.f32 %v6994, 1.0
  %v7005 = vadd.f32 %v6996, 1.0
  %v7006 = vadd.f32 %v6998, 1.0
  %v7007 = vadd.f32 %v7000, 1.0
  %v7008 = vrcp.pop %v7001
  %v7009 = vmul.f32 %v7001, %v7008
  %v7010 = vsub.f32 1.0, %v7009
  %v7011 = vmul.f32 %v7008, %v7010
  %v7012 = vadd.f32 %v7008, %v7011
  %vm7013 = vweird.f32 %v7001
  %vm7014 = vweird.f32 %v7008
  %vm7015 = vmor %vm7013, %vm7014
  %v7016 = vsel %vm7015, %v7008, %v7012
  %v7017 = vand.u32 2147483647, %v7001
  %vm7018 = vcmp.eq.f32.partialorder %v7017, 8.507059e+37
  %v7019 = vand.u32 %v7001, 2147483648
  %v7020 = vor.u32 1.1754944e-38, %v7019
  %v7021 = vsel %vm7018, %v7020, %v7016
  %v7022 = vmul.f32 1.0, %v7021
  %v7023 = vrcp.pop %v7002
  %v7024 = vmul.f32 %v7002, %v7023
  %v7025 = vsub.f32 1.0, %v7024
  %v7026 = vmul.f32 %v7023, %v7025
  %v7027 = vadd.f32 %v7023, %v7026
  %vm7028 = vweird.f32 %v7002
  %vm7029 = vweird.f32 %v7023
  %vm7030 = vmor %vm7028, %vm7029
  %v7031 = vsel %vm7030, %v7023, %v7027
  %v7032 = vand.u32 2147483647, %v7002
  %vm7033 = vcmp.eq.f32.partialorder %v7032, 8.507059e+37
  %v7034 = vand.u32 %v7002, 2147483648
  %v7035 = vor.u32 1.1754944e-38, %v7034
  %v7036 = vsel %vm7033, %v7035, %v7031
  %v7037 = vmul.f32 1.0, %v7036
  %v7038 = vrcp.pop %v7003
  %v7039 = vmul.f32 %v7003, %v7038
  %v7040 = vsub.f32 1.0, %v7039
  %v7041 = vmul.f32 %v7038, %v7040
  %v7042 = vadd.f32 %v7038, %v7041
  %vm7043 = vweird.f32 %v7003
  %vm7044 = vweird.f32 %v7038
  %vm7045 = vmor %vm7043, %vm7044
  %v7046 = vsel %vm7045, %v7038, %v7042
  %v7047 = vand.u32 2147483647, %v7003
  %vm7048 = vcmp.eq.f32.partialorder %v7047, 8.507059e+37
  %v7049 = vand.u32 %v7003, 2147483648
  %v7050 = vor.u32 1.1754944e-38, %v7049
  %v7051 = vsel %vm7048, %v7050, %v7046
  %v7052 = vmul.f32 1.0, %v7051
  %v7053 = vrcp.pop %v7004
  %v7054 = vmul.f32 %v7004, %v7053
  %v7055 = vsub.f32 1.0, %v7054
  %v7056 = vmul.f32 %v7053, %v7055
  %v7057 = vadd.f32 %v7053, %v7056
  %vm7058 = vweird.f32 %v7004
  %vm7059 = vweird.f32 %v7053
  %vm7060 = vmor %vm7058, %vm7059
  %v7061 = vsel %vm7060, %v7053, %v7057
  %v7062 = vand.u32 2147483647, %v7004
  %vm7063 = vcmp.eq.f32.partialorder %v7062, 8.507059e+37
  %v7064 = vand.u32 %v7004, 2147483648
  %v7065 = vor.u32 1.1754944e-38, %v7064
  %v7066 = vsel %vm7063, %v7065, %v7061
  %v7067 = vmul.f32 1.0, %v7066
  %v7068 = vrcp.pop %v7005
  %v7069 = vmul.f32 %v7005, %v7068
  %v7070 = vsub.f32 1.0, %v7069
  %v7071 = vmul.f32 %v7068, %v7070
  %v7072 = vadd.f32 %v7068, %v7071
  %vm7073 = vweird.f32 %v7005
  %vm7074 = vweird.f32 %v7068
  %vm7075 = vmor %vm7073, %vm7074
  %v7076 = vsel %vm7075, %v7068, %v7072
  %v7077 = vand.u32 2147483647, %v7005
  %vm7078 = vcmp.eq.f32.partialorder %v7077, 8.507059e+37
  %v7079 = vand.u32 %v7005, 2147483648
  %v7080 = vor.u32 1.1754944e-38, %v7079
  %v7081 = vsel %vm7078, %v7080, %v7076
  %v7082 = vmul.f32 1.0, %v7081
  %v7083 = vrcp.pop %v7006
  %v7084 = vmul.f32 %v7006, %v7083
  %v7085 = vsub.f32 1.0, %v7084
  %v7086 = vmul.f32 %v7083, %v7085
  %v7087 = vadd.f32 %v7083, %v7086
  %vm7088 = vweird.f32 %v7006
  %vm7089 = vweird.f32 %v7083
  %vm7090 = vmor %vm7088, %vm7089
  %v7091 = vsel %vm7090, %v7083, %v7087
  %v7092 = vand.u32 2147483647, %v7006
  %vm7093 = vcmp.eq.f32.partialorder %v7092, 8.507059e+37
  %v7094 = vand.u32 %v7006, 2147483648
  %v7095 = vor.u32 1.1754944e-38, %v7094
  %v7096 = vsel %vm7093, %v7095, %v7091
  %v7097 = vmul.f32 1.0, %v7096
  %v7098 = vrcp.pop %v7007
  %v7099 = vmul.f32 %v7007, %v7098
  %v7100 = vsub.f32 1.0, %v7099
  %v7101 = vmul.f32 %v7098, %v7100
  %v7102 = vadd.f32 %v7098, %v7101
  %vm7103 = vweird.f32 %v7007
  %vm7104 = vweird.f32 %v7098
  %vm7105 = vmor %vm7103, %vm7104
  %v7106 = vsel %vm7105, %v7098, %v7102
  %v7107 = vand.u32 2147483647, %v7007
  %vm7108 = vcmp.eq.f32.partialorder %v7107, 8.507059e+37
  %v7109 = vand.u32 %v7007, 2147483648
  %v7110 = vor.u32 1.1754944e-38, %v7109
  %v7111 = vsel %vm7108, %v7110, %v7106
  %v7112 = vmul.f32 1.0, %v7111
  %7113 = vst [vmem:[%s8] sm:$0xff] %v7022
  %7114 = vst [vmem:[%s8 + $0x8] sm:$0xff] %v7037
  %7115 = vst [vmem:[%s8 + $0x10] sm:$0xff] %v7052
  %7116 = vst [vmem:[%s8 + $0x18] sm:$0xff] %v7067
  %7117 = vst [vmem:[%s8 + $0x20] sm:$0xff] %v7082
  %7118 = vst [vmem:[%s8 + $0x28] sm:$0xff] %v7097
  %7119 = vst.msk [vmem:[%s8 + $0x30] sm:$0xff] %vm62, %v7112
  // Predicated region
  $region34: #{generator_forward.1} parent=0 // pred_check
    _
  $region35: #{generator_forward.1} parent=0 // pred_check_branch
    %7121 = sbr.rel (0) target = $region37
  $region36: #{generator_forward.1} parent=0 // pred_region
    _
  $region37: #{generator_forward.1} parent=0 // pred_fallthru
    _
  // Predicated region
  $region38: #{generator_forward.1} parent=0 // pred_check
    _
  $region39: #{generator_forward.1} parent=0 // pred_check_branch
    %7123 = sbr.rel (0) target = $region41
  $region40: #{generator_forward.1} parent=0 // pred_region
    _
  $region41: #{generator_forward.1} parent=0 // pred_fallthru
    _

</llo_original>
